<compile_context>
chip_gen: v7x
topology: tpu7x:2x2x1
jax: 0.10.0
libtpu: 0.0.40
codegen_flags: <defaults>
</compile_context>

<pallas_src>
import numpy as np
import jax
import jax.numpy as jnp
from jax import lax
from jax.experimental import pallas as pl
from jax.experimental.pallas import tpu as pltpu

# ---- small synthetic config (consistent with the module's __init__) ----
D = 32              # transformer width
H = 4               # attention heads
DH = D // H         # head dim
L = 8               # context length (seq)
HID = 4 * D         # MLP hidden
E = 32              # text_projection output dim
N_LAYERS = 3        # transformer depth
N_DEEP = N_LAYERS - 1
N_TEXT_PROMPTS = 4
N_TOKENS = 4        # number_tokens (deep compound prompt length)
N_CLASSES = 2
N = N_CLASSES * N_TEXT_PROMPTS    # total prompts
NL = N * L
EPS = 1e-5
DTYPE = jnp.float32
BF16 = jnp.bfloat16

# softmax divide uses the EUP approximate reciprocal (~2^-12 rel error); set False
# for an exact divide if bit-closeness to the reference softmax is required.
APPROX_SOFTMAX_RECIP = True

# ---------------- call-invariant host constants (built once with numpy) ----------------
_r = np.arange(NL)
_tok = _r % L                      # token position within a prompt
_pid = _r // L                     # prompt id
_same = _pid[:, None] == _pid[None, :]
_causal = _tok[None, :] <= _tok[:, None]
# additive attention mask over the flat (NL, NL) score matrix:
# causal within a prompt, -1e30 across prompts (prompts never attend to each other).
_MASK_ADD = np.where(_same & _causal, 0.0, -1e30).astype(np.float32)         # (NL, NL)
# deep-prompt injection helpers (tokens 1 .. 1+N_TOKENS of every prompt):
_inj = (_tok >= 1) & (_tok < 1 + N_TOKENS)
_SEL = np.zeros((NL, N_TOKENS), np.float32)                                   # broadcast matrix
_SEL[_r[_inj], _tok[_inj] - 1] = 1.0
_KEEP = np.repeat(np.where(_inj, 0.0, 1.0).astype(np.float32)[:, None], D, 1)  # (NL, D)


# ---------------- fused Pallas kernel ----------------

def text_encoder_kernel(x_ref, pos_ref, deep0_ref, deep1_ref, gather_ref,
                        mask_ref, sel_ref, keep_ref,
                        wqkv_ref, bqkv_ref, wo_ref, bo_ref,
                        wfc1_ref, bfc1_ref, wfc2_ref, bfc2_ref,
                        proj_ref, projb_ref,
                        tf_ref, xnorm_ref):
    f32 = jnp.float32
    deep_refs = (deep0_ref, deep1_ref)

    # activations carried as a single strictly-2D (NL, D) slab.
    x = x_ref[...] + pos_ref[...]                    # positional emb pre-tiled to (NL, D)
    mask = mask_ref[...]                             # (NL, NL) additive, f32
    sel = sel_ref[...]                               # (NL, N_TOKENS)
    keep = keep_ref[...]                             # (NL, D)

    def ln_nomean(v):
        # LayerNorm with gamma/beta already folded into the following matmul.
        # E[x^2]-E[x]^2 form: both cross-lane reduces issue independently.
        mu = jnp.mean(v, axis=-1, keepdims=True)
        ms = jnp.mean(v * v, axis=-1, keepdims=True)
        return (v - mu) * lax.rsqrt(ms - mu * mu + EPS)

    def softmax_rows(s):
        # no max-subtraction: 1/sqrt(DH) is pre-folded into W_qkv's q columns so
        # logits are bounded well below the f32 exp overflow point; the -1e30
        # masked entries underflow exp to exactly 0.
        p = jnp.exp(s)
        denom = jnp.sum(p, axis=-1, keepdims=True)
        if APPROX_SOFTMAX_RECIP:
            return p * pl.reciprocal(denom, approx=True)
        return p / denom

    for li in range(N_LAYERS):                       # static unroll, weights VMEM-resident
        if 1 <= li <= N_DEEP:
            # MaPLe deep-prompt injection, strictly 2D: zero the injected rows and
            # add the selection-matrix broadcast of the deep prompt (no reshapes).
            x = x * keep + jnp.dot(sel, deep_refs[li - 1][...],
                                   preferred_element_type=f32)

        # ---- pre-LN multi-head causal self-attention ----
        xn = ln_nomean(x)
        qkv = jnp.dot(xn.astype(BF16), wqkv_ref[li],
                      preferred_element_type=f32) + bqkv_ref[li]          # (NL, 3D) f32
        qb = qkv[:, 0 * D:1 * D].astype(BF16)        # softmax scale pre-folded into W_qkv
        kb = qkv[:, 1 * D:2 * D].astype(BF16)
        vb = qkv[:, 2 * D:3 * D].astype(BF16)

        # V folded into W_O: one lane-dense (NL, D)@(D, H*D) matmul; column block h
        # is v_h @ W_o[h-th rows] (block-diagonal weight built at prep time).
        vw = jnp.dot(vb, wo_ref[li], preferred_element_type=f32).astype(BF16)  # (NL, H*D)

        attn = jnp.zeros((NL, D), f32)
        for h in range(H):                           # static head loop, 2D matmuls only
            sl = slice(h * DH, (h + 1) * DH)
            s = lax.dot_general(qb[:, sl], kb[:, sl],
                                (((1,), (1,)), ((), ())),
                                preferred_element_type=f32) + mask       # (NL, NL)
            p = softmax_rows(s)
            attn = attn + jnp.dot(p.astype(BF16), vw[:, h * D:(h + 1) * D],
                                  preferred_element_type=f32)            # (NL, D)
        x = x + attn + bo_ref[li]

        # ---- pre-LN MLP with QuickGELU ----
        xn2 = ln_nomean(x)
        hdn = jnp.dot(xn2.astype(BF16), wfc1_ref[li],
                      preferred_element_type=f32) + bfc1_ref[li]          # (NL, HID)
        hdn = hdn * jax.nn.sigmoid(1.702 * hdn)
        x = x + jnp.dot(hdn.astype(BF16), wfc2_ref[li],
                        preferred_element_type=f32) + bfc2_ref[li]

    # ---- ln_final + text_projection (affine folded into proj / projb) ----
    xf = jnp.dot(ln_nomean(x).astype(BF16), proj_ref[...],
                 preferred_element_type=f32) + projb_ref[...]             # (NL, E)

    # fused EOT gather (precomputed one-hot matmul) -> unnormalized text_features (N, E)
    tf_ref[...] = jnp.dot(gather_ref[...], xf, preferred_element_type=f32)

    # row-wise L2 normalization of every projected token (eps guards all-zero rows);
    # the ragged per-class slicing (data-dependent lengths) happens outside.
    xnorm_ref[...] = xf * lax.rsqrt(jnp.sum(xf * xf, axis=-1, keepdims=True) + 1e-12)


# ---------------- one-time host-side preparation ----------------

def prepare_params(params):
    """Fold LN affines + softmax scale into the following matmuls, build the
    block-diagonal W_o (V folded into W_o per head), pre-tile the positional
    embedding, and cast matmul weights to bf16.  Runs once per model."""
    f32 = DTYPE
    g1 = params["ln1_g"].reshape(N_LAYERS, D)
    b1 = params["ln1_b"].reshape(N_LAYERS, D)
    g2 = params["ln2_g"].reshape(N_LAYERS, D)
    b2 = params["ln2_b"].reshape(N_LAYERS, D)
    gf = params["lnf_g"].reshape(D)
    bf = params["lnf_b"].reshape(D)

    scale = 1.0 / (DH ** 0.5)
    qcol = jnp.concatenate([jnp.full((D,), scale, f32), jnp.ones((2 * D,), f32)])

    w_qkv = params["w_qkv"] * g1[:, :, None]
    b_qkv = params["b_qkv"][:, 0, :] + jnp.einsum('ld,ldk->lk', b1, params["w_qkv"])
    w_qkv = w_qkv * qcol[None, None, :]              # fold 1/sqrt(DH) into q columns
    b_qkv = b_qkv * qcol[None, :]

    w_fc1 = params["w_fc1"] * g2[:, :, None]
    b_fc1 = params["b_fc1"][:, 0, :] + jnp.einsum('ld,ldh->lh', b2, params["w_fc1"])

    proj = params["text_proj"] * gf[:, None]
    proj_b = (bf @ params["text_proj"])[None, :]

    # block-diagonal out-projection: column block h holds W_o restricted to head h rows
    wo_blk = jnp.zeros((N_LAYERS, D, H * D), f32)
    for h in range(H):
        wo_blk = wo_blk.at[:, h * DH:(h + 1) * DH, h * D:(h + 1) * D].set(
            params["w_o"][:, h * DH:(h + 1) * DH, :])

    return {
        "pos_slab": jnp.tile(params["pos_emb"], (N, 1)).astype(f32),      # (NL, D)
        "w_qkv": w_qkv.astype(BF16), "b_qkv": b_qkv[:, None, :].astype(f32),
        "w_o": wo_blk.astype(BF16),  "b_o": params["b_o"].astype(f32),
        "w_fc1": w_fc1.astype(BF16), "b_fc1": b_fc1[:, None, :].astype(f32),
        "w_fc2": params["w_fc2"].astype(BF16), "b_fc2": params["b_fc2"].astype(f32),
        "proj": proj.astype(BF16),   "proj_b": proj_b.astype(f32),
        "mask_add": jnp.asarray(_MASK_ADD), "sel": jnp.asarray(_SEL),
        "keep": jnp.asarray(_KEEP),
    }


def prepare_text_constants(tokenized_prompts_np):
    """tokenized_prompts is fixed per model: precompute the EOT one-hot gather
    matrix and the ragged per-class cut lengths ONCE on the host (no per-call
    argmax / scatter / device->host sync)."""
    eot = tokenized_prompts_np.argmax(axis=-1)                            # (N,)
    gather = np.zeros((N, NL), np.float32)
    gather[np.arange(N), np.arange(N) * L + eot] = 1.0
    g = N // N_TEXT_PROMPTS
    tg = tokenized_prompts_np.reshape(g, N_TEXT_PROMPTS, -1)
    cuts = [max(int(tg[i, 0].argmax()) - 1, 1) for i in range(g)]         # clamp >= 1
    return jnp.asarray(gather), cuts


# ---------------- device-side wrapper ----------------

@jax.jit
def _device_forward(prompts, deep0, deep1, gather, prep):
    args = (prompts.reshape(NL, D), prep["pos_slab"], deep0, deep1, gather,
            prep["mask_add"], prep["sel"], prep["keep"],
            prep["w_qkv"], prep["b_qkv"], prep["w_o"], prep["b_o"],
            prep["w_fc1"], prep["b_fc1"], prep["w_fc2"], prep["b_fc2"],
            prep["proj"], prep["proj_b"])
    vmem = pltpu.MemorySpace.VMEM
    text_features, xnorm = pl.pallas_call(
        text_encoder_kernel,
        out_shape=(jax.ShapeDtypeStruct((N, E), DTYPE),
                   jax.ShapeDtypeStruct((NL, E), DTYPE)),
        in_specs=[pl.BlockSpec(memory_space=vmem) for _ in args],
        out_specs=(pl.BlockSpec(memory_space=vmem), pl.BlockSpec(memory_space=vmem)),
    )(*args)
    return text_features, xnorm


def text_encoder_forward(prompts, compound_prompts_deeper_text, gather, cuts, prep):
    assert len(compound_prompts_deeper_text) == N_DEEP == 2
    text_features, xnorm = _device_forward(
        prompts, compound_prompts_deeper_text[0], compound_prompts_deeper_text[1],
        gather, prep)
    # Ragged per-class grouping: output *shapes* depend on the (fixed) EOT positions,
    # so the lengths were precomputed once on the host; no per-call device sync here.
    # TODO(synk): a fully on-device variant would return padded+masked tensors
    # instead of a ragged Python list (shape raggedness has no Pallas equivalent).
    g = N // N_TEXT_PROMPTS
    xg = xnorm.reshape(g, N_TEXT_PROMPTS, L, E)
    normalized_xout = [xg[i, :, :cuts[i]] for i in range(g)]
    return text_features, normalized_xout


# ---------------- pure-JAX reference (for correctness check) ----------------

def _ln_ref(x, g, b):
    mu = jnp.mean(x, axis=-1, keepdims=True)
    var = jnp.mean((x - mu) ** 2, axis=-1, keepdims=True)
    return (x - mu) * lax.rsqrt(var + EPS) * g + b


def reference_forward(prompts, tokenized_prompts, compound_prompts_deeper_text, params):
    x = (prompts + params["pos_emb"][None]).astype(DTYPE)                  # (N, L, D)
    causal = jnp.where(jnp.tril(jnp.ones((L, L), dtype=bool)), 0.0, -1e30).astype(jnp.float32)
    for li in range(N_LAYERS):
        if li >= 1 and (li - 1) < len(compound_prompts_deeper_text):
            ctx = jnp.broadcast_to(compound_prompts_deeper_text[li - 1][None],
                                   (x.shape[0], N_TOKENS, D))
            x = jnp.concatenate([x[:, :1], ctx, x[:, 1 + N_TOKENS:]], axis=1)
        xn = _ln_ref(x, params["ln1_g"][li], params["ln1_b"][li])
        qkv = xn @ params["w_qkv"][li] + params["b_qkv"][li]
        q, k, v = jnp.split(qkv, 3, axis=-1)
        q = q.reshape(N, L, H, DH).transpose(0, 2, 1, 3)
        k = k.reshape(N, L, H, DH).transpose(0, 2, 1, 3)
        v = v.reshape(N, L, H, DH).transpose(0, 2, 1, 3)
        s = jnp.einsum('nhqd,nhkd->nhqk', q, k) / (DH ** 0.5) + causal
        p = jax.nn.softmax(s, axis=-1)
        o = jnp.einsum('nhqk,nhkd->nhqd', p, v).transpose(0, 2, 1, 3).reshape(N, L, D)
        x = x + o @ params["w_o"][li] + params["b_o"][li]
        xn2 = _ln_ref(x, params["ln2_g"][li], params["ln2_b"][li])
        hdn = xn2 @ params["w_fc1"][li] + params["b_fc1"][li]
        hdn = hdn * jax.nn.sigmoid(1.702 * hdn)
        x = x + hdn @ params["w_fc2"][li] + params["b_fc2"][li]
    xf = _ln_ref(x, params["lnf_g"], params["lnf_b"]) @ params["text_proj"]  # (N, L, E)
    eot = jnp.argmax(tokenized_prompts, axis=-1)
    tf = xf[jnp.arange(N), eot]
    xnorm = xf / jnp.linalg.norm(xf, axis=-1, keepdims=True)
    return tf, xnorm


# ---------------- parameter init (deterministic, synthetic; stacked per layer) ----------------

def init_params(key):
    def nrm(k, shape, scale=0.02):
        return (scale * jax.random.normal(k, shape)).astype(DTYPE)

    ks = jax.random.split(key, 10)
    return {
        "pos_emb": nrm(ks[0], (L, D), 0.01),
        "ln1_g": jnp.ones((N_LAYERS, 1, D), DTYPE),
        "ln1_b": jnp.zeros((N_LAYERS, 1, D), DTYPE),
        "w_qkv": nrm(ks[1], (N_LAYERS, D, 3 * D)),
        "b_qkv": nrm(ks[2], (N_LAYERS, 1, 3 * D)),
        "w_o":   nrm(ks[3], (N_LAYERS, D, D)),
        "b_o":   nrm(ks[4], (N_LAYERS, 1, D)),
        "ln2_g": jnp.ones((N_LAYERS, 1, D), DTYPE),
        "ln2_b": jnp.zeros((N_LAYERS, 1, D), DTYPE),
        "w_fc1": nrm(ks[5], (N_LAYERS, D, HID)),
        "b_fc1": nrm(ks[6], (N_LAYERS, 1, HID)),
        "w_fc2": nrm(ks[7], (N_LAYERS, HID, D)),
        "b_fc2": nrm(ks[8], (N_LAYERS, 1, D)),
        "lnf_g": jnp.ones((1, D), DTYPE),
        "lnf_b": jnp.zeros((1, D), DTYPE),
        "text_proj": nrm(ks[9], (D, E)),
    }


if __name__ == "__main__":
    key = jax.random.PRNGKey(0)
    kp, kd, kt, kw = jax.random.split(key, 4)

    params = init_params(kw)
    prep = prepare_params(params)                      # one-time host/param prep

    prompts = (0.02 * jax.random.normal(kp, (N, L, D))).astype(DTYPE)
    compound_prompts_deeper_text = [
        (0.02 * jax.random.normal(jax.random.fold_in(kd, i), (N_TOKENS, D))).astype(DTYPE)
        for i in range(N_DEEP)
    ]
    # tokenized prompts: small ids with the EOT (max id) planted at a fixed position
    base = jax.random.randint(kt, (N, L), 1, 50)
    eot_pos = jnp.array([6, 6, 6, 6, 5, 5, 5, 5], dtype=jnp.int32)
    tokenized_prompts = base.at[jnp.arange(N), eot_pos].set(1000)

    # one-time host prep of tokenized-prompt-derived constants (no per-call sync)
    tp_host = np.asarray(jax.device_get(tokenized_prompts))
    gather, cuts = prepare_text_constants(tp_host)

    text_features, normalized_xout = text_encoder_forward(
        prompts, compound_prompts_deeper_text, gather, cuts, prep)

    jax.block_until_ready(text_features)
    for a in normalized_xout:
        jax.block_until_ready(a)

    assert text_features.shape == (N, E)
    assert len(normalized_xout) == N // N_TEXT_PROMPTS

    # correctness check against the pure-JAX f32 reference (kernel uses bf16 matmuls)
    tf_ref, xnorm_ref = reference_forward(
        prompts, tokenized_prompts, compound_prompts_deeper_text, params)
    ok = bool(jnp.allclose(text_features, tf_ref, rtol=2e-2, atol=2e-2))
    g = N // N_TEXT_PROMPTS
    xg_ref = xnorm_ref.reshape(g, N_TEXT_PROMPTS, L, E)
    for i in range(g):
        ok = ok and bool(jnp.allclose(normalized_xout[i], xg_ref[i, :, :cuts[i]],
                                      rtol=2e-2, atol=2e-2))
    assert ok, "Pallas kernel output does not match pure-JAX reference"

    print("KERNEL_OK")
</pallas_src>

<mosaic_0001>
module attributes {stable_mosaic.version = 11 : i64} {
  func.func @text_encoder_kernel(%arg0: memref<64x32xf32, #tpu.memory_space<vmem>>, %arg1: memref<64x32xf32, #tpu.memory_space<vmem>>, %arg2: memref<4x32xf32, #tpu.memory_space<vmem>>, %arg3: memref<4x32xf32, #tpu.memory_space<vmem>>, %arg4: memref<8x64xf32, #tpu.memory_space<vmem>>, %arg5: memref<64x64xf32, #tpu.memory_space<vmem>>, %arg6: memref<64x4xf32, #tpu.memory_space<vmem>>, %arg7: memref<64x32xf32, #tpu.memory_space<vmem>>, %arg8: memref<3x32x96xbf16, #tpu.memory_space<vmem>>, %arg9: memref<3x1x96xf32, #tpu.memory_space<vmem>>, %arg10: memref<3x32x128xbf16, #tpu.memory_space<vmem>>, %arg11: memref<3x1x32xf32, #tpu.memory_space<vmem>>, %arg12: memref<3x32x128xbf16, #tpu.memory_space<vmem>>, %arg13: memref<3x1x128xf32, #tpu.memory_space<vmem>>, %arg14: memref<3x128x32xbf16, #tpu.memory_space<vmem>>, %arg15: memref<3x1x32xf32, #tpu.memory_space<vmem>>, %arg16: memref<32x32xbf16, #tpu.memory_space<vmem>>, %arg17: memref<1x32xf32, #tpu.memory_space<vmem>>, %arg18: memref<8x32xf32, #tpu.memory_space<vmem>>, %arg19: memref<64x32xf32, #tpu.memory_space<vmem>>) attributes {dimension_semantics = [], scalar_prefetch = 0 : i64, scratch_operands = 0 : i64, tpu.core_type = #tpu.core_type<tc>} {
    %c0 = arith.constant 0 : index
    %c0_0 = arith.constant 0 : index
    %0 = vector.load %arg0[%c0, %c0_0] : memref<64x32xf32, #tpu.memory_space<vmem>>, vector<64x32xf32>
    %c0_1 = arith.constant 0 : index
    %c0_2 = arith.constant 0 : index
    %1 = vector.load %arg1[%c0_1, %c0_2] : memref<64x32xf32, #tpu.memory_space<vmem>>, vector<64x32xf32>
    %2 = arith.addf %0, %1 : vector<64x32xf32>
    %c0_3 = arith.constant 0 : index
    %c0_4 = arith.constant 0 : index
    %3 = vector.load %arg5[%c0_3, %c0_4] : memref<64x64xf32, #tpu.memory_space<vmem>>, vector<64x64xf32>
    %c0_5 = arith.constant 0 : index
    %c0_6 = arith.constant 0 : index
    %4 = vector.load %arg6[%c0_5, %c0_6] : memref<64x4xf32, #tpu.memory_space<vmem>>, vector<64x4xf32>
    %c0_7 = arith.constant 0 : index
    %c0_8 = arith.constant 0 : index
    %5 = vector.load %arg7[%c0_7, %c0_8] : memref<64x32xf32, #tpu.memory_space<vmem>>, vector<64x32xf32>
    %cst = arith.constant dense<0.000000e+00> : vector<64xf32>
    %6 = vector.multi_reduction <add>, %2, %cst [1] : vector<64x32xf32> to vector<64xf32>
    %7 = vector.shape_cast %6 : vector<64xf32> to vector<64x1xf32>
    %cst_9 = arith.constant 3.200000e+01 : f32
    %8 = vector.broadcast %cst_9 : f32 to vector<64x1xf32>
    %9 = arith.divf %7, %8 : vector<64x1xf32>
    %10 = arith.mulf %2, %2 : vector<64x32xf32>
    %cst_10 = arith.constant dense<0.000000e+00> : vector<64xf32>
    %11 = vector.multi_reduction <add>, %10, %cst_10 [1] : vector<64x32xf32> to vector<64xf32>
    %12 = vector.shape_cast %11 : vector<64xf32> to vector<64x1xf32>
    %cst_11 = arith.constant 3.200000e+01 : f32
    %13 = vector.broadcast %cst_11 : f32 to vector<64x1xf32>
    %14 = arith.divf %12, %13 : vector<64x1xf32>
    %15 = vector.broadcast %9 : vector<64x1xf32> to vector<64x32xf32>
    %16 = arith.subf %2, %15 : vector<64x32xf32>
    %17 = arith.mulf %9, %9 : vector<64x1xf32>
    %18 = arith.subf %14, %17 : vector<64x1xf32>
    %cst_12 = arith.constant 9.99999974E-6 : f32
    %19 = vector.broadcast %cst_12 : f32 to vector<64x1xf32>
    %20 = arith.addf %18, %19 : vector<64x1xf32>
    %21 = math.rsqrt %20 : vector<64x1xf32>
    %22 = vector.broadcast %21 : vector<64x1xf32> to vector<64x32xf32>
    %23 = arith.mulf %16, %22 : vector<64x32xf32>
    %24 = arith.truncf %23 : vector<64x32xf32> to vector<64x32xbf16>
    %c0_13 = arith.constant 0 : index
    %c0_14 = arith.constant 0 : index
    %c0_15 = arith.constant 0 : index
    %25 = vector.load %arg8[%c0_13, %c0_14, %c0_15] : memref<3x32x96xbf16, #tpu.memory_space<vmem>>, vector<1x32x96xbf16>
    %26 = vector.shape_cast %25 : vector<1x32x96xbf16> to vector<32x96xbf16>
    %cst_16 = arith.constant dense<0.000000e+00> : vector<64x96xf32>
    %27 = tpu.matmul %24, %26, %cst_16 {dimension_numbers = #tpu.dot_dimension_numbers<[1], [0], [0], [1], [0, 0, 1, 1], [], []>} : vector<64x32xbf16>, vector<32x96xbf16>, vector<64x96xf32> -> vector<64x96xf32>
    %c0_17 = arith.constant 0 : index
    %c0_18 = arith.constant 0 : index
    %c0_19 = arith.constant 0 : index
    %28 = vector.load %arg9[%c0_17, %c0_18, %c0_19] : memref<3x1x96xf32, #tpu.memory_space<vmem>>, vector<1x1x96xf32>
    %29 = vector.shape_cast %28 : vector<1x1x96xf32> to vector<1x96xf32>
    %30 = vector.broadcast %29 : vector<1x96xf32> to vector<64x96xf32>
    %31 = arith.addf %27, %30 : vector<64x96xf32>
    %32 = vector.extract_strided_slice %31 {offsets = [0, 0], sizes = [64, 32], strides = [1, 1]} : vector<64x96xf32> to vector<64x32xf32>
    %33 = arith.truncf %32 : vector<64x32xf32> to vector<64x32xbf16>
    %34 = vector.extract_strided_slice %31 {offsets = [0, 32], sizes = [64, 32], strides = [1, 1]} : vector<64x96xf32> to vector<64x32xf32>
    %35 = arith.truncf %34 : vector<64x32xf32> to vector<64x32xbf16>
    %36 = vector.extract_strided_slice %31 {offsets = [0, 64], sizes = [64, 32], strides = [1, 1]} : vector<64x96xf32> to vector<64x32xf32>
    %37 = arith.truncf %36 : vector<64x32xf32> to vector<64x32xbf16>
    %c0_20 = arith.constant 0 : index
    %c0_21 = arith.constant 0 : index
    %c0_22 = arith.constant 0 : index
    %38 = vector.load %arg10[%c0_20, %c0_21, %c0_22] : memref<3x32x128xbf16, #tpu.memory_space<vmem>>, vector<1x32x128xbf16>
    %39 = vector.shape_cast %38 : vector<1x32x128xbf16> to vector<32x128xbf16>
    %cst_23 = arith.constant dense<0.000000e+00> : vector<64x128xf32>
    %40 = tpu.matmul %37, %39, %cst_23 {dimension_numbers = #tpu.dot_dimension_numbers<[1], [0], [0], [1], [0, 0, 1, 1], [], []>} : vector<64x32xbf16>, vector<32x128xbf16>, vector<64x128xf32> -> vector<64x128xf32>
    %41 = arith.truncf %40 : vector<64x128xf32> to vector<64x128xbf16>
    %cst_24 = arith.constant 0.000000e+00 : f32
    %42 = vector.broadcast %cst_24 : f32 to vector<64x32xf32>
    %43 = vector.extract_strided_slice %33 {offsets = [0, 0], sizes = [64, 8], strides = [1, 1]} : vector<64x32xbf16> to vector<64x8xbf16>
    %44 = vector.extract_strided_slice %35 {offsets = [0, 0], sizes = [64, 8], strides = [1, 1]} : vector<64x32xbf16> to vector<64x8xbf16>
    %cst_25 = arith.constant dense<0.000000e+00> : vector<64x64xf32>
    %45 = tpu.matmul %43, %44, %cst_25 {dimension_numbers = #tpu.dot_dimension_numbers<[1], [1], [0], [0], [0, 0, 1, 0], [], []>} : vector<64x8xbf16>, vector<64x8xbf16>, vector<64x64xf32> -> vector<64x64xf32>
    %46 = arith.addf %45, %3 : vector<64x64xf32>
    %47 = math.exp %46 : vector<64x64xf32>
    %cst_26 = arith.constant dense<0.000000e+00> : vector<64xf32>
    %48 = vector.multi_reduction <add>, %47, %cst_26 [1] : vector<64x64xf32> to vector<64xf32>
    %49 = vector.shape_cast %48 : vector<64xf32> to vector<64x1xf32>
    %50 = tpu.reciprocal %49 {approx = true} : vector<64x1xf32> -> vector<64x1xf32>
    %51 = vector.broadcast %50 : vector<64x1xf32> to vector<64x64xf32>
    %52 = arith.mulf %47, %51 : vector<64x64xf32>
    %53 = arith.truncf %52 : vector<64x64xf32> to vector<64x64xbf16>
    %54 = vector.extract_strided_slice %41 {offsets = [0, 0], sizes = [64, 32], strides = [1, 1]} : vector<64x128xbf16> to vector<64x32xbf16>
    %cst_27 = arith.constant dense<0.000000e+00> : vector<64x32xf32>
    %55 = tpu.matmul %53, %54, %cst_27 {dimension_numbers = #tpu.dot_dimension_numbers<[1], [0], [0], [1], [0, 0, 1, 1], [], []>} : vector<64x64xbf16>, vector<64x32xbf16>, vector<64x32xf32> -> vector<64x32xf32>
    %56 = arith.addf %42, %55 : vector<64x32xf32>
    %57 = vector.extract_strided_slice %33 {offsets = [0, 8], sizes = [64, 8], strides = [1, 1]} : vector<64x32xbf16> to vector<64x8xbf16>
    %58 = vector.extract_strided_slice %35 {offsets = [0, 8], sizes = [64, 8], strides = [1, 1]} : vector<64x32xbf16> to vector<64x8xbf16>
    %cst_28 = arith.constant dense<0.000000e+00> : vector<64x64xf32>
    %59 = tpu.matmul %57, %58, %cst_28 {dimension_numbers = #tpu.dot_dimension_numbers<[1], [1], [0], [0], [0, 0, 1, 0], [], []>} : vector<64x8xbf16>, vector<64x8xbf16>, vector<64x64xf32> -> vector<64x64xf32>
    %60 = arith.addf %59, %3 : vector<64x64xf32>
    %61 = math.exp %60 : vector<64x64xf32>
    %cst_29 = arith.constant dense<0.000000e+00> : vector<64xf32>
    %62 = vector.multi_reduction <add>, %61, %cst_29 [1] : vector<64x64xf32> to vector<64xf32>
    %63 = vector.shape_cast %62 : vector<64xf32> to vector<64x1xf32>
    %64 = tpu.reciprocal %63 {approx = true} : vector<64x1xf32> -> vector<64x1xf32>
    %65 = vector.broadcast %64 : vector<64x1xf32> to vector<64x64xf32>
    %66 = arith.mulf %61, %65 : vector<64x64xf32>
    %67 = arith.truncf %66 : vector<64x64xf32> to vector<64x64xbf16>
    %68 = vector.extract_strided_slice %41 {offsets = [0, 32], sizes = [64, 32], strides = [1, 1]} : vector<64x128xbf16> to vector<64x32xbf16>
    %cst_30 = arith.constant dense<0.000000e+00> : vector<64x32xf32>
    %69 = tpu.matmul %67, %68, %cst_30 {dimension_numbers = #tpu.dot_dimension_numbers<[1], [0], [0], [1], [0, 0, 1, 1], [], []>} : vector<64x64xbf16>, vector<64x32xbf16>, vector<64x32xf32> -> vector<64x32xf32>
    %70 = arith.addf %56, %69 : vector<64x32xf32>
    %71 = vector.extract_strided_slice %33 {offsets = [0, 16], sizes = [64, 8], strides = [1, 1]} : vector<64x32xbf16> to vector<64x8xbf16>
    %72 = vector.extract_strided_slice %35 {offsets = [0, 16], sizes = [64, 8], strides = [1, 1]} : vector<64x32xbf16> to vector<64x8xbf16>
    %cst_31 = arith.constant dense<0.000000e+00> : vector<64x64xf32>
    %73 = tpu.matmul %71, %72, %cst_31 {dimension_numbers = #tpu.dot_dimension_numbers<[1], [1], [0], [0], [0, 0, 1, 0], [], []>} : vector<64x8xbf16>, vector<64x8xbf16>, vector<64x64xf32> -> vector<64x64xf32>
    %74 = arith.addf %73, %3 : vector<64x64xf32>
    %75 = math.exp %74 : vector<64x64xf32>
    %cst_32 = arith.constant dense<0.000000e+00> : vector<64xf32>
    %76 = vector.multi_reduction <add>, %75, %cst_32 [1] : vector<64x64xf32> to vector<64xf32>
    %77 = vector.shape_cast %76 : vector<64xf32> to vector<64x1xf32>
    %78 = tpu.reciprocal %77 {approx = true} : vector<64x1xf32> -> vector<64x1xf32>
    %79 = vector.broadcast %78 : vector<64x1xf32> to vector<64x64xf32>
    %80 = arith.mulf %75, %79 : vector<64x64xf32>
    %81 = arith.truncf %80 : vector<64x64xf32> to vector<64x64xbf16>
    %82 = vector.extract_strided_slice %41 {offsets = [0, 64], sizes = [64, 32], strides = [1, 1]} : vector<64x128xbf16> to vector<64x32xbf16>
    %cst_33 = arith.constant dense<0.000000e+00> : vector<64x32xf32>
    %83 = tpu.matmul %81, %82, %cst_33 {dimension_numbers = #tpu.dot_dimension_numbers<[1], [0], [0], [1], [0, 0, 1, 1], [], []>} : vector<64x64xbf16>, vector<64x32xbf16>, vector<64x32xf32> -> vector<64x32xf32>
    %84 = arith.addf %70, %83 : vector<64x32xf32>
    %85 = vector.extract_strided_slice %33 {offsets = [0, 24], sizes = [64, 8], strides = [1, 1]} : vector<64x32xbf16> to vector<64x8xbf16>
    %86 = vector.extract_strided_slice %35 {offsets = [0, 24], sizes = [64, 8], strides = [1, 1]} : vector<64x32xbf16> to vector<64x8xbf16>
    %cst_34 = arith.constant dense<0.000000e+00> : vector<64x64xf32>
    %87 = tpu.matmul %85, %86, %cst_34 {dimension_numbers = #tpu.dot_dimension_numbers<[1], [1], [0], [0], [0, 0, 1, 0], [], []>} : vector<64x8xbf16>, vector<64x8xbf16>, vector<64x64xf32> -> vector<64x64xf32>
    %88 = arith.addf %87, %3 : vector<64x64xf32>
    %89 = math.exp %88 : vector<64x64xf32>
    %cst_35 = arith.constant dense<0.000000e+00> : vector<64xf32>
    %90 = vector.multi_reduction <add>, %89, %cst_35 [1] : vector<64x64xf32> to vector<64xf32>
    %91 = vector.shape_cast %90 : vector<64xf32> to vector<64x1xf32>
    %92 = tpu.reciprocal %91 {approx = true} : vector<64x1xf32> -> vector<64x1xf32>
    %93 = vector.broadcast %92 : vector<64x1xf32> to vector<64x64xf32>
    %94 = arith.mulf %89, %93 : vector<64x64xf32>
    %95 = arith.truncf %94 : vector<64x64xf32> to vector<64x64xbf16>
    %96 = vector.extract_strided_slice %41 {offsets = [0, 96], sizes = [64, 32], strides = [1, 1]} : vector<64x128xbf16> to vector<64x32xbf16>
    %cst_36 = arith.constant dense<0.000000e+00> : vector<64x32xf32>
    %97 = tpu.matmul %95, %96, %cst_36 {dimension_numbers = #tpu.dot_dimension_numbers<[1], [0], [0], [1], [0, 0, 1, 1], [], []>} : vector<64x64xbf16>, vector<64x32xbf16>, vector<64x32xf32> -> vector<64x32xf32>
    %98 = arith.addf %84, %97 : vector<64x32xf32>
    %99 = arith.addf %2, %98 : vector<64x32xf32>
    %c0_37 = arith.constant 0 : index
    %c0_38 = arith.constant 0 : index
    %c0_39 = arith.constant 0 : index
    %100 = vector.load %arg11[%c0_37, %c0_38, %c0_39] : memref<3x1x32xf32, #tpu.memory_space<vmem>>, vector<1x1x32xf32>
    %101 = vector.shape_cast %100 : vector<1x1x32xf32> to vector<1x32xf32>
    %102 = vector.broadcast %101 : vector<1x32xf32> to vector<64x32xf32>
    %103 = arith.addf %99, %102 : vector<64x32xf32>
    %cst_40 = arith.constant dense<0.000000e+00> : vector<64xf32>
    %104 = vector.multi_reduction <add>, %103, %cst_40 [1] : vector<64x32xf32> to vector<64xf32>
    %105 = vector.shape_cast %104 : vector<64xf32> to vector<64x1xf32>
    %cst_41 = arith.constant 3.200000e+01 : f32
    %106 = vector.broadcast %cst_41 : f32 to vector<64x1xf32>
    %107 = arith.divf %105, %106 : vector<64x1xf32>
    %108 = arith.mulf %103, %103 : vector<64x32xf32>
    %cst_42 = arith.constant dense<0.000000e+00> : vector<64xf32>
    %109 = vector.multi_reduction <add>, %108, %cst_42 [1] : vector<64x32xf32> to vector<64xf32>
    %110 = vector.shape_cast %109 : vector<64xf32> to vector<64x1xf32>
    %cst_43 = arith.constant 3.200000e+01 : f32
    %111 = vector.broadcast %cst_43 : f32 to vector<64x1xf32>
    %112 = arith.divf %110, %111 : vector<64x1xf32>
    %113 = vector.broadcast %107 : vector<64x1xf32> to vector<64x32xf32>
    %114 = arith.subf %103, %113 : vector<64x32xf32>
    %115 = arith.mulf %107, %107 : vector<64x1xf32>
    %116 = arith.subf %112, %115 : vector<64x1xf32>
    %cst_44 = arith.constant 9.99999974E-6 : f32
    %117 = vector.broadcast %cst_44 : f32 to vector<64x1xf32>
    %118 = arith.addf %116, %117 : vector<64x1xf32>
    %119 = math.rsqrt %118 : vector<64x1xf32>
    %120 = vector.broadcast %119 : vector<64x1xf32> to vector<64x32xf32>
    %121 = arith.mulf %114, %120 : vector<64x32xf32>
    %122 = arith.truncf %121 : vector<64x32xf32> to vector<64x32xbf16>
    %c0_45 = arith.constant 0 : index
    %c0_46 = arith.constant 0 : index
    %c0_47 = arith.constant 0 : index
    %123 = vector.load %arg12[%c0_45, %c0_46, %c0_47] : memref<3x32x128xbf16, #tpu.memory_space<vmem>>, vector<1x32x128xbf16>
    %124 = vector.shape_cast %123 : vector<1x32x128xbf16> to vector<32x128xbf16>
    %cst_48 = arith.constant dense<0.000000e+00> : vector<64x128xf32>
    %125 = tpu.matmul %122, %124, %cst_48 {dimension_numbers = #tpu.dot_dimension_numbers<[1], [0], [0], [1], [0, 0, 1, 1], [], []>} : vector<64x32xbf16>, vector<32x128xbf16>, vector<64x128xf32> -> vector<64x128xf32>
    %c0_49 = arith.constant 0 : index
    %c0_50 = arith.constant 0 : index
    %c0_51 = arith.constant 0 : index
    %126 = vector.load %arg13[%c0_49, %c0_50, %c0_51] : memref<3x1x128xf32, #tpu.memory_space<vmem>>, vector<1x1x128xf32>
    %127 = vector.shape_cast %126 : vector<1x1x128xf32> to vector<1x128xf32>
    %128 = vector.broadcast %127 : vector<1x128xf32> to vector<64x128xf32>
    %129 = arith.addf %125, %128 : vector<64x128xf32>
    %cst_52 = arith.constant 1.702000e+00 : f32
    %130 = vector.broadcast %cst_52 : f32 to vector<64x128xf32>
    %131 = arith.mulf %130, %129 : vector<64x128xf32>
    %132 = arith.negf %131 : vector<64x128xf32>
    %133 = math.exp %132 : vector<64x128xf32>
    %cst_53 = arith.constant 1.000000e+00 : f32
    %134 = vector.broadcast %cst_53 : f32 to vector<64x128xf32>
    %135 = arith.addf %134, %133 : vector<64x128xf32>
    %136 = arith.divf %134, %135 : vector<64x128xf32>
    %137 = arith.mulf %129, %136 : vector<64x128xf32>
    %138 = arith.truncf %137 : vector<64x128xf32> to vector<64x128xbf16>
    %c0_54 = arith.constant 0 : index
    %c0_55 = arith.constant 0 : index
    %c0_56 = arith.constant 0 : index
    %139 = vector.load %arg14[%c0_54, %c0_55, %c0_56] : memref<3x128x32xbf16, #tpu.memory_space<vmem>>, vector<1x128x32xbf16>
    %140 = vector.shape_cast %139 : vector<1x128x32xbf16> to vector<128x32xbf16>
    %cst_57 = arith.constant dense<0.000000e+00> : vector<64x32xf32>
    %141 = tpu.matmul %138, %140, %cst_57 {dimension_numbers = #tpu.dot_dimension_numbers<[1], [0], [0], [1], [0, 0, 1, 1], [], []>} : vector<64x128xbf16>, vector<128x32xbf16>, vector<64x32xf32> -> vector<64x32xf32>
    %142 = arith.addf %103, %141 : vector<64x32xf32>
    %c0_58 = arith.constant 0 : index
    %c0_59 = arith.constant 0 : index
    %c0_60 = arith.constant 0 : index
    %143 = vector.load %arg15[%c0_58, %c0_59, %c0_60] : memref<3x1x32xf32, #tpu.memory_space<vmem>>, vector<1x1x32xf32>
    %144 = vector.shape_cast %143 : vector<1x1x32xf32> to vector<1x32xf32>
    %145 = vector.broadcast %144 : vector<1x32xf32> to vector<64x32xf32>
    %146 = arith.addf %142, %145 : vector<64x32xf32>
    %147 = arith.mulf %146, %5 : vector<64x32xf32>
    %c0_61 = arith.constant 0 : index
    %c0_62 = arith.constant 0 : index
    %148 = vector.load %arg2[%c0_61, %c0_62] : memref<4x32xf32, #tpu.memory_space<vmem>>, vector<4x32xf32>
    %cst_63 = arith.constant dense<0.000000e+00> : vector<64x32xf32>
    %149 = tpu.matmul %4, %148, %cst_63 {dimension_numbers = #tpu.dot_dimension_numbers<[1], [0], [0], [1], [0, 0, 1, 1], [], []>} : vector<64x4xf32>, vector<4x32xf32>, vector<64x32xf32> -> vector<64x32xf32>
    %150 = arith.addf %147, %149 : vector<64x32xf32>
    %cst_64 = arith.constant dense<0.000000e+00> : vector<64xf32>
    %151 = vector.multi_reduction <add>, %150, %cst_64 [1] : vector<64x32xf32> to vector<64xf32>
    %152 = vector.shape_cast %151 : vector<64xf32> to vector<64x1xf32>
    %cst_65 = arith.constant 3.200000e+01 : f32
    %153 = vector.broadcast %cst_65 : f32 to vector<64x1xf32>
    %154 = arith.divf %152, %153 : vector<64x1xf32>
    %155 = arith.mulf %150, %150 : vector<64x32xf32>
    %cst_66 = arith.constant dense<0.000000e+00> : vector<64xf32>
    %156 = vector.multi_reduction <add>, %155, %cst_66 [1] : vector<64x32xf32> to vector<64xf32>
    %157 = vector.shape_cast %156 : vector<64xf32> to vector<64x1xf32>
    %cst_67 = arith.constant 3.200000e+01 : f32
    %158 = vector.broadcast %cst_67 : f32 to vector<64x1xf32>
    %159 = arith.divf %157, %158 : vector<64x1xf32>
    %160 = vector.broadcast %154 : vector<64x1xf32> to vector<64x32xf32>
    %161 = arith.subf %150, %160 : vector<64x32xf32>
    %162 = arith.mulf %154, %154 : vector<64x1xf32>
    %163 = arith.subf %159, %162 : vector<64x1xf32>
    %cst_68 = arith.constant 9.99999974E-6 : f32
    %164 = vector.broadcast %cst_68 : f32 to vector<64x1xf32>
    %165 = arith.addf %163, %164 : vector<64x1xf32>
    %166 = math.rsqrt %165 : vector<64x1xf32>
    %167 = vector.broadcast %166 : vector<64x1xf32> to vector<64x32xf32>
    %168 = arith.mulf %161, %167 : vector<64x32xf32>
    %169 = arith.truncf %168 : vector<64x32xf32> to vector<64x32xbf16>
    %c1 = arith.constant 1 : index
    %c0_69 = arith.constant 0 : index
    %c0_70 = arith.constant 0 : index
    %170 = vector.load %arg8[%c1, %c0_69, %c0_70] : memref<3x32x96xbf16, #tpu.memory_space<vmem>>, vector<1x32x96xbf16>
    %171 = vector.shape_cast %170 : vector<1x32x96xbf16> to vector<32x96xbf16>
    %cst_71 = arith.constant dense<0.000000e+00> : vector<64x96xf32>
    %172 = tpu.matmul %169, %171, %cst_71 {dimension_numbers = #tpu.dot_dimension_numbers<[1], [0], [0], [1], [0, 0, 1, 1], [], []>} : vector<64x32xbf16>, vector<32x96xbf16>, vector<64x96xf32> -> vector<64x96xf32>
    %c1_72 = arith.constant 1 : index
    %c0_73 = arith.constant 0 : index
    %c0_74 = arith.constant 0 : index
    %173 = vector.load %arg9[%c1_72, %c0_73, %c0_74] : memref<3x1x96xf32, #tpu.memory_space<vmem>>, vector<1x1x96xf32>
    %174 = vector.shape_cast %173 : vector<1x1x96xf32> to vector<1x96xf32>
    %175 = vector.broadcast %174 : vector<1x96xf32> to vector<64x96xf32>
    %176 = arith.addf %172, %175 : vector<64x96xf32>
    %177 = vector.extract_strided_slice %176 {offsets = [0, 0], sizes = [64, 32], strides = [1, 1]} : vector<64x96xf32> to vector<64x32xf32>
    %178 = arith.truncf %177 : vector<64x32xf32> to vector<64x32xbf16>
    %179 = vector.extract_strided_slice %176 {offsets = [0, 32], sizes = [64, 32], strides = [1, 1]} : vector<64x96xf32> to vector<64x32xf32>
    %180 = arith.truncf %179 : vector<64x32xf32> to vector<64x32xbf16>
    %181 = vector.extract_strided_slice %176 {offsets = [0, 64], sizes = [64, 32], strides = [1, 1]} : vector<64x96xf32> to vector<64x32xf32>
    %182 = arith.truncf %181 : vector<64x32xf32> to vector<64x32xbf16>
    %c1_75 = arith.constant 1 : index
    %c0_76 = arith.constant 0 : index
    %c0_77 = arith.constant 0 : index
    %183 = vector.load %arg10[%c1_75, %c0_76, %c0_77] : memref<3x32x128xbf16, #tpu.memory_space<vmem>>, vector<1x32x128xbf16>
    %184 = vector.shape_cast %183 : vector<1x32x128xbf16> to vector<32x128xbf16>
    %cst_78 = arith.constant dense<0.000000e+00> : vector<64x128xf32>
    %185 = tpu.matmul %182, %184, %cst_78 {dimension_numbers = #tpu.dot_dimension_numbers<[1], [0], [0], [1], [0, 0, 1, 1], [], []>} : vector<64x32xbf16>, vector<32x128xbf16>, vector<64x128xf32> -> vector<64x128xf32>
    %186 = arith.truncf %185 : vector<64x128xf32> to vector<64x128xbf16>
    %cst_79 = arith.constant 0.000000e+00 : f32
    %187 = vector.broadcast %cst_79 : f32 to vector<64x32xf32>
    %188 = vector.extract_strided_slice %178 {offsets = [0, 0], sizes = [64, 8], strides = [1, 1]} : vector<64x32xbf16> to vector<64x8xbf16>
    %189 = vector.extract_strided_slice %180 {offsets = [0, 0], sizes = [64, 8], strides = [1, 1]} : vector<64x32xbf16> to vector<64x8xbf16>
    %cst_80 = arith.constant dense<0.000000e+00> : vector<64x64xf32>
    %190 = tpu.matmul %188, %189, %cst_80 {dimension_numbers = #tpu.dot_dimension_numbers<[1], [1], [0], [0], [0, 0, 1, 0], [], []>} : vector<64x8xbf16>, vector<64x8xbf16>, vector<64x64xf32> -> vector<64x64xf32>
    %191 = arith.addf %190, %3 : vector<64x64xf32>
    %192 = math.exp %191 : vector<64x64xf32>
    %cst_81 = arith.constant dense<0.000000e+00> : vector<64xf32>
    %193 = vector.multi_reduction <add>, %192, %cst_81 [1] : vector<64x64xf32> to vector<64xf32>
    %194 = vector.shape_cast %193 : vector<64xf32> to vector<64x1xf32>
    %195 = tpu.reciprocal %194 {approx = true} : vector<64x1xf32> -> vector<64x1xf32>
    %196 = vector.broadcast %195 : vector<64x1xf32> to vector<64x64xf32>
    %197 = arith.mulf %192, %196 : vector<64x64xf32>
    %198 = arith.truncf %197 : vector<64x64xf32> to vector<64x64xbf16>
    %199 = vector.extract_strided_slice %186 {offsets = [0, 0], sizes = [64, 32], strides = [1, 1]} : vector<64x128xbf16> to vector<64x32xbf16>
    %cst_82 = arith.constant dense<0.000000e+00> : vector<64x32xf32>
    %200 = tpu.matmul %198, %199, %cst_82 {dimension_numbers = #tpu.dot_dimension_numbers<[1], [0], [0], [1], [0, 0, 1, 1], [], []>} : vector<64x64xbf16>, vector<64x32xbf16>, vector<64x32xf32> -> vector<64x32xf32>
    %201 = arith.addf %187, %200 : vector<64x32xf32>
    %202 = vector.extract_strided_slice %178 {offsets = [0, 8], sizes = [64, 8], strides = [1, 1]} : vector<64x32xbf16> to vector<64x8xbf16>
    %203 = vector.extract_strided_slice %180 {offsets = [0, 8], sizes = [64, 8], strides = [1, 1]} : vector<64x32xbf16> to vector<64x8xbf16>
    %cst_83 = arith.constant dense<0.000000e+00> : vector<64x64xf32>
    %204 = tpu.matmul %202, %203, %cst_83 {dimension_numbers = #tpu.dot_dimension_numbers<[1], [1], [0], [0], [0, 0, 1, 0], [], []>} : vector<64x8xbf16>, vector<64x8xbf16>, vector<64x64xf32> -> vector<64x64xf32>
    %205 = arith.addf %204, %3 : vector<64x64xf32>
    %206 = math.exp %205 : vector<64x64xf32>
    %cst_84 = arith.constant dense<0.000000e+00> : vector<64xf32>
    %207 = vector.multi_reduction <add>, %206, %cst_84 [1] : vector<64x64xf32> to vector<64xf32>
    %208 = vector.shape_cast %207 : vector<64xf32> to vector<64x1xf32>
    %209 = tpu.reciprocal %208 {approx = true} : vector<64x1xf32> -> vector<64x1xf32>
    %210 = vector.broadcast %209 : vector<64x1xf32> to vector<64x64xf32>
    %211 = arith.mulf %206, %210 : vector<64x64xf32>
    %212 = arith.truncf %211 : vector<64x64xf32> to vector<64x64xbf16>
    %213 = vector.extract_strided_slice %186 {offsets = [0, 32], sizes = [64, 32], strides = [1, 1]} : vector<64x128xbf16> to vector<64x32xbf16>
    %cst_85 = arith.constant dense<0.000000e+00> : vector<64x32xf32>
    %214 = tpu.matmul %212, %213, %cst_85 {dimension_numbers = #tpu.dot_dimension_numbers<[1], [0], [0], [1], [0, 0, 1, 1], [], []>} : vector<64x64xbf16>, vector<64x32xbf16>, vector<64x32xf32> -> vector<64x32xf32>
    %215 = arith.addf %201, %214 : vector<64x32xf32>
    %216 = vector.extract_strided_slice %178 {offsets = [0, 16], sizes = [64, 8], strides = [1, 1]} : vector<64x32xbf16> to vector<64x8xbf16>
    %217 = vector.extract_strided_slice %180 {offsets = [0, 16], sizes = [64, 8], strides = [1, 1]} : vector<64x32xbf16> to vector<64x8xbf16>
    %cst_86 = arith.constant dense<0.000000e+00> : vector<64x64xf32>
    %218 = tpu.matmul %216, %217, %cst_86 {dimension_numbers = #tpu.dot_dimension_numbers<[1], [1], [0], [0], [0, 0, 1, 0], [], []>} : vector<64x8xbf16>, vector<64x8xbf16>, vector<64x64xf32> -> vector<64x64xf32>
    %219 = arith.addf %218, %3 : vector<64x64xf32>
    %220 = math.exp %219 : vector<64x64xf32>
    %cst_87 = arith.constant dense<0.000000e+00> : vector<64xf32>
    %221 = vector.multi_reduction <add>, %220, %cst_87 [1] : vector<64x64xf32> to vector<64xf32>
    %222 = vector.shape_cast %221 : vector<64xf32> to vector<64x1xf32>
    %223 = tpu.reciprocal %222 {approx = true} : vector<64x1xf32> -> vector<64x1xf32>
    %224 = vector.broadcast %223 : vector<64x1xf32> to vector<64x64xf32>
    %225 = arith.mulf %220, %224 : vector<64x64xf32>
    %226 = arith.truncf %225 : vector<64x64xf32> to vector<64x64xbf16>
    %227 = vector.extract_strided_slice %186 {offsets = [0, 64], sizes = [64, 32], strides = [1, 1]} : vector<64x128xbf16> to vector<64x32xbf16>
    %cst_88 = arith.constant dense<0.000000e+00> : vector<64x32xf32>
    %228 = tpu.matmul %226, %227, %cst_88 {dimension_numbers = #tpu.dot_dimension_numbers<[1], [0], [0], [1], [0, 0, 1, 1], [], []>} : vector<64x64xbf16>, vector<64x32xbf16>, vector<64x32xf32> -> vector<64x32xf32>
    %229 = arith.addf %215, %228 : vector<64x32xf32>
    %230 = vector.extract_strided_slice %178 {offsets = [0, 24], sizes = [64, 8], strides = [1, 1]} : vector<64x32xbf16> to vector<64x8xbf16>
    %231 = vector.extract_strided_slice %180 {offsets = [0, 24], sizes = [64, 8], strides = [1, 1]} : vector<64x32xbf16> to vector<64x8xbf16>
    %cst_89 = arith.constant dense<0.000000e+00> : vector<64x64xf32>
    %232 = tpu.matmul %230, %231, %cst_89 {dimension_numbers = #tpu.dot_dimension_numbers<[1], [1], [0], [0], [0, 0, 1, 0], [], []>} : vector<64x8xbf16>, vector<64x8xbf16>, vector<64x64xf32> -> vector<64x64xf32>
    %233 = arith.addf %232, %3 : vector<64x64xf32>
    %234 = math.exp %233 : vector<64x64xf32>
    %cst_90 = arith.constant dense<0.000000e+00> : vector<64xf32>
    %235 = vector.multi_reduction <add>, %234, %cst_90 [1] : vector<64x64xf32> to vector<64xf32>
    %236 = vector.shape_cast %235 : vector<64xf32> to vector<64x1xf32>
    %237 = tpu.reciprocal %236 {approx = true} : vector<64x1xf32> -> vector<64x1xf32>
    %238 = vector.broadcast %237 : vector<64x1xf32> to vector<64x64xf32>
    %239 = arith.mulf %234, %238 : vector<64x64xf32>
    %240 = arith.truncf %239 : vector<64x64xf32> to vector<64x64xbf16>
    %241 = vector.extract_strided_slice %186 {offsets = [0, 96], sizes = [64, 32], strides = [1, 1]} : vector<64x128xbf16> to vector<64x32xbf16>
    %cst_91 = arith.constant dense<0.000000e+00> : vector<64x32xf32>
    %242 = tpu.matmul %240, %241, %cst_91 {dimension_numbers = #tpu.dot_dimension_numbers<[1], [0], [0], [1], [0, 0, 1, 1], [], []>} : vector<64x64xbf16>, vector<64x32xbf16>, vector<64x32xf32> -> vector<64x32xf32>
    %243 = arith.addf %229, %242 : vector<64x32xf32>
    %244 = arith.addf %150, %243 : vector<64x32xf32>
    %c1_92 = arith.constant 1 : index
    %c0_93 = arith.constant 0 : index
    %c0_94 = arith.constant 0 : index
    %245 = vector.load %arg11[%c1_92, %c0_93, %c0_94] : memref<3x1x32xf32, #tpu.memory_space<vmem>>, vector<1x1x32xf32>
    %246 = vector.shape_cast %245 : vector<1x1x32xf32> to vector<1x32xf32>
    %247 = vector.broadcast %246 : vector<1x32xf32> to vector<64x32xf32>
    %248 = arith.addf %244, %247 : vector<64x32xf32>
    %cst_95 = arith.constant dense<0.000000e+00> : vector<64xf32>
    %249 = vector.multi_reduction <add>, %248, %cst_95 [1] : vector<64x32xf32> to vector<64xf32>
    %250 = vector.shape_cast %249 : vector<64xf32> to vector<64x1xf32>
    %cst_96 = arith.constant 3.200000e+01 : f32
    %251 = vector.broadcast %cst_96 : f32 to vector<64x1xf32>
    %252 = arith.divf %250, %251 : vector<64x1xf32>
    %253 = arith.mulf %248, %248 : vector<64x32xf32>
    %cst_97 = arith.constant dense<0.000000e+00> : vector<64xf32>
    %254 = vector.multi_reduction <add>, %253, %cst_97 [1] : vector<64x32xf32> to vector<64xf32>
    %255 = vector.shape_cast %254 : vector<64xf32> to vector<64x1xf32>
    %cst_98 = arith.constant 3.200000e+01 : f32
    %256 = vector.broadcast %cst_98 : f32 to vector<64x1xf32>
    %257 = arith.divf %255, %256 : vector<64x1xf32>
    %258 = vector.broadcast %252 : vector<64x1xf32> to vector<64x32xf32>
    %259 = arith.subf %248, %258 : vector<64x32xf32>
    %260 = arith.mulf %252, %252 : vector<64x1xf32>
    %261 = arith.subf %257, %260 : vector<64x1xf32>
    %cst_99 = arith.constant 9.99999974E-6 : f32
    %262 = vector.broadcast %cst_99 : f32 to vector<64x1xf32>
    %263 = arith.addf %261, %262 : vector<64x1xf32>
    %264 = math.rsqrt %263 : vector<64x1xf32>
    %265 = vector.broadcast %264 : vector<64x1xf32> to vector<64x32xf32>
    %266 = arith.mulf %259, %265 : vector<64x32xf32>
    %267 = arith.truncf %266 : vector<64x32xf32> to vector<64x32xbf16>
    %c1_100 = arith.constant 1 : index
    %c0_101 = arith.constant 0 : index
    %c0_102 = arith.constant 0 : index
    %268 = vector.load %arg12[%c1_100, %c0_101, %c0_102] : memref<3x32x128xbf16, #tpu.memory_space<vmem>>, vector<1x32x128xbf16>
    %269 = vector.shape_cast %268 : vector<1x32x128xbf16> to vector<32x128xbf16>
    %cst_103 = arith.constant dense<0.000000e+00> : vector<64x128xf32>
    %270 = tpu.matmul %267, %269, %cst_103 {dimension_numbers = #tpu.dot_dimension_numbers<[1], [0], [0], [1], [0, 0, 1, 1], [], []>} : vector<64x32xbf16>, vector<32x128xbf16>, vector<64x128xf32> -> vector<64x128xf32>
    %c1_104 = arith.constant 1 : index
    %c0_105 = arith.constant 0 : index
    %c0_106 = arith.constant 0 : index
    %271 = vector.load %arg13[%c1_104, %c0_105, %c0_106] : memref<3x1x128xf32, #tpu.memory_space<vmem>>, vector<1x1x128xf32>
    %272 = vector.shape_cast %271 : vector<1x1x128xf32> to vector<1x128xf32>
    %273 = vector.broadcast %272 : vector<1x128xf32> to vector<64x128xf32>
    %274 = arith.addf %270, %273 : vector<64x128xf32>
    %cst_107 = arith.constant 1.702000e+00 : f32
    %275 = vector.broadcast %cst_107 : f32 to vector<64x128xf32>
    %276 = arith.mulf %275, %274 : vector<64x128xf32>
    %277 = arith.negf %276 : vector<64x128xf32>
    %278 = math.exp %277 : vector<64x128xf32>
    %cst_108 = arith.constant 1.000000e+00 : f32
    %279 = vector.broadcast %cst_108 : f32 to vector<64x128xf32>
    %280 = arith.addf %279, %278 : vector<64x128xf32>
    %281 = arith.divf %279, %280 : vector<64x128xf32>
    %282 = arith.mulf %274, %281 : vector<64x128xf32>
    %283 = arith.truncf %282 : vector<64x128xf32> to vector<64x128xbf16>
    %c1_109 = arith.constant 1 : index
    %c0_110 = arith.constant 0 : index
    %c0_111 = arith.constant 0 : index
    %284 = vector.load %arg14[%c1_109, %c0_110, %c0_111] : memref<3x128x32xbf16, #tpu.memory_space<vmem>>, vector<1x128x32xbf16>
    %285 = vector.shape_cast %284 : vector<1x128x32xbf16> to vector<128x32xbf16>
    %cst_112 = arith.constant dense<0.000000e+00> : vector<64x32xf32>
    %286 = tpu.matmul %283, %285, %cst_112 {dimension_numbers = #tpu.dot_dimension_numbers<[1], [0], [0], [1], [0, 0, 1, 1], [], []>} : vector<64x128xbf16>, vector<128x32xbf16>, vector<64x32xf32> -> vector<64x32xf32>
    %287 = arith.addf %248, %286 : vector<64x32xf32>
    %c1_113 = arith.constant 1 : index
    %c0_114 = arith.constant 0 : index
    %c0_115 = arith.constant 0 : index
    %288 = vector.load %arg15[%c1_113, %c0_114, %c0_115] : memref<3x1x32xf32, #tpu.memory_space<vmem>>, vector<1x1x32xf32>
    %289 = vector.shape_cast %288 : vector<1x1x32xf32> to vector<1x32xf32>
    %290 = vector.broadcast %289 : vector<1x32xf32> to vector<64x32xf32>
    %291 = arith.addf %287, %290 : vector<64x32xf32>
    %292 = arith.mulf %291, %5 : vector<64x32xf32>
    %c0_116 = arith.constant 0 : index
    %c0_117 = arith.constant 0 : index
    %293 = vector.load %arg3[%c0_116, %c0_117] : memref<4x32xf32, #tpu.memory_space<vmem>>, vector<4x32xf32>
    %cst_118 = arith.constant dense<0.000000e+00> : vector<64x32xf32>
    %294 = tpu.matmul %4, %293, %cst_118 {dimension_numbers = #tpu.dot_dimension_numbers<[1], [0], [0], [1], [0, 0, 1, 1], [], []>} : vector<64x4xf32>, vector<4x32xf32>, vector<64x32xf32> -> vector<64x32xf32>
    %295 = arith.addf %292, %294 : vector<64x32xf32>
    %cst_119 = arith.constant dense<0.000000e+00> : vector<64xf32>
    %296 = vector.multi_reduction <add>, %295, %cst_119 [1] : vector<64x32xf32> to vector<64xf32>
    %297 = vector.shape_cast %296 : vector<64xf32> to vector<64x1xf32>
    %cst_120 = arith.constant 3.200000e+01 : f32
    %298 = vector.broadcast %cst_120 : f32 to vector<64x1xf32>
    %299 = arith.divf %297, %298 : vector<64x1xf32>
    %300 = arith.mulf %295, %295 : vector<64x32xf32>
    %cst_121 = arith.constant dense<0.000000e+00> : vector<64xf32>
    %301 = vector.multi_reduction <add>, %300, %cst_121 [1] : vector<64x32xf32> to vector<64xf32>
    %302 = vector.shape_cast %301 : vector<64xf32> to vector<64x1xf32>
    %cst_122 = arith.constant 3.200000e+01 : f32
    %303 = vector.broadcast %cst_122 : f32 to vector<64x1xf32>
    %304 = arith.divf %302, %303 : vector<64x1xf32>
    %305 = vector.broadcast %299 : vector<64x1xf32> to vector<64x32xf32>
    %306 = arith.subf %295, %305 : vector<64x32xf32>
    %307 = arith.mulf %299, %299 : vector<64x1xf32>
    %308 = arith.subf %304, %307 : vector<64x1xf32>
    %cst_123 = arith.constant 9.99999974E-6 : f32
    %309 = vector.broadcast %cst_123 : f32 to vector<64x1xf32>
    %310 = arith.addf %308, %309 : vector<64x1xf32>
    %311 = math.rsqrt %310 : vector<64x1xf32>
    %312 = vector.broadcast %311 : vector<64x1xf32> to vector<64x32xf32>
    %313 = arith.mulf %306, %312 : vector<64x32xf32>
    %314 = arith.truncf %313 : vector<64x32xf32> to vector<64x32xbf16>
    %c2 = arith.constant 2 : index
    %c0_124 = arith.constant 0 : index
    %c0_125 = arith.constant 0 : index
    %315 = vector.load %arg8[%c2, %c0_124, %c0_125] : memref<3x32x96xbf16, #tpu.memory_space<vmem>>, vector<1x32x96xbf16>
    %316 = vector.shape_cast %315 : vector<1x32x96xbf16> to vector<32x96xbf16>
    %cst_126 = arith.constant dense<0.000000e+00> : vector<64x96xf32>
    %317 = tpu.matmul %314, %316, %cst_126 {dimension_numbers = #tpu.dot_dimension_numbers<[1], [0], [0], [1], [0, 0, 1, 1], [], []>} : vector<64x32xbf16>, vector<32x96xbf16>, vector<64x96xf32> -> vector<64x96xf32>
    %c2_127 = arith.constant 2 : index
    %c0_128 = arith.constant 0 : index
    %c0_129 = arith.constant 0 : index
    %318 = vector.load %arg9[%c2_127, %c0_128, %c0_129] : memref<3x1x96xf32, #tpu.memory_space<vmem>>, vector<1x1x96xf32>
    %319 = vector.shape_cast %318 : vector<1x1x96xf32> to vector<1x96xf32>
    %320 = vector.broadcast %319 : vector<1x96xf32> to vector<64x96xf32>
    %321 = arith.addf %317, %320 : vector<64x96xf32>
    %322 = vector.extract_strided_slice %321 {offsets = [0, 0], sizes = [64, 32], strides = [1, 1]} : vector<64x96xf32> to vector<64x32xf32>
    %323 = arith.truncf %322 : vector<64x32xf32> to vector<64x32xbf16>
    %324 = vector.extract_strided_slice %321 {offsets = [0, 32], sizes = [64, 32], strides = [1, 1]} : vector<64x96xf32> to vector<64x32xf32>
    %325 = arith.truncf %324 : vector<64x32xf32> to vector<64x32xbf16>
    %326 = vector.extract_strided_slice %321 {offsets = [0, 64], sizes = [64, 32], strides = [1, 1]} : vector<64x96xf32> to vector<64x32xf32>
    %327 = arith.truncf %326 : vector<64x32xf32> to vector<64x32xbf16>
    %c2_130 = arith.constant 2 : index
    %c0_131 = arith.constant 0 : index
    %c0_132 = arith.constant 0 : index
    %328 = vector.load %arg10[%c2_130, %c0_131, %c0_132] : memref<3x32x128xbf16, #tpu.memory_space<vmem>>, vector<1x32x128xbf16>
    %329 = vector.shape_cast %328 : vector<1x32x128xbf16> to vector<32x128xbf16>
    %cst_133 = arith.constant dense<0.000000e+00> : vector<64x128xf32>
    %330 = tpu.matmul %327, %329, %cst_133 {dimension_numbers = #tpu.dot_dimension_numbers<[1], [0], [0], [1], [0, 0, 1, 1], [], []>} : vector<64x32xbf16>, vector<32x128xbf16>, vector<64x128xf32> -> vector<64x128xf32>
    %331 = arith.truncf %330 : vector<64x128xf32> to vector<64x128xbf16>
    %cst_134 = arith.constant 0.000000e+00 : f32
    %332 = vector.broadcast %cst_134 : f32 to vector<64x32xf32>
    %333 = vector.extract_strided_slice %323 {offsets = [0, 0], sizes = [64, 8], strides = [1, 1]} : vector<64x32xbf16> to vector<64x8xbf16>
    %334 = vector.extract_strided_slice %325 {offsets = [0, 0], sizes = [64, 8], strides = [1, 1]} : vector<64x32xbf16> to vector<64x8xbf16>
    %cst_135 = arith.constant dense<0.000000e+00> : vector<64x64xf32>
    %335 = tpu.matmul %333, %334, %cst_135 {dimension_numbers = #tpu.dot_dimension_numbers<[1], [1], [0], [0], [0, 0, 1, 0], [], []>} : vector<64x8xbf16>, vector<64x8xbf16>, vector<64x64xf32> -> vector<64x64xf32>
    %336 = arith.addf %335, %3 : vector<64x64xf32>
    %337 = math.exp %336 : vector<64x64xf32>
    %cst_136 = arith.constant dense<0.000000e+00> : vector<64xf32>
    %338 = vector.multi_reduction <add>, %337, %cst_136 [1] : vector<64x64xf32> to vector<64xf32>
    %339 = vector.shape_cast %338 : vector<64xf32> to vector<64x1xf32>
    %340 = tpu.reciprocal %339 {approx = true} : vector<64x1xf32> -> vector<64x1xf32>
    %341 = vector.broadcast %340 : vector<64x1xf32> to vector<64x64xf32>
    %342 = arith.mulf %337, %341 : vector<64x64xf32>
    %343 = arith.truncf %342 : vector<64x64xf32> to vector<64x64xbf16>
    %344 = vector.extract_strided_slice %331 {offsets = [0, 0], sizes = [64, 32], strides = [1, 1]} : vector<64x128xbf16> to vector<64x32xbf16>
    %cst_137 = arith.constant dense<0.000000e+00> : vector<64x32xf32>
    %345 = tpu.matmul %343, %344, %cst_137 {dimension_numbers = #tpu.dot_dimension_numbers<[1], [0], [0], [1], [0, 0, 1, 1], [], []>} : vector<64x64xbf16>, vector<64x32xbf16>, vector<64x32xf32> -> vector<64x32xf32>
    %346 = arith.addf %332, %345 : vector<64x32xf32>
    %347 = vector.extract_strided_slice %323 {offsets = [0, 8], sizes = [64, 8], strides = [1, 1]} : vector<64x32xbf16> to vector<64x8xbf16>
    %348 = vector.extract_strided_slice %325 {offsets = [0, 8], sizes = [64, 8], strides = [1, 1]} : vector<64x32xbf16> to vector<64x8xbf16>
    %cst_138 = arith.constant dense<0.000000e+00> : vector<64x64xf32>
    %349 = tpu.matmul %347, %348, %cst_138 {dimension_numbers = #tpu.dot_dimension_numbers<[1], [1], [0], [0], [0, 0, 1, 0], [], []>} : vector<64x8xbf16>, vector<64x8xbf16>, vector<64x64xf32> -> vector<64x64xf32>
    %350 = arith.addf %349, %3 : vector<64x64xf32>
    %351 = math.exp %350 : vector<64x64xf32>
    %cst_139 = arith.constant dense<0.000000e+00> : vector<64xf32>
    %352 = vector.multi_reduction <add>, %351, %cst_139 [1] : vector<64x64xf32> to vector<64xf32>
    %353 = vector.shape_cast %352 : vector<64xf32> to vector<64x1xf32>
    %354 = tpu.reciprocal %353 {approx = true} : vector<64x1xf32> -> vector<64x1xf32>
    %355 = vector.broadcast %354 : vector<64x1xf32> to vector<64x64xf32>
    %356 = arith.mulf %351, %355 : vector<64x64xf32>
    %357 = arith.truncf %356 : vector<64x64xf32> to vector<64x64xbf16>
    %358 = vector.extract_strided_slice %331 {offsets = [0, 32], sizes = [64, 32], strides = [1, 1]} : vector<64x128xbf16> to vector<64x32xbf16>
    %cst_140 = arith.constant dense<0.000000e+00> : vector<64x32xf32>
    %359 = tpu.matmul %357, %358, %cst_140 {dimension_numbers = #tpu.dot_dimension_numbers<[1], [0], [0], [1], [0, 0, 1, 1], [], []>} : vector<64x64xbf16>, vector<64x32xbf16>, vector<64x32xf32> -> vector<64x32xf32>
    %360 = arith.addf %346, %359 : vector<64x32xf32>
    %361 = vector.extract_strided_slice %323 {offsets = [0, 16], sizes = [64, 8], strides = [1, 1]} : vector<64x32xbf16> to vector<64x8xbf16>
    %362 = vector.extract_strided_slice %325 {offsets = [0, 16], sizes = [64, 8], strides = [1, 1]} : vector<64x32xbf16> to vector<64x8xbf16>
    %cst_141 = arith.constant dense<0.000000e+00> : vector<64x64xf32>
    %363 = tpu.matmul %361, %362, %cst_141 {dimension_numbers = #tpu.dot_dimension_numbers<[1], [1], [0], [0], [0, 0, 1, 0], [], []>} : vector<64x8xbf16>, vector<64x8xbf16>, vector<64x64xf32> -> vector<64x64xf32>
    %364 = arith.addf %363, %3 : vector<64x64xf32>
    %365 = math.exp %364 : vector<64x64xf32>
    %cst_142 = arith.constant dense<0.000000e+00> : vector<64xf32>
    %366 = vector.multi_reduction <add>, %365, %cst_142 [1] : vector<64x64xf32> to vector<64xf32>
    %367 = vector.shape_cast %366 : vector<64xf32> to vector<64x1xf32>
    %368 = tpu.reciprocal %367 {approx = true} : vector<64x1xf32> -> vector<64x1xf32>
    %369 = vector.broadcast %368 : vector<64x1xf32> to vector<64x64xf32>
    %370 = arith.mulf %365, %369 : vector<64x64xf32>
    %371 = arith.truncf %370 : vector<64x64xf32> to vector<64x64xbf16>
    %372 = vector.extract_strided_slice %331 {offsets = [0, 64], sizes = [64, 32], strides = [1, 1]} : vector<64x128xbf16> to vector<64x32xbf16>
    %cst_143 = arith.constant dense<0.000000e+00> : vector<64x32xf32>
    %373 = tpu.matmul %371, %372, %cst_143 {dimension_numbers = #tpu.dot_dimension_numbers<[1], [0], [0], [1], [0, 0, 1, 1], [], []>} : vector<64x64xbf16>, vector<64x32xbf16>, vector<64x32xf32> -> vector<64x32xf32>
    %374 = arith.addf %360, %373 : vector<64x32xf32>
    %375 = vector.extract_strided_slice %323 {offsets = [0, 24], sizes = [64, 8], strides = [1, 1]} : vector<64x32xbf16> to vector<64x8xbf16>
    %376 = vector.extract_strided_slice %325 {offsets = [0, 24], sizes = [64, 8], strides = [1, 1]} : vector<64x32xbf16> to vector<64x8xbf16>
    %cst_144 = arith.constant dense<0.000000e+00> : vector<64x64xf32>
    %377 = tpu.matmul %375, %376, %cst_144 {dimension_numbers = #tpu.dot_dimension_numbers<[1], [1], [0], [0], [0, 0, 1, 0], [], []>} : vector<64x8xbf16>, vector<64x8xbf16>, vector<64x64xf32> -> vector<64x64xf32>
    %378 = arith.addf %377, %3 : vector<64x64xf32>
    %379 = math.exp %378 : vector<64x64xf32>
    %cst_145 = arith.constant dense<0.000000e+00> : vector<64xf32>
    %380 = vector.multi_reduction <add>, %379, %cst_145 [1] : vector<64x64xf32> to vector<64xf32>
    %381 = vector.shape_cast %380 : vector<64xf32> to vector<64x1xf32>
    %382 = tpu.reciprocal %381 {approx = true} : vector<64x1xf32> -> vector<64x1xf32>
    %383 = vector.broadcast %382 : vector<64x1xf32> to vector<64x64xf32>
    %384 = arith.mulf %379, %383 : vector<64x64xf32>
    %385 = arith.truncf %384 : vector<64x64xf32> to vector<64x64xbf16>
    %386 = vector.extract_strided_slice %331 {offsets = [0, 96], sizes = [64, 32], strides = [1, 1]} : vector<64x128xbf16> to vector<64x32xbf16>
    %cst_146 = arith.constant dense<0.000000e+00> : vector<64x32xf32>
    %387 = tpu.matmul %385, %386, %cst_146 {dimension_numbers = #tpu.dot_dimension_numbers<[1], [0], [0], [1], [0, 0, 1, 1], [], []>} : vector<64x64xbf16>, vector<64x32xbf16>, vector<64x32xf32> -> vector<64x32xf32>
    %388 = arith.addf %374, %387 : vector<64x32xf32>
    %389 = arith.addf %295, %388 : vector<64x32xf32>
    %c2_147 = arith.constant 2 : index
    %c0_148 = arith.constant 0 : index
    %c0_149 = arith.constant 0 : index
    %390 = vector.load %arg11[%c2_147, %c0_148, %c0_149] : memref<3x1x32xf32, #tpu.memory_space<vmem>>, vector<1x1x32xf32>
    %391 = vector.shape_cast %390 : vector<1x1x32xf32> to vector<1x32xf32>
    %392 = vector.broadcast %391 : vector<1x32xf32> to vector<64x32xf32>
    %393 = arith.addf %389, %392 : vector<64x32xf32>
    %cst_150 = arith.constant dense<0.000000e+00> : vector<64xf32>
    %394 = vector.multi_reduction <add>, %393, %cst_150 [1] : vector<64x32xf32> to vector<64xf32>
    %395 = vector.shape_cast %394 : vector<64xf32> to vector<64x1xf32>
    %cst_151 = arith.constant 3.200000e+01 : f32
    %396 = vector.broadcast %cst_151 : f32 to vector<64x1xf32>
    %397 = arith.divf %395, %396 : vector<64x1xf32>
    %398 = arith.mulf %393, %393 : vector<64x32xf32>
    %cst_152 = arith.constant dense<0.000000e+00> : vector<64xf32>
    %399 = vector.multi_reduction <add>, %398, %cst_152 [1] : vector<64x32xf32> to vector<64xf32>
    %400 = vector.shape_cast %399 : vector<64xf32> to vector<64x1xf32>
    %cst_153 = arith.constant 3.200000e+01 : f32
    %401 = vector.broadcast %cst_153 : f32 to vector<64x1xf32>
    %402 = arith.divf %400, %401 : vector<64x1xf32>
    %403 = vector.broadcast %397 : vector<64x1xf32> to vector<64x32xf32>
    %404 = arith.subf %393, %403 : vector<64x32xf32>
    %405 = arith.mulf %397, %397 : vector<64x1xf32>
    %406 = arith.subf %402, %405 : vector<64x1xf32>
    %cst_154 = arith.constant 9.99999974E-6 : f32
    %407 = vector.broadcast %cst_154 : f32 to vector<64x1xf32>
    %408 = arith.addf %406, %407 : vector<64x1xf32>
    %409 = math.rsqrt %408 : vector<64x1xf32>
    %410 = vector.broadcast %409 : vector<64x1xf32> to vector<64x32xf32>
    %411 = arith.mulf %404, %410 : vector<64x32xf32>
    %412 = arith.truncf %411 : vector<64x32xf32> to vector<64x32xbf16>
    %c2_155 = arith.constant 2 : index
    %c0_156 = arith.constant 0 : index
    %c0_157 = arith.constant 0 : index
    %413 = vector.load %arg12[%c2_155, %c0_156, %c0_157] : memref<3x32x128xbf16, #tpu.memory_space<vmem>>, vector<1x32x128xbf16>
    %414 = vector.shape_cast %413 : vector<1x32x128xbf16> to vector<32x128xbf16>
    %cst_158 = arith.constant dense<0.000000e+00> : vector<64x128xf32>
    %415 = tpu.matmul %412, %414, %cst_158 {dimension_numbers = #tpu.dot_dimension_numbers<[1], [0], [0], [1], [0, 0, 1, 1], [], []>} : vector<64x32xbf16>, vector<32x128xbf16>, vector<64x128xf32> -> vector<64x128xf32>
    %c2_159 = arith.constant 2 : index
    %c0_160 = arith.constant 0 : index
    %c0_161 = arith.constant 0 : index
    %416 = vector.load %arg13[%c2_159, %c0_160, %c0_161] : memref<3x1x128xf32, #tpu.memory_space<vmem>>, vector<1x1x128xf32>
    %417 = vector.shape_cast %416 : vector<1x1x128xf32> to vector<1x128xf32>
    %418 = vector.broadcast %417 : vector<1x128xf32> to vector<64x128xf32>
    %419 = arith.addf %415, %418 : vector<64x128xf32>
    %cst_162 = arith.constant 1.702000e+00 : f32
    %420 = vector.broadcast %cst_162 : f32 to vector<64x128xf32>
    %421 = arith.mulf %420, %419 : vector<64x128xf32>
    %422 = arith.negf %421 : vector<64x128xf32>
    %423 = math.exp %422 : vector<64x128xf32>
    %cst_163 = arith.constant 1.000000e+00 : f32
    %424 = vector.broadcast %cst_163 : f32 to vector<64x128xf32>
    %425 = arith.addf %424, %423 : vector<64x128xf32>
    %426 = arith.divf %424, %425 : vector<64x128xf32>
    %427 = arith.mulf %419, %426 : vector<64x128xf32>
    %428 = arith.truncf %427 : vector<64x128xf32> to vector<64x128xbf16>
    %c2_164 = arith.constant 2 : index
    %c0_165 = arith.constant 0 : index
    %c0_166 = arith.constant 0 : index
    %429 = vector.load %arg14[%c2_164, %c0_165, %c0_166] : memref<3x128x32xbf16, #tpu.memory_space<vmem>>, vector<1x128x32xbf16>
    %430 = vector.shape_cast %429 : vector<1x128x32xbf16> to vector<128x32xbf16>
    %cst_167 = arith.constant dense<0.000000e+00> : vector<64x32xf32>
    %431 = tpu.matmul %428, %430, %cst_167 {dimension_numbers = #tpu.dot_dimension_numbers<[1], [0], [0], [1], [0, 0, 1, 1], [], []>} : vector<64x128xbf16>, vector<128x32xbf16>, vector<64x32xf32> -> vector<64x32xf32>
    %432 = arith.addf %393, %431 : vector<64x32xf32>
    %c2_168 = arith.constant 2 : index
    %c0_169 = arith.constant 0 : index
    %c0_170 = arith.constant 0 : index
    %433 = vector.load %arg15[%c2_168, %c0_169, %c0_170] : memref<3x1x32xf32, #tpu.memory_space<vmem>>, vector<1x1x32xf32>
    %434 = vector.shape_cast %433 : vector<1x1x32xf32> to vector<1x32xf32>
    %435 = vector.broadcast %434 : vector<1x32xf32> to vector<64x32xf32>
    %436 = arith.addf %432, %435 : vector<64x32xf32>
    %cst_171 = arith.constant dense<0.000000e+00> : vector<64xf32>
    %437 = vector.multi_reduction <add>, %436, %cst_171 [1] : vector<64x32xf32> to vector<64xf32>
    %438 = vector.shape_cast %437 : vector<64xf32> to vector<64x1xf32>
    %cst_172 = arith.constant 3.200000e+01 : f32
    %439 = vector.broadcast %cst_172 : f32 to vector<64x1xf32>
    %440 = arith.divf %438, %439 : vector<64x1xf32>
    %441 = arith.mulf %436, %436 : vector<64x32xf32>
    %cst_173 = arith.constant dense<0.000000e+00> : vector<64xf32>
    %442 = vector.multi_reduction <add>, %441, %cst_173 [1] : vector<64x32xf32> to vector<64xf32>
    %443 = vector.shape_cast %442 : vector<64xf32> to vector<64x1xf32>
    %cst_174 = arith.constant 3.200000e+01 : f32
    %444 = vector.broadcast %cst_174 : f32 to vector<64x1xf32>
    %445 = arith.divf %443, %444 : vector<64x1xf32>
    %446 = vector.broadcast %440 : vector<64x1xf32> to vector<64x32xf32>
    %447 = arith.subf %436, %446 : vector<64x32xf32>
    %448 = arith.mulf %440, %440 : vector<64x1xf32>
    %449 = arith.subf %445, %448 : vector<64x1xf32>
    %cst_175 = arith.constant 9.99999974E-6 : f32
    %450 = vector.broadcast %cst_175 : f32 to vector<64x1xf32>
    %451 = arith.addf %449, %450 : vector<64x1xf32>
    %452 = math.rsqrt %451 : vector<64x1xf32>
    %453 = vector.broadcast %452 : vector<64x1xf32> to vector<64x32xf32>
    %454 = arith.mulf %447, %453 : vector<64x32xf32>
    %455 = arith.truncf %454 : vector<64x32xf32> to vector<64x32xbf16>
    %c0_176 = arith.constant 0 : index
    %c0_177 = arith.constant 0 : index
    %456 = vector.load %arg16[%c0_176, %c0_177] : memref<32x32xbf16, #tpu.memory_space<vmem>>, vector<32x32xbf16>
    %cst_178 = arith.constant dense<0.000000e+00> : vector<64x32xf32>
    %457 = tpu.matmul %455, %456, %cst_178 {dimension_numbers = #tpu.dot_dimension_numbers<[1], [0], [0], [1], [0, 0, 1, 1], [], []>} : vector<64x32xbf16>, vector<32x32xbf16>, vector<64x32xf32> -> vector<64x32xf32>
    %c0_179 = arith.constant 0 : index
    %c0_180 = arith.constant 0 : index
    %458 = vector.load %arg17[%c0_179, %c0_180] : memref<1x32xf32, #tpu.memory_space<vmem>>, vector<1x32xf32>
    %459 = vector.broadcast %458 : vector<1x32xf32> to vector<64x32xf32>
    %460 = arith.addf %457, %459 : vector<64x32xf32>
    %c0_181 = arith.constant 0 : index
    %c0_182 = arith.constant 0 : index
    %461 = vector.load %arg4[%c0_181, %c0_182] : memref<8x64xf32, #tpu.memory_space<vmem>>, vector<8x64xf32>
    %cst_183 = arith.constant dense<0.000000e+00> : vector<8x32xf32>
    %462 = tpu.matmul %461, %460, %cst_183 {dimension_numbers = #tpu.dot_dimension_numbers<[1], [0], [0], [1], [0, 0, 1, 1], [], []>} : vector<8x64xf32>, vector<64x32xf32>, vector<8x32xf32> -> vector<8x32xf32>
    %c0_184 = arith.constant 0 : index
    %c0_185 = arith.constant 0 : index
    %463 = vector.load %arg18[%c0_184, %c0_185] : memref<8x32xf32, #tpu.memory_space<vmem>>, vector<8x32xf32>
    tpu.vector_store %arg18[%c0_184, %c0_185], %462 {strides = array<i32>} : memref<8x32xf32, #tpu.memory_space<vmem>>, vector<8x32xf32>,
    %464 = arith.mulf %460, %460 : vector<64x32xf32>
    %cst_186 = arith.constant dense<0.000000e+00> : vector<64xf32>
    %465 = vector.multi_reduction <add>, %464, %cst_186 [1] : vector<64x32xf32> to vector<64xf32>
    %466 = vector.shape_cast %465 : vector<64xf32> to vector<64x1xf32>
    %cst_187 = arith.constant 9.99999996E-13 : f32
    %467 = vector.broadcast %cst_187 : f32 to vector<64x1xf32>
    %468 = arith.addf %466, %467 : vector<64x1xf32>
    %469 = math.rsqrt %468 : vector<64x1xf32>
    %470 = vector.broadcast %469 : vector<64x1xf32> to vector<64x32xf32>
    %471 = arith.mulf %460, %470 : vector<64x32xf32>
    %c0_188 = arith.constant 0 : index
    %c0_189 = arith.constant 0 : index
    %472 = vector.load %arg19[%c0_188, %c0_189] : memref<64x32xf32, #tpu.memory_space<vmem>>, vector<64x32xf32>
    tpu.vector_store %arg19[%c0_188, %c0_189], %471 {strides = array<i32>} : memref<64x32xf32, #tpu.memory_space<vmem>>, vector<64x32xf32>,
    return
  }
}

</mosaic_0001>

<llo_original>
// kernel: _device_forward.1
$region0: #{_device_forward.1}
  #allocation0 [shape = 'u32[]', space=smem, size = 0x4, offset = 0x4, fixed_abs, tag = 'smem constant byte address 0x4 - core index']
  #allocation1 [shape = 'u32[144,128]{1,0:T(1,128)}', space=vmem, size = 0x12000, scoped, tag = 'internal scratch']
  %s0 = inlined_call_operand.vmem [shape: f32[64,32], index: 0, kind: input, shape index: {}]
  %s1 = inlined_call_operand.vmem [shape: f32[64,32], index: 1, kind: input, shape index: {}]
  %s2 = inlined_call_operand.vmem [shape: f32[4,32], index: 2, kind: input, shape index: {}]
  %s3 = inlined_call_operand.vmem [shape: f32[4,32], index: 3, kind: input, shape index: {}]
  %s4 = inlined_call_operand.vmem [shape: f32[8,64], index: 4, kind: input, shape index: {}]
  %s5 = inlined_call_operand.vmem [shape: f32[64,64], index: 5, kind: input, shape index: {}]
  %s6 = inlined_call_operand.vmem [shape: f32[64,4], index: 6, kind: input, shape index: {}]
  %s7 = inlined_call_operand.vmem [shape: f32[64,32], index: 7, kind: input, shape index: {}]
  %s8 = inlined_call_operand.vmem [shape: bf16[3,32,96], index: 8, kind: input, shape index: {}]
  %s9 = inlined_call_operand.vmem [shape: f32[3,1,96], index: 9, kind: input, shape index: {}]
  %s10 = inlined_call_operand.vmem [shape: bf16[3,32,128], index: 10, kind: input, shape index: {}]
  %s11 = inlined_call_operand.vmem [shape: f32[3,1,32], index: 11, kind: input, shape index: {}]
  %s12 = inlined_call_operand.vmem [shape: bf16[3,32,128], index: 12, kind: input, shape index: {}]
  %s13 = inlined_call_operand.vmem [shape: f32[3,1,128], index: 13, kind: input, shape index: {}]
  %s14 = inlined_call_operand.vmem [shape: bf16[3,128,32], index: 14, kind: input, shape index: {}]
  %s15 = inlined_call_operand.vmem [shape: f32[3,1,32], index: 15, kind: input, shape index: {}]
  %s16 = inlined_call_operand.vmem [shape: bf16[32,32], index: 16, kind: input, shape index: {}]
  %s17 = inlined_call_operand.vmem [shape: f32[1,32], index: 17, kind: input, shape index: {}]
  %s18 = inlined_call_operand.hbm [shape: f32[8,32], index: 18, kind: output, shape index: {0}]
  %s19 = inlined_call_operand.vmem [shape: f32[64,32], index: 19, kind: output, shape index: {1}]
  %20 = xla_tuple %s18, %s19
  %s21 = sld [smem:[#allocation0]]
  $region90: #{_device_forward.1} parent=0
    _
  %s23 = ssub.s32 1, %s21
  %s24 = scalar_select 0, %s23, %s21
  $region1: #{_device_forward.1} parent=0
    #allocation2 [shape = 'u8[4096]{0}', space=vmem, size = 0x1000, scoped, tag = 'output window, operand 0, single buffered']
    #allocation3 [shape = 's32[1]{0}', space=sflag, size = 0x4, scoped, tag = 'scoped memory for _device_forward.1']
    %25 = vsyncpa [#allocation3], 0
    // Predicated region
    $region2: #{_device_forward.1} parent=1 // pred_check
      _
    $region3: #{_device_forward.1} parent=1 // pred_check_branch
      %27 = sbr.rel (0) target = $region5
    $region4: #{_device_forward.1} parent=1 // pred_region
      _
    $region5: #{_device_forward.1} parent=1 // pred_fallthru
      _
    // Predicated region
    $region6: #{_device_forward.1} parent=1 // pred_check
      _
    $region7: #{_device_forward.1} parent=1 // pred_check_branch
      %29 = sbr.rel (0) target = $region9
    $region8: #{_device_forward.1} parent=1 // pred_region
      _
    $region9: #{_device_forward.1} parent=1 // pred_fallthru
      _
    // Predicated region
    $region10: #{_device_forward.1} parent=1 // pred_check
      _
    $region11: #{_device_forward.1} parent=1 // pred_check_branch
      %31 = sbr.rel (0) target = $region13
    $region12: #{_device_forward.1} parent=1 // pred_region
      _
    $region13: #{_device_forward.1} parent=1 // pred_fallthru
      _
    // Predicated region
    $region14: #{_device_forward.1} parent=1 // pred_check
      _
    $region15: #{_device_forward.1} parent=1 // pred_check_branch
      %33 = sbr.rel (0) target = $region17
    $region16: #{_device_forward.1} parent=1 // pred_region
      _
    $region17: #{_device_forward.1} parent=1 // pred_fallthru
      _
    // Predicated region
    $region18: #{_device_forward.1} parent=1 // pred_check
      _
    $region19: #{_device_forward.1} parent=1 // pred_check_branch
      %35 = sbr.rel (0) target = $region21
    $region20: #{_device_forward.1} parent=1 // pred_region
      _
    $region21: #{_device_forward.1} parent=1 // pred_fallthru
      _
    // Predicated region
    $region22: #{_device_forward.1} parent=1 // pred_check
      _
    $region23: #{_device_forward.1} parent=1 // pred_check_branch
      %37 = sbr.rel (0) target = $region25
    $region24: #{_device_forward.1} parent=1 // pred_region
      _
    $region25: #{_device_forward.1} parent=1 // pred_fallthru
      _
    // Predicated region
    $region26: #{_device_forward.1} parent=1 // pred_check
      _
    $region27: #{_device_forward.1} parent=1 // pred_check_branch
      %39 = sbr.rel (0) target = $region29
    $region28: #{_device_forward.1} parent=1 // pred_region
      _
    $region29: #{_device_forward.1} parent=1 // pred_fallthru
      _
    // Predicated region
    $region30: #{_device_forward.1} parent=1 // pred_check
      _
    $region31: #{_device_forward.1} parent=1 // pred_check_branch
      %41 = sbr.rel (0) target = $region33
    $region32: #{_device_forward.1} parent=1 // pred_region
      _
    $region33: #{_device_forward.1} parent=1 // pred_fallthru
      _
    // Predicated region
    $region34: #{_device_forward.1} parent=1 // pred_check
      _
    $region35: #{_device_forward.1} parent=1 // pred_check_branch
      %43 = sbr.rel (0) target = $region37
    $region36: #{_device_forward.1} parent=1 // pred_region
      _
    $region37: #{_device_forward.1} parent=1 // pred_fallthru
      _
    // Predicated region
    $region38: #{_device_forward.1} parent=1 // pred_check
      _
    $region39: #{_device_forward.1} parent=1 // pred_check_branch
      %45 = sbr.rel (0) target = $region41
    $region40: #{_device_forward.1} parent=1 // pred_region
      _
    $region41: #{_device_forward.1} parent=1 // pred_fallthru
      _
    // Predicated region
    $region42: #{_device_forward.1} parent=1 // pred_check
      _
    $region43: #{_device_forward.1} parent=1 // pred_check_branch
      %47 = sbr.rel (0) target = $region45
    $region44: #{_device_forward.1} parent=1 // pred_region
      _
    $region45: #{_device_forward.1} parent=1 // pred_fallthru
      _
    // Predicated region
    $region46: #{_device_forward.1} parent=1 // pred_check
      _
    $region47: #{_device_forward.1} parent=1 // pred_check_branch
      %49 = sbr.rel (0) target = $region49
    $region48: #{_device_forward.1} parent=1 // pred_region
      _
    $region49: #{_device_forward.1} parent=1 // pred_fallthru
      _
    // Predicated region
    $region50: #{_device_forward.1} parent=1 // pred_check
      _
    $region51: #{_device_forward.1} parent=1 // pred_check_branch
      %51 = sbr.rel (0) target = $region53
    $region52: #{_device_forward.1} parent=1 // pred_region
      _
    $region53: #{_device_forward.1} parent=1 // pred_fallthru
      _
    // Predicated region
    $region54: #{_device_forward.1} parent=1 // pred_check
      _
    $region55: #{_device_forward.1} parent=1 // pred_check_branch
      %53 = sbr.rel (0) target = $region57
    $region56: #{_device_forward.1} parent=1 // pred_region
      _
    $region57: #{_device_forward.1} parent=1 // pred_fallthru
      _
    // Predicated region
    $region58: #{_device_forward.1} parent=1 // pred_check
      _
    $region59: #{_device_forward.1} parent=1 // pred_check_branch
      %55 = sbr.rel (0) target = $region61
    $region60: #{_device_forward.1} parent=1 // pred_region
      _
    $region61: #{_device_forward.1} parent=1 // pred_fallthru
      _
    // Predicated region
    $region62: #{_device_forward.1} parent=1 // pred_check
      _
    $region63: #{_device_forward.1} parent=1 // pred_check_branch
      %57 = sbr.rel (0) target = $region65
    $region64: #{_device_forward.1} parent=1 // pred_region
      _
    $region65: #{_device_forward.1} parent=1 // pred_fallthru
      _
    // Predicated region
    $region66: #{_device_forward.1} parent=1 // pred_check
      _
    $region67: #{_device_forward.1} parent=1 // pred_check_branch
      %59 = sbr.rel (0) target = $region69
    $region68: #{_device_forward.1} parent=1 // pred_region
      _
    $region69: #{_device_forward.1} parent=1 // pred_fallthru
      _
    // Predicated region
    $region70: #{_device_forward.1} parent=1 // pred_check
      _
    $region71: #{_device_forward.1} parent=1 // pred_check_branch
      %61 = sbr.rel (0) target = $region73
    $region72: #{_device_forward.1} parent=1 // pred_region
      _
    $region73: #{_device_forward.1} parent=1 // pred_fallthru
      _
    %v63 = vld [vmem:[%s0] sm:$0xff]
    %v64 = vld [vmem:[%s0 + $0x8] sm:$0xff]
    %v65 = vld [vmem:[%s0 + $0x10] sm:$0xff]
    %v66 = vld [vmem:[%s0 + $0x18] sm:$0xff]
    %v67 = vld [vmem:[%s0 + $0x20] sm:$0xff]
    %v68 = vld [vmem:[%s0 + $0x28] sm:$0xff]
    %v69 = vld [vmem:[%s0 + $0x30] sm:$0xff]
    %v70 = vld [vmem:[%s0 + $0x38] sm:$0xff]
    %v71 = vld [vmem:[%s1] sm:$0xff]
    %v72 = vld [vmem:[%s1 + $0x8] sm:$0xff]
    %v73 = vld [vmem:[%s1 + $0x10] sm:$0xff]
    %v74 = vld [vmem:[%s1 + $0x18] sm:$0xff]
    %v75 = vld [vmem:[%s1 + $0x20] sm:$0xff]
    %v76 = vld [vmem:[%s1 + $0x28] sm:$0xff]
    %v77 = vld [vmem:[%s1 + $0x30] sm:$0xff]
    %v78 = vld [vmem:[%s1 + $0x38] sm:$0xff]
    %v79 = vadd.f32 %v63, %v71
    %v80 = vadd.f32 %v64, %v72
    %v81 = vadd.f32 %v65, %v73
    %v82 = vadd.f32 %v66, %v74
    %v83 = vadd.f32 %v67, %v75
    %v84 = vadd.f32 %v68, %v76
    %v85 = vadd.f32 %v69, %v77
    %v86 = vadd.f32 %v70, %v78
    %v87 = vld [vmem:[%s5] sm:$0xff]
    %v88 = vld [vmem:[%s5 + $0x8] sm:$0xff]
    %v89 = vld [vmem:[%s5 + $0x10] sm:$0xff]
    %v90 = vld [vmem:[%s5 + $0x18] sm:$0xff]
    %v91 = vld [vmem:[%s5 + $0x20] sm:$0xff]
    %v92 = vld [vmem:[%s5 + $0x28] sm:$0xff]
    %v93 = vld [vmem:[%s5 + $0x30] sm:$0xff]
    %v94 = vld [vmem:[%s5 + $0x38] sm:$0xff]
    %v95 = vld [vmem:[%s6] sm:$0xff]
    %v96 = vld [vmem:[%s6 + $0x8] sm:$0xff]
    %v97 = vld [vmem:[%s6 + $0x10] sm:$0xff]
    %v98 = vld [vmem:[%s6 + $0x18] sm:$0xff]
    %v99 = vld [vmem:[%s6 + $0x20] sm:$0xff]
    %v100 = vld [vmem:[%s6 + $0x28] sm:$0xff]
    %v101 = vld [vmem:[%s6 + $0x30] sm:$0xff]
    %v102 = vld [vmem:[%s6 + $0x38] sm:$0xff]
    %v103 = vld [vmem:[%s7] sm:$0xff]
    %v104 = vld [vmem:[%s7 + $0x8] sm:$0xff]
    %v105 = vld [vmem:[%s7 + $0x10] sm:$0xff]
    %v106 = vld [vmem:[%s7 + $0x18] sm:$0xff]
    %v107 = vld [vmem:[%s7 + $0x20] sm:$0xff]
    %v108 = vld [vmem:[%s7 + $0x28] sm:$0xff]
    %v109 = vld [vmem:[%s7 + $0x30] sm:$0xff]
    %v110 = vld [vmem:[%s7 + $0x38] sm:$0xff]
    %vm111 = vcmask 261120
    %v112 = vsel %vm111, %v79, 0.0
    %113 = vadd.xlane.f32.xlu0 %v112
    %v114 = vpop.xlane.xlu0 %113
    %v115 = vsel %vm111, %v80, 0.0
    %116 = vadd.xlane.f32.xlu0 %v115
    %v117 = vpop.xlane.xlu0 %116
    %v118 = vsel %vm111, %v81, 0.0
    %119 = vadd.xlane.f32.xlu0 %v118
    %v120 = vpop.xlane.xlu0 %119
    %v121 = vsel %vm111, %v82, 0.0
    %122 = vadd.xlane.f32.xlu0 %v121
    %v123 = vpop.xlane.xlu0 %122
    %v124 = vsel %vm111, %v83, 0.0
    %125 = vadd.xlane.f32.xlu0 %v124
    %v126 = vpop.xlane.xlu0 %125
    %v127 = vsel %vm111, %v84, 0.0
    %128 = vadd.xlane.f32.xlu0 %v127
    %v129 = vpop.xlane.xlu0 %128
    %v130 = vsel %vm111, %v85, 0.0
    %131 = vadd.xlane.f32.xlu0 %v130
    %v132 = vpop.xlane.xlu0 %131
    %v133 = vsel %vm111, %v86, 0.0
    %134 = vadd.xlane.f32.xlu0 %v133
    %v135 = vpop.xlane.xlu0 %134
    %v136 = vrcp.pop 32.0
    %v137 = vmul.f32 %v114, %v136
    %v138 = vmul.f32 %v117, %v136
    %v139 = vmul.f32 %v120, %v136
    %v140 = vmul.f32 %v123, %v136
    %v141 = vmul.f32 %v126, %v136
    %v142 = vmul.f32 %v129, %v136
    %v143 = vmul.f32 %v132, %v136
    %v144 = vmul.f32 %v135, %v136
    %v145 = vmul.f32 %v79, %v79
    %v146 = vmul.f32 %v80, %v80
    %v147 = vmul.f32 %v81, %v81
    %v148 = vmul.f32 %v82, %v82
    %v149 = vmul.f32 %v83, %v83
    %v150 = vmul.f32 %v84, %v84
    %v151 = vmul.f32 %v85, %v85
    %v152 = vmul.f32 %v86, %v86
    %v153 = vsel %vm111, %v145, 0.0
    %154 = vadd.xlane.f32.xlu0 %v153
    %v155 = vpop.xlane.xlu0 %154
    %v156 = vsel %vm111, %v146, 0.0
    %157 = vadd.xlane.f32.xlu0 %v156
    %v158 = vpop.xlane.xlu0 %157
    %v159 = vsel %vm111, %v147, 0.0
    %160 = vadd.xlane.f32.xlu0 %v159
    %v161 = vpop.xlane.xlu0 %160
    %v162 = vsel %vm111, %v148, 0.0
    %163 = vadd.xlane.f32.xlu0 %v162
    %v164 = vpop.xlane.xlu0 %163
    %v165 = vsel %vm111, %v149, 0.0
    %166 = vadd.xlane.f32.xlu0 %v165
    %v167 = vpop.xlane.xlu0 %166
    %v168 = vsel %vm111, %v150, 0.0
    %169 = vadd.xlane.f32.xlu0 %v168
    %v170 = vpop.xlane.xlu0 %169
    %v171 = vsel %vm111, %v151, 0.0
    %172 = vadd.xlane.f32.xlu0 %v171
    %v173 = vpop.xlane.xlu0 %172
    %v174 = vsel %vm111, %v152, 0.0
    %175 = vadd.xlane.f32.xlu0 %v174
    %v176 = vpop.xlane.xlu0 %175
    %v177 = vmul.f32 %v155, %v136
    %v178 = vmul.f32 %v158, %v136
    %v179 = vmul.f32 %v161, %v136
    %v180 = vmul.f32 %v164, %v136
    %v181 = vmul.f32 %v167, %v136
    %v182 = vmul.f32 %v170, %v136
    %v183 = vmul.f32 %v173, %v136
    %v184 = vmul.f32 %v176, %v136
    %v185 = vsub.f32 %v79, %v137
    %v186 = vsub.f32 %v80, %v138
    %v187 = vsub.f32 %v81, %v139
    %v188 = vsub.f32 %v82, %v140
    %v189 = vsub.f32 %v83, %v141
    %v190 = vsub.f32 %v84, %v142
    %v191 = vsub.f32 %v85, %v143
    %v192 = vsub.f32 %v86, %v144
    %v193 = vmul.f32 %v137, %v137
    %v194 = vmul.f32 %v138, %v138
    %v195 = vmul.f32 %v139, %v139
    %v196 = vmul.f32 %v140, %v140
    %v197 = vmul.f32 %v141, %v141
    %v198 = vmul.f32 %v142, %v142
    %v199 = vmul.f32 %v143, %v143
    %v200 = vmul.f32 %v144, %v144
    %v201 = vsub.f32 %v177, %v193
    %v202 = vsub.f32 %v178, %v194
    %v203 = vsub.f32 %v179, %v195
    %v204 = vsub.f32 %v180, %v196
    %v205 = vsub.f32 %v181, %v197
    %v206 = vsub.f32 %v182, %v198
    %v207 = vsub.f32 %v183, %v199
    %v208 = vsub.f32 %v184, %v200
    %v209 = vadd.f32 %v201, 1e-05
    %v210 = vadd.f32 %v202, 1e-05
    %v211 = vadd.f32 %v203, 1e-05
    %v212 = vadd.f32 %v204, 1e-05
    %v213 = vadd.f32 %v205, 1e-05
    %v214 = vadd.f32 %v206, 1e-05
    %v215 = vadd.f32 %v207, 1e-05
    %v216 = vadd.f32 %v208, 1e-05
    %v217 = vrsqrt.pop %v209
    %v218 = vrsqrt.pop %v210
    %v219 = vrsqrt.pop %v211
    %v220 = vrsqrt.pop %v212
    %v221 = vrsqrt.pop %v213
    %v222 = vrsqrt.pop %v214
    %v223 = vrsqrt.pop %v215
    %v224 = vrsqrt.pop %v216
    %v225 = vmul.f32 %v185, %v217
    %v226 = vmul.f32 %v186, %v218
    %v227 = vmul.f32 %v187, %v219
    %v228 = vmul.f32 %v188, %v220
    %v229 = vmul.f32 %v189, %v221
    %v230 = vmul.f32 %v190, %v222
    %v231 = vmul.f32 %v191, %v223
    %v232 = vmul.f32 %v192, %v224
    %v233 = vpack.c.bf16 %v226, %v225
    %v234 = vpack.c.bf16 %v228, %v227
    %v235 = vpack.c.bf16 %v230, %v229
    %v236 = vpack.c.bf16 %v232, %v231
    %v237 = vld [vmem:[%s8] sm:$0xf]
    %v238 = vld [vmem:[%s8 + $0x4] sm:$0xf]
    %v239 = vld [vmem:[%s8 + $0x8] sm:$0xf]
    %v240 = vld [vmem:[%s8 + $0xc] sm:$0xf]
    %v241 = vld [vmem:[%s9] sm:$0x1]
    %v243 = vlaneseq
    %v244 = vshrl.u32 %v243, 7
    %v245 = vsub.s32 0, %v244
    %v246 = vrot.slane %v241, %v245
    %v252 = vunpack.c.l.b16 %v237
    %v253 = vunpack.c.l.b16 %v238
    %v254 = vunpack.c.l.b16 %v239
    %v255 = vunpack.c.l.b16 %v240
    %v256 = vpack.c.b16 %v253, %v252
    %v257 = vpack.c.b16 %v255, %v254
    %v261 = vsel %vm111, %v233, 0
    %v264 = vsel %vm111, %v234, 0
    %v267 = vsel %vm111, %v235, 0
    %v270 = vsel %vm111, %v236, 0
    %272 = vmatprep.subr.bf16.mxu0 0
    %273 = vmatpush1.bf16.msra.mxu0 %v256
    %274 = vmatprep.subr.bf16.mxu0 0
    %275 = vmatpush1.bf16.msra.mxu0 %v257
    %276 = vmatprep.subr.bf16.mxu0 0
    %277 = vmatpush1.bf16.msra.mxu0 0
    %278 = vmatprep.subr.bf16.mxu0 0
    %279 = vmatpush1.bf16.msra.mxu0 0
    %280 = vmatprep.subr.bf16.mxu0 0
    %281 = vmatpush1.bf16.msra.mxu0 0
    %282 = vmatprep.subr.bf16.mxu0 0
    %283 = vmatpush1.bf16.msra.mxu0 0
    %284 = vmatprep.subr.bf16.mxu0 0
    %285 = vmatpush1.bf16.msra.mxu0 0
    %286 = vmatprep.subr.bf16.mxu0 0
    %287 = vmatpush1.bf16.msra.mxu0 0
    %288 = vmatprep.subr.bf16.mxu0 0
    %289 = vmatpush1.bf16.msra.mxu0 0
    %290 = vmatprep.subr.bf16.mxu0 0
    %291 = vmatpush1.bf16.msra.mxu0 0
    %292 = vmatprep.subr.bf16.mxu0 0
    %293 = vmatpush1.bf16.msra.mxu0 0
    %294 = vmatprep.subr.bf16.mxu0 0
    %295 = vmatpush1.bf16.msra.mxu0 0
    %296 = vmatprep.subr.bf16.mxu0 0
    %297 = vmatpush1.bf16.msra.mxu0 0
    %298 = vmatprep.subr.bf16.mxu0 0
    %299 = vmatpush1.bf16.msra.mxu0 0
    %300 = vmatprep.subr.bf16.mxu0 0
    %301 = vmatpush1.bf16.msra.mxu0 0
    %302 = vmatprep.subr.bf16.mxu0 0
    %303 = vmatpush1.bf16.msra.mxu0 0
    %304 = vmatprep.mubr.bf16.mxu0 0
    %305 = vmatmul.mubr.bf16.gmra.mrb[0].mxu0 %v261
    %v306 = vpop.f32.mrb[0].mxu0
    %v307 = vadd.f32 %v246, %v306
    %v308 = vpop.f32.mrb[0].mxu0
    %v309 = vpop.f32.mrb[0].mxu0
    %v310 = vadd.f32 %v246, %v309
    %v311 = vpop.f32.mrb[0].mxu0
    %312 = vmatprep.mubr.bf16.mxu0 0
    %313 = vmatmul.mubr.bf16.gmra.mrb[0].mxu0 %v264
    %v314 = vpop.f32.mrb[0].mxu0
    %v315 = vadd.f32 %v246, %v314
    %v316 = vpop.f32.mrb[0].mxu0
    %v317 = vpop.f32.mrb[0].mxu0
    %v318 = vadd.f32 %v246, %v317
    %v319 = vpop.f32.mrb[0].mxu0
    %320 = vmatprep.mubr.bf16.mxu0 0
    %321 = vmatmul.mubr.bf16.gmra.mrb[0].mxu0 %v267
    %v322 = vpop.f32.mrb[0].mxu0
    %v323 = vadd.f32 %v246, %v322
    %v324 = vpop.f32.mrb[0].mxu0
    %v325 = vpop.f32.mrb[0].mxu0
    %v326 = vadd.f32 %v246, %v325
    %v327 = vpop.f32.mrb[0].mxu0
    %328 = vmatprep.mubr.bf16.mxu0 0
    %329 = vmatmul.mubr.bf16.gmra.mrb[0].mxu0 %v270
    %v330 = vpop.f32.mrb[0].mxu0
    %v331 = vadd.f32 %v246, %v330
    %v332 = vpop.f32.mrb[0].mxu0
    %v333 = vpop.f32.mrb[0].mxu0
    %v334 = vadd.f32 %v246, %v333
    %v335 = vpop.f32.mrb[0].mxu0
    %336 = vdwg.mxu0
    %v337 = vpack.c.bf16 %v310, %v307
    %v338 = vpack.c.bf16 %v318, %v315
    %v339 = vpack.c.bf16 %v326, %v323
    %v340 = vpack.c.bf16 %v334, %v331
    %v341 = vld [vmem:[%s10] sm:$0xf]
    %v342 = vld [vmem:[%s10 + $0x4] sm:$0xf]
    %v343 = vld [vmem:[%s10 + $0x8] sm:$0xf]
    %v344 = vld [vmem:[%s10 + $0xc] sm:$0xf]
    %349 = vrot.lane.b32.xlu0 %v337, 64
    %v350 = vpop.permute.xlu0 %349
    %351 = vrot.lane.b32.xlu0 %v338, 64
    %v352 = vpop.permute.xlu0 %351
    %353 = vrot.lane.b32.xlu0 %v339, 64
    %v354 = vpop.permute.xlu0 %353
    %355 = vrot.lane.b32.xlu0 %v340, 64
    %v356 = vpop.permute.xlu0 %355
    %v361 = vunpack.c.l.b16 %v341
    %v362 = vunpack.c.l.b16 %v342
    %v363 = vunpack.c.l.b16 %v343
    %v364 = vunpack.c.l.b16 %v344
    %v365 = vpack.c.b16 %v362, %v361
    %v366 = vpack.c.b16 %v364, %v363
    %v370 = vsel %vm111, %v350, 0
    %v373 = vsel %vm111, %v352, 0
    %v376 = vsel %vm111, %v354, 0
    %v379 = vsel %vm111, %v356, 0
    %381 = vmatprep.subr.bf16.mxu0 0
    %382 = vmatpush1.bf16.msra.mxu0 %v365
    %383 = vmatprep.subr.bf16.mxu0 0
    %384 = vmatpush1.bf16.msra.mxu0 %v366
    %385 = vmatprep.subr.bf16.mxu0 0
    %386 = vmatpush1.bf16.msra.mxu0 0
    %387 = vmatprep.subr.bf16.mxu0 0
    %388 = vmatpush1.bf16.msra.mxu0 0
    %389 = vmatprep.subr.bf16.mxu0 0
    %390 = vmatpush1.bf16.msra.mxu0 0
    %391 = vmatprep.subr.bf16.mxu0 0
    %392 = vmatpush1.bf16.msra.mxu0 0
    %393 = vmatprep.subr.bf16.mxu0 0
    %394 = vmatpush1.bf16.msra.mxu0 0
    %395 = vmatprep.subr.bf16.mxu0 0
    %396 = vmatpush1.bf16.msra.mxu0 0
    %397 = vmatprep.subr.bf16.mxu0 0
    %398 = vmatpush1.bf16.msra.mxu0 0
    %399 = vmatprep.subr.bf16.mxu0 0
    %400 = vmatpush1.bf16.msra.mxu0 0
    %401 = vmatprep.subr.bf16.mxu0 0
    %402 = vmatpush1.bf16.msra.mxu0 0
    %403 = vmatprep.subr.bf16.mxu0 0
    %404 = vmatpush1.bf16.msra.mxu0 0
    %405 = vmatprep.subr.bf16.mxu0 0
    %406 = vmatpush1.bf16.msra.mxu0 0
    %407 = vmatprep.subr.bf16.mxu0 0
    %408 = vmatpush1.bf16.msra.mxu0 0
    %409 = vmatprep.subr.bf16.mxu0 0
    %410 = vmatpush1.bf16.msra.mxu0 0
    %411 = vmatprep.subr.bf16.mxu0 0
    %412 = vmatpush1.bf16.msra.mxu0 0
    %413 = vmatprep.mubr.bf16.mxu0 0
    %414 = vmatmul.mubr.bf16.gmra.mrb[0].mxu0 %v370
    %v415 = vpop.f32.mrb[0].mxu0
    %v416 = vadd.f32 0.0, %v415
    %v417 = vpop.f32.mrb[0].mxu0
    %v418 = vpop.f32.mrb[0].mxu0
    %v419 = vadd.f32 0.0, %v418
    %v420 = vpop.f32.mrb[0].mxu0
    %421 = vmatprep.mubr.bf16.mxu0 0
    %422 = vmatmul.mubr.bf16.gmra.mrb[0].mxu0 %v373
    %v423 = vpop.f32.mrb[0].mxu0
    %v424 = vadd.f32 0.0, %v423
    %v425 = vpop.f32.mrb[0].mxu0
    %v426 = vpop.f32.mrb[0].mxu0
    %v427 = vadd.f32 0.0, %v426
    %v428 = vpop.f32.mrb[0].mxu0
    %429 = vmatprep.mubr.bf16.mxu0 0
    %430 = vmatmul.mubr.bf16.gmra.mrb[0].mxu0 %v376
    %v431 = vpop.f32.mrb[0].mxu0
    %v432 = vadd.f32 0.0, %v431
    %v433 = vpop.f32.mrb[0].mxu0
    %v434 = vpop.f32.mrb[0].mxu0
    %v435 = vadd.f32 0.0, %v434
    %v436 = vpop.f32.mrb[0].mxu0
    %437 = vmatprep.mubr.bf16.mxu0 0
    %438 = vmatmul.mubr.bf16.gmra.mrb[0].mxu0 %v379
    %v439 = vpop.f32.mrb[0].mxu0
    %v440 = vadd.f32 0.0, %v439
    %v441 = vpop.f32.mrb[0].mxu0
    %v442 = vpop.f32.mrb[0].mxu0
    %v443 = vadd.f32 0.0, %v442
    %v444 = vpop.f32.mrb[0].mxu0
    %445 = vdwg.mxu0
    %v446 = vpack.c.bf16 %v419, %v416
    %v447 = vpack.c.bf16 %v427, %v424
    %v448 = vpack.c.bf16 %v435, %v432
    %v449 = vpack.c.bf16 %v443, %v440
    %450 = vrot.lane.b32.xlu0 %v337, 96
    %v451 = vpop.permute.xlu0 %450
    %452 = vrot.lane.b32.xlu0 %v338, 96
    %v453 = vpop.permute.xlu0 %452
    %454 = vrot.lane.b32.xlu0 %v339, 96
    %v455 = vpop.permute.xlu0 %454
    %456 = vrot.lane.b32.xlu0 %v340, 96
    %v457 = vpop.permute.xlu0 %456
    %vm458 = vcmask 64512
    %v460 = vsel %vm458, %v337, 0
    %v463 = vsel %vm458, %v338, 0
    %v466 = vsel %vm458, %v339, 0
    %v469 = vsel %vm458, %v340, 0
    %v472 = vsel %vm458, %v451, 0
    %v475 = vsel %vm458, %v453, 0
    %v478 = vsel %vm458, %v455, 0
    %v481 = vsel %vm458, %v457, 0
    %483 = vmatprep.subr.bf16.mxu0 0
    %484 = vmatpush1.bf16.xpose.msra.mxu0 %v472
    %485 = vmatprep.subr.bf16.mxu0 0
    %486 = vmatpush1.bf16.xpose.msra.mxu0 %v475
    %487 = vmatprep.subr.bf16.mxu0 0
    %488 = vmatpush1.bf16.xpose.msra.mxu0 %v478
    %489 = vmatprep.subr.bf16.mxu0 0
    %490 = vmatpush1.bf16.xpose.msra.mxu0 %v481
    %491 = vmatprep.subr.bf16.mxu0 0
    %492 = vmatpush1.bf16.xpose.msra.mxu0 0
    %493 = vmatprep.subr.bf16.mxu0 0
    %494 = vmatpush1.bf16.xpose.msra.mxu0 0
    %495 = vmatprep.subr.bf16.mxu0 0
    %496 = vmatpush1.bf16.xpose.msra.mxu0 0
    %497 = vmatprep.subr.bf16.mxu0 0
    %498 = vmatpush1.bf16.xpose.msra.mxu0 0
    %499 = vmatprep.subr.bf16.mxu0 0
    %500 = vmatpush1.bf16.xpose.msra.mxu0 0
    %501 = vmatprep.subr.bf16.mxu0 0
    %502 = vmatpush1.bf16.xpose.msra.mxu0 0
    %503 = vmatprep.subr.bf16.mxu0 0
    %504 = vmatpush1.bf16.xpose.msra.mxu0 0
    %505 = vmatprep.subr.bf16.mxu0 0
    %506 = vmatpush1.bf16.xpose.msra.mxu0 0
    %507 = vmatprep.subr.bf16.mxu0 0
    %508 = vmatpush1.bf16.xpose.msra.mxu0 0
    %509 = vmatprep.subr.bf16.mxu0 0
    %510 = vmatpush1.bf16.xpose.msra.mxu0 0
    %511 = vmatprep.subr.bf16.mxu0 0
    %512 = vmatpush1.bf16.xpose.msra.mxu0 0
    %513 = vmatprep.subr.bf16.mxu0 0
    %514 = vmatpush1.bf16.xpose.msra.mxu0 0
    %515 = vmatprep.mubr.bf16.mxu0 0
    %516 = vmatmul.mubr.bf16.gmra.mrb[0].mxu0 %v460
    %v517 = vpop.f32.mrb[0].mxu0
    %v518 = vadd.f32 %v87, %v517
    %v519 = vpop.f32.mrb[0].mxu0
    %v520 = vpop.f32.mrb[0].mxu0
    %v521 = vadd.f32 %v88, %v520
    %v522 = vpop.f32.mrb[0].mxu0
    %523 = vmatprep.mubr.bf16.mxu0 0
    %524 = vmatmul.mubr.bf16.gmra.mrb[0].mxu0 %v463
    %v525 = vpop.f32.mrb[0].mxu0
    %v526 = vadd.f32 %v89, %v525
    %v527 = vpop.f32.mrb[0].mxu0
    %v528 = vpop.f32.mrb[0].mxu0
    %v529 = vadd.f32 %v90, %v528
    %v530 = vpop.f32.mrb[0].mxu0
    %531 = vmatprep.mubr.bf16.mxu0 0
    %532 = vmatmul.mubr.bf16.gmra.mrb[0].mxu0 %v466
    %v533 = vpop.f32.mrb[0].mxu0
    %v534 = vadd.f32 %v91, %v533
    %v535 = vpop.f32.mrb[0].mxu0
    %v536 = vpop.f32.mrb[0].mxu0
    %v537 = vadd.f32 %v92, %v536
    %v538 = vpop.f32.mrb[0].mxu0
    %539 = vmatprep.mubr.bf16.mxu0 0
    %540 = vmatmul.mubr.bf16.gmra.mrb[0].mxu0 %v469
    %v541 = vpop.f32.mrb[0].mxu0
    %v542 = vadd.f32 %v93, %v541
    %v543 = vpop.f32.mrb[0].mxu0
    %v544 = vpop.f32.mrb[0].mxu0
    %v545 = vadd.f32 %v94, %v544
    %v546 = vpop.f32.mrb[0].mxu0
    %547 = vdwg.mxu0
    %v548 = vmul.f32 %v518, 1.442695
    %v549 = vpow.pop %v548
    %v550 = vmul.f32 %v521, 1.442695
    %v551 = vpow.pop %v550
    %v552 = vmul.f32 %v526, 1.442695
    %v553 = vpow.pop %v552
    %v554 = vmul.f32 %v529, 1.442695
    %v555 = vpow.pop %v554
    %v556 = vmul.f32 %v534, 1.442695
    %v557 = vpow.pop %v556
    %v558 = vmul.f32 %v537, 1.442695
    %v559 = vpow.pop %v558
    %v560 = vmul.f32 %v542, 1.442695
    %v561 = vpow.pop %v560
    %v562 = vmul.f32 %v545, 1.442695
    %v563 = vpow.pop %v562
    %vm564 = vcmask 523264
    %v565 = vsel %vm564, %v549, 0.0
    %566 = vadd.xlane.f32.xlu0 %v565
    %v567 = vpop.xlane.xlu0 %566
    %v568 = vsel %vm564, %v551, 0.0
    %569 = vadd.xlane.f32.xlu0 %v568
    %v570 = vpop.xlane.xlu0 %569
    %v571 = vsel %vm564, %v553, 0.0
    %572 = vadd.xlane.f32.xlu0 %v571
    %v573 = vpop.xlane.xlu0 %572
    %v574 = vsel %vm564, %v555, 0.0
    %575 = vadd.xlane.f32.xlu0 %v574
    %v576 = vpop.xlane.xlu0 %575
    %v577 = vsel %vm564, %v557, 0.0
    %578 = vadd.xlane.f32.xlu0 %v577
    %v579 = vpop.xlane.xlu0 %578
    %v580 = vsel %vm564, %v559, 0.0
    %581 = vadd.xlane.f32.xlu0 %v580
    %v582 = vpop.xlane.xlu0 %581
    %v583 = vsel %vm564, %v561, 0.0
    %584 = vadd.xlane.f32.xlu0 %v583
    %v585 = vpop.xlane.xlu0 %584
    %v586 = vsel %vm564, %v563, 0.0
    %587 = vadd.xlane.f32.xlu0 %v586
    %v588 = vpop.xlane.xlu0 %587
    %v589 = vrcp.pop %v567
    %v590 = vrcp.pop %v570
    %v591 = vrcp.pop %v573
    %v592 = vrcp.pop %v576
    %v593 = vrcp.pop %v579
    %v594 = vrcp.pop %v582
    %v595 = vrcp.pop %v585
    %v596 = vrcp.pop %v588
    %v597 = vmul.f32 %v549, %v589
    %v598 = vmul.f32 %v551, %v590
    %v599 = vmul.f32 %v553, %v591
    %v600 = vmul.f32 %v555, %v592
    %v601 = vmul.f32 %v557, %v593
    %v602 = vmul.f32 %v559, %v594
    %v603 = vmul.f32 %v561, %v595
    %v604 = vmul.f32 %v563, %v596
    %v605 = vpack.c.bf16 %v598, %v597
    %v606 = vpack.c.bf16 %v600, %v599
    %v607 = vpack.c.bf16 %v602, %v601
    %v608 = vpack.c.bf16 %v604, %v603
    %609 = vrot.lane.b32.xlu0 %v337, 120
    %v610 = vpop.permute.xlu0 %609
    %611 = vrot.lane.b32.xlu0 %v338, 120
    %v612 = vpop.permute.xlu0 %611
    %613 = vrot.lane.b32.xlu0 %v339, 120
    %v614 = vpop.permute.xlu0 %613
    %615 = vrot.lane.b32.xlu0 %v340, 120
    %v616 = vpop.permute.xlu0 %615
    %617 = vrot.lane.b32.xlu0 %v337, 88
    %v618 = vpop.permute.xlu0 %617
    %619 = vrot.lane.b32.xlu0 %v338, 88
    %v620 = vpop.permute.xlu0 %619
    %621 = vrot.lane.b32.xlu0 %v339, 88
    %v622 = vpop.permute.xlu0 %621
    %623 = vrot.lane.b32.xlu0 %v340, 88
    %v624 = vpop.permute.xlu0 %623
    %v626 = vsel %vm458, %v610, 0
    %v629 = vsel %vm458, %v612, 0
    %v632 = vsel %vm458, %v614, 0
    %v635 = vsel %vm458, %v616, 0
    %v638 = vsel %vm458, %v618, 0
    %v641 = vsel %vm458, %v620, 0
    %v644 = vsel %vm458, %v622, 0
    %v647 = vsel %vm458, %v624, 0
    %649 = vmatprep.subr.bf16.mxu0 0
    %650 = vmatpush1.bf16.xpose.msra.mxu0 %v638
    %651 = vmatprep.subr.bf16.mxu0 0
    %652 = vmatpush1.bf16.xpose.msra.mxu0 %v641
    %653 = vmatprep.subr.bf16.mxu0 0
    %654 = vmatpush1.bf16.xpose.msra.mxu0 %v644
    %655 = vmatprep.subr.bf16.mxu0 0
    %656 = vmatpush1.bf16.xpose.msra.mxu0 %v647
    %657 = vmatprep.subr.bf16.mxu0 0
    %658 = vmatpush1.bf16.xpose.msra.mxu0 0
    %659 = vmatprep.subr.bf16.mxu0 0
    %660 = vmatpush1.bf16.xpose.msra.mxu0 0
    %661 = vmatprep.subr.bf16.mxu0 0
    %662 = vmatpush1.bf16.xpose.msra.mxu0 0
    %663 = vmatprep.subr.bf16.mxu0 0
    %664 = vmatpush1.bf16.xpose.msra.mxu0 0
    %665 = vmatprep.subr.bf16.mxu0 0
    %666 = vmatpush1.bf16.xpose.msra.mxu0 0
    %667 = vmatprep.subr.bf16.mxu0 0
    %668 = vmatpush1.bf16.xpose.msra.mxu0 0
    %669 = vmatprep.subr.bf16.mxu0 0
    %670 = vmatpush1.bf16.xpose.msra.mxu0 0
    %671 = vmatprep.subr.bf16.mxu0 0
    %672 = vmatpush1.bf16.xpose.msra.mxu0 0
    %673 = vmatprep.subr.bf16.mxu0 0
    %674 = vmatpush1.bf16.xpose.msra.mxu0 0
    %675 = vmatprep.subr.bf16.mxu0 0
    %676 = vmatpush1.bf16.xpose.msra.mxu0 0
    %677 = vmatprep.subr.bf16.mxu0 0
    %678 = vmatpush1.bf16.xpose.msra.mxu0 0
    %679 = vmatprep.subr.bf16.mxu0 0
    %680 = vmatpush1.bf16.xpose.msra.mxu0 0
    %681 = vmatprep.mubr.bf16.mxu0 0
    %682 = vmatmul.mubr.bf16.gmra.mrb[0].mxu0 %v626
    %v683 = vpop.f32.mrb[0].mxu0
    %v684 = vadd.f32 %v87, %v683
    %v685 = vpop.f32.mrb[0].mxu0
    %v686 = vpop.f32.mrb[0].mxu0
    %v687 = vadd.f32 %v88, %v686
    %v688 = vpop.f32.mrb[0].mxu0
    %689 = vmatprep.mubr.bf16.mxu0 0
    %690 = vmatmul.mubr.bf16.gmra.mrb[0].mxu0 %v629
    %v691 = vpop.f32.mrb[0].mxu0
    %v692 = vadd.f32 %v89, %v691
    %v693 = vpop.f32.mrb[0].mxu0
    %v694 = vpop.f32.mrb[0].mxu0
    %v695 = vadd.f32 %v90, %v694
    %v696 = vpop.f32.mrb[0].mxu0
    %697 = vmatprep.mubr.bf16.mxu0 0
    %698 = vmatmul.mubr.bf16.gmra.mrb[0].mxu0 %v632
    %v699 = vpop.f32.mrb[0].mxu0
    %v700 = vadd.f32 %v91, %v699
    %v701 = vpop.f32.mrb[0].mxu0
    %v702 = vpop.f32.mrb[0].mxu0
    %v703 = vadd.f32 %v92, %v702
    %v704 = vpop.f32.mrb[0].mxu0
    %705 = vmatprep.mubr.bf16.mxu0 0
    %706 = vmatmul.mubr.bf16.gmra.mrb[0].mxu0 %v635
    %v707 = vpop.f32.mrb[0].mxu0
    %v708 = vadd.f32 %v93, %v707
    %v709 = vpop.f32.mrb[0].mxu0
    %v710 = vpop.f32.mrb[0].mxu0
    %v711 = vadd.f32 %v94, %v710
    %v712 = vpop.f32.mrb[0].mxu0
    %713 = vdwg.mxu0
    %v714 = vmul.f32 %v684, 1.442695
    %v715 = vpow.pop %v714
    %v716 = vmul.f32 %v687, 1.442695
    %v717 = vpow.pop %v716
    %v718 = vmul.f32 %v692, 1.442695
    %v719 = vpow.pop %v718
    %v720 = vmul.f32 %v695, 1.442695
    %v721 = vpow.pop %v720
    %v722 = vmul.f32 %v700, 1.442695
    %v723 = vpow.pop %v722
    %v724 = vmul.f32 %v703, 1.442695
    %v725 = vpow.pop %v724
    %v726 = vmul.f32 %v708, 1.442695
    %v727 = vpow.pop %v726
    %v728 = vmul.f32 %v711, 1.442695
    %v729 = vpow.pop %v728
    %v730 = vsel %vm564, %v715, 0.0
    %731 = vadd.xlane.f32.xlu0 %v730
    %v732 = vpop.xlane.xlu0 %731
    %v733 = vsel %vm564, %v717, 0.0
    %734 = vadd.xlane.f32.xlu0 %v733
    %v735 = vpop.xlane.xlu0 %734
    %v736 = vsel %vm564, %v719, 0.0
    %737 = vadd.xlane.f32.xlu0 %v736
    %v738 = vpop.xlane.xlu0 %737
    %v739 = vsel %vm564, %v721, 0.0
    %740 = vadd.xlane.f32.xlu0 %v739
    %v741 = vpop.xlane.xlu0 %740
    %v742 = vsel %vm564, %v723, 0.0
    %743 = vadd.xlane.f32.xlu0 %v742
    %v744 = vpop.xlane.xlu0 %743
    %v745 = vsel %vm564, %v725, 0.0
    %746 = vadd.xlane.f32.xlu0 %v745
    %v747 = vpop.xlane.xlu0 %746
    %v748 = vsel %vm564, %v727, 0.0
    %749 = vadd.xlane.f32.xlu0 %v748
    %v750 = vpop.xlane.xlu0 %749
    %v751 = vsel %vm564, %v729, 0.0
    %752 = vadd.xlane.f32.xlu0 %v751
    %v753 = vpop.xlane.xlu0 %752
    %v754 = vrcp.pop %v732
    %v755 = vrcp.pop %v735
    %v756 = vrcp.pop %v738
    %v757 = vrcp.pop %v741
    %v758 = vrcp.pop %v744
    %v759 = vrcp.pop %v747
    %v760 = vrcp.pop %v750
    %v761 = vrcp.pop %v753
    %v762 = vmul.f32 %v715, %v754
    %v763 = vmul.f32 %v717, %v755
    %v764 = vmul.f32 %v719, %v756
    %v765 = vmul.f32 %v721, %v757
    %v766 = vmul.f32 %v723, %v758
    %v767 = vmul.f32 %v725, %v759
    %v768 = vmul.f32 %v727, %v760
    %v769 = vmul.f32 %v729, %v761
    %v770 = vpack.c.bf16 %v763, %v762
    %v771 = vpack.c.bf16 %v765, %v764
    %v772 = vpack.c.bf16 %v767, %v766
    %v773 = vpack.c.bf16 %v769, %v768
    %778 = vrot.lane.b32.xlu0 %v446, 96
    %v779 = vpop.permute.xlu0 %778
    %780 = vrot.lane.b32.xlu0 %v447, 96
    %v781 = vpop.permute.xlu0 %780
    %782 = vrot.lane.b32.xlu0 %v448, 96
    %v783 = vpop.permute.xlu0 %782
    %784 = vrot.lane.b32.xlu0 %v449, 96
    %v785 = vpop.permute.xlu0 %784
    %v791 = vsel %vm564, %v770, 0
    %v794 = vsel %vm564, %v771, 0
    %v797 = vsel %vm564, %v772, 0
    %v800 = vsel %vm564, %v773, 0
    %802 = vmatprep.subr.bf16.mxu0 0
    %803 = vmatpush1.bf16.msra.mxu0 %v779
    %804 = vmatprep.subr.bf16.mxu0 0
    %805 = vmatpush1.bf16.msra.mxu0 %v781
    %806 = vmatprep.subr.bf16.mxu0 0
    %807 = vmatpush1.bf16.msra.mxu0 %v783
    %808 = vmatprep.subr.bf16.mxu0 0
    %809 = vmatpush1.bf16.msra.mxu0 %v785
    %810 = vmatprep.subr.bf16.mxu0 0
    %811 = vmatpush1.bf16.msra.mxu0 0
    %812 = vmatprep.subr.bf16.mxu0 0
    %813 = vmatpush1.bf16.msra.mxu0 0
    %814 = vmatprep.subr.bf16.mxu0 0
    %815 = vmatpush1.bf16.msra.mxu0 0
    %816 = vmatprep.subr.bf16.mxu0 0
    %817 = vmatpush1.bf16.msra.mxu0 0
    %818 = vmatprep.subr.bf16.mxu0 0
    %819 = vmatpush1.bf16.msra.mxu0 0
    %820 = vmatprep.subr.bf16.mxu0 0
    %821 = vmatpush1.bf16.msra.mxu0 0
    %822 = vmatprep.subr.bf16.mxu0 0
    %823 = vmatpush1.bf16.msra.mxu0 0
    %824 = vmatprep.subr.bf16.mxu0 0
    %825 = vmatpush1.bf16.msra.mxu0 0
    %826 = vmatprep.subr.bf16.mxu0 0
    %827 = vmatpush1.bf16.msra.mxu0 0
    %828 = vmatprep.subr.bf16.mxu0 0
    %829 = vmatpush1.bf16.msra.mxu0 0
    %830 = vmatprep.subr.bf16.mxu0 0
    %831 = vmatpush1.bf16.msra.mxu0 0
    %832 = vmatprep.subr.bf16.mxu0 0
    %833 = vmatpush1.bf16.msra.mxu0 0
    %834 = vmatprep.mubr.bf16.mxu0 0
    %835 = vmatmul.mubr.bf16.gmra.mrb[0].mxu0 %v791
    %v836 = vpop.f32.mrb[0].mxu0
    %v837 = vadd.f32 0.0, %v836
    %v838 = vpop.f32.mrb[0].mxu0
    %v839 = vpop.f32.mrb[0].mxu0
    %v840 = vadd.f32 0.0, %v839
    %v841 = vpop.f32.mrb[0].mxu0
    %842 = vmatprep.mubr.bf16.mxu0 0
    %843 = vmatmul.mubr.bf16.gmra.mrb[0].mxu0 %v794
    %v844 = vpop.f32.mrb[0].mxu0
    %v845 = vadd.f32 0.0, %v844
    %v846 = vpop.f32.mrb[0].mxu0
    %v847 = vpop.f32.mrb[0].mxu0
    %v848 = vadd.f32 0.0, %v847
    %v849 = vpop.f32.mrb[0].mxu0
    %850 = vmatprep.mubr.bf16.mxu0 0
    %851 = vmatmul.mubr.bf16.gmra.mrb[0].mxu0 %v797
    %v852 = vpop.f32.mrb[0].mxu0
    %v853 = vadd.f32 0.0, %v852
    %v854 = vpop.f32.mrb[0].mxu0
    %v855 = vpop.f32.mrb[0].mxu0
    %v856 = vadd.f32 0.0, %v855
    %v857 = vpop.f32.mrb[0].mxu0
    %858 = vmatprep.mubr.bf16.mxu0 0
    %859 = vmatmul.mubr.bf16.gmra.mrb[0].mxu0 %v800
    %v860 = vpop.f32.mrb[0].mxu0
    %v861 = vadd.f32 0.0, %v860
    %v862 = vpop.f32.mrb[0].mxu0
    %v863 = vpop.f32.mrb[0].mxu0
    %v864 = vadd.f32 0.0, %v863
    %v865 = vpop.f32.mrb[0].mxu0
    %866 = vdwg.mxu0
    %v868 = vsel %vm564, %v605, 0
    %v871 = vsel %vm564, %v606, 0
    %v874 = vsel %vm564, %v607, 0
    %v877 = vsel %vm564, %v608, 0
    %879 = vmatprep.subr.bf16.mxu0 0
    %880 = vmatpush1.bf16.msra.mxu0 %v446
    %881 = vmatprep.subr.bf16.mxu0 0
    %882 = vmatpush1.bf16.msra.mxu0 %v447
    %883 = vmatprep.subr.bf16.mxu0 0
    %884 = vmatpush1.bf16.msra.mxu0 %v448
    %885 = vmatprep.subr.bf16.mxu0 0
    %886 = vmatpush1.bf16.msra.mxu0 %v449
    %887 = vmatprep.subr.bf16.mxu0 0
    %888 = vmatpush1.bf16.msra.mxu0 0
    %889 = vmatprep.subr.bf16.mxu0 0
    %890 = vmatpush1.bf16.msra.mxu0 0
    %891 = vmatprep.subr.bf16.mxu0 0
    %892 = vmatpush1.bf16.msra.mxu0 0
    %893 = vmatprep.subr.bf16.mxu0 0
    %894 = vmatpush1.bf16.msra.mxu0 0
    %895 = vmatprep.subr.bf16.mxu0 0
    %896 = vmatpush1.bf16.msra.mxu0 0
    %897 = vmatprep.subr.bf16.mxu0 0
    %898 = vmatpush1.bf16.msra.mxu0 0
    %899 = vmatprep.subr.bf16.mxu0 0
    %900 = vmatpush1.bf16.msra.mxu0 0
    %901 = vmatprep.subr.bf16.mxu0 0
    %902 = vmatpush1.bf16.msra.mxu0 0
    %903 = vmatprep.subr.bf16.mxu0 0
    %904 = vmatpush1.bf16.msra.mxu0 0
    %905 = vmatprep.subr.bf16.mxu0 0
    %906 = vmatpush1.bf16.msra.mxu0 0
    %907 = vmatprep.subr.bf16.mxu0 0
    %908 = vmatpush1.bf16.msra.mxu0 0
    %909 = vmatprep.subr.bf16.mxu0 0
    %910 = vmatpush1.bf16.msra.mxu0 0
    %911 = vmatprep.mubr.bf16.mxu0 0
    %912 = vmatmul.mubr.bf16.gmra.mrb[0].mxu0 %v868
    %v913 = vpop.f32.mrb[0].mxu0
    %v914 = vadd.f32 %v837, %v913
    %v915 = vpop.f32.mrb[0].mxu0
    %v916 = vpop.f32.mrb[0].mxu0
    %v917 = vadd.f32 %v840, %v916
    %v918 = vpop.f32.mrb[0].mxu0
    %919 = vmatprep.mubr.bf16.mxu0 0
    %920 = vmatmul.mubr.bf16.gmra.mrb[0].mxu0 %v871
    %v921 = vpop.f32.mrb[0].mxu0
    %v922 = vadd.f32 %v845, %v921
    %v923 = vpop.f32.mrb[0].mxu0
    %v924 = vpop.f32.mrb[0].mxu0
    %v925 = vadd.f32 %v848, %v924
    %v926 = vpop.f32.mrb[0].mxu0
    %927 = vmatprep.mubr.bf16.mxu0 0
    %928 = vmatmul.mubr.bf16.gmra.mrb[0].mxu0 %v874
    %v929 = vpop.f32.mrb[0].mxu0
    %v930 = vadd.f32 %v853, %v929
    %v931 = vpop.f32.mrb[0].mxu0
    %v932 = vpop.f32.mrb[0].mxu0
    %v933 = vadd.f32 %v856, %v932
    %v934 = vpop.f32.mrb[0].mxu0
    %935 = vmatprep.mubr.bf16.mxu0 0
    %936 = vmatmul.mubr.bf16.gmra.mrb[0].mxu0 %v877
    %v937 = vpop.f32.mrb[0].mxu0
    %v938 = vadd.f32 %v861, %v937
    %v939 = vpop.f32.mrb[0].mxu0
    %v940 = vpop.f32.mrb[0].mxu0
    %v941 = vadd.f32 %v864, %v940
    %v942 = vpop.f32.mrb[0].mxu0
    %943 = vdwg.mxu0
    %944 = vrot.lane.b32.xlu0 %v337, 112
    %v945 = vpop.permute.xlu0 %944
    %946 = vrot.lane.b32.xlu0 %v338, 112
    %v947 = vpop.permute.xlu0 %946
    %948 = vrot.lane.b32.xlu0 %v339, 112
    %v949 = vpop.permute.xlu0 %948
    %950 = vrot.lane.b32.xlu0 %v340, 112
    %v951 = vpop.permute.xlu0 %950
    %952 = vrot.lane.b32.xlu0 %v337, 80
    %v953 = vpop.permute.xlu0 %952
    %954 = vrot.lane.b32.xlu0 %v338, 80
    %v955 = vpop.permute.xlu0 %954
    %956 = vrot.lane.b32.xlu0 %v339, 80
    %v957 = vpop.permute.xlu0 %956
    %958 = vrot.lane.b32.xlu0 %v340, 80
    %v959 = vpop.permute.xlu0 %958
    %v961 = vsel %vm458, %v945, 0
    %v964 = vsel %vm458, %v947, 0
    %v967 = vsel %vm458, %v949, 0
    %v970 = vsel %vm458, %v951, 0
    %v973 = vsel %vm458, %v953, 0
    %v976 = vsel %vm458, %v955, 0
    %v979 = vsel %vm458, %v957, 0
    %v982 = vsel %vm458, %v959, 0
    %984 = vmatprep.subr.bf16.mxu0 0
    %985 = vmatpush1.bf16.xpose.msra.mxu0 %v973
    %986 = vmatprep.subr.bf16.mxu0 0
    %987 = vmatpush1.bf16.xpose.msra.mxu0 %v976
    %988 = vmatprep.subr.bf16.mxu0 0
    %989 = vmatpush1.bf16.xpose.msra.mxu0 %v979
    %990 = vmatprep.subr.bf16.mxu0 0
    %991 = vmatpush1.bf16.xpose.msra.mxu0 %v982
    %992 = vmatprep.subr.bf16.mxu0 0
    %993 = vmatpush1.bf16.xpose.msra.mxu0 0
    %994 = vmatprep.subr.bf16.mxu0 0
    %995 = vmatpush1.bf16.xpose.msra.mxu0 0
    %996 = vmatprep.subr.bf16.mxu0 0
    %997 = vmatpush1.bf16.xpose.msra.mxu0 0
    %998 = vmatprep.subr.bf16.mxu0 0
    %999 = vmatpush1.bf16.xpose.msra.mxu0 0
    %1000 = vmatprep.subr.bf16.mxu0 0
    %1001 = vmatpush1.bf16.xpose.msra.mxu0 0
    %1002 = vmatprep.subr.bf16.mxu0 0
    %1003 = vmatpush1.bf16.xpose.msra.mxu0 0
    %1004 = vmatprep.subr.bf16.mxu0 0
    %1005 = vmatpush1.bf16.xpose.msra.mxu0 0
    %1006 = vmatprep.subr.bf16.mxu0 0
    %1007 = vmatpush1.bf16.xpose.msra.mxu0 0
    %1008 = vmatprep.subr.bf16.mxu0 0
    %1009 = vmatpush1.bf16.xpose.msra.mxu0 0
    %1010 = vmatprep.subr.bf16.mxu0 0
    %1011 = vmatpush1.bf16.xpose.msra.mxu0 0
    %1012 = vmatprep.subr.bf16.mxu0 0
    %1013 = vmatpush1.bf16.xpose.msra.mxu0 0
    %1014 = vmatprep.subr.bf16.mxu0 0
    %1015 = vmatpush1.bf16.xpose.msra.mxu0 0
    %1016 = vmatprep.mubr.bf16.mxu0 0
    %1017 = vmatmul.mubr.bf16.gmra.mrb[0].mxu0 %v961
    %v1018 = vpop.f32.mrb[0].mxu0
    %v1019 = vadd.f32 %v87, %v1018
    %v1020 = vpop.f32.mrb[0].mxu0
    %v1021 = vpop.f32.mrb[0].mxu0
    %v1022 = vadd.f32 %v88, %v1021
    %v1023 = vpop.f32.mrb[0].mxu0
    %1024 = vmatprep.mubr.bf16.mxu0 0
    %1025 = vmatmul.mubr.bf16.gmra.mrb[0].mxu0 %v964
    %v1026 = vpop.f32.mrb[0].mxu0
    %v1027 = vadd.f32 %v89, %v1026
    %v1028 = vpop.f32.mrb[0].mxu0
    %v1029 = vpop.f32.mrb[0].mxu0
    %v1030 = vadd.f32 %v90, %v1029
    %v1031 = vpop.f32.mrb[0].mxu0
    %1032 = vmatprep.mubr.bf16.mxu0 0
    %1033 = vmatmul.mubr.bf16.gmra.mrb[0].mxu0 %v967
    %v1034 = vpop.f32.mrb[0].mxu0
    %v1035 = vadd.f32 %v91, %v1034
    %v1036 = vpop.f32.mrb[0].mxu0
    %v1037 = vpop.f32.mrb[0].mxu0
    %v1038 = vadd.f32 %v92, %v1037
    %v1039 = vpop.f32.mrb[0].mxu0
    %1040 = vmatprep.mubr.bf16.mxu0 0
    %1041 = vmatmul.mubr.bf16.gmra.mrb[0].mxu0 %v970
    %v1042 = vpop.f32.mrb[0].mxu0
    %v1043 = vadd.f32 %v93, %v1042
    %v1044 = vpop.f32.mrb[0].mxu0
    %v1045 = vpop.f32.mrb[0].mxu0
    %v1046 = vadd.f32 %v94, %v1045
    %v1047 = vpop.f32.mrb[0].mxu0
    %1048 = vdwg.mxu0
    %v1049 = vmul.f32 %v1019, 1.442695
    %v1050 = vpow.pop %v1049
    %v1051 = vmul.f32 %v1022, 1.442695
    %v1052 = vpow.pop %v1051
    %v1053 = vmul.f32 %v1027, 1.442695
    %v1054 = vpow.pop %v1053
    %v1055 = vmul.f32 %v1030, 1.442695
    %v1056 = vpow.pop %v1055
    %v1057 = vmul.f32 %v1035, 1.442695
    %v1058 = vpow.pop %v1057
    %v1059 = vmul.f32 %v1038, 1.442695
    %v1060 = vpow.pop %v1059
    %v1061 = vmul.f32 %v1043, 1.442695
    %v1062 = vpow.pop %v1061
    %v1063 = vmul.f32 %v1046, 1.442695
    %v1064 = vpow.pop %v1063
    %v1065 = vsel %vm564, %v1050, 0.0
    %1066 = vadd.xlane.f32.xlu0 %v1065
    %v1067 = vpop.xlane.xlu0 %1066
    %v1068 = vsel %vm564, %v1052, 0.0
    %1069 = vadd.xlane.f32.xlu0 %v1068
    %v1070 = vpop.xlane.xlu0 %1069
    %v1071 = vsel %vm564, %v1054, 0.0
    %1072 = vadd.xlane.f32.xlu0 %v1071
    %v1073 = vpop.xlane.xlu0 %1072
    %v1074 = vsel %vm564, %v1056, 0.0
    %1075 = vadd.xlane.f32.xlu0 %v1074
    %v1076 = vpop.xlane.xlu0 %1075
    %v1077 = vsel %vm564, %v1058, 0.0
    %1078 = vadd.xlane.f32.xlu0 %v1077
    %v1079 = vpop.xlane.xlu0 %1078
    %v1080 = vsel %vm564, %v1060, 0.0
    %1081 = vadd.xlane.f32.xlu0 %v1080
    %v1082 = vpop.xlane.xlu0 %1081
    %v1083 = vsel %vm564, %v1062, 0.0
    %1084 = vadd.xlane.f32.xlu0 %v1083
    %v1085 = vpop.xlane.xlu0 %1084
    %v1086 = vsel %vm564, %v1064, 0.0
    %1087 = vadd.xlane.f32.xlu0 %v1086
    %v1088 = vpop.xlane.xlu0 %1087
    %v1089 = vrcp.pop %v1067
    %v1090 = vrcp.pop %v1070
    %v1091 = vrcp.pop %v1073
    %v1092 = vrcp.pop %v1076
    %v1093 = vrcp.pop %v1079
    %v1094 = vrcp.pop %v1082
    %v1095 = vrcp.pop %v1085
    %v1096 = vrcp.pop %v1088
    %v1097 = vmul.f32 %v1050, %v1089
    %v1098 = vmul.f32 %v1052, %v1090
    %v1099 = vmul.f32 %v1054, %v1091
    %v1100 = vmul.f32 %v1056, %v1092
    %v1101 = vmul.f32 %v1058, %v1093
    %v1102 = vmul.f32 %v1060, %v1094
    %v1103 = vmul.f32 %v1062, %v1095
    %v1104 = vmul.f32 %v1064, %v1096
    %v1105 = vpack.c.bf16 %v1098, %v1097
    %v1106 = vpack.c.bf16 %v1100, %v1099
    %v1107 = vpack.c.bf16 %v1102, %v1101
    %v1108 = vpack.c.bf16 %v1104, %v1103
    %1109 = vrot.lane.b32.xlu0 %v446, 64
    %v1110 = vpop.permute.xlu0 %1109
    %1111 = vrot.lane.b32.xlu0 %v447, 64
    %v1112 = vpop.permute.xlu0 %1111
    %1113 = vrot.lane.b32.xlu0 %v448, 64
    %v1114 = vpop.permute.xlu0 %1113
    %1115 = vrot.lane.b32.xlu0 %v449, 64
    %v1116 = vpop.permute.xlu0 %1115
    %v1122 = vsel %vm564, %v1105, 0
    %v1125 = vsel %vm564, %v1106, 0
    %v1128 = vsel %vm564, %v1107, 0
    %v1131 = vsel %vm564, %v1108, 0
    %1133 = vmatprep.subr.bf16.mxu0 0
    %1134 = vmatpush1.bf16.msra.mxu0 %v1110
    %1135 = vmatprep.subr.bf16.mxu0 0
    %1136 = vmatpush1.bf16.msra.mxu0 %v1112
    %1137 = vmatprep.subr.bf16.mxu0 0
    %1138 = vmatpush1.bf16.msra.mxu0 %v1114
    %1139 = vmatprep.subr.bf16.mxu0 0
    %1140 = vmatpush1.bf16.msra.mxu0 %v1116
    %1141 = vmatprep.subr.bf16.mxu0 0
    %1142 = vmatpush1.bf16.msra.mxu0 0
    %1143 = vmatprep.subr.bf16.mxu0 0
    %1144 = vmatpush1.bf16.msra.mxu0 0
    %1145 = vmatprep.subr.bf16.mxu0 0
    %1146 = vmatpush1.bf16.msra.mxu0 0
    %1147 = vmatprep.subr.bf16.mxu0 0
    %1148 = vmatpush1.bf16.msra.mxu0 0
    %1149 = vmatprep.subr.bf16.mxu0 0
    %1150 = vmatpush1.bf16.msra.mxu0 0
    %1151 = vmatprep.subr.bf16.mxu0 0
    %1152 = vmatpush1.bf16.msra.mxu0 0
    %1153 = vmatprep.subr.bf16.mxu0 0
    %1154 = vmatpush1.bf16.msra.mxu0 0
    %1155 = vmatprep.subr.bf16.mxu0 0
    %1156 = vmatpush1.bf16.msra.mxu0 0
    %1157 = vmatprep.subr.bf16.mxu0 0
    %1158 = vmatpush1.bf16.msra.mxu0 0
    %1159 = vmatprep.subr.bf16.mxu0 0
    %1160 = vmatpush1.bf16.msra.mxu0 0
    %1161 = vmatprep.subr.bf16.mxu0 0
    %1162 = vmatpush1.bf16.msra.mxu0 0
    %1163 = vmatprep.subr.bf16.mxu0 0
    %1164 = vmatpush1.bf16.msra.mxu0 0
    %1165 = vmatprep.mubr.bf16.mxu0 0
    %1166 = vmatmul.mubr.bf16.gmra.mrb[0].mxu0 %v1122
    %v1167 = vpop.f32.mrb[0].mxu0
    %v1168 = vadd.f32 0.0, %v1167
    %v1169 = vpop.f32.mrb[0].mxu0
    %v1170 = vpop.f32.mrb[0].mxu0
    %v1171 = vadd.f32 0.0, %v1170
    %v1172 = vpop.f32.mrb[0].mxu0
    %1173 = vmatprep.mubr.bf16.mxu0 0
    %1174 = vmatmul.mubr.bf16.gmra.mrb[0].mxu0 %v1125
    %v1175 = vpop.f32.mrb[0].mxu0
    %v1176 = vadd.f32 0.0, %v1175
    %v1177 = vpop.f32.mrb[0].mxu0
    %v1178 = vpop.f32.mrb[0].mxu0
    %v1179 = vadd.f32 0.0, %v1178
    %v1180 = vpop.f32.mrb[0].mxu0
    %1181 = vmatprep.mubr.bf16.mxu0 0
    %1182 = vmatmul.mubr.bf16.gmra.mrb[0].mxu0 %v1128
    %v1183 = vpop.f32.mrb[0].mxu0
    %v1184 = vadd.f32 0.0, %v1183
    %v1185 = vpop.f32.mrb[0].mxu0
    %v1186 = vpop.f32.mrb[0].mxu0
    %v1187 = vadd.f32 0.0, %v1186
    %v1188 = vpop.f32.mrb[0].mxu0
    %1189 = vmatprep.mubr.bf16.mxu0 0
    %1190 = vmatmul.mubr.bf16.gmra.mrb[0].mxu0 %v1131
    %v1191 = vpop.f32.mrb[0].mxu0
    %v1192 = vadd.f32 0.0, %v1191
    %v1193 = vpop.f32.mrb[0].mxu0
    %v1194 = vpop.f32.mrb[0].mxu0
    %v1195 = vadd.f32 0.0, %v1194
    %v1196 = vpop.f32.mrb[0].mxu0
    %1197 = vdwg.mxu0
    %v1198 = vadd.f32 %v914, %v1168
    %v1199 = vadd.f32 %v917, %v1171
    %v1200 = vadd.f32 %v922, %v1176
    %v1201 = vadd.f32 %v925, %v1179
    %v1202 = vadd.f32 %v930, %v1184
    %v1203 = vadd.f32 %v933, %v1187
    %v1204 = vadd.f32 %v938, %v1192
    %v1205 = vadd.f32 %v941, %v1195
    %1206 = vrot.lane.b32.xlu0 %v337, 104
    %v1207 = vpop.permute.xlu0 %1206
    %1208 = vrot.lane.b32.xlu0 %v338, 104
    %v1209 = vpop.permute.xlu0 %1208
    %1210 = vrot.lane.b32.xlu0 %v339, 104
    %v1211 = vpop.permute.xlu0 %1210
    %1212 = vrot.lane.b32.xlu0 %v340, 104
    %v1213 = vpop.permute.xlu0 %1212
    %1214 = vrot.lane.b32.xlu0 %v337, 72
    %v1215 = vpop.permute.xlu0 %1214
    %1216 = vrot.lane.b32.xlu0 %v338, 72
    %v1217 = vpop.permute.xlu0 %1216
    %1218 = vrot.lane.b32.xlu0 %v339, 72
    %v1219 = vpop.permute.xlu0 %1218
    %1220 = vrot.lane.b32.xlu0 %v340, 72
    %v1221 = vpop.permute.xlu0 %1220
    %v1223 = vsel %vm458, %v1207, 0
    %v1226 = vsel %vm458, %v1209, 0
    %v1229 = vsel %vm458, %v1211, 0
    %v1232 = vsel %vm458, %v1213, 0
    %v1235 = vsel %vm458, %v1215, 0
    %v1238 = vsel %vm458, %v1217, 0
    %v1241 = vsel %vm458, %v1219, 0
    %v1244 = vsel %vm458, %v1221, 0
    %1246 = vmatprep.subr.bf16.mxu0 0
    %1247 = vmatpush1.bf16.xpose.msra.mxu0 %v1235
    %1248 = vmatprep.subr.bf16.mxu0 0
    %1249 = vmatpush1.bf16.xpose.msra.mxu0 %v1238
    %1250 = vmatprep.subr.bf16.mxu0 0
    %1251 = vmatpush1.bf16.xpose.msra.mxu0 %v1241
    %1252 = vmatprep.subr.bf16.mxu0 0
    %1253 = vmatpush1.bf16.xpose.msra.mxu0 %v1244
    %1254 = vmatprep.subr.bf16.mxu0 0
    %1255 = vmatpush1.bf16.xpose.msra.mxu0 0
    %1256 = vmatprep.subr.bf16.mxu0 0
    %1257 = vmatpush1.bf16.xpose.msra.mxu0 0
    %1258 = vmatprep.subr.bf16.mxu0 0
    %1259 = vmatpush1.bf16.xpose.msra.mxu0 0
    %1260 = vmatprep.subr.bf16.mxu0 0
    %1261 = vmatpush1.bf16.xpose.msra.mxu0 0
    %1262 = vmatprep.subr.bf16.mxu0 0
    %1263 = vmatpush1.bf16.xpose.msra.mxu0 0
    %1264 = vmatprep.subr.bf16.mxu0 0
    %1265 = vmatpush1.bf16.xpose.msra.mxu0 0
    %1266 = vmatprep.subr.bf16.mxu0 0
    %1267 = vmatpush1.bf16.xpose.msra.mxu0 0
    %1268 = vmatprep.subr.bf16.mxu0 0
    %1269 = vmatpush1.bf16.xpose.msra.mxu0 0
    %1270 = vmatprep.subr.bf16.mxu0 0
    %1271 = vmatpush1.bf16.xpose.msra.mxu0 0
    %1272 = vmatprep.subr.bf16.mxu0 0
    %1273 = vmatpush1.bf16.xpose.msra.mxu0 0
    %1274 = vmatprep.subr.bf16.mxu0 0
    %1275 = vmatpush1.bf16.xpose.msra.mxu0 0
    %1276 = vmatprep.subr.bf16.mxu0 0
    %1277 = vmatpush1.bf16.xpose.msra.mxu0 0
    %1278 = vmatprep.mubr.bf16.mxu0 0
    %1279 = vmatmul.mubr.bf16.gmra.mrb[0].mxu0 %v1223
    %v1280 = vpop.f32.mrb[0].mxu0
    %v1281 = vadd.f32 %v87, %v1280
    %v1282 = vpop.f32.mrb[0].mxu0
    %v1283 = vpop.f32.mrb[0].mxu0
    %v1284 = vadd.f32 %v88, %v1283
    %v1285 = vpop.f32.mrb[0].mxu0
    %1286 = vmatprep.mubr.bf16.mxu0 0
    %1287 = vmatmul.mubr.bf16.gmra.mrb[0].mxu0 %v1226
    %v1288 = vpop.f32.mrb[0].mxu0
    %v1289 = vadd.f32 %v89, %v1288
    %v1290 = vpop.f32.mrb[0].mxu0
    %v1291 = vpop.f32.mrb[0].mxu0
    %v1292 = vadd.f32 %v90, %v1291
    %v1293 = vpop.f32.mrb[0].mxu0
    %1294 = vmatprep.mubr.bf16.mxu0 0
    %1295 = vmatmul.mubr.bf16.gmra.mrb[0].mxu0 %v1229
    %v1296 = vpop.f32.mrb[0].mxu0
    %v1297 = vadd.f32 %v91, %v1296
    %v1298 = vpop.f32.mrb[0].mxu0
    %v1299 = vpop.f32.mrb[0].mxu0
    %v1300 = vadd.f32 %v92, %v1299
    %v1301 = vpop.f32.mrb[0].mxu0
    %1302 = vmatprep.mubr.bf16.mxu0 0
    %1303 = vmatmul.mubr.bf16.gmra.mrb[0].mxu0 %v1232
    %v1304 = vpop.f32.mrb[0].mxu0
    %v1305 = vadd.f32 %v93, %v1304
    %v1306 = vpop.f32.mrb[0].mxu0
    %v1307 = vpop.f32.mrb[0].mxu0
    %v1308 = vadd.f32 %v94, %v1307
    %v1309 = vpop.f32.mrb[0].mxu0
    %1310 = vdwg.mxu0
    %v1311 = vmul.f32 %v1281, 1.442695
    %v1312 = vpow.pop %v1311
    %v1313 = vmul.f32 %v1284, 1.442695
    %v1314 = vpow.pop %v1313
    %v1315 = vmul.f32 %v1289, 1.442695
    %v1316 = vpow.pop %v1315
    %v1317 = vmul.f32 %v1292, 1.442695
    %v1318 = vpow.pop %v1317
    %v1319 = vmul.f32 %v1297, 1.442695
    %v1320 = vpow.pop %v1319
    %v1321 = vmul.f32 %v1300, 1.442695
    %v1322 = vpow.pop %v1321
    %v1323 = vmul.f32 %v1305, 1.442695
    %v1324 = vpow.pop %v1323
    %v1325 = vmul.f32 %v1308, 1.442695
    %v1326 = vpow.pop %v1325
    %v1327 = vsel %vm564, %v1312, 0.0
    %1328 = vadd.xlane.f32.xlu0 %v1327
    %v1329 = vpop.xlane.xlu0 %1328
    %v1330 = vsel %vm564, %v1314, 0.0
    %1331 = vadd.xlane.f32.xlu0 %v1330
    %v1332 = vpop.xlane.xlu0 %1331
    %v1333 = vsel %vm564, %v1316, 0.0
    %1334 = vadd.xlane.f32.xlu0 %v1333
    %v1335 = vpop.xlane.xlu0 %1334
    %v1336 = vsel %vm564, %v1318, 0.0
    %1337 = vadd.xlane.f32.xlu0 %v1336
    %v1338 = vpop.xlane.xlu0 %1337
    %v1339 = vsel %vm564, %v1320, 0.0
    %1340 = vadd.xlane.f32.xlu0 %v1339
    %v1341 = vpop.xlane.xlu0 %1340
    %v1342 = vsel %vm564, %v1322, 0.0
    %1343 = vadd.xlane.f32.xlu0 %v1342
    %v1344 = vpop.xlane.xlu0 %1343
    %v1345 = vsel %vm564, %v1324, 0.0
    %1346 = vadd.xlane.f32.xlu0 %v1345
    %v1347 = vpop.xlane.xlu0 %1346
    %v1348 = vsel %vm564, %v1326, 0.0
    %1349 = vadd.xlane.f32.xlu0 %v1348
    %v1350 = vpop.xlane.xlu0 %1349
    %v1351 = vrcp.pop %v1329
    %v1352 = vrcp.pop %v1332
    %v1353 = vrcp.pop %v1335
    %v1354 = vrcp.pop %v1338
    %v1355 = vrcp.pop %v1341
    %v1356 = vrcp.pop %v1344
    %v1357 = vrcp.pop %v1347
    %v1358 = vrcp.pop %v1350
    %v1359 = vmul.f32 %v1312, %v1351
    %v1360 = vmul.f32 %v1314, %v1352
    %v1361 = vmul.f32 %v1316, %v1353
    %v1362 = vmul.f32 %v1318, %v1354
    %v1363 = vmul.f32 %v1320, %v1355
    %v1364 = vmul.f32 %v1322, %v1356
    %v1365 = vmul.f32 %v1324, %v1357
    %v1366 = vmul.f32 %v1326, %v1358
    %v1367 = vpack.c.bf16 %v1360, %v1359
    %v1368 = vpack.c.bf16 %v1362, %v1361
    %v1369 = vpack.c.bf16 %v1364, %v1363
    %v1370 = vpack.c.bf16 %v1366, %v1365
    %1371 = vrot.lane.b32.xlu0 %v446, 32
    %v1372 = vpop.permute.xlu0 %1371
    %1373 = vrot.lane.b32.xlu0 %v447, 32
    %v1374 = vpop.permute.xlu0 %1373
    %1375 = vrot.lane.b32.xlu0 %v448, 32
    %v1376 = vpop.permute.xlu0 %1375
    %1377 = vrot.lane.b32.xlu0 %v449, 32
    %v1378 = vpop.permute.xlu0 %1377
    %v1384 = vsel %vm564, %v1367, 0
    %v1387 = vsel %vm564, %v1368, 0
    %v1390 = vsel %vm564, %v1369, 0
    %v1393 = vsel %vm564, %v1370, 0
    %1395 = vmatprep.subr.bf16.mxu0 0
    %1396 = vmatpush1.bf16.msra.mxu0 %v1372
    %1397 = vmatprep.subr.bf16.mxu0 0
    %1398 = vmatpush1.bf16.msra.mxu0 %v1374
    %1399 = vmatprep.subr.bf16.mxu0 0
    %1400 = vmatpush1.bf16.msra.mxu0 %v1376
    %1401 = vmatprep.subr.bf16.mxu0 0
    %1402 = vmatpush1.bf16.msra.mxu0 %v1378
    %1403 = vmatprep.subr.bf16.mxu0 0
    %1404 = vmatpush1.bf16.msra.mxu0 0
    %1405 = vmatprep.subr.bf16.mxu0 0
    %1406 = vmatpush1.bf16.msra.mxu0 0
    %1407 = vmatprep.subr.bf16.mxu0 0
    %1408 = vmatpush1.bf16.msra.mxu0 0
    %1409 = vmatprep.subr.bf16.mxu0 0
    %1410 = vmatpush1.bf16.msra.mxu0 0
    %1411 = vmatprep.subr.bf16.mxu0 0
    %1412 = vmatpush1.bf16.msra.mxu0 0
    %1413 = vmatprep.subr.bf16.mxu0 0
    %1414 = vmatpush1.bf16.msra.mxu0 0
    %1415 = vmatprep.subr.bf16.mxu0 0
    %1416 = vmatpush1.bf16.msra.mxu0 0
    %1417 = vmatprep.subr.bf16.mxu0 0
    %1418 = vmatpush1.bf16.msra.mxu0 0
    %1419 = vmatprep.subr.bf16.mxu0 0
    %1420 = vmatpush1.bf16.msra.mxu0 0
    %1421 = vmatprep.subr.bf16.mxu0 0
    %1422 = vmatpush1.bf16.msra.mxu0 0
    %1423 = vmatprep.subr.bf16.mxu0 0
    %1424 = vmatpush1.bf16.msra.mxu0 0
    %1425 = vmatprep.subr.bf16.mxu0 0
    %1426 = vmatpush1.bf16.msra.mxu0 0
    %1427 = vmatprep.mubr.bf16.mxu0 0
    %1428 = vmatmul.mubr.bf16.gmra.mrb[0].mxu0 %v1384
    %v1429 = vpop.f32.mrb[0].mxu0
    %v1430 = vadd.f32 0.0, %v1429
    %v1431 = vpop.f32.mrb[0].mxu0
    %v1432 = vpop.f32.mrb[0].mxu0
    %v1433 = vadd.f32 0.0, %v1432
    %v1434 = vpop.f32.mrb[0].mxu0
    %1435 = vmatprep.mubr.bf16.mxu0 0
    %1436 = vmatmul.mubr.bf16.gmra.mrb[0].mxu0 %v1387
    %v1437 = vpop.f32.mrb[0].mxu0
    %v1438 = vadd.f32 0.0, %v1437
    %v1439 = vpop.f32.mrb[0].mxu0
    %v1440 = vpop.f32.mrb[0].mxu0
    %v1441 = vadd.f32 0.0, %v1440
    %v1442 = vpop.f32.mrb[0].mxu0
    %1443 = vmatprep.mubr.bf16.mxu0 0
    %1444 = vmatmul.mubr.bf16.gmra.mrb[0].mxu0 %v1390
    %v1445 = vpop.f32.mrb[0].mxu0
    %v1446 = vadd.f32 0.0, %v1445
    %v1447 = vpop.f32.mrb[0].mxu0
    %v1448 = vpop.f32.mrb[0].mxu0
    %v1449 = vadd.f32 0.0, %v1448
    %v1450 = vpop.f32.mrb[0].mxu0
    %1451 = vmatprep.mubr.bf16.mxu0 0
    %1452 = vmatmul.mubr.bf16.gmra.mrb[0].mxu0 %v1393
    %v1453 = vpop.f32.mrb[0].mxu0
    %v1454 = vadd.f32 0.0, %v1453
    %v1455 = vpop.f32.mrb[0].mxu0
    %v1456 = vpop.f32.mrb[0].mxu0
    %v1457 = vadd.f32 0.0, %v1456
    %v1458 = vpop.f32.mrb[0].mxu0
    %1459 = vdwg.mxu0
    %v1460 = vadd.f32 %v1198, %v1430
    %v1461 = vadd.f32 %v1199, %v1433
    %v1462 = vadd.f32 %v1200, %v1438
    %v1463 = vadd.f32 %v1201, %v1441
    %v1464 = vadd.f32 %v1202, %v1446
    %v1465 = vadd.f32 %v1203, %v1449
    %v1466 = vadd.f32 %v1204, %v1454
    %v1467 = vadd.f32 %v1205, %v1457
    %v1468 = vadd.f32 %v79, %v1460
    %v1469 = vadd.f32 %v80, %v1461
    %v1470 = vadd.f32 %v81, %v1462
    %v1471 = vadd.f32 %v82, %v1463
    %v1472 = vadd.f32 %v83, %v1464
    %v1473 = vadd.f32 %v84, %v1465
    %v1474 = vadd.f32 %v85, %v1466
    %v1475 = vadd.f32 %v86, %v1467
    %v1476 = vld [vmem:[%s11] sm:$0x1]
    %v1478 = vlaneseq
    %v1479 = vshrl.u32 %v1478, 7
    %v1480 = vsub.s32 0, %v1479
    %v1481 = vrot.slane %v1476, %v1480
    %v1483 = vadd.f32 %v1468, %v1481
    %v1484 = vadd.f32 %v1469, %v1481
    %v1485 = vadd.f32 %v1470, %v1481
    %v1486 = vadd.f32 %v1471, %v1481
    %v1487 = vadd.f32 %v1472, %v1481
    %v1488 = vadd.f32 %v1473, %v1481
    %v1489 = vadd.f32 %v1474, %v1481
    %v1490 = vadd.f32 %v1475, %v1481
    %v1491 = vsel %vm111, %v1483, 0.0
    %1492 = vadd.xlane.f32.xlu0 %v1491
    %v1493 = vpop.xlane.xlu0 %1492
    %v1494 = vsel %vm111, %v1484, 0.0
    %1495 = vadd.xlane.f32.xlu0 %v1494
    %v1496 = vpop.xlane.xlu0 %1495
    %v1497 = vsel %vm111, %v1485, 0.0
    %1498 = vadd.xlane.f32.xlu0 %v1497
    %v1499 = vpop.xlane.xlu0 %1498
    %v1500 = vsel %vm111, %v1486, 0.0
    %1501 = vadd.xlane.f32.xlu0 %v1500
    %v1502 = vpop.xlane.xlu0 %1501
    %v1503 = vsel %vm111, %v1487, 0.0
    %1504 = vadd.xlane.f32.xlu0 %v1503
    %v1505 = vpop.xlane.xlu0 %1504
    %v1506 = vsel %vm111, %v1488, 0.0
    %1507 = vadd.xlane.f32.xlu0 %v1506
    %v1508 = vpop.xlane.xlu0 %1507
    %v1509 = vsel %vm111, %v1489, 0.0
    %1510 = vadd.xlane.f32.xlu0 %v1509
    %v1511 = vpop.xlane.xlu0 %1510
    %v1512 = vsel %vm111, %v1490, 0.0
    %1513 = vadd.xlane.f32.xlu0 %v1512
    %v1514 = vpop.xlane.xlu0 %1513
    %v1515 = vmul.f32 %v1493, %v136
    %v1516 = vmul.f32 %v1496, %v136
    %v1517 = vmul.f32 %v1499, %v136
    %v1518 = vmul.f32 %v1502, %v136
    %v1519 = vmul.f32 %v1505, %v136
    %v1520 = vmul.f32 %v1508, %v136
    %v1521 = vmul.f32 %v1511, %v136
    %v1522 = vmul.f32 %v1514, %v136
    %v1523 = vmul.f32 %v1483, %v1483
    %v1524 = vmul.f32 %v1484, %v1484
    %v1525 = vmul.f32 %v1485, %v1485
    %v1526 = vmul.f32 %v1486, %v1486
    %v1527 = vmul.f32 %v1487, %v1487
    %v1528 = vmul.f32 %v1488, %v1488
    %v1529 = vmul.f32 %v1489, %v1489
    %v1530 = vmul.f32 %v1490, %v1490
    %v1531 = vsel %vm111, %v1523, 0.0
    %1532 = vadd.xlane.f32.xlu0 %v1531
    %v1533 = vpop.xlane.xlu0 %1532
    %v1534 = vsel %vm111, %v1524, 0.0
    %1535 = vadd.xlane.f32.xlu0 %v1534
    %v1536 = vpop.xlane.xlu0 %1535
    %v1537 = vsel %vm111, %v1525, 0.0
    %1538 = vadd.xlane.f32.xlu0 %v1537
    %v1539 = vpop.xlane.xlu0 %1538
    %v1540 = vsel %vm111, %v1526, 0.0
    %1541 = vadd.xlane.f32.xlu0 %v1540
    %v1542 = vpop.xlane.xlu0 %1541
    %v1543 = vsel %vm111, %v1527, 0.0
    %1544 = vadd.xlane.f32.xlu0 %v1543
    %v1545 = vpop.xlane.xlu0 %1544
    %v1546 = vsel %vm111, %v1528, 0.0
    %1547 = vadd.xlane.f32.xlu0 %v1546
    %v1548 = vpop.xlane.xlu0 %1547
    %v1549 = vsel %vm111, %v1529, 0.0
    %1550 = vadd.xlane.f32.xlu0 %v1549
    %v1551 = vpop.xlane.xlu0 %1550
    %v1552 = vsel %vm111, %v1530, 0.0
    %1553 = vadd.xlane.f32.xlu0 %v1552
    %v1554 = vpop.xlane.xlu0 %1553
    %v1555 = vmul.f32 %v1533, %v136
    %v1556 = vmul.f32 %v1536, %v136
    %v1557 = vmul.f32 %v1539, %v136
    %v1558 = vmul.f32 %v1542, %v136
    %v1559 = vmul.f32 %v1545, %v136
    %v1560 = vmul.f32 %v1548, %v136
    %v1561 = vmul.f32 %v1551, %v136
    %v1562 = vmul.f32 %v1554, %v136
    %v1563 = vsub.f32 %v1483, %v1515
    %v1564 = vsub.f32 %v1484, %v1516
    %v1565 = vsub.f32 %v1485, %v1517
    %v1566 = vsub.f32 %v1486, %v1518
    %v1567 = vsub.f32 %v1487, %v1519
    %v1568 = vsub.f32 %v1488, %v1520
    %v1569 = vsub.f32 %v1489, %v1521
    %v1570 = vsub.f32 %v1490, %v1522
    %v1571 = vmul.f32 %v1515, %v1515
    %v1572 = vmul.f32 %v1516, %v1516
    %v1573 = vmul.f32 %v1517, %v1517
    %v1574 = vmul.f32 %v1518, %v1518
    %v1575 = vmul.f32 %v1519, %v1519
    %v1576 = vmul.f32 %v1520, %v1520
    %v1577 = vmul.f32 %v1521, %v1521
    %v1578 = vmul.f32 %v1522, %v1522
    %v1579 = vsub.f32 %v1555, %v1571
    %v1580 = vsub.f32 %v1556, %v1572
    %v1581 = vsub.f32 %v1557, %v1573
    %v1582 = vsub.f32 %v1558, %v1574
    %v1583 = vsub.f32 %v1559, %v1575
    %v1584 = vsub.f32 %v1560, %v1576
    %v1585 = vsub.f32 %v1561, %v1577
    %v1586 = vsub.f32 %v1562, %v1578
    %v1587 = vadd.f32 %v1579, 1e-05
    %v1588 = vadd.f32 %v1580, 1e-05
    %v1589 = vadd.f32 %v1581, 1e-05
    %v1590 = vadd.f32 %v1582, 1e-05
    %v1591 = vadd.f32 %v1583, 1e-05
    %v1592 = vadd.f32 %v1584, 1e-05
    %v1593 = vadd.f32 %v1585, 1e-05
    %v1594 = vadd.f32 %v1586, 1e-05
    %v1595 = vrsqrt.pop %v1587
    %v1596 = vrsqrt.pop %v1588
    %v1597 = vrsqrt.pop %v1589
    %v1598 = vrsqrt.pop %v1590
    %v1599 = vrsqrt.pop %v1591
    %v1600 = vrsqrt.pop %v1592
    %v1601 = vrsqrt.pop %v1593
    %v1602 = vrsqrt.pop %v1594
    %v1603 = vmul.f32 %v1563, %v1595
    %v1604 = vmul.f32 %v1564, %v1596
    %v1605 = vmul.f32 %v1565, %v1597
    %v1606 = vmul.f32 %v1566, %v1598
    %v1607 = vmul.f32 %v1567, %v1599
    %v1608 = vmul.f32 %v1568, %v1600
    %v1609 = vmul.f32 %v1569, %v1601
    %v1610 = vmul.f32 %v1570, %v1602
    %v1611 = vpack.c.bf16 %v1604, %v1603
    %v1612 = vpack.c.bf16 %v1606, %v1605
    %v1613 = vpack.c.bf16 %v1608, %v1607
    %v1614 = vpack.c.bf16 %v1610, %v1609
    %v1615 = vld [vmem:[%s12] sm:$0xf]
    %v1616 = vld [vmem:[%s12 + $0x4] sm:$0xf]
    %v1617 = vld [vmem:[%s12 + $0x8] sm:$0xf]
    %v1618 = vld [vmem:[%s12 + $0xc] sm:$0xf]
    %v1619 = vld [vmem:[%s13] sm:$0x1]
    %v1621 = vlaneseq
    %v1622 = vshrl.u32 %v1621, 7
    %v1623 = vsub.s32 0, %v1622
    %v1624 = vrot.slane %v1619, %v1623
    %v1630 = vunpack.c.l.b16 %v1615
    %v1631 = vunpack.c.l.b16 %v1616
    %v1632 = vunpack.c.l.b16 %v1617
    %v1633 = vunpack.c.l.b16 %v1618
    %v1634 = vpack.c.b16 %v1631, %v1630
    %v1635 = vpack.c.b16 %v1633, %v1632
    %v1639 = vsel %vm111, %v1611, 0
    %v1642 = vsel %vm111, %v1612, 0
    %v1645 = vsel %vm111, %v1613, 0
    %v1648 = vsel %vm111, %v1614, 0
    %1650 = vmatprep.subr.bf16.mxu0 0
    %1651 = vmatpush1.bf16.msra.mxu0 %v1634
    %1652 = vmatprep.subr.bf16.mxu0 0
    %1653 = vmatpush1.bf16.msra.mxu0 %v1635
    %1654 = vmatprep.subr.bf16.mxu0 0
    %1655 = vmatpush1.bf16.msra.mxu0 0
    %1656 = vmatprep.subr.bf16.mxu0 0
    %1657 = vmatpush1.bf16.msra.mxu0 0
    %1658 = vmatprep.subr.bf16.mxu0 0
    %1659 = vmatpush1.bf16.msra.mxu0 0
    %1660 = vmatprep.subr.bf16.mxu0 0
    %1661 = vmatpush1.bf16.msra.mxu0 0
    %1662 = vmatprep.subr.bf16.mxu0 0
    %1663 = vmatpush1.bf16.msra.mxu0 0
    %1664 = vmatprep.subr.bf16.mxu0 0
    %1665 = vmatpush1.bf16.msra.mxu0 0
    %1666 = vmatprep.subr.bf16.mxu0 0
    %1667 = vmatpush1.bf16.msra.mxu0 0
    %1668 = vmatprep.subr.bf16.mxu0 0
    %1669 = vmatpush1.bf16.msra.mxu0 0
    %1670 = vmatprep.subr.bf16.mxu0 0
    %1671 = vmatpush1.bf16.msra.mxu0 0
    %1672 = vmatprep.subr.bf16.mxu0 0
    %1673 = vmatpush1.bf16.msra.mxu0 0
    %1674 = vmatprep.subr.bf16.mxu0 0
    %1675 = vmatpush1.bf16.msra.mxu0 0
    %1676 = vmatprep.subr.bf16.mxu0 0
    %1677 = vmatpush1.bf16.msra.mxu0 0
    %1678 = vmatprep.subr.bf16.mxu0 0
    %1679 = vmatpush1.bf16.msra.mxu0 0
    %1680 = vmatprep.subr.bf16.mxu0 0
    %1681 = vmatpush1.bf16.msra.mxu0 0
    %1682 = vmatprep.mubr.bf16.mxu0 0
    %1683 = vmatmul.mubr.bf16.gmra.mrb[0].mxu0 %v1639
    %v1684 = vpop.f32.mrb[0].mxu0
    %v1685 = vadd.f32 %v1624, %v1684
    %v1686 = vpop.f32.mrb[0].mxu0
    %v1687 = vpop.f32.mrb[0].mxu0
    %v1688 = vadd.f32 %v1624, %v1687
    %v1689 = vpop.f32.mrb[0].mxu0
    %1690 = vmatprep.mubr.bf16.mxu0 0
    %1691 = vmatmul.mubr.bf16.gmra.mrb[0].mxu0 %v1642
    %v1692 = vpop.f32.mrb[0].mxu0
    %v1693 = vadd.f32 %v1624, %v1692
    %v1694 = vpop.f32.mrb[0].mxu0
    %v1695 = vpop.f32.mrb[0].mxu0
    %v1696 = vadd.f32 %v1624, %v1695
    %v1697 = vpop.f32.mrb[0].mxu0
    %1698 = vmatprep.mubr.bf16.mxu0 0
    %1699 = vmatmul.mubr.bf16.gmra.mrb[0].mxu0 %v1645
    %v1700 = vpop.f32.mrb[0].mxu0
    %v1701 = vadd.f32 %v1624, %v1700
    %v1702 = vpop.f32.mrb[0].mxu0
    %v1703 = vpop.f32.mrb[0].mxu0
    %v1704 = vadd.f32 %v1624, %v1703
    %v1705 = vpop.f32.mrb[0].mxu0
    %1706 = vmatprep.mubr.bf16.mxu0 0
    %1707 = vmatmul.mubr.bf16.gmra.mrb[0].mxu0 %v1648
    %v1708 = vpop.f32.mrb[0].mxu0
    %v1709 = vadd.f32 %v1624, %v1708
    %v1710 = vpop.f32.mrb[0].mxu0
    %v1711 = vpop.f32.mrb[0].mxu0
    %v1712 = vadd.f32 %v1624, %v1711
    %v1713 = vpop.f32.mrb[0].mxu0
    %1714 = vdwg.mxu0
    %v1715 = vmul.f32 %v1685, 1.702
    %v1716 = vmul.f32 %v1688, 1.702
    %v1717 = vmul.f32 %v1693, 1.702
    %v1718 = vmul.f32 %v1696, 1.702
    %v1719 = vmul.f32 %v1701, 1.702
    %v1720 = vmul.f32 %v1704, 1.702
    %v1721 = vmul.f32 %v1709, 1.702
    %v1722 = vmul.f32 %v1712, 1.702
    %v1723 = vxor.u32 %v1715, 2147483648
    %v1724 = vxor.u32 %v1716, 2147483648
    %v1725 = vxor.u32 %v1717, 2147483648
    %v1726 = vxor.u32 %v1718, 2147483648
    %v1727 = vxor.u32 %v1719, 2147483648
    %v1728 = vxor.u32 %v1720, 2147483648
    %v1729 = vxor.u32 %v1721, 2147483648
    %v1730 = vxor.u32 %v1722, 2147483648
    %v1731 = vmul.f32 %v1723, 1.442695
    %v1732 = vpow.pop %v1731
    %v1733 = vmul.f32 %v1724, 1.442695
    %v1734 = vpow.pop %v1733
    %v1735 = vmul.f32 %v1725, 1.442695
    %v1736 = vpow.pop %v1735
    %v1737 = vmul.f32 %v1726, 1.442695
    %v1738 = vpow.pop %v1737
    %v1739 = vmul.f32 %v1727, 1.442695
    %v1740 = vpow.pop %v1739
    %v1741 = vmul.f32 %v1728, 1.442695
    %v1742 = vpow.pop %v1741
    %v1743 = vmul.f32 %v1729, 1.442695
    %v1744 = vpow.pop %v1743
    %v1745 = vmul.f32 %v1730, 1.442695
    %v1746 = vpow.pop %v1745
    %v1747 = vadd.f32 %v1732, 1.0
    %v1748 = vadd.f32 %v1734, 1.0
    %v1749 = vadd.f32 %v1736, 1.0
    %v1750 = vadd.f32 %v1738, 1.0
    %v1751 = vadd.f32 %v1740, 1.0
    %v1752 = vadd.f32 %v1742, 1.0
    %v1753 = vadd.f32 %v1744, 1.0
    %v1754 = vadd.f32 %v1746, 1.0
    %v1755 = vrcp.pop %v1747
    %v1756 = vmul.f32 1.0, %v1755
    %v1757 = vrcp.pop %v1748
    %v1758 = vmul.f32 1.0, %v1757
    %v1759 = vrcp.pop %v1749
    %v1760 = vmul.f32 1.0, %v1759
    %v1761 = vrcp.pop %v1750
    %v1762 = vmul.f32 1.0, %v1761
    %v1763 = vrcp.pop %v1751
    %v1764 = vmul.f32 1.0, %v1763
    %v1765 = vrcp.pop %v1752
    %v1766 = vmul.f32 1.0, %v1765
    %v1767 = vrcp.pop %v1753
    %v1768 = vmul.f32 1.0, %v1767
    %v1769 = vrcp.pop %v1754
    %v1770 = vmul.f32 1.0, %v1769
    %v1771 = vmul.f32 %v1685, %v1756
    %v1772 = vmul.f32 %v1688, %v1758
    %v1773 = vmul.f32 %v1693, %v1760
    %v1774 = vmul.f32 %v1696, %v1762
    %v1775 = vmul.f32 %v1701, %v1764
    %v1776 = vmul.f32 %v1704, %v1766
    %v1777 = vmul.f32 %v1709, %v1768
    %v1778 = vmul.f32 %v1712, %v1770
    %v1779 = vpack.c.bf16 %v1772, %v1771
    %v1780 = vpack.c.bf16 %v1774, %v1773
    %v1781 = vpack.c.bf16 %v1776, %v1775
    %v1782 = vpack.c.bf16 %v1778, %v1777
    %v1783 = vld [vmem:[%s14] sm:$0xf]
    %v1784 = vld [vmem:[%s14 + $0x4] sm:$0xf]
    %v1785 = vld [vmem:[%s14 + $0x8] sm:$0xf]
    %v1786 = vld [vmem:[%s14 + $0xc] sm:$0xf]
    %v1787 = vld [vmem:[%s14 + $0x10] sm:$0xf]
    %v1788 = vld [vmem:[%s14 + $0x14] sm:$0xf]
    %v1789 = vld [vmem:[%s14 + $0x18] sm:$0xf]
    %v1790 = vld [vmem:[%s14 + $0x1c] sm:$0xf]
    %v1791 = vld [vmem:[%s14 + $0x20] sm:$0xf]
    %v1792 = vld [vmem:[%s14 + $0x24] sm:$0xf]
    %v1793 = vld [vmem:[%s14 + $0x28] sm:$0xf]
    %v1794 = vld [vmem:[%s14 + $0x2c] sm:$0xf]
    %v1795 = vld [vmem:[%s14 + $0x30] sm:$0xf]
    %v1796 = vld [vmem:[%s14 + $0x34] sm:$0xf]
    %v1797 = vld [vmem:[%s14 + $0x38] sm:$0xf]
    %v1798 = vld [vmem:[%s14 + $0x3c] sm:$0xf]
    %v1815 = vunpack.c.l.b16 %v1783
    %v1816 = vunpack.c.l.b16 %v1784
    %v1817 = vunpack.c.l.b16 %v1785
    %v1818 = vunpack.c.l.b16 %v1786
    %v1819 = vunpack.c.l.b16 %v1787
    %v1820 = vunpack.c.l.b16 %v1788
    %v1821 = vunpack.c.l.b16 %v1789
    %v1822 = vunpack.c.l.b16 %v1790
    %v1823 = vunpack.c.l.b16 %v1791
    %v1824 = vunpack.c.l.b16 %v1792
    %v1825 = vunpack.c.l.b16 %v1793
    %v1826 = vunpack.c.l.b16 %v1794
    %v1827 = vunpack.c.l.b16 %v1795
    %v1828 = vunpack.c.l.b16 %v1796
    %v1829 = vunpack.c.l.b16 %v1797
    %v1830 = vunpack.c.l.b16 %v1798
    %v1831 = vpack.c.b16 %v1816, %v1815
    %v1832 = vpack.c.b16 %v1818, %v1817
    %v1833 = vpack.c.b16 %v1820, %v1819
    %v1834 = vpack.c.b16 %v1822, %v1821
    %v1835 = vpack.c.b16 %v1824, %v1823
    %v1836 = vpack.c.b16 %v1826, %v1825
    %v1837 = vpack.c.b16 %v1828, %v1827
    %v1838 = vpack.c.b16 %v1830, %v1829
    %1847 = vmatprep.subr.bf16.mxu0 0
    %1848 = vmatpush1.bf16.msra.mxu0 %v1831
    %1849 = vmatprep.subr.bf16.mxu0 0
    %1850 = vmatpush1.bf16.msra.mxu0 %v1832
    %1851 = vmatprep.subr.bf16.mxu0 0
    %1852 = vmatpush1.bf16.msra.mxu0 %v1833
    %1853 = vmatprep.subr.bf16.mxu0 0
    %1854 = vmatpush1.bf16.msra.mxu0 %v1834
    %1855 = vmatprep.subr.bf16.mxu0 0
    %1856 = vmatpush1.bf16.msra.mxu0 %v1835
    %1857 = vmatprep.subr.bf16.mxu0 0
    %1858 = vmatpush1.bf16.msra.mxu0 %v1836
    %1859 = vmatprep.subr.bf16.mxu0 0
    %1860 = vmatpush1.bf16.msra.mxu0 %v1837
    %1861 = vmatprep.subr.bf16.mxu0 0
    %1862 = vmatpush1.bf16.msra.mxu0 %v1838
    %1863 = vmatprep.subr.bf16.mxu0 0
    %1864 = vmatpush1.bf16.msra.mxu0 0
    %1865 = vmatprep.subr.bf16.mxu0 0
    %1866 = vmatpush1.bf16.msra.mxu0 0
    %1867 = vmatprep.subr.bf16.mxu0 0
    %1868 = vmatpush1.bf16.msra.mxu0 0
    %1869 = vmatprep.subr.bf16.mxu0 0
    %1870 = vmatpush1.bf16.msra.mxu0 0
    %1871 = vmatprep.subr.bf16.mxu0 0
    %1872 = vmatpush1.bf16.msra.mxu0 0
    %1873 = vmatprep.subr.bf16.mxu0 0
    %1874 = vmatpush1.bf16.msra.mxu0 0
    %1875 = vmatprep.subr.bf16.mxu0 0
    %1876 = vmatpush1.bf16.msra.mxu0 0
    %1877 = vmatprep.subr.bf16.mxu0 0
    %1878 = vmatpush1.bf16.msra.mxu0 0
    %1879 = vmatprep.mubr.bf16.mxu0 0
    %1880 = vmatmul.mubr.bf16.gmra.mrb[0].mxu0 %v1779
    %v1881 = vpop.f32.mrb[0].mxu0
    %v1882 = vadd.f32 0.0, %v1881
    %v1883 = vpop.f32.mrb[0].mxu0
    %v1884 = vpop.f32.mrb[0].mxu0
    %v1885 = vadd.f32 0.0, %v1884
    %v1886 = vpop.f32.mrb[0].mxu0
    %1887 = vmatprep.mubr.bf16.mxu0 0
    %1888 = vmatmul.mubr.bf16.gmra.mrb[0].mxu0 %v1780
    %v1889 = vpop.f32.mrb[0].mxu0
    %v1890 = vadd.f32 0.0, %v1889
    %v1891 = vpop.f32.mrb[0].mxu0
    %v1892 = vpop.f32.mrb[0].mxu0
    %v1893 = vadd.f32 0.0, %v1892
    %v1894 = vpop.f32.mrb[0].mxu0
    %1895 = vmatprep.mubr.bf16.mxu0 0
    %1896 = vmatmul.mubr.bf16.gmra.mrb[0].mxu0 %v1781
    %v1897 = vpop.f32.mrb[0].mxu0
    %v1898 = vadd.f32 0.0, %v1897
    %v1899 = vpop.f32.mrb[0].mxu0
    %v1900 = vpop.f32.mrb[0].mxu0
    %v1901 = vadd.f32 0.0, %v1900
    %v1902 = vpop.f32.mrb[0].mxu0
    %1903 = vmatprep.mubr.bf16.mxu0 0
    %1904 = vmatmul.mubr.bf16.gmra.mrb[0].mxu0 %v1782
    %v1905 = vpop.f32.mrb[0].mxu0
    %v1906 = vadd.f32 0.0, %v1905
    %v1907 = vpop.f32.mrb[0].mxu0
    %v1908 = vpop.f32.mrb[0].mxu0
    %v1909 = vadd.f32 0.0, %v1908
    %v1910 = vpop.f32.mrb[0].mxu0
    %1911 = vdwg.mxu0
    %v1912 = vadd.f32 %v1483, %v1882
    %v1913 = vadd.f32 %v1484, %v1885
    %v1914 = vadd.f32 %v1485, %v1890
    %v1915 = vadd.f32 %v1486, %v1893
    %v1916 = vadd.f32 %v1487, %v1898
    %v1917 = vadd.f32 %v1488, %v1901
    %v1918 = vadd.f32 %v1489, %v1906
    %v1919 = vadd.f32 %v1490, %v1909
    %v1920 = vld [vmem:[%s15] sm:$0x1]
    %v1922 = vlaneseq
    %v1923 = vshrl.u32 %v1922, 7
    %v1924 = vsub.s32 0, %v1923
    %v1925 = vrot.slane %v1920, %v1924
    %v1927 = vadd.f32 %v1912, %v1925
    %v1928 = vadd.f32 %v1913, %v1925
    %v1929 = vadd.f32 %v1914, %v1925
    %v1930 = vadd.f32 %v1915, %v1925
    %v1931 = vadd.f32 %v1916, %v1925
    %v1932 = vadd.f32 %v1917, %v1925
    %v1933 = vadd.f32 %v1918, %v1925
    %v1934 = vadd.f32 %v1919, %v1925
    %v1935 = vmul.f32 %v1927, %v103
    %v1936 = vmul.f32 %v1928, %v104
    %v1937 = vmul.f32 %v1929, %v105
    %v1938 = vmul.f32 %v1930, %v106
    %v1939 = vmul.f32 %v1931, %v107
    %v1940 = vmul.f32 %v1932, %v108
    %v1941 = vmul.f32 %v1933, %v109
    %v1942 = vmul.f32 %v1934, %v110
    %v1943 = vld [vmem:[%s2] sm:$0xf]
    %vm1944 = vcmask 31744
    %v1946 = vsel %vm1944, %v95, 0
    %v1949 = vsel %vm1944, %v96, 0
    %v1952 = vsel %vm1944, %v97, 0
    %v1955 = vsel %vm1944, %v98, 0
    %v1958 = vsel %vm1944, %v99, 0
    %v1961 = vsel %vm1944, %v100, 0
    %v1964 = vsel %vm1944, %v101, 0
    %v1967 = vsel %vm1944, %v102, 0
    %vm1969 = vcmask 1043456
    %v1971 = vsel %vm1969, %v1943, 0
    %1973 = vmatprep.subr.mxu0 0.0
    %1974 = vmatpush1.msra.mxu0 %v1971
    %1975 = vmatprep.subr.mxu0 0.0
    %1976 = vmatpush1.msra.mxu0 0.0
    %1977 = vmatprep.subr.mxu0 0.0
    %1978 = vmatpush1.msra.mxu0 0.0
    %1979 = vmatprep.subr.mxu0 0.0
    %1980 = vmatpush1.msra.mxu0 0.0
    %1981 = vmatprep.subr.mxu0 0.0
    %1982 = vmatpush1.msra.mxu0 0.0
    %1983 = vmatprep.subr.mxu0 0.0
    %1984 = vmatpush1.msra.mxu0 0.0
    %1985 = vmatprep.subr.mxu0 0.0
    %1986 = vmatpush1.msra.mxu0 0.0
    %1987 = vmatprep.subr.mxu0 0.0
    %1988 = vmatpush1.msra.mxu0 0.0
    %1989 = vmatprep.subr.mxu0 0.0
    %1990 = vmatpush1.msra.mxu0 0.0
    %1991 = vmatprep.subr.mxu0 0.0
    %1992 = vmatpush1.msra.mxu0 0.0
    %1993 = vmatprep.subr.mxu0 0.0
    %1994 = vmatpush1.msra.mxu0 0.0
    %1995 = vmatprep.subr.mxu0 0.0
    %1996 = vmatpush1.msra.mxu0 0.0
    %1997 = vmatprep.subr.mxu0 0.0
    %1998 = vmatpush1.msra.mxu0 0.0
    %1999 = vmatprep.subr.mxu0 0.0
    %2000 = vmatpush1.msra.mxu0 0.0
    %2001 = vmatprep.subr.mxu0 0.0
    %2002 = vmatpush1.msra.mxu0 0.0
    %2003 = vmatprep.subr.mxu0 0.0
    %2004 = vmatpush1.msra.mxu0 0.0
    %2005 = vmatprep.subr.mxu0 0.0
    %2006 = vmatpush1.msra.mxu0 0.0
    %2007 = vmatprep.subr.mxu0 0.0
    %2008 = vmatpush1.msra.mxu0 0.0
    %2009 = vmatprep.subr.mxu0 0.0
    %2010 = vmatpush1.msra.mxu0 0.0
    %2011 = vmatprep.subr.mxu0 0.0
    %2012 = vmatpush1.msra.mxu0 0.0
    %2013 = vmatprep.subr.mxu0 0.0
    %2014 = vmatpush1.msra.mxu0 0.0
    %2015 = vmatprep.subr.mxu0 0.0
    %2016 = vmatpush1.msra.mxu0 0.0
    %2017 = vmatprep.subr.mxu0 0.0
    %2018 = vmatpush1.msra.mxu0 0.0
    %2019 = vmatprep.subr.mxu0 0.0
    %2020 = vmatpush1.msra.mxu0 0.0
    %2021 = vmatprep.subr.mxu0 0.0
    %2022 = vmatpush1.msra.mxu0 0.0
    %2023 = vmatprep.subr.mxu0 0.0
    %2024 = vmatpush1.msra.mxu0 0.0
    %2025 = vmatprep.subr.mxu0 0.0
    %2026 = vmatpush1.msra.mxu0 0.0
    %2027 = vmatprep.subr.mxu0 0.0
    %2028 = vmatpush1.msra.mxu0 0.0
    %2029 = vmatprep.subr.mxu0 0.0
    %2030 = vmatpush1.msra.mxu0 0.0
    %2031 = vmatprep.subr.mxu0 0.0
    %2032 = vmatpush1.msra.mxu0 0.0
    %2033 = vmatprep.subr.mxu0 0.0
    %2034 = vmatpush1.msra.mxu0 0.0
    %2035 = vmatprep.subr.mxu0 0.0
    %2036 = vmatpush1.msra.mxu0 0.0
    %2037 = vmatprep.mubr.f32.mxu0 0.0
    %2038 = vmatmul.mubr.f32.gmra.mrb[0].mxu0 %v1946
    %v2039 = vpop.f32.mrb[0].mxu0
    %v2040 = vadd.f32 0.0, %v2039
    %v2041 = vpop.f32.mrb[0].mxu0
    %2042 = vmatprep.mubr.f32.mxu0 0.0
    %2043 = vmatmul.mubr.f32.gmra.mrb[0].mxu0 %v1949
    %v2044 = vpop.f32.mrb[0].mxu0
    %v2045 = vadd.f32 0.0, %v2044
    %v2046 = vpop.f32.mrb[0].mxu0
    %2047 = vmatprep.mubr.f32.mxu0 0.0
    %2048 = vmatmul.mubr.f32.gmra.mrb[0].mxu0 %v1952
    %v2049 = vpop.f32.mrb[0].mxu0
    %v2050 = vadd.f32 0.0, %v2049
    %v2051 = vpop.f32.mrb[0].mxu0
    %2052 = vmatprep.mubr.f32.mxu0 0.0
    %2053 = vmatmul.mubr.f32.gmra.mrb[0].mxu0 %v1955
    %v2054 = vpop.f32.mrb[0].mxu0
    %v2055 = vadd.f32 0.0, %v2054
    %v2056 = vpop.f32.mrb[0].mxu0
    %2057 = vmatprep.mubr.f32.mxu0 0.0
    %2058 = vmatmul.mubr.f32.gmra.mrb[0].mxu0 %v1958
    %v2059 = vpop.f32.mrb[0].mxu0
    %v2060 = vadd.f32 0.0, %v2059
    %v2061 = vpop.f32.mrb[0].mxu0
    %2062 = vmatprep.mubr.f32.mxu0 0.0
    %2063 = vmatmul.mubr.f32.gmra.mrb[0].mxu0 %v1961
    %v2064 = vpop.f32.mrb[0].mxu0
    %v2065 = vadd.f32 0.0, %v2064
    %v2066 = vpop.f32.mrb[0].mxu0
    %2067 = vmatprep.mubr.f32.mxu0 0.0
    %2068 = vmatmul.mubr.f32.gmra.mrb[0].mxu0 %v1964
    %v2069 = vpop.f32.mrb[0].mxu0
    %v2070 = vadd.f32 0.0, %v2069
    %v2071 = vpop.f32.mrb[0].mxu0
    %2072 = vmatprep.mubr.f32.mxu0 0.0
    %2073 = vmatmul.mubr.f32.gmra.mrb[0].mxu0 %v1967
    %v2074 = vpop.f32.mrb[0].mxu0
    %v2075 = vadd.f32 0.0, %v2074
    %v2076 = vpop.f32.mrb[0].mxu0
    %2077 = vdwg.mxu0
    %v2078 = vadd.f32 %v1935, %v2040
    %v2079 = vadd.f32 %v1936, %v2045
    %v2080 = vadd.f32 %v1937, %v2050
    %v2081 = vadd.f32 %v1938, %v2055
    %v2082 = vadd.f32 %v1939, %v2060
    %v2083 = vadd.f32 %v1940, %v2065
    %v2084 = vadd.f32 %v1941, %v2070
    %v2085 = vadd.f32 %v1942, %v2075
    %v2086 = vsel %vm111, %v2078, 0.0
    %2087 = vadd.xlane.f32.xlu0 %v2086
    %v2088 = vpop.xlane.xlu0 %2087
    %v2089 = vsel %vm111, %v2079, 0.0
    %2090 = vadd.xlane.f32.xlu0 %v2089
    %v2091 = vpop.xlane.xlu0 %2090
    %v2092 = vsel %vm111, %v2080, 0.0
    %2093 = vadd.xlane.f32.xlu0 %v2092
    %v2094 = vpop.xlane.xlu0 %2093
    %v2095 = vsel %vm111, %v2081, 0.0
    %2096 = vadd.xlane.f32.xlu0 %v2095
    %v2097 = vpop.xlane.xlu0 %2096
    %v2098 = vsel %vm111, %v2082, 0.0
    %2099 = vadd.xlane.f32.xlu0 %v2098
    %v2100 = vpop.xlane.xlu0 %2099
    %v2101 = vsel %vm111, %v2083, 0.0
    %2102 = vadd.xlane.f32.xlu0 %v2101
    %v2103 = vpop.xlane.xlu0 %2102
    %v2104 = vsel %vm111, %v2084, 0.0
    %2105 = vadd.xlane.f32.xlu0 %v2104
    %v2106 = vpop.xlane.xlu0 %2105
    %v2107 = vsel %vm111, %v2085, 0.0
    %2108 = vadd.xlane.f32.xlu0 %v2107
    %v2109 = vpop.xlane.xlu0 %2108
    %v2110 = vmul.f32 %v2088, %v136
    %v2111 = vmul.f32 %v2091, %v136
    %v2112 = vmul.f32 %v2094, %v136
    %v2113 = vmul.f32 %v2097, %v136
    %v2114 = vmul.f32 %v2100, %v136
    %v2115 = vmul.f32 %v2103, %v136
    %v2116 = vmul.f32 %v2106, %v136
    %v2117 = vmul.f32 %v2109, %v136
    %v2118 = vmul.f32 %v2078, %v2078
    %v2119 = vmul.f32 %v2079, %v2079
    %v2120 = vmul.f32 %v2080, %v2080
    %v2121 = vmul.f32 %v2081, %v2081
    %v2122 = vmul.f32 %v2082, %v2082
    %v2123 = vmul.f32 %v2083, %v2083
    %v2124 = vmul.f32 %v2084, %v2084
    %v2125 = vmul.f32 %v2085, %v2085
    %v2126 = vsel %vm111, %v2118, 0.0
    %2127 = vadd.xlane.f32.xlu0 %v2126
    %v2128 = vpop.xlane.xlu0 %2127
    %v2129 = vsel %vm111, %v2119, 0.0
    %2130 = vadd.xlane.f32.xlu0 %v2129
    %v2131 = vpop.xlane.xlu0 %2130
    %v2132 = vsel %vm111, %v2120, 0.0
    %2133 = vadd.xlane.f32.xlu0 %v2132
    %v2134 = vpop.xlane.xlu0 %2133
    %v2135 = vsel %vm111, %v2121, 0.0
    %2136 = vadd.xlane.f32.xlu0 %v2135
    %v2137 = vpop.xlane.xlu0 %2136
    %v2138 = vsel %vm111, %v2122, 0.0
    %2139 = vadd.xlane.f32.xlu0 %v2138
    %v2140 = vpop.xlane.xlu0 %2139
    %v2141 = vsel %vm111, %v2123, 0.0
    %2142 = vadd.xlane.f32.xlu0 %v2141
    %v2143 = vpop.xlane.xlu0 %2142
    %v2144 = vsel %vm111, %v2124, 0.0
    %2145 = vadd.xlane.f32.xlu0 %v2144
    %v2146 = vpop.xlane.xlu0 %2145
    %v2147 = vsel %vm111, %v2125, 0.0
    %2148 = vadd.xlane.f32.xlu0 %v2147
    %v2149 = vpop.xlane.xlu0 %2148
    %v2150 = vmul.f32 %v2128, %v136
    %v2151 = vmul.f32 %v2131, %v136
    %v2152 = vmul.f32 %v2134, %v136
    %v2153 = vmul.f32 %v2137, %v136
    %v2154 = vmul.f32 %v2140, %v136
    %v2155 = vmul.f32 %v2143, %v136
    %v2156 = vmul.f32 %v2146, %v136
    %v2157 = vmul.f32 %v2149, %v136
    %v2158 = vsub.f32 %v2078, %v2110
    %v2159 = vsub.f32 %v2079, %v2111
    %v2160 = vsub.f32 %v2080, %v2112
    %v2161 = vsub.f32 %v2081, %v2113
    %v2162 = vsub.f32 %v2082, %v2114
    %v2163 = vsub.f32 %v2083, %v2115
    %v2164 = vsub.f32 %v2084, %v2116
    %v2165 = vsub.f32 %v2085, %v2117
    %v2166 = vmul.f32 %v2110, %v2110
    %v2167 = vmul.f32 %v2111, %v2111
    %v2168 = vmul.f32 %v2112, %v2112
    %v2169 = vmul.f32 %v2113, %v2113
    %v2170 = vmul.f32 %v2114, %v2114
    %v2171 = vmul.f32 %v2115, %v2115
    %v2172 = vmul.f32 %v2116, %v2116
    %v2173 = vmul.f32 %v2117, %v2117
    %v2174 = vsub.f32 %v2150, %v2166
    %v2175 = vsub.f32 %v2151, %v2167
    %v2176 = vsub.f32 %v2152, %v2168
    %v2177 = vsub.f32 %v2153, %v2169
    %v2178 = vsub.f32 %v2154, %v2170
    %v2179 = vsub.f32 %v2155, %v2171
    %v2180 = vsub.f32 %v2156, %v2172
    %v2181 = vsub.f32 %v2157, %v2173
    %v2182 = vadd.f32 %v2174, 1e-05
    %v2183 = vadd.f32 %v2175, 1e-05
    %v2184 = vadd.f32 %v2176, 1e-05
    %v2185 = vadd.f32 %v2177, 1e-05
    %v2186 = vadd.f32 %v2178, 1e-05
    %v2187 = vadd.f32 %v2179, 1e-05
    %v2188 = vadd.f32 %v2180, 1e-05
    %v2189 = vadd.f32 %v2181, 1e-05
    %v2190 = vrsqrt.pop %v2182
    %v2191 = vrsqrt.pop %v2183
    %v2192 = vrsqrt.pop %v2184
    %v2193 = vrsqrt.pop %v2185
    %v2194 = vrsqrt.pop %v2186
    %v2195 = vrsqrt.pop %v2187
    %v2196 = vrsqrt.pop %v2188
    %v2197 = vrsqrt.pop %v2189
    %v2198 = vmul.f32 %v2158, %v2190
    %v2199 = vmul.f32 %v2159, %v2191
    %v2200 = vmul.f32 %v2160, %v2192
    %v2201 = vmul.f32 %v2161, %v2193
    %v2202 = vmul.f32 %v2162, %v2194
    %v2203 = vmul.f32 %v2163, %v2195
    %v2204 = vmul.f32 %v2164, %v2196
    %v2205 = vmul.f32 %v2165, %v2197
    %v2206 = vpack.c.bf16 %v2199, %v2198
    %v2207 = vpack.c.bf16 %v2201, %v2200
    %v2208 = vpack.c.bf16 %v2203, %v2202
    %v2209 = vpack.c.bf16 %v2205, %v2204
    %s2210 = scalar_lea.vmem %s8, 16
    %v2211 = vld [vmem:[%s2210] sm:$0xf]
    %v2212 = vld [vmem:[%s2210 + $0x4] sm:$0xf]
    %v2213 = vld [vmem:[%s2210 + $0x8] sm:$0xf]
    %v2214 = vld [vmem:[%s2210 + $0xc] sm:$0xf]
    %s2215 = scalar_lea.vmem %s9, 1
    %v2216 = vld [vmem:[%s2215] sm:$0x1]
    %v2218 = vlaneseq
    %v2219 = vshrl.u32 %v2218, 7
    %v2220 = vsub.s32 0, %v2219
    %v2221 = vrot.slane %v2216, %v2220
    %v2227 = vunpack.c.l.b16 %v2211
    %v2228 = vunpack.c.l.b16 %v2212
    %v2229 = vunpack.c.l.b16 %v2213
    %v2230 = vunpack.c.l.b16 %v2214
    %v2231 = vpack.c.b16 %v2228, %v2227
    %v2232 = vpack.c.b16 %v2230, %v2229
    %v2236 = vsel %vm111, %v2206, 0
    %v2239 = vsel %vm111, %v2207, 0
    %v2242 = vsel %vm111, %v2208, 0
    %v2245 = vsel %vm111, %v2209, 0
    %2247 = vmatprep.subr.bf16.mxu0 0
    %2248 = vmatpush1.bf16.msra.mxu0 %v2231
    %2249 = vmatprep.subr.bf16.mxu0 0
    %2250 = vmatpush1.bf16.msra.mxu0 %v2232
    %2251 = vmatprep.subr.bf16.mxu0 0
    %2252 = vmatpush1.bf16.msra.mxu0 0
    %2253 = vmatprep.subr.bf16.mxu0 0
    %2254 = vmatpush1.bf16.msra.mxu0 0
    %2255 = vmatprep.subr.bf16.mxu0 0
    %2256 = vmatpush1.bf16.msra.mxu0 0
    %2257 = vmatprep.subr.bf16.mxu0 0
    %2258 = vmatpush1.bf16.msra.mxu0 0
    %2259 = vmatprep.subr.bf16.mxu0 0
    %2260 = vmatpush1.bf16.msra.mxu0 0
    %2261 = vmatprep.subr.bf16.mxu0 0
    %2262 = vmatpush1.bf16.msra.mxu0 0
    %2263 = vmatprep.subr.bf16.mxu0 0
    %2264 = vmatpush1.bf16.msra.mxu0 0
    %2265 = vmatprep.subr.bf16.mxu0 0
    %2266 = vmatpush1.bf16.msra.mxu0 0
    %2267 = vmatprep.subr.bf16.mxu0 0
    %2268 = vmatpush1.bf16.msra.mxu0 0
    %2269 = vmatprep.subr.bf16.mxu0 0
    %2270 = vmatpush1.bf16.msra.mxu0 0
    %2271 = vmatprep.subr.bf16.mxu0 0
    %2272 = vmatpush1.bf16.msra.mxu0 0
    %2273 = vmatprep.subr.bf16.mxu0 0
    %2274 = vmatpush1.bf16.msra.mxu0 0
    %2275 = vmatprep.subr.bf16.mxu0 0
    %2276 = vmatpush1.bf16.msra.mxu0 0
    %2277 = vmatprep.subr.bf16.mxu0 0
    %2278 = vmatpush1.bf16.msra.mxu0 0
    %2279 = vmatprep.mubr.bf16.mxu0 0
    %2280 = vmatmul.mubr.bf16.gmra.mrb[0].mxu0 %v2236
    %v2281 = vpop.f32.mrb[0].mxu0
    %v2282 = vadd.f32 %v2221, %v2281
    %v2283 = vpop.f32.mrb[0].mxu0
    %v2284 = vpop.f32.mrb[0].mxu0
    %v2285 = vadd.f32 %v2221, %v2284
    %v2286 = vpop.f32.mrb[0].mxu0
    %2287 = vmatprep.mubr.bf16.mxu0 0
    %2288 = vmatmul.mubr.bf16.gmra.mrb[0].mxu0 %v2239
    %v2289 = vpop.f32.mrb[0].mxu0
    %v2290 = vadd.f32 %v2221, %v2289
    %v2291 = vpop.f32.mrb[0].mxu0
    %v2292 = vpop.f32.mrb[0].mxu0
    %v2293 = vadd.f32 %v2221, %v2292
    %v2294 = vpop.f32.mrb[0].mxu0
    %2295 = vmatprep.mubr.bf16.mxu0 0
    %2296 = vmatmul.mubr.bf16.gmra.mrb[0].mxu0 %v2242
    %v2297 = vpop.f32.mrb[0].mxu0
    %v2298 = vadd.f32 %v2221, %v2297
    %v2299 = vpop.f32.mrb[0].mxu0
    %v2300 = vpop.f32.mrb[0].mxu0
    %v2301 = vadd.f32 %v2221, %v2300
    %v2302 = vpop.f32.mrb[0].mxu0
    %2303 = vmatprep.mubr.bf16.mxu0 0
    %2304 = vmatmul.mubr.bf16.gmra.mrb[0].mxu0 %v2245
    %v2305 = vpop.f32.mrb[0].mxu0
    %v2306 = vadd.f32 %v2221, %v2305
    %v2307 = vpop.f32.mrb[0].mxu0
    %v2308 = vpop.f32.mrb[0].mxu0
    %v2309 = vadd.f32 %v2221, %v2308
    %v2310 = vpop.f32.mrb[0].mxu0
    %2311 = vdwg.mxu0
    %v2312 = vpack.c.bf16 %v2285, %v2282
    %v2313 = vpack.c.bf16 %v2293, %v2290
    %v2314 = vpack.c.bf16 %v2301, %v2298
    %v2315 = vpack.c.bf16 %v2309, %v2306
    %s2316 = scalar_lea.vmem %s10, 16
    %v2317 = vld [vmem:[%s2316] sm:$0xf]
    %v2318 = vld [vmem:[%s2316 + $0x4] sm:$0xf]
    %v2319 = vld [vmem:[%s2316 + $0x8] sm:$0xf]
    %v2320 = vld [vmem:[%s2316 + $0xc] sm:$0xf]
    %2325 = vrot.lane.b32.xlu0 %v2312, 64
    %v2326 = vpop.permute.xlu0 %2325
    %2327 = vrot.lane.b32.xlu0 %v2313, 64
    %v2328 = vpop.permute.xlu0 %2327
    %2329 = vrot.lane.b32.xlu0 %v2314, 64
    %v2330 = vpop.permute.xlu0 %2329
    %2331 = vrot.lane.b32.xlu0 %v2315, 64
    %v2332 = vpop.permute.xlu0 %2331
    %v2337 = vunpack.c.l.b16 %v2317
    %v2338 = vunpack.c.l.b16 %v2318
    %v2339 = vunpack.c.l.b16 %v2319
    %v2340 = vunpack.c.l.b16 %v2320
    %v2341 = vpack.c.b16 %v2338, %v2337
    %v2342 = vpack.c.b16 %v2340, %v2339
    %v2346 = vsel %vm111, %v2326, 0
    %v2349 = vsel %vm111, %v2328, 0
    %v2352 = vsel %vm111, %v2330, 0
    %v2355 = vsel %vm111, %v2332, 0
    %2357 = vmatprep.subr.bf16.mxu0 0
    %2358 = vmatpush1.bf16.msra.mxu0 %v2341
    %2359 = vmatprep.subr.bf16.mxu0 0
    %2360 = vmatpush1.bf16.msra.mxu0 %v2342
    %2361 = vmatprep.subr.bf16.mxu0 0
    %2362 = vmatpush1.bf16.msra.mxu0 0
    %2363 = vmatprep.subr.bf16.mxu0 0
    %2364 = vmatpush1.bf16.msra.mxu0 0
    %2365 = vmatprep.subr.bf16.mxu0 0
    %2366 = vmatpush1.bf16.msra.mxu0 0
    %2367 = vmatprep.subr.bf16.mxu0 0
    %2368 = vmatpush1.bf16.msra.mxu0 0
    %2369 = vmatprep.subr.bf16.mxu0 0
    %2370 = vmatpush1.bf16.msra.mxu0 0
    %2371 = vmatprep.subr.bf16.mxu0 0
    %2372 = vmatpush1.bf16.msra.mxu0 0
    %2373 = vmatprep.subr.bf16.mxu0 0
    %2374 = vmatpush1.bf16.msra.mxu0 0
    %2375 = vmatprep.subr.bf16.mxu0 0
    %2376 = vmatpush1.bf16.msra.mxu0 0
    %2377 = vmatprep.subr.bf16.mxu0 0
    %2378 = vmatpush1.bf16.msra.mxu0 0
    %2379 = vmatprep.subr.bf16.mxu0 0
    %2380 = vmatpush1.bf16.msra.mxu0 0
    %2381 = vmatprep.subr.bf16.mxu0 0
    %2382 = vmatpush1.bf16.msra.mxu0 0
    %2383 = vmatprep.subr.bf16.mxu0 0
    %2384 = vmatpush1.bf16.msra.mxu0 0
    %2385 = vmatprep.subr.bf16.mxu0 0
    %2386 = vmatpush1.bf16.msra.mxu0 0
    %2387 = vmatprep.subr.bf16.mxu0 0
    %2388 = vmatpush1.bf16.msra.mxu0 0
    %2389 = vmatprep.mubr.bf16.mxu0 0
    %2390 = vmatmul.mubr.bf16.gmra.mrb[0].mxu0 %v2346
    %v2391 = vpop.f32.mrb[0].mxu0
    %v2392 = vadd.f32 0.0, %v2391
    %v2393 = vpop.f32.mrb[0].mxu0
    %v2394 = vpop.f32.mrb[0].mxu0
    %v2395 = vadd.f32 0.0, %v2394
    %v2396 = vpop.f32.mrb[0].mxu0
    %2397 = vmatprep.mubr.bf16.mxu0 0
    %2398 = vmatmul.mubr.bf16.gmra.mrb[0].mxu0 %v2349
    %v2399 = vpop.f32.mrb[0].mxu0
    %v2400 = vadd.f32 0.0, %v2399
    %v2401 = vpop.f32.mrb[0].mxu0
    %v2402 = vpop.f32.mrb[0].mxu0
    %v2403 = vadd.f32 0.0, %v2402
    %v2404 = vpop.f32.mrb[0].mxu0
    %2405 = vmatprep.mubr.bf16.mxu0 0
    %2406 = vmatmul.mubr.bf16.gmra.mrb[0].mxu0 %v2352
    %v2407 = vpop.f32.mrb[0].mxu0
    %v2408 = vadd.f32 0.0, %v2407
    %v2409 = vpop.f32.mrb[0].mxu0
    %v2410 = vpop.f32.mrb[0].mxu0
    %v2411 = vadd.f32 0.0, %v2410
    %v2412 = vpop.f32.mrb[0].mxu0
    %2413 = vmatprep.mubr.bf16.mxu0 0
    %2414 = vmatmul.mubr.bf16.gmra.mrb[0].mxu0 %v2355
    %v2415 = vpop.f32.mrb[0].mxu0
    %v2416 = vadd.f32 0.0, %v2415
    %v2417 = vpop.f32.mrb[0].mxu0
    %v2418 = vpop.f32.mrb[0].mxu0
    %v2419 = vadd.f32 0.0, %v2418
    %v2420 = vpop.f32.mrb[0].mxu0
    %2421 = vdwg.mxu0
    %v2422 = vpack.c.bf16 %v2395, %v2392
    %v2423 = vpack.c.bf16 %v2403, %v2400
    %v2424 = vpack.c.bf16 %v2411, %v2408
    %v2425 = vpack.c.bf16 %v2419, %v2416
    %2426 = vrot.lane.b32.xlu0 %v2312, 96
    %v2427 = vpop.permute.xlu0 %2426
    %2428 = vrot.lane.b32.xlu0 %v2313, 96
    %v2429 = vpop.permute.xlu0 %2428
    %2430 = vrot.lane.b32.xlu0 %v2314, 96
    %v2431 = vpop.permute.xlu0 %2430
    %2432 = vrot.lane.b32.xlu0 %v2315, 96
    %v2433 = vpop.permute.xlu0 %2432
    %v2435 = vsel %vm458, %v2312, 0
    %v2438 = vsel %vm458, %v2313, 0
    %v2441 = vsel %vm458, %v2314, 0
    %v2444 = vsel %vm458, %v2315, 0
    %v2447 = vsel %vm458, %v2427, 0
    %v2450 = vsel %vm458, %v2429, 0
    %v2453 = vsel %vm458, %v2431, 0
    %v2456 = vsel %vm458, %v2433, 0
    %2458 = vmatprep.subr.bf16.mxu0 0
    %2459 = vmatpush1.bf16.xpose.msra.mxu0 %v2447
    %2460 = vmatprep.subr.bf16.mxu0 0
    %2461 = vmatpush1.bf16.xpose.msra.mxu0 %v2450
    %2462 = vmatprep.subr.bf16.mxu0 0
    %2463 = vmatpush1.bf16.xpose.msra.mxu0 %v2453
    %2464 = vmatprep.subr.bf16.mxu0 0
    %2465 = vmatpush1.bf16.xpose.msra.mxu0 %v2456
    %2466 = vmatprep.subr.bf16.mxu0 0
    %2467 = vmatpush1.bf16.xpose.msra.mxu0 0
    %2468 = vmatprep.subr.bf16.mxu0 0
    %2469 = vmatpush1.bf16.xpose.msra.mxu0 0
    %2470 = vmatprep.subr.bf16.mxu0 0
    %2471 = vmatpush1.bf16.xpose.msra.mxu0 0
    %2472 = vmatprep.subr.bf16.mxu0 0
    %2473 = vmatpush1.bf16.xpose.msra.mxu0 0
    %2474 = vmatprep.subr.bf16.mxu0 0
    %2475 = vmatpush1.bf16.xpose.msra.mxu0 0
    %2476 = vmatprep.subr.bf16.mxu0 0
    %2477 = vmatpush1.bf16.xpose.msra.mxu0 0
    %2478 = vmatprep.subr.bf16.mxu0 0
    %2479 = vmatpush1.bf16.xpose.msra.mxu0 0
    %2480 = vmatprep.subr.bf16.mxu0 0
    %2481 = vmatpush1.bf16.xpose.msra.mxu0 0
    %2482 = vmatprep.subr.bf16.mxu0 0
    %2483 = vmatpush1.bf16.xpose.msra.mxu0 0
    %2484 = vmatprep.subr.bf16.mxu0 0
    %2485 = vmatpush1.bf16.xpose.msra.mxu0 0
    %2486 = vmatprep.subr.bf16.mxu0 0
    %2487 = vmatpush1.bf16.xpose.msra.mxu0 0
    %2488 = vmatprep.subr.bf16.mxu0 0
    %2489 = vmatpush1.bf16.xpose.msra.mxu0 0
    %2490 = vmatprep.mubr.bf16.mxu0 0
    %2491 = vmatmul.mubr.bf16.gmra.mrb[0].mxu0 %v2435
    %v2492 = vpop.f32.mrb[0].mxu0
    %v2493 = vadd.f32 %v87, %v2492
    %v2494 = vpop.f32.mrb[0].mxu0
    %v2495 = vpop.f32.mrb[0].mxu0
    %v2496 = vadd.f32 %v88, %v2495
    %v2497 = vpop.f32.mrb[0].mxu0
    %2498 = vmatprep.mubr.bf16.mxu0 0
    %2499 = vmatmul.mubr.bf16.gmra.mrb[0].mxu0 %v2438
    %v2500 = vpop.f32.mrb[0].mxu0
    %v2501 = vadd.f32 %v89, %v2500
    %v2502 = vpop.f32.mrb[0].mxu0
    %v2503 = vpop.f32.mrb[0].mxu0
    %v2504 = vadd.f32 %v90, %v2503
    %v2505 = vpop.f32.mrb[0].mxu0
    %2506 = vmatprep.mubr.bf16.mxu0 0
    %2507 = vmatmul.mubr.bf16.gmra.mrb[0].mxu0 %v2441
    %v2508 = vpop.f32.mrb[0].mxu0
    %v2509 = vadd.f32 %v91, %v2508
    %v2510 = vpop.f32.mrb[0].mxu0
    %v2511 = vpop.f32.mrb[0].mxu0
    %v2512 = vadd.f32 %v92, %v2511
    %v2513 = vpop.f32.mrb[0].mxu0
    %2514 = vmatprep.mubr.bf16.mxu0 0
    %2515 = vmatmul.mubr.bf16.gmra.mrb[0].mxu0 %v2444
    %v2516 = vpop.f32.mrb[0].mxu0
    %v2517 = vadd.f32 %v93, %v2516
    %v2518 = vpop.f32.mrb[0].mxu0
    %v2519 = vpop.f32.mrb[0].mxu0
    %v2520 = vadd.f32 %v94, %v2519
    %v2521 = vpop.f32.mrb[0].mxu0
    %2522 = vdwg.mxu0
    %v2523 = vmul.f32 %v2493, 1.442695
    %v2524 = vpow.pop %v2523
    %v2525 = vmul.f32 %v2496, 1.442695
    %v2526 = vpow.pop %v2525
    %v2527 = vmul.f32 %v2501, 1.442695
    %v2528 = vpow.pop %v2527
    %v2529 = vmul.f32 %v2504, 1.442695
    %v2530 = vpow.pop %v2529
    %v2531 = vmul.f32 %v2509, 1.442695
    %v2532 = vpow.pop %v2531
    %v2533 = vmul.f32 %v2512, 1.442695
    %v2534 = vpow.pop %v2533
    %v2535 = vmul.f32 %v2517, 1.442695
    %v2536 = vpow.pop %v2535
    %v2537 = vmul.f32 %v2520, 1.442695
    %v2538 = vpow.pop %v2537
    %v2539 = vsel %vm564, %v2524, 0.0
    %2540 = vadd.xlane.f32.xlu0 %v2539
    %v2541 = vpop.xlane.xlu0 %2540
    %v2542 = vsel %vm564, %v2526, 0.0
    %2543 = vadd.xlane.f32.xlu0 %v2542
    %v2544 = vpop.xlane.xlu0 %2543
    %v2545 = vsel %vm564, %v2528, 0.0
    %2546 = vadd.xlane.f32.xlu0 %v2545
    %v2547 = vpop.xlane.xlu0 %2546
    %v2548 = vsel %vm564, %v2530, 0.0
    %2549 = vadd.xlane.f32.xlu0 %v2548
    %v2550 = vpop.xlane.xlu0 %2549
    %v2551 = vsel %vm564, %v2532, 0.0
    %2552 = vadd.xlane.f32.xlu0 %v2551
    %v2553 = vpop.xlane.xlu0 %2552
    %v2554 = vsel %vm564, %v2534, 0.0
    %2555 = vadd.xlane.f32.xlu0 %v2554
    %v2556 = vpop.xlane.xlu0 %2555
    %v2557 = vsel %vm564, %v2536, 0.0
    %2558 = vadd.xlane.f32.xlu0 %v2557
    %v2559 = vpop.xlane.xlu0 %2558
    %v2560 = vsel %vm564, %v2538, 0.0
    %2561 = vadd.xlane.f32.xlu0 %v2560
    %v2562 = vpop.xlane.xlu0 %2561
    %v2563 = vrcp.pop %v2541
    %v2564 = vrcp.pop %v2544
    %v2565 = vrcp.pop %v2547
    %v2566 = vrcp.pop %v2550
    %v2567 = vrcp.pop %v2553
    %v2568 = vrcp.pop %v2556
    %v2569 = vrcp.pop %v2559
    %v2570 = vrcp.pop %v2562
    %v2571 = vmul.f32 %v2524, %v2563
    %v2572 = vmul.f32 %v2526, %v2564
    %v2573 = vmul.f32 %v2528, %v2565
    %v2574 = vmul.f32 %v2530, %v2566
    %v2575 = vmul.f32 %v2532, %v2567
    %v2576 = vmul.f32 %v2534, %v2568
    %v2577 = vmul.f32 %v2536, %v2569
    %v2578 = vmul.f32 %v2538, %v2570
    %v2579 = vpack.c.bf16 %v2572, %v2571
    %v2580 = vpack.c.bf16 %v2574, %v2573
    %v2581 = vpack.c.bf16 %v2576, %v2575
    %v2582 = vpack.c.bf16 %v2578, %v2577
    %2583 = vrot.lane.b32.xlu0 %v2312, 120
    %v2584 = vpop.permute.xlu0 %2583
    %2585 = vrot.lane.b32.xlu0 %v2313, 120
    %v2586 = vpop.permute.xlu0 %2585
    %2587 = vrot.lane.b32.xlu0 %v2314, 120
    %v2588 = vpop.permute.xlu0 %2587
    %2589 = vrot.lane.b32.xlu0 %v2315, 120
    %v2590 = vpop.permute.xlu0 %2589
    %2591 = vrot.lane.b32.xlu0 %v2312, 88
    %v2592 = vpop.permute.xlu0 %2591
    %2593 = vrot.lane.b32.xlu0 %v2313, 88
    %v2594 = vpop.permute.xlu0 %2593
    %2595 = vrot.lane.b32.xlu0 %v2314, 88
    %v2596 = vpop.permute.xlu0 %2595
    %2597 = vrot.lane.b32.xlu0 %v2315, 88
    %v2598 = vpop.permute.xlu0 %2597
    %v2600 = vsel %vm458, %v2584, 0
    %v2603 = vsel %vm458, %v2586, 0
    %v2606 = vsel %vm458, %v2588, 0
    %v2609 = vsel %vm458, %v2590, 0
    %v2612 = vsel %vm458, %v2592, 0
    %v2615 = vsel %vm458, %v2594, 0
    %v2618 = vsel %vm458, %v2596, 0
    %v2621 = vsel %vm458, %v2598, 0
    %2623 = vmatprep.subr.bf16.mxu0 0
    %2624 = vmatpush1.bf16.xpose.msra.mxu0 %v2612
    %2625 = vmatprep.subr.bf16.mxu0 0
    %2626 = vmatpush1.bf16.xpose.msra.mxu0 %v2615
    %2627 = vmatprep.subr.bf16.mxu0 0
    %2628 = vmatpush1.bf16.xpose.msra.mxu0 %v2618
    %2629 = vmatprep.subr.bf16.mxu0 0
    %2630 = vmatpush1.bf16.xpose.msra.mxu0 %v2621
    %2631 = vmatprep.subr.bf16.mxu0 0
    %2632 = vmatpush1.bf16.xpose.msra.mxu0 0
    %2633 = vmatprep.subr.bf16.mxu0 0
    %2634 = vmatpush1.bf16.xpose.msra.mxu0 0
    %2635 = vmatprep.subr.bf16.mxu0 0
    %2636 = vmatpush1.bf16.xpose.msra.mxu0 0
    %2637 = vmatprep.subr.bf16.mxu0 0
    %2638 = vmatpush1.bf16.xpose.msra.mxu0 0
    %2639 = vmatprep.subr.bf16.mxu0 0
    %2640 = vmatpush1.bf16.xpose.msra.mxu0 0
    %2641 = vmatprep.subr.bf16.mxu0 0
    %2642 = vmatpush1.bf16.xpose.msra.mxu0 0
    %2643 = vmatprep.subr.bf16.mxu0 0
    %2644 = vmatpush1.bf16.xpose.msra.mxu0 0
    %2645 = vmatprep.subr.bf16.mxu0 0
    %2646 = vmatpush1.bf16.xpose.msra.mxu0 0
    %2647 = vmatprep.subr.bf16.mxu0 0
    %2648 = vmatpush1.bf16.xpose.msra.mxu0 0
    %2649 = vmatprep.subr.bf16.mxu0 0
    %2650 = vmatpush1.bf16.xpose.msra.mxu0 0
    %2651 = vmatprep.subr.bf16.mxu0 0
    %2652 = vmatpush1.bf16.xpose.msra.mxu0 0
    %2653 = vmatprep.subr.bf16.mxu0 0
    %2654 = vmatpush1.bf16.xpose.msra.mxu0 0
    %2655 = vmatprep.mubr.bf16.mxu0 0
    %2656 = vmatmul.mubr.bf16.gmra.mrb[0].mxu0 %v2600
    %v2657 = vpop.f32.mrb[0].mxu0
    %v2658 = vadd.f32 %v87, %v2657
    %v2659 = vpop.f32.mrb[0].mxu0
    %v2660 = vpop.f32.mrb[0].mxu0
    %v2661 = vadd.f32 %v88, %v2660
    %v2662 = vpop.f32.mrb[0].mxu0
    %2663 = vmatprep.mubr.bf16.mxu0 0
    %2664 = vmatmul.mubr.bf16.gmra.mrb[0].mxu0 %v2603
    %v2665 = vpop.f32.mrb[0].mxu0
    %v2666 = vadd.f32 %v89, %v2665
    %v2667 = vpop.f32.mrb[0].mxu0
    %v2668 = vpop.f32.mrb[0].mxu0
    %v2669 = vadd.f32 %v90, %v2668
    %v2670 = vpop.f32.mrb[0].mxu0
    %2671 = vmatprep.mubr.bf16.mxu0 0
    %2672 = vmatmul.mubr.bf16.gmra.mrb[0].mxu0 %v2606
    %v2673 = vpop.f32.mrb[0].mxu0
    %v2674 = vadd.f32 %v91, %v2673
    %v2675 = vpop.f32.mrb[0].mxu0
    %v2676 = vpop.f32.mrb[0].mxu0
    %v2677 = vadd.f32 %v92, %v2676
    %v2678 = vpop.f32.mrb[0].mxu0
    %2679 = vmatprep.mubr.bf16.mxu0 0
    %2680 = vmatmul.mubr.bf16.gmra.mrb[0].mxu0 %v2609
    %v2681 = vpop.f32.mrb[0].mxu0
    %v2682 = vadd.f32 %v93, %v2681
    %v2683 = vpop.f32.mrb[0].mxu0
    %v2684 = vpop.f32.mrb[0].mxu0
    %v2685 = vadd.f32 %v94, %v2684
    %v2686 = vpop.f32.mrb[0].mxu0
    %2687 = vdwg.mxu0
    %v2688 = vmul.f32 %v2658, 1.442695
    %v2689 = vpow.pop %v2688
    %v2690 = vmul.f32 %v2661, 1.442695
    %v2691 = vpow.pop %v2690
    %v2692 = vmul.f32 %v2666, 1.442695
    %v2693 = vpow.pop %v2692
    %v2694 = vmul.f32 %v2669, 1.442695
    %v2695 = vpow.pop %v2694
    %v2696 = vmul.f32 %v2674, 1.442695
    %v2697 = vpow.pop %v2696
    %v2698 = vmul.f32 %v2677, 1.442695
    %v2699 = vpow.pop %v2698
    %v2700 = vmul.f32 %v2682, 1.442695
    %v2701 = vpow.pop %v2700
    %v2702 = vmul.f32 %v2685, 1.442695
    %v2703 = vpow.pop %v2702
    %v2704 = vsel %vm564, %v2689, 0.0
    %2705 = vadd.xlane.f32.xlu0 %v2704
    %v2706 = vpop.xlane.xlu0 %2705
    %v2707 = vsel %vm564, %v2691, 0.0
    %2708 = vadd.xlane.f32.xlu0 %v2707
    %v2709 = vpop.xlane.xlu0 %2708
    %v2710 = vsel %vm564, %v2693, 0.0
    %2711 = vadd.xlane.f32.xlu0 %v2710
    %v2712 = vpop.xlane.xlu0 %2711
    %v2713 = vsel %vm564, %v2695, 0.0
    %2714 = vadd.xlane.f32.xlu0 %v2713
    %v2715 = vpop.xlane.xlu0 %2714
    %v2716 = vsel %vm564, %v2697, 0.0
    %2717 = vadd.xlane.f32.xlu0 %v2716
    %v2718 = vpop.xlane.xlu0 %2717
    %v2719 = vsel %vm564, %v2699, 0.0
    %2720 = vadd.xlane.f32.xlu0 %v2719
    %v2721 = vpop.xlane.xlu0 %2720
    %v2722 = vsel %vm564, %v2701, 0.0
    %2723 = vadd.xlane.f32.xlu0 %v2722
    %v2724 = vpop.xlane.xlu0 %2723
    %v2725 = vsel %vm564, %v2703, 0.0
    %2726 = vadd.xlane.f32.xlu0 %v2725
    %v2727 = vpop.xlane.xlu0 %2726
    %v2728 = vrcp.pop %v2706
    %v2729 = vrcp.pop %v2709
    %v2730 = vrcp.pop %v2712
    %v2731 = vrcp.pop %v2715
    %v2732 = vrcp.pop %v2718
    %v2733 = vrcp.pop %v2721
    %v2734 = vrcp.pop %v2724
    %v2735 = vrcp.pop %v2727
    %v2736 = vmul.f32 %v2689, %v2728
    %v2737 = vmul.f32 %v2691, %v2729
    %v2738 = vmul.f32 %v2693, %v2730
    %v2739 = vmul.f32 %v2695, %v2731
    %v2740 = vmul.f32 %v2697, %v2732
    %v2741 = vmul.f32 %v2699, %v2733
    %v2742 = vmul.f32 %v2701, %v2734
    %v2743 = vmul.f32 %v2703, %v2735
    %v2744 = vpack.c.bf16 %v2737, %v2736
    %v2745 = vpack.c.bf16 %v2739, %v2738
    %v2746 = vpack.c.bf16 %v2741, %v2740
    %v2747 = vpack.c.bf16 %v2743, %v2742
    %2752 = vrot.lane.b32.xlu0 %v2422, 96
    %v2753 = vpop.permute.xlu0 %2752
    %2754 = vrot.lane.b32.xlu0 %v2423, 96
    %v2755 = vpop.permute.xlu0 %2754
    %2756 = vrot.lane.b32.xlu0 %v2424, 96
    %v2757 = vpop.permute.xlu0 %2756
    %2758 = vrot.lane.b32.xlu0 %v2425, 96
    %v2759 = vpop.permute.xlu0 %2758
    %v2765 = vsel %vm564, %v2744, 0
    %v2768 = vsel %vm564, %v2745, 0
    %v2771 = vsel %vm564, %v2746, 0
    %v2774 = vsel %vm564, %v2747, 0
    %2776 = vmatprep.subr.bf16.mxu0 0
    %2777 = vmatpush1.bf16.msra.mxu0 %v2753
    %2778 = vmatprep.subr.bf16.mxu0 0
    %2779 = vmatpush1.bf16.msra.mxu0 %v2755
    %2780 = vmatprep.subr.bf16.mxu0 0
    %2781 = vmatpush1.bf16.msra.mxu0 %v2757
    %2782 = vmatprep.subr.bf16.mxu0 0
    %2783 = vmatpush1.bf16.msra.mxu0 %v2759
    %2784 = vmatprep.subr.bf16.mxu0 0
    %2785 = vmatpush1.bf16.msra.mxu0 0
    %2786 = vmatprep.subr.bf16.mxu0 0
    %2787 = vmatpush1.bf16.msra.mxu0 0
    %2788 = vmatprep.subr.bf16.mxu0 0
    %2789 = vmatpush1.bf16.msra.mxu0 0
    %2790 = vmatprep.subr.bf16.mxu0 0
    %2791 = vmatpush1.bf16.msra.mxu0 0
    %2792 = vmatprep.subr.bf16.mxu0 0
    %2793 = vmatpush1.bf16.msra.mxu0 0
    %2794 = vmatprep.subr.bf16.mxu0 0
    %2795 = vmatpush1.bf16.msra.mxu0 0
    %2796 = vmatprep.subr.bf16.mxu0 0
    %2797 = vmatpush1.bf16.msra.mxu0 0
    %2798 = vmatprep.subr.bf16.mxu0 0
    %2799 = vmatpush1.bf16.msra.mxu0 0
    %2800 = vmatprep.subr.bf16.mxu0 0
    %2801 = vmatpush1.bf16.msra.mxu0 0
    %2802 = vmatprep.subr.bf16.mxu0 0
    %2803 = vmatpush1.bf16.msra.mxu0 0
    %2804 = vmatprep.subr.bf16.mxu0 0
    %2805 = vmatpush1.bf16.msra.mxu0 0
    %2806 = vmatprep.subr.bf16.mxu0 0
    %2807 = vmatpush1.bf16.msra.mxu0 0
    %2808 = vmatprep.mubr.bf16.mxu0 0
    %2809 = vmatmul.mubr.bf16.gmra.mrb[0].mxu0 %v2765
    %v2810 = vpop.f32.mrb[0].mxu0
    %v2811 = vadd.f32 0.0, %v2810
    %v2812 = vpop.f32.mrb[0].mxu0
    %v2813 = vpop.f32.mrb[0].mxu0
    %v2814 = vadd.f32 0.0, %v2813
    %v2815 = vpop.f32.mrb[0].mxu0
    %2816 = vmatprep.mubr.bf16.mxu0 0
    %2817 = vmatmul.mubr.bf16.gmra.mrb[0].mxu0 %v2768
    %v2818 = vpop.f32.mrb[0].mxu0
    %v2819 = vadd.f32 0.0, %v2818
    %v2820 = vpop.f32.mrb[0].mxu0
    %v2821 = vpop.f32.mrb[0].mxu0
    %v2822 = vadd.f32 0.0, %v2821
    %v2823 = vpop.f32.mrb[0].mxu0
    %2824 = vmatprep.mubr.bf16.mxu0 0
    %2825 = vmatmul.mubr.bf16.gmra.mrb[0].mxu0 %v2771
    %v2826 = vpop.f32.mrb[0].mxu0
    %v2827 = vadd.f32 0.0, %v2826
    %v2828 = vpop.f32.mrb[0].mxu0
    %v2829 = vpop.f32.mrb[0].mxu0
    %v2830 = vadd.f32 0.0, %v2829
    %v2831 = vpop.f32.mrb[0].mxu0
    %2832 = vmatprep.mubr.bf16.mxu0 0
    %2833 = vmatmul.mubr.bf16.gmra.mrb[0].mxu0 %v2774
    %v2834 = vpop.f32.mrb[0].mxu0
    %v2835 = vadd.f32 0.0, %v2834
    %v2836 = vpop.f32.mrb[0].mxu0
    %v2837 = vpop.f32.mrb[0].mxu0
    %v2838 = vadd.f32 0.0, %v2837
    %v2839 = vpop.f32.mrb[0].mxu0
    %2840 = vdwg.mxu0
    %v2842 = vsel %vm564, %v2579, 0
    %v2845 = vsel %vm564, %v2580, 0
    %v2848 = vsel %vm564, %v2581, 0
    %v2851 = vsel %vm564, %v2582, 0
    %2853 = vmatprep.subr.bf16.mxu0 0
    %2854 = vmatpush1.bf16.msra.mxu0 %v2422
    %2855 = vmatprep.subr.bf16.mxu0 0
    %2856 = vmatpush1.bf16.msra.mxu0 %v2423
    %2857 = vmatprep.subr.bf16.mxu0 0
    %2858 = vmatpush1.bf16.msra.mxu0 %v2424
    %2859 = vmatprep.subr.bf16.mxu0 0
    %2860 = vmatpush1.bf16.msra.mxu0 %v2425
    %2861 = vmatprep.subr.bf16.mxu0 0
    %2862 = vmatpush1.bf16.msra.mxu0 0
    %2863 = vmatprep.subr.bf16.mxu0 0
    %2864 = vmatpush1.bf16.msra.mxu0 0
    %2865 = vmatprep.subr.bf16.mxu0 0
    %2866 = vmatpush1.bf16.msra.mxu0 0
    %2867 = vmatprep.subr.bf16.mxu0 0
    %2868 = vmatpush1.bf16.msra.mxu0 0
    %2869 = vmatprep.subr.bf16.mxu0 0
    %2870 = vmatpush1.bf16.msra.mxu0 0
    %2871 = vmatprep.subr.bf16.mxu0 0
    %2872 = vmatpush1.bf16.msra.mxu0 0
    %2873 = vmatprep.subr.bf16.mxu0 0
    %2874 = vmatpush1.bf16.msra.mxu0 0
    %2875 = vmatprep.subr.bf16.mxu0 0
    %2876 = vmatpush1.bf16.msra.mxu0 0
    %2877 = vmatprep.subr.bf16.mxu0 0
    %2878 = vmatpush1.bf16.msra.mxu0 0
    %2879 = vmatprep.subr.bf16.mxu0 0
    %2880 = vmatpush1.bf16.msra.mxu0 0
    %2881 = vmatprep.subr.bf16.mxu0 0
    %2882 = vmatpush1.bf16.msra.mxu0 0
    %2883 = vmatprep.subr.bf16.mxu0 0
    %2884 = vmatpush1.bf16.msra.mxu0 0
    %2885 = vmatprep.mubr.bf16.mxu0 0
    %2886 = vmatmul.mubr.bf16.gmra.mrb[0].mxu0 %v2842
    %v2887 = vpop.f32.mrb[0].mxu0
    %v2888 = vadd.f32 %v2811, %v2887
    %v2889 = vpop.f32.mrb[0].mxu0
    %v2890 = vpop.f32.mrb[0].mxu0
    %v2891 = vadd.f32 %v2814, %v2890
    %v2892 = vpop.f32.mrb[0].mxu0
    %2893 = vmatprep.mubr.bf16.mxu0 0
    %2894 = vmatmul.mubr.bf16.gmra.mrb[0].mxu0 %v2845
    %v2895 = vpop.f32.mrb[0].mxu0
    %v2896 = vadd.f32 %v2819, %v2895
    %v2897 = vpop.f32.mrb[0].mxu0
    %v2898 = vpop.f32.mrb[0].mxu0
    %v2899 = vadd.f32 %v2822, %v2898
    %v2900 = vpop.f32.mrb[0].mxu0
    %2901 = vmatprep.mubr.bf16.mxu0 0
    %2902 = vmatmul.mubr.bf16.gmra.mrb[0].mxu0 %v2848
    %v2903 = vpop.f32.mrb[0].mxu0
    %v2904 = vadd.f32 %v2827, %v2903
    %v2905 = vpop.f32.mrb[0].mxu0
    %v2906 = vpop.f32.mrb[0].mxu0
    %v2907 = vadd.f32 %v2830, %v2906
    %v2908 = vpop.f32.mrb[0].mxu0
    %2909 = vmatprep.mubr.bf16.mxu0 0
    %2910 = vmatmul.mubr.bf16.gmra.mrb[0].mxu0 %v2851
    %v2911 = vpop.f32.mrb[0].mxu0
    %v2912 = vadd.f32 %v2835, %v2911
    %v2913 = vpop.f32.mrb[0].mxu0
    %v2914 = vpop.f32.mrb[0].mxu0
    %v2915 = vadd.f32 %v2838, %v2914
    %v2916 = vpop.f32.mrb[0].mxu0
    %2917 = vdwg.mxu0
    %2918 = vrot.lane.b32.xlu0 %v2312, 112
    %v2919 = vpop.permute.xlu0 %2918
    %2920 = vrot.lane.b32.xlu0 %v2313, 112
    %v2921 = vpop.permute.xlu0 %2920
    %2922 = vrot.lane.b32.xlu0 %v2314, 112
    %v2923 = vpop.permute.xlu0 %2922
    %2924 = vrot.lane.b32.xlu0 %v2315, 112
    %v2925 = vpop.permute.xlu0 %2924
    %2926 = vrot.lane.b32.xlu0 %v2312, 80
    %v2927 = vpop.permute.xlu0 %2926
    %2928 = vrot.lane.b32.xlu0 %v2313, 80
    %v2929 = vpop.permute.xlu0 %2928
    %2930 = vrot.lane.b32.xlu0 %v2314, 80
    %v2931 = vpop.permute.xlu0 %2930
    %2932 = vrot.lane.b32.xlu0 %v2315, 80
    %v2933 = vpop.permute.xlu0 %2932
    %v2935 = vsel %vm458, %v2919, 0
    %v2938 = vsel %vm458, %v2921, 0
    %v2941 = vsel %vm458, %v2923, 0
    %v2944 = vsel %vm458, %v2925, 0
    %v2947 = vsel %vm458, %v2927, 0
    %v2950 = vsel %vm458, %v2929, 0
    %v2953 = vsel %vm458, %v2931, 0
    %v2956 = vsel %vm458, %v2933, 0
    %2958 = vmatprep.subr.bf16.mxu0 0
    %2959 = vmatpush1.bf16.xpose.msra.mxu0 %v2947
    %2960 = vmatprep.subr.bf16.mxu0 0
    %2961 = vmatpush1.bf16.xpose.msra.mxu0 %v2950
    %2962 = vmatprep.subr.bf16.mxu0 0
    %2963 = vmatpush1.bf16.xpose.msra.mxu0 %v2953
    %2964 = vmatprep.subr.bf16.mxu0 0
    %2965 = vmatpush1.bf16.xpose.msra.mxu0 %v2956
    %2966 = vmatprep.subr.bf16.mxu0 0
    %2967 = vmatpush1.bf16.xpose.msra.mxu0 0
    %2968 = vmatprep.subr.bf16.mxu0 0
    %2969 = vmatpush1.bf16.xpose.msra.mxu0 0
    %2970 = vmatprep.subr.bf16.mxu0 0
    %2971 = vmatpush1.bf16.xpose.msra.mxu0 0
    %2972 = vmatprep.subr.bf16.mxu0 0
    %2973 = vmatpush1.bf16.xpose.msra.mxu0 0
    %2974 = vmatprep.subr.bf16.mxu0 0
    %2975 = vmatpush1.bf16.xpose.msra.mxu0 0
    %2976 = vmatprep.subr.bf16.mxu0 0
    %2977 = vmatpush1.bf16.xpose.msra.mxu0 0
    %2978 = vmatprep.subr.bf16.mxu0 0
    %2979 = vmatpush1.bf16.xpose.msra.mxu0 0
    %2980 = vmatprep.subr.bf16.mxu0 0
    %2981 = vmatpush1.bf16.xpose.msra.mxu0 0
    %2982 = vmatprep.subr.bf16.mxu0 0
    %2983 = vmatpush1.bf16.xpose.msra.mxu0 0
    %2984 = vmatprep.subr.bf16.mxu0 0
    %2985 = vmatpush1.bf16.xpose.msra.mxu0 0
    %2986 = vmatprep.subr.bf16.mxu0 0
    %2987 = vmatpush1.bf16.xpose.msra.mxu0 0
    %2988 = vmatprep.subr.bf16.mxu0 0
    %2989 = vmatpush1.bf16.xpose.msra.mxu0 0
    %2990 = vmatprep.mubr.bf16.mxu0 0
    %2991 = vmatmul.mubr.bf16.gmra.mrb[0].mxu0 %v2935
    %v2992 = vpop.f32.mrb[0].mxu0
    %v2993 = vadd.f32 %v87, %v2992
    %v2994 = vpop.f32.mrb[0].mxu0
    %v2995 = vpop.f32.mrb[0].mxu0
    %v2996 = vadd.f32 %v88, %v2995
    %v2997 = vpop.f32.mrb[0].mxu0
    %2998 = vmatprep.mubr.bf16.mxu0 0
    %2999 = vmatmul.mubr.bf16.gmra.mrb[0].mxu0 %v2938
    %v3000 = vpop.f32.mrb[0].mxu0
    %v3001 = vadd.f32 %v89, %v3000
    %v3002 = vpop.f32.mrb[0].mxu0
    %v3003 = vpop.f32.mrb[0].mxu0
    %v3004 = vadd.f32 %v90, %v3003
    %v3005 = vpop.f32.mrb[0].mxu0
    %3006 = vmatprep.mubr.bf16.mxu0 0
    %3007 = vmatmul.mubr.bf16.gmra.mrb[0].mxu0 %v2941
    %v3008 = vpop.f32.mrb[0].mxu0
    %v3009 = vadd.f32 %v91, %v3008
    %v3010 = vpop.f32.mrb[0].mxu0
    %v3011 = vpop.f32.mrb[0].mxu0
    %v3012 = vadd.f32 %v92, %v3011
    %v3013 = vpop.f32.mrb[0].mxu0
    %3014 = vmatprep.mubr.bf16.mxu0 0
    %3015 = vmatmul.mubr.bf16.gmra.mrb[0].mxu0 %v2944
    %v3016 = vpop.f32.mrb[0].mxu0
    %v3017 = vadd.f32 %v93, %v3016
    %v3018 = vpop.f32.mrb[0].mxu0
    %v3019 = vpop.f32.mrb[0].mxu0
    %v3020 = vadd.f32 %v94, %v3019
    %v3021 = vpop.f32.mrb[0].mxu0
    %3022 = vdwg.mxu0
    %v3023 = vmul.f32 %v2993, 1.442695
    %v3024 = vpow.pop %v3023
    %v3025 = vmul.f32 %v2996, 1.442695
    %v3026 = vpow.pop %v3025
    %v3027 = vmul.f32 %v3001, 1.442695
    %v3028 = vpow.pop %v3027
    %v3029 = vmul.f32 %v3004, 1.442695
    %v3030 = vpow.pop %v3029
    %v3031 = vmul.f32 %v3009, 1.442695
    %v3032 = vpow.pop %v3031
    %v3033 = vmul.f32 %v3012, 1.442695
    %v3034 = vpow.pop %v3033
    %v3035 = vmul.f32 %v3017, 1.442695
    %v3036 = vpow.pop %v3035
    %v3037 = vmul.f32 %v3020, 1.442695
    %v3038 = vpow.pop %v3037
    %v3039 = vsel %vm564, %v3024, 0.0
    %3040 = vadd.xlane.f32.xlu0 %v3039
    %v3041 = vpop.xlane.xlu0 %3040
    %v3042 = vsel %vm564, %v3026, 0.0
    %3043 = vadd.xlane.f32.xlu0 %v3042
    %v3044 = vpop.xlane.xlu0 %3043
    %v3045 = vsel %vm564, %v3028, 0.0
    %3046 = vadd.xlane.f32.xlu0 %v3045
    %v3047 = vpop.xlane.xlu0 %3046
    %v3048 = vsel %vm564, %v3030, 0.0
    %3049 = vadd.xlane.f32.xlu0 %v3048
    %v3050 = vpop.xlane.xlu0 %3049
    %v3051 = vsel %vm564, %v3032, 0.0
    %3052 = vadd.xlane.f32.xlu0 %v3051
    %v3053 = vpop.xlane.xlu0 %3052
    %v3054 = vsel %vm564, %v3034, 0.0
    %3055 = vadd.xlane.f32.xlu0 %v3054
    %v3056 = vpop.xlane.xlu0 %3055
    %v3057 = vsel %vm564, %v3036, 0.0
    %3058 = vadd.xlane.f32.xlu0 %v3057
    %v3059 = vpop.xlane.xlu0 %3058
    %v3060 = vsel %vm564, %v3038, 0.0
    %3061 = vadd.xlane.f32.xlu0 %v3060
    %v3062 = vpop.xlane.xlu0 %3061
    %v3063 = vrcp.pop %v3041
    %v3064 = vrcp.pop %v3044
    %v3065 = vrcp.pop %v3047
    %v3066 = vrcp.pop %v3050
    %v3067 = vrcp.pop %v3053
    %v3068 = vrcp.pop %v3056
    %v3069 = vrcp.pop %v3059
    %v3070 = vrcp.pop %v3062
    %v3071 = vmul.f32 %v3024, %v3063
    %v3072 = vmul.f32 %v3026, %v3064
    %v3073 = vmul.f32 %v3028, %v3065
    %v3074 = vmul.f32 %v3030, %v3066
    %v3075 = vmul.f32 %v3032, %v3067
    %v3076 = vmul.f32 %v3034, %v3068
    %v3077 = vmul.f32 %v3036, %v3069
    %v3078 = vmul.f32 %v3038, %v3070
    %v3079 = vpack.c.bf16 %v3072, %v3071
    %v3080 = vpack.c.bf16 %v3074, %v3073
    %v3081 = vpack.c.bf16 %v3076, %v3075
    %v3082 = vpack.c.bf16 %v3078, %v3077
    %3083 = vrot.lane.b32.xlu0 %v2422, 64
    %v3084 = vpop.permute.xlu0 %3083
    %3085 = vrot.lane.b32.xlu0 %v2423, 64
    %v3086 = vpop.permute.xlu0 %3085
    %3087 = vrot.lane.b32.xlu0 %v2424, 64
    %v3088 = vpop.permute.xlu0 %3087
    %3089 = vrot.lane.b32.xlu0 %v2425, 64
    %v3090 = vpop.permute.xlu0 %3089
    %v3096 = vsel %vm564, %v3079, 0
    %v3099 = vsel %vm564, %v3080, 0
    %v3102 = vsel %vm564, %v3081, 0
    %v3105 = vsel %vm564, %v3082, 0
    %3107 = vmatprep.subr.bf16.mxu0 0
    %3108 = vmatpush1.bf16.msra.mxu0 %v3084
    %3109 = vmatprep.subr.bf16.mxu0 0
    %3110 = vmatpush1.bf16.msra.mxu0 %v3086
    %3111 = vmatprep.subr.bf16.mxu0 0
    %3112 = vmatpush1.bf16.msra.mxu0 %v3088
    %3113 = vmatprep.subr.bf16.mxu0 0
    %3114 = vmatpush1.bf16.msra.mxu0 %v3090
    %3115 = vmatprep.subr.bf16.mxu0 0
    %3116 = vmatpush1.bf16.msra.mxu0 0
    %3117 = vmatprep.subr.bf16.mxu0 0
    %3118 = vmatpush1.bf16.msra.mxu0 0
    %3119 = vmatprep.subr.bf16.mxu0 0
    %3120 = vmatpush1.bf16.msra.mxu0 0
    %3121 = vmatprep.subr.bf16.mxu0 0
    %3122 = vmatpush1.bf16.msra.mxu0 0
    %3123 = vmatprep.subr.bf16.mxu0 0
    %3124 = vmatpush1.bf16.msra.mxu0 0
    %3125 = vmatprep.subr.bf16.mxu0 0
    %3126 = vmatpush1.bf16.msra.mxu0 0
    %3127 = vmatprep.subr.bf16.mxu0 0
    %3128 = vmatpush1.bf16.msra.mxu0 0
    %3129 = vmatprep.subr.bf16.mxu0 0
    %3130 = vmatpush1.bf16.msra.mxu0 0
    %3131 = vmatprep.subr.bf16.mxu0 0
    %3132 = vmatpush1.bf16.msra.mxu0 0
    %3133 = vmatprep.subr.bf16.mxu0 0
    %3134 = vmatpush1.bf16.msra.mxu0 0
    %3135 = vmatprep.subr.bf16.mxu0 0
    %3136 = vmatpush1.bf16.msra.mxu0 0
    %3137 = vmatprep.subr.bf16.mxu0 0
    %3138 = vmatpush1.bf16.msra.mxu0 0
    %3139 = vmatprep.mubr.bf16.mxu0 0
    %3140 = vmatmul.mubr.bf16.gmra.mrb[0].mxu0 %v3096
    %v3141 = vpop.f32.mrb[0].mxu0
    %v3142 = vadd.f32 0.0, %v3141
    %v3143 = vpop.f32.mrb[0].mxu0
    %v3144 = vpop.f32.mrb[0].mxu0
    %v3145 = vadd.f32 0.0, %v3144
    %v3146 = vpop.f32.mrb[0].mxu0
    %3147 = vmatprep.mubr.bf16.mxu0 0
    %3148 = vmatmul.mubr.bf16.gmra.mrb[0].mxu0 %v3099
    %v3149 = vpop.f32.mrb[0].mxu0
    %v3150 = vadd.f32 0.0, %v3149
    %v3151 = vpop.f32.mrb[0].mxu0
    %v3152 = vpop.f32.mrb[0].mxu0
    %v3153 = vadd.f32 0.0, %v3152
    %v3154 = vpop.f32.mrb[0].mxu0
    %3155 = vmatprep.mubr.bf16.mxu0 0
    %3156 = vmatmul.mubr.bf16.gmra.mrb[0].mxu0 %v3102
    %v3157 = vpop.f32.mrb[0].mxu0
    %v3158 = vadd.f32 0.0, %v3157
    %v3159 = vpop.f32.mrb[0].mxu0
    %v3160 = vpop.f32.mrb[0].mxu0
    %v3161 = vadd.f32 0.0, %v3160
    %v3162 = vpop.f32.mrb[0].mxu0
    %3163 = vmatprep.mubr.bf16.mxu0 0
    %3164 = vmatmul.mubr.bf16.gmra.mrb[0].mxu0 %v3105
    %v3165 = vpop.f32.mrb[0].mxu0
    %v3166 = vadd.f32 0.0, %v3165
    %v3167 = vpop.f32.mrb[0].mxu0
    %v3168 = vpop.f32.mrb[0].mxu0
    %v3169 = vadd.f32 0.0, %v3168
    %v3170 = vpop.f32.mrb[0].mxu0
    %3171 = vdwg.mxu0
    %v3172 = vadd.f32 %v2888, %v3142
    %v3173 = vadd.f32 %v2891, %v3145
    %v3174 = vadd.f32 %v2896, %v3150
    %v3175 = vadd.f32 %v2899, %v3153
    %v3176 = vadd.f32 %v2904, %v3158
    %v3177 = vadd.f32 %v2907, %v3161
    %v3178 = vadd.f32 %v2912, %v3166
    %v3179 = vadd.f32 %v2915, %v3169
    %3180 = vrot.lane.b32.xlu0 %v2312, 104
    %v3181 = vpop.permute.xlu0 %3180
    %3182 = vrot.lane.b32.xlu0 %v2313, 104
    %v3183 = vpop.permute.xlu0 %3182
    %3184 = vrot.lane.b32.xlu0 %v2314, 104
    %v3185 = vpop.permute.xlu0 %3184
    %3186 = vrot.lane.b32.xlu0 %v2315, 104
    %v3187 = vpop.permute.xlu0 %3186
    %3188 = vrot.lane.b32.xlu0 %v2312, 72
    %v3189 = vpop.permute.xlu0 %3188
    %3190 = vrot.lane.b32.xlu0 %v2313, 72
    %v3191 = vpop.permute.xlu0 %3190
    %3192 = vrot.lane.b32.xlu0 %v2314, 72
    %v3193 = vpop.permute.xlu0 %3192
    %3194 = vrot.lane.b32.xlu0 %v2315, 72
    %v3195 = vpop.permute.xlu0 %3194
    %v3197 = vsel %vm458, %v3181, 0
    %v3200 = vsel %vm458, %v3183, 0
    %v3203 = vsel %vm458, %v3185, 0
    %v3206 = vsel %vm458, %v3187, 0
    %v3209 = vsel %vm458, %v3189, 0
    %v3212 = vsel %vm458, %v3191, 0
    %v3215 = vsel %vm458, %v3193, 0
    %v3218 = vsel %vm458, %v3195, 0
    %3220 = vmatprep.subr.bf16.mxu0 0
    %3221 = vmatpush1.bf16.xpose.msra.mxu0 %v3209
    %3222 = vmatprep.subr.bf16.mxu0 0
    %3223 = vmatpush1.bf16.xpose.msra.mxu0 %v3212
    %3224 = vmatprep.subr.bf16.mxu0 0
    %3225 = vmatpush1.bf16.xpose.msra.mxu0 %v3215
    %3226 = vmatprep.subr.bf16.mxu0 0
    %3227 = vmatpush1.bf16.xpose.msra.mxu0 %v3218
    %3228 = vmatprep.subr.bf16.mxu0 0
    %3229 = vmatpush1.bf16.xpose.msra.mxu0 0
    %3230 = vmatprep.subr.bf16.mxu0 0
    %3231 = vmatpush1.bf16.xpose.msra.mxu0 0
    %3232 = vmatprep.subr.bf16.mxu0 0
    %3233 = vmatpush1.bf16.xpose.msra.mxu0 0
    %3234 = vmatprep.subr.bf16.mxu0 0
    %3235 = vmatpush1.bf16.xpose.msra.mxu0 0
    %3236 = vmatprep.subr.bf16.mxu0 0
    %3237 = vmatpush1.bf16.xpose.msra.mxu0 0
    %3238 = vmatprep.subr.bf16.mxu0 0
    %3239 = vmatpush1.bf16.xpose.msra.mxu0 0
    %3240 = vmatprep.subr.bf16.mxu0 0
    %3241 = vmatpush1.bf16.xpose.msra.mxu0 0
    %3242 = vmatprep.subr.bf16.mxu0 0
    %3243 = vmatpush1.bf16.xpose.msra.mxu0 0
    %3244 = vmatprep.subr.bf16.mxu0 0
    %3245 = vmatpush1.bf16.xpose.msra.mxu0 0
    %3246 = vmatprep.subr.bf16.mxu0 0
    %3247 = vmatpush1.bf16.xpose.msra.mxu0 0
    %3248 = vmatprep.subr.bf16.mxu0 0
    %3249 = vmatpush1.bf16.xpose.msra.mxu0 0
    %3250 = vmatprep.subr.bf16.mxu0 0
    %3251 = vmatpush1.bf16.xpose.msra.mxu0 0
    %3252 = vmatprep.mubr.bf16.mxu0 0
    %3253 = vmatmul.mubr.bf16.gmra.mrb[0].mxu0 %v3197
    %v3254 = vpop.f32.mrb[0].mxu0
    %v3255 = vadd.f32 %v87, %v3254
    %v3256 = vpop.f32.mrb[0].mxu0
    %v3257 = vpop.f32.mrb[0].mxu0
    %v3258 = vadd.f32 %v88, %v3257
    %v3259 = vpop.f32.mrb[0].mxu0
    %3260 = vmatprep.mubr.bf16.mxu0 0
    %3261 = vmatmul.mubr.bf16.gmra.mrb[0].mxu0 %v3200
    %v3262 = vpop.f32.mrb[0].mxu0
    %v3263 = vadd.f32 %v89, %v3262
    %v3264 = vpop.f32.mrb[0].mxu0
    %v3265 = vpop.f32.mrb[0].mxu0
    %v3266 = vadd.f32 %v90, %v3265
    %v3267 = vpop.f32.mrb[0].mxu0
    %3268 = vmatprep.mubr.bf16.mxu0 0
    %3269 = vmatmul.mubr.bf16.gmra.mrb[0].mxu0 %v3203
    %v3270 = vpop.f32.mrb[0].mxu0
    %v3271 = vadd.f32 %v91, %v3270
    %v3272 = vpop.f32.mrb[0].mxu0
    %v3273 = vpop.f32.mrb[0].mxu0
    %v3274 = vadd.f32 %v92, %v3273
    %v3275 = vpop.f32.mrb[0].mxu0
    %3276 = vmatprep.mubr.bf16.mxu0 0
    %3277 = vmatmul.mubr.bf16.gmra.mrb[0].mxu0 %v3206
    %v3278 = vpop.f32.mrb[0].mxu0
    %v3279 = vadd.f32 %v93, %v3278
    %v3280 = vpop.f32.mrb[0].mxu0
    %v3281 = vpop.f32.mrb[0].mxu0
    %v3282 = vadd.f32 %v94, %v3281
    %v3283 = vpop.f32.mrb[0].mxu0
    %3284 = vdwg.mxu0
    %v3285 = vmul.f32 %v3255, 1.442695
    %v3286 = vpow.pop %v3285
    %v3287 = vmul.f32 %v3258, 1.442695
    %v3288 = vpow.pop %v3287
    %v3289 = vmul.f32 %v3263, 1.442695
    %v3290 = vpow.pop %v3289
    %v3291 = vmul.f32 %v3266, 1.442695
    %v3292 = vpow.pop %v3291
    %v3293 = vmul.f32 %v3271, 1.442695
    %v3294 = vpow.pop %v3293
    %v3295 = vmul.f32 %v3274, 1.442695
    %v3296 = vpow.pop %v3295
    %v3297 = vmul.f32 %v3279, 1.442695
    %v3298 = vpow.pop %v3297
    %v3299 = vmul.f32 %v3282, 1.442695
    %v3300 = vpow.pop %v3299
    %v3301 = vsel %vm564, %v3286, 0.0
    %3302 = vadd.xlane.f32.xlu0 %v3301
    %v3303 = vpop.xlane.xlu0 %3302
    %v3304 = vsel %vm564, %v3288, 0.0
    %3305 = vadd.xlane.f32.xlu0 %v3304
    %v3306 = vpop.xlane.xlu0 %3305
    %v3307 = vsel %vm564, %v3290, 0.0
    %3308 = vadd.xlane.f32.xlu0 %v3307
    %v3309 = vpop.xlane.xlu0 %3308
    %v3310 = vsel %vm564, %v3292, 0.0
    %3311 = vadd.xlane.f32.xlu0 %v3310
    %v3312 = vpop.xlane.xlu0 %3311
    %v3313 = vsel %vm564, %v3294, 0.0
    %3314 = vadd.xlane.f32.xlu0 %v3313
    %v3315 = vpop.xlane.xlu0 %3314
    %v3316 = vsel %vm564, %v3296, 0.0
    %3317 = vadd.xlane.f32.xlu0 %v3316
    %v3318 = vpop.xlane.xlu0 %3317
    %v3319 = vsel %vm564, %v3298, 0.0
    %3320 = vadd.xlane.f32.xlu0 %v3319
    %v3321 = vpop.xlane.xlu0 %3320
    %v3322 = vsel %vm564, %v3300, 0.0
    %3323 = vadd.xlane.f32.xlu0 %v3322
    %v3324 = vpop.xlane.xlu0 %3323
    %v3325 = vrcp.pop %v3303
    %v3326 = vrcp.pop %v3306
    %v3327 = vrcp.pop %v3309
    %v3328 = vrcp.pop %v3312
    %v3329 = vrcp.pop %v3315
    %v3330 = vrcp.pop %v3318
    %v3331 = vrcp.pop %v3321
    %v3332 = vrcp.pop %v3324
    %v3333 = vmul.f32 %v3286, %v3325
    %v3334 = vmul.f32 %v3288, %v3326
    %v3335 = vmul.f32 %v3290, %v3327
    %v3336 = vmul.f32 %v3292, %v3328
    %v3337 = vmul.f32 %v3294, %v3329
    %v3338 = vmul.f32 %v3296, %v3330
    %v3339 = vmul.f32 %v3298, %v3331
    %v3340 = vmul.f32 %v3300, %v3332
    %v3341 = vpack.c.bf16 %v3334, %v3333
    %v3342 = vpack.c.bf16 %v3336, %v3335
    %v3343 = vpack.c.bf16 %v3338, %v3337
    %v3344 = vpack.c.bf16 %v3340, %v3339
    %3345 = vrot.lane.b32.xlu0 %v2422, 32
    %v3346 = vpop.permute.xlu0 %3345
    %3347 = vrot.lane.b32.xlu0 %v2423, 32
    %v3348 = vpop.permute.xlu0 %3347
    %3349 = vrot.lane.b32.xlu0 %v2424, 32
    %v3350 = vpop.permute.xlu0 %3349
    %3351 = vrot.lane.b32.xlu0 %v2425, 32
    %v3352 = vpop.permute.xlu0 %3351
    %v3358 = vsel %vm564, %v3341, 0
    %v3361 = vsel %vm564, %v3342, 0
    %v3364 = vsel %vm564, %v3343, 0
    %v3367 = vsel %vm564, %v3344, 0
    %3369 = vmatprep.subr.bf16.mxu0 0
    %3370 = vmatpush1.bf16.msra.mxu0 %v3346
    %3371 = vmatprep.subr.bf16.mxu0 0
    %3372 = vmatpush1.bf16.msra.mxu0 %v3348
    %3373 = vmatprep.subr.bf16.mxu0 0
    %3374 = vmatpush1.bf16.msra.mxu0 %v3350
    %3375 = vmatprep.subr.bf16.mxu0 0
    %3376 = vmatpush1.bf16.msra.mxu0 %v3352
    %3377 = vmatprep.subr.bf16.mxu0 0
    %3378 = vmatpush1.bf16.msra.mxu0 0
    %3379 = vmatprep.subr.bf16.mxu0 0
    %3380 = vmatpush1.bf16.msra.mxu0 0
    %3381 = vmatprep.subr.bf16.mxu0 0
    %3382 = vmatpush1.bf16.msra.mxu0 0
    %3383 = vmatprep.subr.bf16.mxu0 0
    %3384 = vmatpush1.bf16.msra.mxu0 0
    %3385 = vmatprep.subr.bf16.mxu0 0
    %3386 = vmatpush1.bf16.msra.mxu0 0
    %3387 = vmatprep.subr.bf16.mxu0 0
    %3388 = vmatpush1.bf16.msra.mxu0 0
    %3389 = vmatprep.subr.bf16.mxu0 0
    %3390 = vmatpush1.bf16.msra.mxu0 0
    %3391 = vmatprep.subr.bf16.mxu0 0
    %3392 = vmatpush1.bf16.msra.mxu0 0
    %3393 = vmatprep.subr.bf16.mxu0 0
    %3394 = vmatpush1.bf16.msra.mxu0 0
    %3395 = vmatprep.subr.bf16.mxu0 0
    %3396 = vmatpush1.bf16.msra.mxu0 0
    %3397 = vmatprep.subr.bf16.mxu0 0
    %3398 = vmatpush1.bf16.msra.mxu0 0
    %3399 = vmatprep.subr.bf16.mxu0 0
    %3400 = vmatpush1.bf16.msra.mxu0 0
    %3401 = vmatprep.mubr.bf16.mxu0 0
    %3402 = vmatmul.mubr.bf16.gmra.mrb[0].mxu0 %v3358
    %v3403 = vpop.f32.mrb[0].mxu0
    %v3404 = vadd.f32 0.0, %v3403
    %v3405 = vpop.f32.mrb[0].mxu0
    %v3406 = vpop.f32.mrb[0].mxu0
    %v3407 = vadd.f32 0.0, %v3406
    %v3408 = vpop.f32.mrb[0].mxu0
    %3409 = vmatprep.mubr.bf16.mxu0 0
    %3410 = vmatmul.mubr.bf16.gmra.mrb[0].mxu0 %v3361
    %v3411 = vpop.f32.mrb[0].mxu0
    %v3412 = vadd.f32 0.0, %v3411
    %v3413 = vpop.f32.mrb[0].mxu0
    %v3414 = vpop.f32.mrb[0].mxu0
    %v3415 = vadd.f32 0.0, %v3414
    %v3416 = vpop.f32.mrb[0].mxu0
    %3417 = vmatprep.mubr.bf16.mxu0 0
    %3418 = vmatmul.mubr.bf16.gmra.mrb[0].mxu0 %v3364
    %v3419 = vpop.f32.mrb[0].mxu0
    %v3420 = vadd.f32 0.0, %v3419
    %v3421 = vpop.f32.mrb[0].mxu0
    %v3422 = vpop.f32.mrb[0].mxu0
    %v3423 = vadd.f32 0.0, %v3422
    %v3424 = vpop.f32.mrb[0].mxu0
    %3425 = vmatprep.mubr.bf16.mxu0 0
    %3426 = vmatmul.mubr.bf16.gmra.mrb[0].mxu0 %v3367
    %v3427 = vpop.f32.mrb[0].mxu0
    %v3428 = vadd.f32 0.0, %v3427
    %v3429 = vpop.f32.mrb[0].mxu0
    %v3430 = vpop.f32.mrb[0].mxu0
    %v3431 = vadd.f32 0.0, %v3430
    %v3432 = vpop.f32.mrb[0].mxu0
    %3433 = vdwg.mxu0
    %v3434 = vadd.f32 %v3172, %v3404
    %v3435 = vadd.f32 %v3173, %v3407
    %v3436 = vadd.f32 %v3174, %v3412
    %v3437 = vadd.f32 %v3175, %v3415
    %v3438 = vadd.f32 %v3176, %v3420
    %v3439 = vadd.f32 %v3177, %v3423
    %v3440 = vadd.f32 %v3178, %v3428
    %v3441 = vadd.f32 %v3179, %v3431
    %v3442 = vadd.f32 %v2078, %v3434
    %v3443 = vadd.f32 %v2079, %v3435
    %v3444 = vadd.f32 %v2080, %v3436
    %v3445 = vadd.f32 %v2081, %v3437
    %v3446 = vadd.f32 %v2082, %v3438
    %v3447 = vadd.f32 %v2083, %v3439
    %v3448 = vadd.f32 %v2084, %v3440
    %v3449 = vadd.f32 %v2085, %v3441
    %s3450 = scalar_lea.vmem %s11, 1
    %v3451 = vld [vmem:[%s3450] sm:$0x1]
    %v3453 = vlaneseq
    %v3454 = vshrl.u32 %v3453, 7
    %v3455 = vsub.s32 0, %v3454
    %v3456 = vrot.slane %v3451, %v3455
    %v3458 = vadd.f32 %v3442, %v3456
    %v3459 = vadd.f32 %v3443, %v3456
    %v3460 = vadd.f32 %v3444, %v3456
    %v3461 = vadd.f32 %v3445, %v3456
    %v3462 = vadd.f32 %v3446, %v3456
    %v3463 = vadd.f32 %v3447, %v3456
    %v3464 = vadd.f32 %v3448, %v3456
    %v3465 = vadd.f32 %v3449, %v3456
    %v3466 = vsel %vm111, %v3458, 0.0
    %3467 = vadd.xlane.f32.xlu0 %v3466
    %v3468 = vpop.xlane.xlu0 %3467
    %v3469 = vsel %vm111, %v3459, 0.0
    %3470 = vadd.xlane.f32.xlu0 %v3469
    %v3471 = vpop.xlane.xlu0 %3470
    %v3472 = vsel %vm111, %v3460, 0.0
    %3473 = vadd.xlane.f32.xlu0 %v3472
    %v3474 = vpop.xlane.xlu0 %3473
    %v3475 = vsel %vm111, %v3461, 0.0
    %3476 = vadd.xlane.f32.xlu0 %v3475
    %v3477 = vpop.xlane.xlu0 %3476
    %v3478 = vsel %vm111, %v3462, 0.0
    %3479 = vadd.xlane.f32.xlu0 %v3478
    %v3480 = vpop.xlane.xlu0 %3479
    %v3481 = vsel %vm111, %v3463, 0.0
    %3482 = vadd.xlane.f32.xlu0 %v3481
    %v3483 = vpop.xlane.xlu0 %3482
    %v3484 = vsel %vm111, %v3464, 0.0
    %3485 = vadd.xlane.f32.xlu0 %v3484
    %v3486 = vpop.xlane.xlu0 %3485
    %v3487 = vsel %vm111, %v3465, 0.0
    %3488 = vadd.xlane.f32.xlu0 %v3487
    %v3489 = vpop.xlane.xlu0 %3488
    %v3490 = vmul.f32 %v3468, %v136
    %v3491 = vmul.f32 %v3471, %v136
    %v3492 = vmul.f32 %v3474, %v136
    %v3493 = vmul.f32 %v3477, %v136
    %v3494 = vmul.f32 %v3480, %v136
    %v3495 = vmul.f32 %v3483, %v136
    %v3496 = vmul.f32 %v3486, %v136
    %v3497 = vmul.f32 %v3489, %v136
    %v3498 = vmul.f32 %v3458, %v3458
    %v3499 = vmul.f32 %v3459, %v3459
    %v3500 = vmul.f32 %v3460, %v3460
    %v3501 = vmul.f32 %v3461, %v3461
    %v3502 = vmul.f32 %v3462, %v3462
    %v3503 = vmul.f32 %v3463, %v3463
    %v3504 = vmul.f32 %v3464, %v3464
    %v3505 = vmul.f32 %v3465, %v3465
    %v3506 = vsel %vm111, %v3498, 0.0
    %3507 = vadd.xlane.f32.xlu0 %v3506
    %v3508 = vpop.xlane.xlu0 %3507
    %v3509 = vsel %vm111, %v3499, 0.0
    %3510 = vadd.xlane.f32.xlu0 %v3509
    %v3511 = vpop.xlane.xlu0 %3510
    %v3512 = vsel %vm111, %v3500, 0.0
    %3513 = vadd.xlane.f32.xlu0 %v3512
    %v3514 = vpop.xlane.xlu0 %3513
    %v3515 = vsel %vm111, %v3501, 0.0
    %3516 = vadd.xlane.f32.xlu0 %v3515
    %v3517 = vpop.xlane.xlu0 %3516
    %v3518 = vsel %vm111, %v3502, 0.0
    %3519 = vadd.xlane.f32.xlu0 %v3518
    %v3520 = vpop.xlane.xlu0 %3519
    %v3521 = vsel %vm111, %v3503, 0.0
    %3522 = vadd.xlane.f32.xlu0 %v3521
    %v3523 = vpop.xlane.xlu0 %3522
    %v3524 = vsel %vm111, %v3504, 0.0
    %3525 = vadd.xlane.f32.xlu0 %v3524
    %v3526 = vpop.xlane.xlu0 %3525
    %v3527 = vsel %vm111, %v3505, 0.0
    %3528 = vadd.xlane.f32.xlu0 %v3527
    %v3529 = vpop.xlane.xlu0 %3528
    %v3530 = vmul.f32 %v3508, %v136
    %v3531 = vmul.f32 %v3511, %v136
    %v3532 = vmul.f32 %v3514, %v136
    %v3533 = vmul.f32 %v3517, %v136
    %v3534 = vmul.f32 %v3520, %v136
    %v3535 = vmul.f32 %v3523, %v136
    %v3536 = vmul.f32 %v3526, %v136
    %v3537 = vmul.f32 %v3529, %v136
    %v3538 = vsub.f32 %v3458, %v3490
    %v3539 = vsub.f32 %v3459, %v3491
    %v3540 = vsub.f32 %v3460, %v3492
    %v3541 = vsub.f32 %v3461, %v3493
    %v3542 = vsub.f32 %v3462, %v3494
    %v3543 = vsub.f32 %v3463, %v3495
    %v3544 = vsub.f32 %v3464, %v3496
    %v3545 = vsub.f32 %v3465, %v3497
    %v3546 = vmul.f32 %v3490, %v3490
    %v3547 = vmul.f32 %v3491, %v3491
    %v3548 = vmul.f32 %v3492, %v3492
    %v3549 = vmul.f32 %v3493, %v3493
    %v3550 = vmul.f32 %v3494, %v3494
    %v3551 = vmul.f32 %v3495, %v3495
    %v3552 = vmul.f32 %v3496, %v3496
    %v3553 = vmul.f32 %v3497, %v3497
    %v3554 = vsub.f32 %v3530, %v3546
    %v3555 = vsub.f32 %v3531, %v3547
    %v3556 = vsub.f32 %v3532, %v3548
    %v3557 = vsub.f32 %v3533, %v3549
    %v3558 = vsub.f32 %v3534, %v3550
    %v3559 = vsub.f32 %v3535, %v3551
    %v3560 = vsub.f32 %v3536, %v3552
    %v3561 = vsub.f32 %v3537, %v3553
    %v3562 = vadd.f32 %v3554, 1e-05
    %v3563 = vadd.f32 %v3555, 1e-05
    %v3564 = vadd.f32 %v3556, 1e-05
    %v3565 = vadd.f32 %v3557, 1e-05
    %v3566 = vadd.f32 %v3558, 1e-05
    %v3567 = vadd.f32 %v3559, 1e-05
    %v3568 = vadd.f32 %v3560, 1e-05
    %v3569 = vadd.f32 %v3561, 1e-05
    %v3570 = vrsqrt.pop %v3562
    %v3571 = vrsqrt.pop %v3563
    %v3572 = vrsqrt.pop %v3564
    %v3573 = vrsqrt.pop %v3565
    %v3574 = vrsqrt.pop %v3566
    %v3575 = vrsqrt.pop %v3567
    %v3576 = vrsqrt.pop %v3568
    %v3577 = vrsqrt.pop %v3569
    %v3578 = vmul.f32 %v3538, %v3570
    %v3579 = vmul.f32 %v3539, %v3571
    %v3580 = vmul.f32 %v3540, %v3572
    %v3581 = vmul.f32 %v3541, %v3573
    %v3582 = vmul.f32 %v3542, %v3574
    %v3583 = vmul.f32 %v3543, %v3575
    %v3584 = vmul.f32 %v3544, %v3576
    %v3585 = vmul.f32 %v3545, %v3577
    %v3586 = vpack.c.bf16 %v3579, %v3578
    %v3587 = vpack.c.bf16 %v3581, %v3580
    %v3588 = vpack.c.bf16 %v3583, %v3582
    %v3589 = vpack.c.bf16 %v3585, %v3584
    %s3590 = scalar_lea.vmem %s12, 16
    %v3591 = vld [vmem:[%s3590] sm:$0xf]
    %v3592 = vld [vmem:[%s3590 + $0x4] sm:$0xf]
    %v3593 = vld [vmem:[%s3590 + $0x8] sm:$0xf]
    %v3594 = vld [vmem:[%s3590 + $0xc] sm:$0xf]
    %s3595 = scalar_lea.vmem %s13, 1
    %v3596 = vld [vmem:[%s3595] sm:$0x1]
    %v3598 = vlaneseq
    %v3599 = vshrl.u32 %v3598, 7
    %v3600 = vsub.s32 0, %v3599
    %v3601 = vrot.slane %v3596, %v3600
    %v3607 = vunpack.c.l.b16 %v3591
    %v3608 = vunpack.c.l.b16 %v3592
    %v3609 = vunpack.c.l.b16 %v3593
    %v3610 = vunpack.c.l.b16 %v3594
    %v3611 = vpack.c.b16 %v3608, %v3607
    %v3612 = vpack.c.b16 %v3610, %v3609
    %v3616 = vsel %vm111, %v3586, 0
    %v3619 = vsel %vm111, %v3587, 0
    %v3622 = vsel %vm111, %v3588, 0
    %v3625 = vsel %vm111, %v3589, 0
    %3627 = vmatprep.subr.bf16.mxu0 0
    %3628 = vmatpush1.bf16.msra.mxu0 %v3611
    %3629 = vmatprep.subr.bf16.mxu0 0
    %3630 = vmatpush1.bf16.msra.mxu0 %v3612
    %3631 = vmatprep.subr.bf16.mxu0 0
    %3632 = vmatpush1.bf16.msra.mxu0 0
    %3633 = vmatprep.subr.bf16.mxu0 0
    %3634 = vmatpush1.bf16.msra.mxu0 0
    %3635 = vmatprep.subr.bf16.mxu0 0
    %3636 = vmatpush1.bf16.msra.mxu0 0
    %3637 = vmatprep.subr.bf16.mxu0 0
    %3638 = vmatpush1.bf16.msra.mxu0 0
    %3639 = vmatprep.subr.bf16.mxu0 0
    %3640 = vmatpush1.bf16.msra.mxu0 0
    %3641 = vmatprep.subr.bf16.mxu0 0
    %3642 = vmatpush1.bf16.msra.mxu0 0
    %3643 = vmatprep.subr.bf16.mxu0 0
    %3644 = vmatpush1.bf16.msra.mxu0 0
    %3645 = vmatprep.subr.bf16.mxu0 0
    %3646 = vmatpush1.bf16.msra.mxu0 0
    %3647 = vmatprep.subr.bf16.mxu0 0
    %3648 = vmatpush1.bf16.msra.mxu0 0
    %3649 = vmatprep.subr.bf16.mxu0 0
    %3650 = vmatpush1.bf16.msra.mxu0 0
    %3651 = vmatprep.subr.bf16.mxu0 0
    %3652 = vmatpush1.bf16.msra.mxu0 0
    %3653 = vmatprep.subr.bf16.mxu0 0
    %3654 = vmatpush1.bf16.msra.mxu0 0
    %3655 = vmatprep.subr.bf16.mxu0 0
    %3656 = vmatpush1.bf16.msra.mxu0 0
    %3657 = vmatprep.subr.bf16.mxu0 0
    %3658 = vmatpush1.bf16.msra.mxu0 0
    %3659 = vmatprep.mubr.bf16.mxu0 0
    %3660 = vmatmul.mubr.bf16.gmra.mrb[0].mxu0 %v3616
    %v3661 = vpop.f32.mrb[0].mxu0
    %v3662 = vadd.f32 %v3601, %v3661
    %v3663 = vpop.f32.mrb[0].mxu0
    %v3664 = vpop.f32.mrb[0].mxu0
    %v3665 = vadd.f32 %v3601, %v3664
    %v3666 = vpop.f32.mrb[0].mxu0
    %3667 = vmatprep.mubr.bf16.mxu0 0
    %3668 = vmatmul.mubr.bf16.gmra.mrb[0].mxu0 %v3619
    %v3669 = vpop.f32.mrb[0].mxu0
    %v3670 = vadd.f32 %v3601, %v3669
    %v3671 = vpop.f32.mrb[0].mxu0
    %v3672 = vpop.f32.mrb[0].mxu0
    %v3673 = vadd.f32 %v3601, %v3672
    %v3674 = vpop.f32.mrb[0].mxu0
    %3675 = vmatprep.mubr.bf16.mxu0 0
    %3676 = vmatmul.mubr.bf16.gmra.mrb[0].mxu0 %v3622
    %v3677 = vpop.f32.mrb[0].mxu0
    %v3678 = vadd.f32 %v3601, %v3677
    %v3679 = vpop.f32.mrb[0].mxu0
    %v3680 = vpop.f32.mrb[0].mxu0
    %v3681 = vadd.f32 %v3601, %v3680
    %v3682 = vpop.f32.mrb[0].mxu0
    %3683 = vmatprep.mubr.bf16.mxu0 0
    %3684 = vmatmul.mubr.bf16.gmra.mrb[0].mxu0 %v3625
    %v3685 = vpop.f32.mrb[0].mxu0
    %v3686 = vadd.f32 %v3601, %v3685
    %v3687 = vpop.f32.mrb[0].mxu0
    %v3688 = vpop.f32.mrb[0].mxu0
    %v3689 = vadd.f32 %v3601, %v3688
    %v3690 = vpop.f32.mrb[0].mxu0
    %3691 = vdwg.mxu0
    %v3692 = vmul.f32 %v3662, 1.702
    %v3693 = vmul.f32 %v3665, 1.702
    %v3694 = vmul.f32 %v3670, 1.702
    %v3695 = vmul.f32 %v3673, 1.702
    %v3696 = vmul.f32 %v3678, 1.702
    %v3697 = vmul.f32 %v3681, 1.702
    %v3698 = vmul.f32 %v3686, 1.702
    %v3699 = vmul.f32 %v3689, 1.702
    %v3700 = vxor.u32 %v3692, 2147483648
    %v3701 = vxor.u32 %v3693, 2147483648
    %v3702 = vxor.u32 %v3694, 2147483648
    %v3703 = vxor.u32 %v3695, 2147483648
    %v3704 = vxor.u32 %v3696, 2147483648
    %v3705 = vxor.u32 %v3697, 2147483648
    %v3706 = vxor.u32 %v3698, 2147483648
    %v3707 = vxor.u32 %v3699, 2147483648
    %v3708 = vmul.f32 %v3700, 1.442695
    %v3709 = vpow.pop %v3708
    %v3710 = vmul.f32 %v3701, 1.442695
    %v3711 = vpow.pop %v3710
    %v3712 = vmul.f32 %v3702, 1.442695
    %v3713 = vpow.pop %v3712
    %v3714 = vmul.f32 %v3703, 1.442695
    %v3715 = vpow.pop %v3714
    %v3716 = vmul.f32 %v3704, 1.442695
    %v3717 = vpow.pop %v3716
    %v3718 = vmul.f32 %v3705, 1.442695
    %v3719 = vpow.pop %v3718
    %v3720 = vmul.f32 %v3706, 1.442695
    %v3721 = vpow.pop %v3720
    %v3722 = vmul.f32 %v3707, 1.442695
    %v3723 = vpow.pop %v3722
    %v3724 = vadd.f32 %v3709, 1.0
    %v3725 = vadd.f32 %v3711, 1.0
    %v3726 = vadd.f32 %v3713, 1.0
    %v3727 = vadd.f32 %v3715, 1.0
    %v3728 = vadd.f32 %v3717, 1.0
    %v3729 = vadd.f32 %v3719, 1.0
    %v3730 = vadd.f32 %v3721, 1.0
    %v3731 = vadd.f32 %v3723, 1.0
    %v3732 = vrcp.pop %v3724
    %v3733 = vmul.f32 1.0, %v3732
    %v3734 = vrcp.pop %v3725
    %v3735 = vmul.f32 1.0, %v3734
    %v3736 = vrcp.pop %v3726
    %v3737 = vmul.f32 1.0, %v3736
    %v3738 = vrcp.pop %v3727
    %v3739 = vmul.f32 1.0, %v3738
    %v3740 = vrcp.pop %v3728
    %v3741 = vmul.f32 1.0, %v3740
    %v3742 = vrcp.pop %v3729
    %v3743 = vmul.f32 1.0, %v3742
    %v3744 = vrcp.pop %v3730
    %v3745 = vmul.f32 1.0, %v3744
    %v3746 = vrcp.pop %v3731
    %v3747 = vmul.f32 1.0, %v3746
    %v3748 = vmul.f32 %v3662, %v3733
    %v3749 = vmul.f32 %v3665, %v3735
    %v3750 = vmul.f32 %v3670, %v3737
    %v3751 = vmul.f32 %v3673, %v3739
    %v3752 = vmul.f32 %v3678, %v3741
    %v3753 = vmul.f32 %v3681, %v3743
    %v3754 = vmul.f32 %v3686, %v3745
    %v3755 = vmul.f32 %v3689, %v3747
    %v3756 = vpack.c.bf16 %v3749, %v3748
    %v3757 = vpack.c.bf16 %v3751, %v3750
    %v3758 = vpack.c.bf16 %v3753, %v3752
    %v3759 = vpack.c.bf16 %v3755, %v3754
    %s3760 = scalar_lea.vmem %s14, 64
    %v3761 = vld [vmem:[%s3760] sm:$0xf]
    %v3762 = vld [vmem:[%s3760 + $0x4] sm:$0xf]
    %v3763 = vld [vmem:[%s3760 + $0x8] sm:$0xf]
    %v3764 = vld [vmem:[%s3760 + $0xc] sm:$0xf]
    %v3765 = vld [vmem:[%s3760 + $0x10] sm:$0xf]
    %v3766 = vld [vmem:[%s3760 + $0x14] sm:$0xf]
    %v3767 = vld [vmem:[%s3760 + $0x18] sm:$0xf]
    %v3768 = vld [vmem:[%s3760 + $0x1c] sm:$0xf]
    %v3769 = vld [vmem:[%s3760 + $0x20] sm:$0xf]
    %v3770 = vld [vmem:[%s3760 + $0x24] sm:$0xf]
    %v3771 = vld [vmem:[%s3760 + $0x28] sm:$0xf]
    %v3772 = vld [vmem:[%s3760 + $0x2c] sm:$0xf]
    %v3773 = vld [vmem:[%s3760 + $0x30] sm:$0xf]
    %v3774 = vld [vmem:[%s3760 + $0x34] sm:$0xf]
    %v3775 = vld [vmem:[%s3760 + $0x38] sm:$0xf]
    %v3776 = vld [vmem:[%s3760 + $0x3c] sm:$0xf]
    %v3793 = vunpack.c.l.b16 %v3761
    %v3794 = vunpack.c.l.b16 %v3762
    %v3795 = vunpack.c.l.b16 %v3763
    %v3796 = vunpack.c.l.b16 %v3764
    %v3797 = vunpack.c.l.b16 %v3765
    %v3798 = vunpack.c.l.b16 %v3766
    %v3799 = vunpack.c.l.b16 %v3767
    %v3800 = vunpack.c.l.b16 %v3768
    %v3801 = vunpack.c.l.b16 %v3769
    %v3802 = vunpack.c.l.b16 %v3770
    %v3803 = vunpack.c.l.b16 %v3771
    %v3804 = vunpack.c.l.b16 %v3772
    %v3805 = vunpack.c.l.b16 %v3773
    %v3806 = vunpack.c.l.b16 %v3774
    %v3807 = vunpack.c.l.b16 %v3775
    %v3808 = vunpack.c.l.b16 %v3776
    %v3809 = vpack.c.b16 %v3794, %v3793
    %v3810 = vpack.c.b16 %v3796, %v3795
    %v3811 = vpack.c.b16 %v3798, %v3797
    %v3812 = vpack.c.b16 %v3800, %v3799
    %v3813 = vpack.c.b16 %v3802, %v3801
    %v3814 = vpack.c.b16 %v3804, %v3803
    %v3815 = vpack.c.b16 %v3806, %v3805
    %v3816 = vpack.c.b16 %v3808, %v3807
    %3825 = vmatprep.subr.bf16.mxu0 0
    %3826 = vmatpush1.bf16.msra.mxu0 %v3809
    %3827 = vmatprep.subr.bf16.mxu0 0
    %3828 = vmatpush1.bf16.msra.mxu0 %v3810
    %3829 = vmatprep.subr.bf16.mxu0 0
    %3830 = vmatpush1.bf16.msra.mxu0 %v3811
    %3831 = vmatprep.subr.bf16.mxu0 0
    %3832 = vmatpush1.bf16.msra.mxu0 %v3812
    %3833 = vmatprep.subr.bf16.mxu0 0
    %3834 = vmatpush1.bf16.msra.mxu0 %v3813
    %3835 = vmatprep.subr.bf16.mxu0 0
    %3836 = vmatpush1.bf16.msra.mxu0 %v3814
    %3837 = vmatprep.subr.bf16.mxu0 0
    %3838 = vmatpush1.bf16.msra.mxu0 %v3815
    %3839 = vmatprep.subr.bf16.mxu0 0
    %3840 = vmatpush1.bf16.msra.mxu0 %v3816
    %3841 = vmatprep.subr.bf16.mxu0 0
    %3842 = vmatpush1.bf16.msra.mxu0 0
    %3843 = vmatprep.subr.bf16.mxu0 0
    %3844 = vmatpush1.bf16.msra.mxu0 0
    %3845 = vmatprep.subr.bf16.mxu0 0
    %3846 = vmatpush1.bf16.msra.mxu0 0
    %3847 = vmatprep.subr.bf16.mxu0 0
    %3848 = vmatpush1.bf16.msra.mxu0 0
    %3849 = vmatprep.subr.bf16.mxu0 0
    %3850 = vmatpush1.bf16.msra.mxu0 0
    %3851 = vmatprep.subr.bf16.mxu0 0
    %3852 = vmatpush1.bf16.msra.mxu0 0
    %3853 = vmatprep.subr.bf16.mxu0 0
    %3854 = vmatpush1.bf16.msra.mxu0 0
    %3855 = vmatprep.subr.bf16.mxu0 0
    %3856 = vmatpush1.bf16.msra.mxu0 0
    %3857 = vmatprep.mubr.bf16.mxu0 0
    %3858 = vmatmul.mubr.bf16.gmra.mrb[0].mxu0 %v3756
    %v3859 = vpop.f32.mrb[0].mxu0
    %v3860 = vadd.f32 0.0, %v3859
    %v3861 = vpop.f32.mrb[0].mxu0
    %v3862 = vpop.f32.mrb[0].mxu0
    %v3863 = vadd.f32 0.0, %v3862
    %v3864 = vpop.f32.mrb[0].mxu0
    %3865 = vmatprep.mubr.bf16.mxu0 0
    %3866 = vmatmul.mubr.bf16.gmra.mrb[0].mxu0 %v3757
    %v3867 = vpop.f32.mrb[0].mxu0
    %v3868 = vadd.f32 0.0, %v3867
    %v3869 = vpop.f32.mrb[0].mxu0
    %v3870 = vpop.f32.mrb[0].mxu0
    %v3871 = vadd.f32 0.0, %v3870
    %v3872 = vpop.f32.mrb[0].mxu0
    %3873 = vmatprep.mubr.bf16.mxu0 0
    %3874 = vmatmul.mubr.bf16.gmra.mrb[0].mxu0 %v3758
    %v3875 = vpop.f32.mrb[0].mxu0
    %v3876 = vadd.f32 0.0, %v3875
    %v3877 = vpop.f32.mrb[0].mxu0
    %v3878 = vpop.f32.mrb[0].mxu0
    %v3879 = vadd.f32 0.0, %v3878
    %v3880 = vpop.f32.mrb[0].mxu0
    %3881 = vmatprep.mubr.bf16.mxu0 0
    %3882 = vmatmul.mubr.bf16.gmra.mrb[0].mxu0 %v3759
    %v3883 = vpop.f32.mrb[0].mxu0
    %v3884 = vadd.f32 0.0, %v3883
    %v3885 = vpop.f32.mrb[0].mxu0
    %v3886 = vpop.f32.mrb[0].mxu0
    %v3887 = vadd.f32 0.0, %v3886
    %v3888 = vpop.f32.mrb[0].mxu0
    %3889 = vdwg.mxu0
    %v3890 = vadd.f32 %v3458, %v3860
    %v3891 = vadd.f32 %v3459, %v3863
    %v3892 = vadd.f32 %v3460, %v3868
    %v3893 = vadd.f32 %v3461, %v3871
    %v3894 = vadd.f32 %v3462, %v3876
    %v3895 = vadd.f32 %v3463, %v3879
    %v3896 = vadd.f32 %v3464, %v3884
    %v3897 = vadd.f32 %v3465, %v3887
    %s3898 = scalar_lea.vmem %s15, 1
    %v3899 = vld [vmem:[%s3898] sm:$0x1]
    %v3901 = vlaneseq
    %v3902 = vshrl.u32 %v3901, 7
    %v3903 = vsub.s32 0, %v3902
    %v3904 = vrot.slane %v3899, %v3903
    %v3906 = vadd.f32 %v3890, %v3904
    %v3907 = vadd.f32 %v3891, %v3904
    %v3908 = vadd.f32 %v3892, %v3904
    %v3909 = vadd.f32 %v3893, %v3904
    %v3910 = vadd.f32 %v3894, %v3904
    %v3911 = vadd.f32 %v3895, %v3904
    %v3912 = vadd.f32 %v3896, %v3904
    %v3913 = vadd.f32 %v3897, %v3904
    %v3914 = vmul.f32 %v3906, %v103
    %v3915 = vmul.f32 %v3907, %v104
    %v3916 = vmul.f32 %v3908, %v105
    %v3917 = vmul.f32 %v3909, %v106
    %v3918 = vmul.f32 %v3910, %v107
    %v3919 = vmul.f32 %v3911, %v108
    %v3920 = vmul.f32 %v3912, %v109
    %v3921 = vmul.f32 %v3913, %v110
    %v3922 = vld [vmem:[%s3] sm:$0xf]
    %v3924 = vsel %vm1969, %v3922, 0
    %3926 = vmatprep.subr.mxu0 0.0
    %3927 = vmatpush1.msra.mxu0 %v3924
    %3928 = vmatprep.subr.mxu0 0.0
    %3929 = vmatpush1.msra.mxu0 0.0
    %3930 = vmatprep.subr.mxu0 0.0
    %3931 = vmatpush1.msra.mxu0 0.0
    %3932 = vmatprep.subr.mxu0 0.0
    %3933 = vmatpush1.msra.mxu0 0.0
    %3934 = vmatprep.subr.mxu0 0.0
    %3935 = vmatpush1.msra.mxu0 0.0
    %3936 = vmatprep.subr.mxu0 0.0
    %3937 = vmatpush1.msra.mxu0 0.0
    %3938 = vmatprep.subr.mxu0 0.0
    %3939 = vmatpush1.msra.mxu0 0.0
    %3940 = vmatprep.subr.mxu0 0.0
    %3941 = vmatpush1.msra.mxu0 0.0
    %3942 = vmatprep.subr.mxu0 0.0
    %3943 = vmatpush1.msra.mxu0 0.0
    %3944 = vmatprep.subr.mxu0 0.0
    %3945 = vmatpush1.msra.mxu0 0.0
    %3946 = vmatprep.subr.mxu0 0.0
    %3947 = vmatpush1.msra.mxu0 0.0
    %3948 = vmatprep.subr.mxu0 0.0
    %3949 = vmatpush1.msra.mxu0 0.0
    %3950 = vmatprep.subr.mxu0 0.0
    %3951 = vmatpush1.msra.mxu0 0.0
    %3952 = vmatprep.subr.mxu0 0.0
    %3953 = vmatpush1.msra.mxu0 0.0
    %3954 = vmatprep.subr.mxu0 0.0
    %3955 = vmatpush1.msra.mxu0 0.0
    %3956 = vmatprep.subr.mxu0 0.0
    %3957 = vmatpush1.msra.mxu0 0.0
    %3958 = vmatprep.subr.mxu0 0.0
    %3959 = vmatpush1.msra.mxu0 0.0
    %3960 = vmatprep.subr.mxu0 0.0
    %3961 = vmatpush1.msra.mxu0 0.0
    %3962 = vmatprep.subr.mxu0 0.0
    %3963 = vmatpush1.msra.mxu0 0.0
    %3964 = vmatprep.subr.mxu0 0.0
    %3965 = vmatpush1.msra.mxu0 0.0
    %3966 = vmatprep.subr.mxu0 0.0
    %3967 = vmatpush1.msra.mxu0 0.0
    %3968 = vmatprep.subr.mxu0 0.0
    %3969 = vmatpush1.msra.mxu0 0.0
    %3970 = vmatprep.subr.mxu0 0.0
    %3971 = vmatpush1.msra.mxu0 0.0
    %3972 = vmatprep.subr.mxu0 0.0
    %3973 = vmatpush1.msra.mxu0 0.0
    %3974 = vmatprep.subr.mxu0 0.0
    %3975 = vmatpush1.msra.mxu0 0.0
    %3976 = vmatprep.subr.mxu0 0.0
    %3977 = vmatpush1.msra.mxu0 0.0
    %3978 = vmatprep.subr.mxu0 0.0
    %3979 = vmatpush1.msra.mxu0 0.0
    %3980 = vmatprep.subr.mxu0 0.0
    %3981 = vmatpush1.msra.mxu0 0.0
    %3982 = vmatprep.subr.mxu0 0.0
    %3983 = vmatpush1.msra.mxu0 0.0
    %3984 = vmatprep.subr.mxu0 0.0
    %3985 = vmatpush1.msra.mxu0 0.0
    %3986 = vmatprep.subr.mxu0 0.0
    %3987 = vmatpush1.msra.mxu0 0.0
    %3988 = vmatprep.subr.mxu0 0.0
    %3989 = vmatpush1.msra.mxu0 0.0
    %3990 = vmatprep.mubr.f32.mxu0 0.0
    %3991 = vmatmul.mubr.f32.gmra.mrb[0].mxu0 %v1946
    %v3992 = vpop.f32.mrb[0].mxu0
    %v3993 = vadd.f32 0.0, %v3992
    %v3994 = vpop.f32.mrb[0].mxu0
    %3995 = vmatprep.mubr.f32.mxu0 0.0
    %3996 = vmatmul.mubr.f32.gmra.mrb[0].mxu0 %v1949
    %v3997 = vpop.f32.mrb[0].mxu0
    %v3998 = vadd.f32 0.0, %v3997
    %v3999 = vpop.f32.mrb[0].mxu0
    %4000 = vmatprep.mubr.f32.mxu0 0.0
    %4001 = vmatmul.mubr.f32.gmra.mrb[0].mxu0 %v1952
    %v4002 = vpop.f32.mrb[0].mxu0
    %v4003 = vadd.f32 0.0, %v4002
    %v4004 = vpop.f32.mrb[0].mxu0
    %4005 = vmatprep.mubr.f32.mxu0 0.0
    %4006 = vmatmul.mubr.f32.gmra.mrb[0].mxu0 %v1955
    %v4007 = vpop.f32.mrb[0].mxu0
    %v4008 = vadd.f32 0.0, %v4007
    %v4009 = vpop.f32.mrb[0].mxu0
    %4010 = vmatprep.mubr.f32.mxu0 0.0
    %4011 = vmatmul.mubr.f32.gmra.mrb[0].mxu0 %v1958
    %v4012 = vpop.f32.mrb[0].mxu0
    %v4013 = vadd.f32 0.0, %v4012
    %v4014 = vpop.f32.mrb[0].mxu0
    %4015 = vmatprep.mubr.f32.mxu0 0.0
    %4016 = vmatmul.mubr.f32.gmra.mrb[0].mxu0 %v1961
    %v4017 = vpop.f32.mrb[0].mxu0
    %v4018 = vadd.f32 0.0, %v4017
    %v4019 = vpop.f32.mrb[0].mxu0
    %4020 = vmatprep.mubr.f32.mxu0 0.0
    %4021 = vmatmul.mubr.f32.gmra.mrb[0].mxu0 %v1964
    %v4022 = vpop.f32.mrb[0].mxu0
    %v4023 = vadd.f32 0.0, %v4022
    %v4024 = vpop.f32.mrb[0].mxu0
    %4025 = vmatprep.mubr.f32.mxu0 0.0
    %4026 = vmatmul.mubr.f32.gmra.mrb[0].mxu0 %v1967
    %v4027 = vpop.f32.mrb[0].mxu0
    %v4028 = vadd.f32 0.0, %v4027
    %v4029 = vpop.f32.mrb[0].mxu0
    %4030 = vdwg.mxu0
    %v4031 = vadd.f32 %v3914, %v3993
    %v4032 = vadd.f32 %v3915, %v3998
    %v4033 = vadd.f32 %v3916, %v4003
    %v4034 = vadd.f32 %v3917, %v4008
    %v4035 = vadd.f32 %v3918, %v4013
    %v4036 = vadd.f32 %v3919, %v4018
    %v4037 = vadd.f32 %v3920, %v4023
    %v4038 = vadd.f32 %v3921, %v4028
    %v4039 = vsel %vm111, %v4031, 0.0
    %4040 = vadd.xlane.f32.xlu0 %v4039
    %v4041 = vpop.xlane.xlu0 %4040
    %v4042 = vsel %vm111, %v4032, 0.0
    %4043 = vadd.xlane.f32.xlu0 %v4042
    %v4044 = vpop.xlane.xlu0 %4043
    %v4045 = vsel %vm111, %v4033, 0.0
    %4046 = vadd.xlane.f32.xlu0 %v4045
    %v4047 = vpop.xlane.xlu0 %4046
    %v4048 = vsel %vm111, %v4034, 0.0
    %4049 = vadd.xlane.f32.xlu0 %v4048
    %v4050 = vpop.xlane.xlu0 %4049
    %v4051 = vsel %vm111, %v4035, 0.0
    %4052 = vadd.xlane.f32.xlu0 %v4051
    %v4053 = vpop.xlane.xlu0 %4052
    %v4054 = vsel %vm111, %v4036, 0.0
    %4055 = vadd.xlane.f32.xlu0 %v4054
    %v4056 = vpop.xlane.xlu0 %4055
    %v4057 = vsel %vm111, %v4037, 0.0
    %4058 = vadd.xlane.f32.xlu0 %v4057
    %v4059 = vpop.xlane.xlu0 %4058
    %v4060 = vsel %vm111, %v4038, 0.0
    %4061 = vadd.xlane.f32.xlu0 %v4060
    %v4062 = vpop.xlane.xlu0 %4061
    %v4063 = vmul.f32 %v4041, %v136
    %v4064 = vmul.f32 %v4044, %v136
    %v4065 = vmul.f32 %v4047, %v136
    %v4066 = vmul.f32 %v4050, %v136
    %v4067 = vmul.f32 %v4053, %v136
    %v4068 = vmul.f32 %v4056, %v136
    %v4069 = vmul.f32 %v4059, %v136
    %v4070 = vmul.f32 %v4062, %v136
    %v4071 = vmul.f32 %v4031, %v4031
    %v4072 = vmul.f32 %v4032, %v4032
    %v4073 = vmul.f32 %v4033, %v4033
    %v4074 = vmul.f32 %v4034, %v4034
    %v4075 = vmul.f32 %v4035, %v4035
    %v4076 = vmul.f32 %v4036, %v4036
    %v4077 = vmul.f32 %v4037, %v4037
    %v4078 = vmul.f32 %v4038, %v4038
    %v4079 = vsel %vm111, %v4071, 0.0
    %4080 = vadd.xlane.f32.xlu0 %v4079
    %v4081 = vpop.xlane.xlu0 %4080
    %v4082 = vsel %vm111, %v4072, 0.0
    %4083 = vadd.xlane.f32.xlu0 %v4082
    %v4084 = vpop.xlane.xlu0 %4083
    %v4085 = vsel %vm111, %v4073, 0.0
    %4086 = vadd.xlane.f32.xlu0 %v4085
    %v4087 = vpop.xlane.xlu0 %4086
    %v4088 = vsel %vm111, %v4074, 0.0
    %4089 = vadd.xlane.f32.xlu0 %v4088
    %v4090 = vpop.xlane.xlu0 %4089
    %v4091 = vsel %vm111, %v4075, 0.0
    %4092 = vadd.xlane.f32.xlu0 %v4091
    %v4093 = vpop.xlane.xlu0 %4092
    %v4094 = vsel %vm111, %v4076, 0.0
    %4095 = vadd.xlane.f32.xlu0 %v4094
    %v4096 = vpop.xlane.xlu0 %4095
    %v4097 = vsel %vm111, %v4077, 0.0
    %4098 = vadd.xlane.f32.xlu0 %v4097
    %v4099 = vpop.xlane.xlu0 %4098
    %v4100 = vsel %vm111, %v4078, 0.0
    %4101 = vadd.xlane.f32.xlu0 %v4100
    %v4102 = vpop.xlane.xlu0 %4101
    %v4103 = vmul.f32 %v4081, %v136
    %v4104 = vmul.f32 %v4084, %v136
    %v4105 = vmul.f32 %v4087, %v136
    %v4106 = vmul.f32 %v4090, %v136
    %v4107 = vmul.f32 %v4093, %v136
    %v4108 = vmul.f32 %v4096, %v136
    %v4109 = vmul.f32 %v4099, %v136
    %v4110 = vmul.f32 %v4102, %v136
    %v4111 = vsub.f32 %v4031, %v4063
    %v4112 = vsub.f32 %v4032, %v4064
    %v4113 = vsub.f32 %v4033, %v4065
    %v4114 = vsub.f32 %v4034, %v4066
    %v4115 = vsub.f32 %v4035, %v4067
    %v4116 = vsub.f32 %v4036, %v4068
    %v4117 = vsub.f32 %v4037, %v4069
    %v4118 = vsub.f32 %v4038, %v4070
    %v4119 = vmul.f32 %v4063, %v4063
    %v4120 = vmul.f32 %v4064, %v4064
    %v4121 = vmul.f32 %v4065, %v4065
    %v4122 = vmul.f32 %v4066, %v4066
    %v4123 = vmul.f32 %v4067, %v4067
    %v4124 = vmul.f32 %v4068, %v4068
    %v4125 = vmul.f32 %v4069, %v4069
    %v4126 = vmul.f32 %v4070, %v4070
    %v4127 = vsub.f32 %v4103, %v4119
    %v4128 = vsub.f32 %v4104, %v4120
    %v4129 = vsub.f32 %v4105, %v4121
    %v4130 = vsub.f32 %v4106, %v4122
    %v4131 = vsub.f32 %v4107, %v4123
    %v4132 = vsub.f32 %v4108, %v4124
    %v4133 = vsub.f32 %v4109, %v4125
    %v4134 = vsub.f32 %v4110, %v4126
    %v4135 = vadd.f32 %v4127, 1e-05
    %v4136 = vadd.f32 %v4128, 1e-05
    %v4137 = vadd.f32 %v4129, 1e-05
    %v4138 = vadd.f32 %v4130, 1e-05
    %v4139 = vadd.f32 %v4131, 1e-05
    %v4140 = vadd.f32 %v4132, 1e-05
    %v4141 = vadd.f32 %v4133, 1e-05
    %v4142 = vadd.f32 %v4134, 1e-05
    %v4143 = vrsqrt.pop %v4135
    %v4144 = vrsqrt.pop %v4136
    %v4145 = vrsqrt.pop %v4137
    %v4146 = vrsqrt.pop %v4138
    %v4147 = vrsqrt.pop %v4139
    %v4148 = vrsqrt.pop %v4140
    %v4149 = vrsqrt.pop %v4141
    %v4150 = vrsqrt.pop %v4142
    %v4151 = vmul.f32 %v4111, %v4143
    %v4152 = vmul.f32 %v4112, %v4144
    %v4153 = vmul.f32 %v4113, %v4145
    %v4154 = vmul.f32 %v4114, %v4146
    %v4155 = vmul.f32 %v4115, %v4147
    %v4156 = vmul.f32 %v4116, %v4148
    %v4157 = vmul.f32 %v4117, %v4149
    %v4158 = vmul.f32 %v4118, %v4150
    %v4159 = vpack.c.bf16 %v4152, %v4151
    %v4160 = vpack.c.bf16 %v4154, %v4153
    %v4161 = vpack.c.bf16 %v4156, %v4155
    %v4162 = vpack.c.bf16 %v4158, %v4157
    %s4163 = scalar_lea.vmem %s8, 32
    %v4164 = vld [vmem:[%s4163] sm:$0xf]
    %v4165 = vld [vmem:[%s4163 + $0x4] sm:$0xf]
    %v4166 = vld [vmem:[%s4163 + $0x8] sm:$0xf]
    %v4167 = vld [vmem:[%s4163 + $0xc] sm:$0xf]
    %s4168 = scalar_lea.vmem %s9, 2
    %v4169 = vld [vmem:[%s4168] sm:$0x1]
    %v4171 = vlaneseq
    %v4172 = vshrl.u32 %v4171, 7
    %v4173 = vsub.s32 0, %v4172
    %v4174 = vrot.slane %v4169, %v4173
    %v4180 = vunpack.c.l.b16 %v4164
    %v4181 = vunpack.c.l.b16 %v4165
    %v4182 = vunpack.c.l.b16 %v4166
    %v4183 = vunpack.c.l.b16 %v4167
    %v4184 = vpack.c.b16 %v4181, %v4180
    %v4185 = vpack.c.b16 %v4183, %v4182
    %v4189 = vsel %vm111, %v4159, 0
    %v4192 = vsel %vm111, %v4160, 0
    %v4195 = vsel %vm111, %v4161, 0
    %v4198 = vsel %vm111, %v4162, 0
    %4200 = vmatprep.subr.bf16.mxu0 0
    %4201 = vmatpush1.bf16.msra.mxu0 %v4184
    %4202 = vmatprep.subr.bf16.mxu0 0
    %4203 = vmatpush1.bf16.msra.mxu0 %v4185
    %4204 = vmatprep.subr.bf16.mxu0 0
    %4205 = vmatpush1.bf16.msra.mxu0 0
    %4206 = vmatprep.subr.bf16.mxu0 0
    %4207 = vmatpush1.bf16.msra.mxu0 0
    %4208 = vmatprep.subr.bf16.mxu0 0
    %4209 = vmatpush1.bf16.msra.mxu0 0
    %4210 = vmatprep.subr.bf16.mxu0 0
    %4211 = vmatpush1.bf16.msra.mxu0 0
    %4212 = vmatprep.subr.bf16.mxu0 0
    %4213 = vmatpush1.bf16.msra.mxu0 0
    %4214 = vmatprep.subr.bf16.mxu0 0
    %4215 = vmatpush1.bf16.msra.mxu0 0
    %4216 = vmatprep.subr.bf16.mxu0 0
    %4217 = vmatpush1.bf16.msra.mxu0 0
    %4218 = vmatprep.subr.bf16.mxu0 0
    %4219 = vmatpush1.bf16.msra.mxu0 0
    %4220 = vmatprep.subr.bf16.mxu0 0
    %4221 = vmatpush1.bf16.msra.mxu0 0
    %4222 = vmatprep.subr.bf16.mxu0 0
    %4223 = vmatpush1.bf16.msra.mxu0 0
    %4224 = vmatprep.subr.bf16.mxu0 0
    %4225 = vmatpush1.bf16.msra.mxu0 0
    %4226 = vmatprep.subr.bf16.mxu0 0
    %4227 = vmatpush1.bf16.msra.mxu0 0
    %4228 = vmatprep.subr.bf16.mxu0 0
    %4229 = vmatpush1.bf16.msra.mxu0 0
    %4230 = vmatprep.subr.bf16.mxu0 0
    %4231 = vmatpush1.bf16.msra.mxu0 0
    %4232 = vmatprep.mubr.bf16.mxu0 0
    %4233 = vmatmul.mubr.bf16.gmra.mrb[0].mxu0 %v4189
    %v4234 = vpop.f32.mrb[0].mxu0
    %v4235 = vadd.f32 %v4174, %v4234
    %v4236 = vpop.f32.mrb[0].mxu0
    %v4237 = vpop.f32.mrb[0].mxu0
    %v4238 = vadd.f32 %v4174, %v4237
    %v4239 = vpop.f32.mrb[0].mxu0
    %4240 = vmatprep.mubr.bf16.mxu0 0
    %4241 = vmatmul.mubr.bf16.gmra.mrb[0].mxu0 %v4192
    %v4242 = vpop.f32.mrb[0].mxu0
    %v4243 = vadd.f32 %v4174, %v4242
    %v4244 = vpop.f32.mrb[0].mxu0
    %v4245 = vpop.f32.mrb[0].mxu0
    %v4246 = vadd.f32 %v4174, %v4245
    %v4247 = vpop.f32.mrb[0].mxu0
    %4248 = vmatprep.mubr.bf16.mxu0 0
    %4249 = vmatmul.mubr.bf16.gmra.mrb[0].mxu0 %v4195
    %v4250 = vpop.f32.mrb[0].mxu0
    %v4251 = vadd.f32 %v4174, %v4250
    %v4252 = vpop.f32.mrb[0].mxu0
    %v4253 = vpop.f32.mrb[0].mxu0
    %v4254 = vadd.f32 %v4174, %v4253
    %v4255 = vpop.f32.mrb[0].mxu0
    %4256 = vmatprep.mubr.bf16.mxu0 0
    %4257 = vmatmul.mubr.bf16.gmra.mrb[0].mxu0 %v4198
    %v4258 = vpop.f32.mrb[0].mxu0
    %v4259 = vadd.f32 %v4174, %v4258
    %v4260 = vpop.f32.mrb[0].mxu0
    %v4261 = vpop.f32.mrb[0].mxu0
    %v4262 = vadd.f32 %v4174, %v4261
    %v4263 = vpop.f32.mrb[0].mxu0
    %4264 = vdwg.mxu0
    %v4265 = vpack.c.bf16 %v4238, %v4235
    %v4266 = vpack.c.bf16 %v4246, %v4243
    %v4267 = vpack.c.bf16 %v4254, %v4251
    %v4268 = vpack.c.bf16 %v4262, %v4259
    %s4269 = scalar_lea.vmem %s10, 32
    %v4270 = vld [vmem:[%s4269] sm:$0xf]
    %v4271 = vld [vmem:[%s4269 + $0x4] sm:$0xf]
    %v4272 = vld [vmem:[%s4269 + $0x8] sm:$0xf]
    %v4273 = vld [vmem:[%s4269 + $0xc] sm:$0xf]
    %4278 = vrot.lane.b32.xlu0 %v4265, 64
    %v4279 = vpop.permute.xlu0 %4278
    %4280 = vrot.lane.b32.xlu0 %v4266, 64
    %v4281 = vpop.permute.xlu0 %4280
    %4282 = vrot.lane.b32.xlu0 %v4267, 64
    %v4283 = vpop.permute.xlu0 %4282
    %4284 = vrot.lane.b32.xlu0 %v4268, 64
    %v4285 = vpop.permute.xlu0 %4284
    %v4290 = vunpack.c.l.b16 %v4270
    %v4291 = vunpack.c.l.b16 %v4271
    %v4292 = vunpack.c.l.b16 %v4272
    %v4293 = vunpack.c.l.b16 %v4273
    %v4294 = vpack.c.b16 %v4291, %v4290
    %v4295 = vpack.c.b16 %v4293, %v4292
    %v4299 = vsel %vm111, %v4279, 0
    %v4302 = vsel %vm111, %v4281, 0
    %v4305 = vsel %vm111, %v4283, 0
    %v4308 = vsel %vm111, %v4285, 0
    %4310 = vmatprep.subr.bf16.mxu0 0
    %4311 = vmatpush1.bf16.msra.mxu0 %v4294
    %4312 = vmatprep.subr.bf16.mxu0 0
    %4313 = vmatpush1.bf16.msra.mxu0 %v4295
    %4314 = vmatprep.subr.bf16.mxu0 0
    %4315 = vmatpush1.bf16.msra.mxu0 0
    %4316 = vmatprep.subr.bf16.mxu0 0
    %4317 = vmatpush1.bf16.msra.mxu0 0
    %4318 = vmatprep.subr.bf16.mxu0 0
    %4319 = vmatpush1.bf16.msra.mxu0 0
    %4320 = vmatprep.subr.bf16.mxu0 0
    %4321 = vmatpush1.bf16.msra.mxu0 0
    %4322 = vmatprep.subr.bf16.mxu0 0
    %4323 = vmatpush1.bf16.msra.mxu0 0
    %4324 = vmatprep.subr.bf16.mxu0 0
    %4325 = vmatpush1.bf16.msra.mxu0 0
    %4326 = vmatprep.subr.bf16.mxu0 0
    %4327 = vmatpush1.bf16.msra.mxu0 0
    %4328 = vmatprep.subr.bf16.mxu0 0
    %4329 = vmatpush1.bf16.msra.mxu0 0
    %4330 = vmatprep.subr.bf16.mxu0 0
    %4331 = vmatpush1.bf16.msra.mxu0 0
    %4332 = vmatprep.subr.bf16.mxu0 0
    %4333 = vmatpush1.bf16.msra.mxu0 0
    %4334 = vmatprep.subr.bf16.mxu0 0
    %4335 = vmatpush1.bf16.msra.mxu0 0
    %4336 = vmatprep.subr.bf16.mxu0 0
    %4337 = vmatpush1.bf16.msra.mxu0 0
    %4338 = vmatprep.subr.bf16.mxu0 0
    %4339 = vmatpush1.bf16.msra.mxu0 0
    %4340 = vmatprep.subr.bf16.mxu0 0
    %4341 = vmatpush1.bf16.msra.mxu0 0
    %4342 = vmatprep.mubr.bf16.mxu0 0
    %4343 = vmatmul.mubr.bf16.gmra.mrb[0].mxu0 %v4299
    %v4344 = vpop.f32.mrb[0].mxu0
    %v4345 = vadd.f32 0.0, %v4344
    %v4346 = vpop.f32.mrb[0].mxu0
    %v4347 = vpop.f32.mrb[0].mxu0
    %v4348 = vadd.f32 0.0, %v4347
    %v4349 = vpop.f32.mrb[0].mxu0
    %4350 = vmatprep.mubr.bf16.mxu0 0
    %4351 = vmatmul.mubr.bf16.gmra.mrb[0].mxu0 %v4302
    %v4352 = vpop.f32.mrb[0].mxu0
    %v4353 = vadd.f32 0.0, %v4352
    %v4354 = vpop.f32.mrb[0].mxu0
    %v4355 = vpop.f32.mrb[0].mxu0
    %v4356 = vadd.f32 0.0, %v4355
    %v4357 = vpop.f32.mrb[0].mxu0
    %4358 = vmatprep.mubr.bf16.mxu0 0
    %4359 = vmatmul.mubr.bf16.gmra.mrb[0].mxu0 %v4305
    %v4360 = vpop.f32.mrb[0].mxu0
    %v4361 = vadd.f32 0.0, %v4360
    %v4362 = vpop.f32.mrb[0].mxu0
    %v4363 = vpop.f32.mrb[0].mxu0
    %v4364 = vadd.f32 0.0, %v4363
    %v4365 = vpop.f32.mrb[0].mxu0
    %4366 = vmatprep.mubr.bf16.mxu0 0
    %4367 = vmatmul.mubr.bf16.gmra.mrb[0].mxu0 %v4308
    %v4368 = vpop.f32.mrb[0].mxu0
    %v4369 = vadd.f32 0.0, %v4368
    %v4370 = vpop.f32.mrb[0].mxu0
    %v4371 = vpop.f32.mrb[0].mxu0
    %v4372 = vadd.f32 0.0, %v4371
    %v4373 = vpop.f32.mrb[0].mxu0
    %4374 = vdwg.mxu0
    %v4375 = vpack.c.bf16 %v4348, %v4345
    %v4376 = vpack.c.bf16 %v4356, %v4353
    %v4377 = vpack.c.bf16 %v4364, %v4361
    %v4378 = vpack.c.bf16 %v4372, %v4369
    %4379 = vrot.lane.b32.xlu0 %v4265, 96
    %v4380 = vpop.permute.xlu0 %4379
    %4381 = vrot.lane.b32.xlu0 %v4266, 96
    %v4382 = vpop.permute.xlu0 %4381
    %4383 = vrot.lane.b32.xlu0 %v4267, 96
    %v4384 = vpop.permute.xlu0 %4383
    %4385 = vrot.lane.b32.xlu0 %v4268, 96
    %v4386 = vpop.permute.xlu0 %4385
    %v4388 = vsel %vm458, %v4265, 0
    %v4391 = vsel %vm458, %v4266, 0
    %v4394 = vsel %vm458, %v4267, 0
    %v4397 = vsel %vm458, %v4268, 0
    %v4400 = vsel %vm458, %v4380, 0
    %v4403 = vsel %vm458, %v4382, 0
    %v4406 = vsel %vm458, %v4384, 0
    %v4409 = vsel %vm458, %v4386, 0
    %4411 = vmatprep.subr.bf16.mxu0 0
    %4412 = vmatpush1.bf16.xpose.msra.mxu0 %v4400
    %4413 = vmatprep.subr.bf16.mxu0 0
    %4414 = vmatpush1.bf16.xpose.msra.mxu0 %v4403
    %4415 = vmatprep.subr.bf16.mxu0 0
    %4416 = vmatpush1.bf16.xpose.msra.mxu0 %v4406
    %4417 = vmatprep.subr.bf16.mxu0 0
    %4418 = vmatpush1.bf16.xpose.msra.mxu0 %v4409
    %4419 = vmatprep.subr.bf16.mxu0 0
    %4420 = vmatpush1.bf16.xpose.msra.mxu0 0
    %4421 = vmatprep.subr.bf16.mxu0 0
    %4422 = vmatpush1.bf16.xpose.msra.mxu0 0
    %4423 = vmatprep.subr.bf16.mxu0 0
    %4424 = vmatpush1.bf16.xpose.msra.mxu0 0
    %4425 = vmatprep.subr.bf16.mxu0 0
    %4426 = vmatpush1.bf16.xpose.msra.mxu0 0
    %4427 = vmatprep.subr.bf16.mxu0 0
    %4428 = vmatpush1.bf16.xpose.msra.mxu0 0
    %4429 = vmatprep.subr.bf16.mxu0 0
    %4430 = vmatpush1.bf16.xpose.msra.mxu0 0
    %4431 = vmatprep.subr.bf16.mxu0 0
    %4432 = vmatpush1.bf16.xpose.msra.mxu0 0
    %4433 = vmatprep.subr.bf16.mxu0 0
    %4434 = vmatpush1.bf16.xpose.msra.mxu0 0
    %4435 = vmatprep.subr.bf16.mxu0 0
    %4436 = vmatpush1.bf16.xpose.msra.mxu0 0
    %4437 = vmatprep.subr.bf16.mxu0 0
    %4438 = vmatpush1.bf16.xpose.msra.mxu0 0
    %4439 = vmatprep.subr.bf16.mxu0 0
    %4440 = vmatpush1.bf16.xpose.msra.mxu0 0
    %4441 = vmatprep.subr.bf16.mxu0 0
    %4442 = vmatpush1.bf16.xpose.msra.mxu0 0
    %4443 = vmatprep.mubr.bf16.mxu0 0
    %4444 = vmatmul.mubr.bf16.gmra.mrb[0].mxu0 %v4388
    %v4445 = vpop.f32.mrb[0].mxu0
    %v4446 = vadd.f32 %v87, %v4445
    %v4447 = vpop.f32.mrb[0].mxu0
    %v4448 = vpop.f32.mrb[0].mxu0
    %v4449 = vadd.f32 %v88, %v4448
    %v4450 = vpop.f32.mrb[0].mxu0
    %4451 = vmatprep.mubr.bf16.mxu0 0
    %4452 = vmatmul.mubr.bf16.gmra.mrb[0].mxu0 %v4391
    %v4453 = vpop.f32.mrb[0].mxu0
    %v4454 = vadd.f32 %v89, %v4453
    %v4455 = vpop.f32.mrb[0].mxu0
    %v4456 = vpop.f32.mrb[0].mxu0
    %v4457 = vadd.f32 %v90, %v4456
    %v4458 = vpop.f32.mrb[0].mxu0
    %4459 = vmatprep.mubr.bf16.mxu0 0
    %4460 = vmatmul.mubr.bf16.gmra.mrb[0].mxu0 %v4394
    %v4461 = vpop.f32.mrb[0].mxu0
    %v4462 = vadd.f32 %v91, %v4461
    %v4463 = vpop.f32.mrb[0].mxu0
    %v4464 = vpop.f32.mrb[0].mxu0
    %v4465 = vadd.f32 %v92, %v4464
    %v4466 = vpop.f32.mrb[0].mxu0
    %4467 = vmatprep.mubr.bf16.mxu0 0
    %4468 = vmatmul.mubr.bf16.gmra.mrb[0].mxu0 %v4397
    %v4469 = vpop.f32.mrb[0].mxu0
    %v4470 = vadd.f32 %v93, %v4469
    %v4471 = vpop.f32.mrb[0].mxu0
    %v4472 = vpop.f32.mrb[0].mxu0
    %v4473 = vadd.f32 %v94, %v4472
    %v4474 = vpop.f32.mrb[0].mxu0
    %4475 = vdwg.mxu0
    %v4476 = vmul.f32 %v4446, 1.442695
    %v4477 = vpow.pop %v4476
    %v4478 = vmul.f32 %v4449, 1.442695
    %v4479 = vpow.pop %v4478
    %v4480 = vmul.f32 %v4454, 1.442695
    %v4481 = vpow.pop %v4480
    %v4482 = vmul.f32 %v4457, 1.442695
    %v4483 = vpow.pop %v4482
    %v4484 = vmul.f32 %v4462, 1.442695
    %v4485 = vpow.pop %v4484
    %v4486 = vmul.f32 %v4465, 1.442695
    %v4487 = vpow.pop %v4486
    %v4488 = vmul.f32 %v4470, 1.442695
    %v4489 = vpow.pop %v4488
    %v4490 = vmul.f32 %v4473, 1.442695
    %v4491 = vpow.pop %v4490
    %v4492 = vsel %vm564, %v4477, 0.0
    %4493 = vadd.xlane.f32.xlu0 %v4492
    %v4494 = vpop.xlane.xlu0 %4493
    %v4495 = vsel %vm564, %v4479, 0.0
    %4496 = vadd.xlane.f32.xlu0 %v4495
    %v4497 = vpop.xlane.xlu0 %4496
    %v4498 = vsel %vm564, %v4481, 0.0
    %4499 = vadd.xlane.f32.xlu0 %v4498
    %v4500 = vpop.xlane.xlu0 %4499
    %v4501 = vsel %vm564, %v4483, 0.0
    %4502 = vadd.xlane.f32.xlu0 %v4501
    %v4503 = vpop.xlane.xlu0 %4502
    %v4504 = vsel %vm564, %v4485, 0.0
    %4505 = vadd.xlane.f32.xlu0 %v4504
    %v4506 = vpop.xlane.xlu0 %4505
    %v4507 = vsel %vm564, %v4487, 0.0
    %4508 = vadd.xlane.f32.xlu0 %v4507
    %v4509 = vpop.xlane.xlu0 %4508
    %v4510 = vsel %vm564, %v4489, 0.0
    %4511 = vadd.xlane.f32.xlu0 %v4510
    %v4512 = vpop.xlane.xlu0 %4511
    %v4513 = vsel %vm564, %v4491, 0.0
    %4514 = vadd.xlane.f32.xlu0 %v4513
    %v4515 = vpop.xlane.xlu0 %4514
    %v4516 = vrcp.pop %v4494
    %v4517 = vrcp.pop %v4497
    %v4518 = vrcp.pop %v4500
    %v4519 = vrcp.pop %v4503
    %v4520 = vrcp.pop %v4506
    %v4521 = vrcp.pop %v4509
    %v4522 = vrcp.pop %v4512
    %v4523 = vrcp.pop %v4515
    %v4524 = vmul.f32 %v4477, %v4516
    %v4525 = vmul.f32 %v4479, %v4517
    %v4526 = vmul.f32 %v4481, %v4518
    %v4527 = vmul.f32 %v4483, %v4519
    %v4528 = vmul.f32 %v4485, %v4520
    %v4529 = vmul.f32 %v4487, %v4521
    %v4530 = vmul.f32 %v4489, %v4522
    %v4531 = vmul.f32 %v4491, %v4523
    %v4532 = vpack.c.bf16 %v4525, %v4524
    %v4533 = vpack.c.bf16 %v4527, %v4526
    %v4534 = vpack.c.bf16 %v4529, %v4528
    %v4535 = vpack.c.bf16 %v4531, %v4530
    %4536 = vrot.lane.b32.xlu0 %v4265, 120
    %v4537 = vpop.permute.xlu0 %4536
    %4538 = vrot.lane.b32.xlu0 %v4266, 120
    %v4539 = vpop.permute.xlu0 %4538
    %4540 = vrot.lane.b32.xlu0 %v4267, 120
    %v4541 = vpop.permute.xlu0 %4540
    %4542 = vrot.lane.b32.xlu0 %v4268, 120
    %v4543 = vpop.permute.xlu0 %4542
    %4544 = vrot.lane.b32.xlu0 %v4265, 88
    %v4545 = vpop.permute.xlu0 %4544
    %4546 = vrot.lane.b32.xlu0 %v4266, 88
    %v4547 = vpop.permute.xlu0 %4546
    %4548 = vrot.lane.b32.xlu0 %v4267, 88
    %v4549 = vpop.permute.xlu0 %4548
    %4550 = vrot.lane.b32.xlu0 %v4268, 88
    %v4551 = vpop.permute.xlu0 %4550
    %v4553 = vsel %vm458, %v4537, 0
    %v4556 = vsel %vm458, %v4539, 0
    %v4559 = vsel %vm458, %v4541, 0
    %v4562 = vsel %vm458, %v4543, 0
    %v4565 = vsel %vm458, %v4545, 0
    %v4568 = vsel %vm458, %v4547, 0
    %v4571 = vsel %vm458, %v4549, 0
    %v4574 = vsel %vm458, %v4551, 0
    %4576 = vmatprep.subr.bf16.mxu0 0
    %4577 = vmatpush1.bf16.xpose.msra.mxu0 %v4565
    %4578 = vmatprep.subr.bf16.mxu0 0
    %4579 = vmatpush1.bf16.xpose.msra.mxu0 %v4568
    %4580 = vmatprep.subr.bf16.mxu0 0
    %4581 = vmatpush1.bf16.xpose.msra.mxu0 %v4571
    %4582 = vmatprep.subr.bf16.mxu0 0
    %4583 = vmatpush1.bf16.xpose.msra.mxu0 %v4574
    %4584 = vmatprep.subr.bf16.mxu0 0
    %4585 = vmatpush1.bf16.xpose.msra.mxu0 0
    %4586 = vmatprep.subr.bf16.mxu0 0
    %4587 = vmatpush1.bf16.xpose.msra.mxu0 0
    %4588 = vmatprep.subr.bf16.mxu0 0
    %4589 = vmatpush1.bf16.xpose.msra.mxu0 0
    %4590 = vmatprep.subr.bf16.mxu0 0
    %4591 = vmatpush1.bf16.xpose.msra.mxu0 0
    %4592 = vmatprep.subr.bf16.mxu0 0
    %4593 = vmatpush1.bf16.xpose.msra.mxu0 0
    %4594 = vmatprep.subr.bf16.mxu0 0
    %4595 = vmatpush1.bf16.xpose.msra.mxu0 0
    %4596 = vmatprep.subr.bf16.mxu0 0
    %4597 = vmatpush1.bf16.xpose.msra.mxu0 0
    %4598 = vmatprep.subr.bf16.mxu0 0
    %4599 = vmatpush1.bf16.xpose.msra.mxu0 0
    %4600 = vmatprep.subr.bf16.mxu0 0
    %4601 = vmatpush1.bf16.xpose.msra.mxu0 0
    %4602 = vmatprep.subr.bf16.mxu0 0
    %4603 = vmatpush1.bf16.xpose.msra.mxu0 0
    %4604 = vmatprep.subr.bf16.mxu0 0
    %4605 = vmatpush1.bf16.xpose.msra.mxu0 0
    %4606 = vmatprep.subr.bf16.mxu0 0
    %4607 = vmatpush1.bf16.xpose.msra.mxu0 0
    %4608 = vmatprep.mubr.bf16.mxu0 0
    %4609 = vmatmul.mubr.bf16.gmra.mrb[0].mxu0 %v4553
    %v4610 = vpop.f32.mrb[0].mxu0
    %v4611 = vadd.f32 %v87, %v4610
    %v4612 = vpop.f32.mrb[0].mxu0
    %v4613 = vpop.f32.mrb[0].mxu0
    %v4614 = vadd.f32 %v88, %v4613
    %v4615 = vpop.f32.mrb[0].mxu0
    %4616 = vmatprep.mubr.bf16.mxu0 0
    %4617 = vmatmul.mubr.bf16.gmra.mrb[0].mxu0 %v4556
    %v4618 = vpop.f32.mrb[0].mxu0
    %v4619 = vadd.f32 %v89, %v4618
    %v4620 = vpop.f32.mrb[0].mxu0
    %v4621 = vpop.f32.mrb[0].mxu0
    %v4622 = vadd.f32 %v90, %v4621
    %v4623 = vpop.f32.mrb[0].mxu0
    %4624 = vmatprep.mubr.bf16.mxu0 0
    %4625 = vmatmul.mubr.bf16.gmra.mrb[0].mxu0 %v4559
    %v4626 = vpop.f32.mrb[0].mxu0
    %v4627 = vadd.f32 %v91, %v4626
    %v4628 = vpop.f32.mrb[0].mxu0
    %v4629 = vpop.f32.mrb[0].mxu0
    %v4630 = vadd.f32 %v92, %v4629
    %v4631 = vpop.f32.mrb[0].mxu0
    %4632 = vmatprep.mubr.bf16.mxu0 0
    %4633 = vmatmul.mubr.bf16.gmra.mrb[0].mxu0 %v4562
    %v4634 = vpop.f32.mrb[0].mxu0
    %v4635 = vadd.f32 %v93, %v4634
    %v4636 = vpop.f32.mrb[0].mxu0
    %v4637 = vpop.f32.mrb[0].mxu0
    %v4638 = vadd.f32 %v94, %v4637
    %v4639 = vpop.f32.mrb[0].mxu0
    %4640 = vdwg.mxu0
    %v4641 = vmul.f32 %v4611, 1.442695
    %v4642 = vpow.pop %v4641
    %v4643 = vmul.f32 %v4614, 1.442695
    %v4644 = vpow.pop %v4643
    %v4645 = vmul.f32 %v4619, 1.442695
    %v4646 = vpow.pop %v4645
    %v4647 = vmul.f32 %v4622, 1.442695
    %v4648 = vpow.pop %v4647
    %v4649 = vmul.f32 %v4627, 1.442695
    %v4650 = vpow.pop %v4649
    %v4651 = vmul.f32 %v4630, 1.442695
    %v4652 = vpow.pop %v4651
    %v4653 = vmul.f32 %v4635, 1.442695
    %v4654 = vpow.pop %v4653
    %v4655 = vmul.f32 %v4638, 1.442695
    %v4656 = vpow.pop %v4655
    %v4657 = vsel %vm564, %v4642, 0.0
    %4658 = vadd.xlane.f32.xlu0 %v4657
    %v4659 = vpop.xlane.xlu0 %4658
    %v4660 = vsel %vm564, %v4644, 0.0
    %4661 = vadd.xlane.f32.xlu0 %v4660
    %v4662 = vpop.xlane.xlu0 %4661
    %v4663 = vsel %vm564, %v4646, 0.0
    %4664 = vadd.xlane.f32.xlu0 %v4663
    %v4665 = vpop.xlane.xlu0 %4664
    %v4666 = vsel %vm564, %v4648, 0.0
    %4667 = vadd.xlane.f32.xlu0 %v4666
    %v4668 = vpop.xlane.xlu0 %4667
    %v4669 = vsel %vm564, %v4650, 0.0
    %4670 = vadd.xlane.f32.xlu0 %v4669
    %v4671 = vpop.xlane.xlu0 %4670
    %v4672 = vsel %vm564, %v4652, 0.0
    %4673 = vadd.xlane.f32.xlu0 %v4672
    %v4674 = vpop.xlane.xlu0 %4673
    %v4675 = vsel %vm564, %v4654, 0.0
    %4676 = vadd.xlane.f32.xlu0 %v4675
    %v4677 = vpop.xlane.xlu0 %4676
    %v4678 = vsel %vm564, %v4656, 0.0
    %4679 = vadd.xlane.f32.xlu0 %v4678
    %v4680 = vpop.xlane.xlu0 %4679
    %v4681 = vrcp.pop %v4659
    %v4682 = vrcp.pop %v4662
    %v4683 = vrcp.pop %v4665
    %v4684 = vrcp.pop %v4668
    %v4685 = vrcp.pop %v4671
    %v4686 = vrcp.pop %v4674
    %v4687 = vrcp.pop %v4677
    %v4688 = vrcp.pop %v4680
    %v4689 = vmul.f32 %v4642, %v4681
    %v4690 = vmul.f32 %v4644, %v4682
    %v4691 = vmul.f32 %v4646, %v4683
    %v4692 = vmul.f32 %v4648, %v4684
    %v4693 = vmul.f32 %v4650, %v4685
    %v4694 = vmul.f32 %v4652, %v4686
    %v4695 = vmul.f32 %v4654, %v4687
    %v4696 = vmul.f32 %v4656, %v4688
    %v4697 = vpack.c.bf16 %v4690, %v4689
    %v4698 = vpack.c.bf16 %v4692, %v4691
    %v4699 = vpack.c.bf16 %v4694, %v4693
    %v4700 = vpack.c.bf16 %v4696, %v4695
    %4705 = vrot.lane.b32.xlu0 %v4375, 96
    %v4706 = vpop.permute.xlu0 %4705
    %4707 = vrot.lane.b32.xlu0 %v4376, 96
    %v4708 = vpop.permute.xlu0 %4707
    %4709 = vrot.lane.b32.xlu0 %v4377, 96
    %v4710 = vpop.permute.xlu0 %4709
    %4711 = vrot.lane.b32.xlu0 %v4378, 96
    %v4712 = vpop.permute.xlu0 %4711
    %v4718 = vsel %vm564, %v4697, 0
    %v4721 = vsel %vm564, %v4698, 0
    %v4724 = vsel %vm564, %v4699, 0
    %v4727 = vsel %vm564, %v4700, 0
    %4729 = vmatprep.subr.bf16.mxu0 0
    %4730 = vmatpush1.bf16.msra.mxu0 %v4706
    %4731 = vmatprep.subr.bf16.mxu0 0
    %4732 = vmatpush1.bf16.msra.mxu0 %v4708
    %4733 = vmatprep.subr.bf16.mxu0 0
    %4734 = vmatpush1.bf16.msra.mxu0 %v4710
    %4735 = vmatprep.subr.bf16.mxu0 0
    %4736 = vmatpush1.bf16.msra.mxu0 %v4712
    %4737 = vmatprep.subr.bf16.mxu0 0
    %4738 = vmatpush1.bf16.msra.mxu0 0
    %4739 = vmatprep.subr.bf16.mxu0 0
    %4740 = vmatpush1.bf16.msra.mxu0 0
    %4741 = vmatprep.subr.bf16.mxu0 0
    %4742 = vmatpush1.bf16.msra.mxu0 0
    %4743 = vmatprep.subr.bf16.mxu0 0
    %4744 = vmatpush1.bf16.msra.mxu0 0
    %4745 = vmatprep.subr.bf16.mxu0 0
    %4746 = vmatpush1.bf16.msra.mxu0 0
    %4747 = vmatprep.subr.bf16.mxu0 0
    %4748 = vmatpush1.bf16.msra.mxu0 0
    %4749 = vmatprep.subr.bf16.mxu0 0
    %4750 = vmatpush1.bf16.msra.mxu0 0
    %4751 = vmatprep.subr.bf16.mxu0 0
    %4752 = vmatpush1.bf16.msra.mxu0 0
    %4753 = vmatprep.subr.bf16.mxu0 0
    %4754 = vmatpush1.bf16.msra.mxu0 0
    %4755 = vmatprep.subr.bf16.mxu0 0
    %4756 = vmatpush1.bf16.msra.mxu0 0
    %4757 = vmatprep.subr.bf16.mxu0 0
    %4758 = vmatpush1.bf16.msra.mxu0 0
    %4759 = vmatprep.subr.bf16.mxu0 0
    %4760 = vmatpush1.bf16.msra.mxu0 0
    %4761 = vmatprep.mubr.bf16.mxu0 0
    %4762 = vmatmul.mubr.bf16.gmra.mrb[0].mxu0 %v4718
    %v4763 = vpop.f32.mrb[0].mxu0
    %v4764 = vadd.f32 0.0, %v4763
    %v4765 = vpop.f32.mrb[0].mxu0
    %v4766 = vpop.f32.mrb[0].mxu0
    %v4767 = vadd.f32 0.0, %v4766
    %v4768 = vpop.f32.mrb[0].mxu0
    %4769 = vmatprep.mubr.bf16.mxu0 0
    %4770 = vmatmul.mubr.bf16.gmra.mrb[0].mxu0 %v4721
    %v4771 = vpop.f32.mrb[0].mxu0
    %v4772 = vadd.f32 0.0, %v4771
    %v4773 = vpop.f32.mrb[0].mxu0
    %v4774 = vpop.f32.mrb[0].mxu0
    %v4775 = vadd.f32 0.0, %v4774
    %v4776 = vpop.f32.mrb[0].mxu0
    %4777 = vmatprep.mubr.bf16.mxu0 0
    %4778 = vmatmul.mubr.bf16.gmra.mrb[0].mxu0 %v4724
    %v4779 = vpop.f32.mrb[0].mxu0
    %v4780 = vadd.f32 0.0, %v4779
    %v4781 = vpop.f32.mrb[0].mxu0
    %v4782 = vpop.f32.mrb[0].mxu0
    %v4783 = vadd.f32 0.0, %v4782
    %v4784 = vpop.f32.mrb[0].mxu0
    %4785 = vmatprep.mubr.bf16.mxu0 0
    %4786 = vmatmul.mubr.bf16.gmra.mrb[0].mxu0 %v4727
    %v4787 = vpop.f32.mrb[0].mxu0
    %v4788 = vadd.f32 0.0, %v4787
    %v4789 = vpop.f32.mrb[0].mxu0
    %v4790 = vpop.f32.mrb[0].mxu0
    %v4791 = vadd.f32 0.0, %v4790
    %v4792 = vpop.f32.mrb[0].mxu0
    %4793 = vdwg.mxu0
    %v4795 = vsel %vm564, %v4532, 0
    %v4798 = vsel %vm564, %v4533, 0
    %v4801 = vsel %vm564, %v4534, 0
    %v4804 = vsel %vm564, %v4535, 0
    %4806 = vmatprep.subr.bf16.mxu0 0
    %4807 = vmatpush1.bf16.msra.mxu0 %v4375
    %4808 = vmatprep.subr.bf16.mxu0 0
    %4809 = vmatpush1.bf16.msra.mxu0 %v4376
    %4810 = vmatprep.subr.bf16.mxu0 0
    %4811 = vmatpush1.bf16.msra.mxu0 %v4377
    %4812 = vmatprep.subr.bf16.mxu0 0
    %4813 = vmatpush1.bf16.msra.mxu0 %v4378
    %4814 = vmatprep.subr.bf16.mxu0 0
    %4815 = vmatpush1.bf16.msra.mxu0 0
    %4816 = vmatprep.subr.bf16.mxu0 0
    %4817 = vmatpush1.bf16.msra.mxu0 0
    %4818 = vmatprep.subr.bf16.mxu0 0
    %4819 = vmatpush1.bf16.msra.mxu0 0
    %4820 = vmatprep.subr.bf16.mxu0 0
    %4821 = vmatpush1.bf16.msra.mxu0 0
    %4822 = vmatprep.subr.bf16.mxu0 0
    %4823 = vmatpush1.bf16.msra.mxu0 0
    %4824 = vmatprep.subr.bf16.mxu0 0
    %4825 = vmatpush1.bf16.msra.mxu0 0
    %4826 = vmatprep.subr.bf16.mxu0 0
    %4827 = vmatpush1.bf16.msra.mxu0 0
    %4828 = vmatprep.subr.bf16.mxu0 0
    %4829 = vmatpush1.bf16.msra.mxu0 0
    %4830 = vmatprep.subr.bf16.mxu0 0
    %4831 = vmatpush1.bf16.msra.mxu0 0
    %4832 = vmatprep.subr.bf16.mxu0 0
    %4833 = vmatpush1.bf16.msra.mxu0 0
    %4834 = vmatprep.subr.bf16.mxu0 0
    %4835 = vmatpush1.bf16.msra.mxu0 0
    %4836 = vmatprep.subr.bf16.mxu0 0
    %4837 = vmatpush1.bf16.msra.mxu0 0
    %4838 = vmatprep.mubr.bf16.mxu0 0
    %4839 = vmatmul.mubr.bf16.gmra.mrb[0].mxu0 %v4795
    %v4840 = vpop.f32.mrb[0].mxu0
    %v4841 = vadd.f32 %v4764, %v4840
    %v4842 = vpop.f32.mrb[0].mxu0
    %v4843 = vpop.f32.mrb[0].mxu0
    %v4844 = vadd.f32 %v4767, %v4843
    %v4845 = vpop.f32.mrb[0].mxu0
    %4846 = vmatprep.mubr.bf16.mxu0 0
    %4847 = vmatmul.mubr.bf16.gmra.mrb[0].mxu0 %v4798
    %v4848 = vpop.f32.mrb[0].mxu0
    %v4849 = vadd.f32 %v4772, %v4848
    %v4850 = vpop.f32.mrb[0].mxu0
    %v4851 = vpop.f32.mrb[0].mxu0
    %v4852 = vadd.f32 %v4775, %v4851
    %v4853 = vpop.f32.mrb[0].mxu0
    %4854 = vmatprep.mubr.bf16.mxu0 0
    %4855 = vmatmul.mubr.bf16.gmra.mrb[0].mxu0 %v4801
    %v4856 = vpop.f32.mrb[0].mxu0
    %v4857 = vadd.f32 %v4780, %v4856
    %v4858 = vpop.f32.mrb[0].mxu0
    %v4859 = vpop.f32.mrb[0].mxu0
    %v4860 = vadd.f32 %v4783, %v4859
    %v4861 = vpop.f32.mrb[0].mxu0
    %4862 = vmatprep.mubr.bf16.mxu0 0
    %4863 = vmatmul.mubr.bf16.gmra.mrb[0].mxu0 %v4804
    %v4864 = vpop.f32.mrb[0].mxu0
    %v4865 = vadd.f32 %v4788, %v4864
    %v4866 = vpop.f32.mrb[0].mxu0
    %v4867 = vpop.f32.mrb[0].mxu0
    %v4868 = vadd.f32 %v4791, %v4867
    %v4869 = vpop.f32.mrb[0].mxu0
    %4870 = vdwg.mxu0
    %4871 = vrot.lane.b32.xlu0 %v4265, 112
    %v4872 = vpop.permute.xlu0 %4871
    %4873 = vrot.lane.b32.xlu0 %v4266, 112
    %v4874 = vpop.permute.xlu0 %4873
    %4875 = vrot.lane.b32.xlu0 %v4267, 112
    %v4876 = vpop.permute.xlu0 %4875
    %4877 = vrot.lane.b32.xlu0 %v4268, 112
    %v4878 = vpop.permute.xlu0 %4877
    %4879 = vrot.lane.b32.xlu0 %v4265, 80
    %v4880 = vpop.permute.xlu0 %4879
    %4881 = vrot.lane.b32.xlu0 %v4266, 80
    %v4882 = vpop.permute.xlu0 %4881
    %4883 = vrot.lane.b32.xlu0 %v4267, 80
    %v4884 = vpop.permute.xlu0 %4883
    %4885 = vrot.lane.b32.xlu0 %v4268, 80
    %v4886 = vpop.permute.xlu0 %4885
    %v4888 = vsel %vm458, %v4872, 0
    %v4891 = vsel %vm458, %v4874, 0
    %v4894 = vsel %vm458, %v4876, 0
    %v4897 = vsel %vm458, %v4878, 0
    %v4900 = vsel %vm458, %v4880, 0
    %v4903 = vsel %vm458, %v4882, 0
    %v4906 = vsel %vm458, %v4884, 0
    %v4909 = vsel %vm458, %v4886, 0
    %4911 = vmatprep.subr.bf16.mxu0 0
    %4912 = vmatpush1.bf16.xpose.msra.mxu0 %v4900
    %4913 = vmatprep.subr.bf16.mxu0 0
    %4914 = vmatpush1.bf16.xpose.msra.mxu0 %v4903
    %4915 = vmatprep.subr.bf16.mxu0 0
    %4916 = vmatpush1.bf16.xpose.msra.mxu0 %v4906
    %4917 = vmatprep.subr.bf16.mxu0 0
    %4918 = vmatpush1.bf16.xpose.msra.mxu0 %v4909
    %4919 = vmatprep.subr.bf16.mxu0 0
    %4920 = vmatpush1.bf16.xpose.msra.mxu0 0
    %4921 = vmatprep.subr.bf16.mxu0 0
    %4922 = vmatpush1.bf16.xpose.msra.mxu0 0
    %4923 = vmatprep.subr.bf16.mxu0 0
    %4924 = vmatpush1.bf16.xpose.msra.mxu0 0
    %4925 = vmatprep.subr.bf16.mxu0 0
    %4926 = vmatpush1.bf16.xpose.msra.mxu0 0
    %4927 = vmatprep.subr.bf16.mxu0 0
    %4928 = vmatpush1.bf16.xpose.msra.mxu0 0
    %4929 = vmatprep.subr.bf16.mxu0 0
    %4930 = vmatpush1.bf16.xpose.msra.mxu0 0
    %4931 = vmatprep.subr.bf16.mxu0 0
    %4932 = vmatpush1.bf16.xpose.msra.mxu0 0
    %4933 = vmatprep.subr.bf16.mxu0 0
    %4934 = vmatpush1.bf16.xpose.msra.mxu0 0
    %4935 = vmatprep.subr.bf16.mxu0 0
    %4936 = vmatpush1.bf16.xpose.msra.mxu0 0
    %4937 = vmatprep.subr.bf16.mxu0 0
    %4938 = vmatpush1.bf16.xpose.msra.mxu0 0
    %4939 = vmatprep.subr.bf16.mxu0 0
    %4940 = vmatpush1.bf16.xpose.msra.mxu0 0
    %4941 = vmatprep.subr.bf16.mxu0 0
    %4942 = vmatpush1.bf16.xpose.msra.mxu0 0
    %4943 = vmatprep.mubr.bf16.mxu0 0
    %4944 = vmatmul.mubr.bf16.gmra.mrb[0].mxu0 %v4888
    %v4945 = vpop.f32.mrb[0].mxu0
    %v4946 = vadd.f32 %v87, %v4945
    %v4947 = vpop.f32.mrb[0].mxu0
    %v4948 = vpop.f32.mrb[0].mxu0
    %v4949 = vadd.f32 %v88, %v4948
    %v4950 = vpop.f32.mrb[0].mxu0
    %4951 = vmatprep.mubr.bf16.mxu0 0
    %4952 = vmatmul.mubr.bf16.gmra.mrb[0].mxu0 %v4891
    %v4953 = vpop.f32.mrb[0].mxu0
    %v4954 = vadd.f32 %v89, %v4953
    %v4955 = vpop.f32.mrb[0].mxu0
    %v4956 = vpop.f32.mrb[0].mxu0
    %v4957 = vadd.f32 %v90, %v4956
    %v4958 = vpop.f32.mrb[0].mxu0
    %4959 = vmatprep.mubr.bf16.mxu0 0
    %4960 = vmatmul.mubr.bf16.gmra.mrb[0].mxu0 %v4894
    %v4961 = vpop.f32.mrb[0].mxu0
    %v4962 = vadd.f32 %v91, %v4961
    %v4963 = vpop.f32.mrb[0].mxu0
    %v4964 = vpop.f32.mrb[0].mxu0
    %v4965 = vadd.f32 %v92, %v4964
    %v4966 = vpop.f32.mrb[0].mxu0
    %4967 = vmatprep.mubr.bf16.mxu0 0
    %4968 = vmatmul.mubr.bf16.gmra.mrb[0].mxu0 %v4897
    %v4969 = vpop.f32.mrb[0].mxu0
    %v4970 = vadd.f32 %v93, %v4969
    %v4971 = vpop.f32.mrb[0].mxu0
    %v4972 = vpop.f32.mrb[0].mxu0
    %v4973 = vadd.f32 %v94, %v4972
    %v4974 = vpop.f32.mrb[0].mxu0
    %4975 = vdwg.mxu0
    %v4976 = vmul.f32 %v4946, 1.442695
    %v4977 = vpow.pop %v4976
    %v4978 = vmul.f32 %v4949, 1.442695
    %v4979 = vpow.pop %v4978
    %v4980 = vmul.f32 %v4954, 1.442695
    %v4981 = vpow.pop %v4980
    %v4982 = vmul.f32 %v4957, 1.442695
    %v4983 = vpow.pop %v4982
    %v4984 = vmul.f32 %v4962, 1.442695
    %v4985 = vpow.pop %v4984
    %v4986 = vmul.f32 %v4965, 1.442695
    %v4987 = vpow.pop %v4986
    %v4988 = vmul.f32 %v4970, 1.442695
    %v4989 = vpow.pop %v4988
    %v4990 = vmul.f32 %v4973, 1.442695
    %v4991 = vpow.pop %v4990
    %v4992 = vsel %vm564, %v4977, 0.0
    %4993 = vadd.xlane.f32.xlu0 %v4992
    %v4994 = vpop.xlane.xlu0 %4993
    %v4995 = vsel %vm564, %v4979, 0.0
    %4996 = vadd.xlane.f32.xlu0 %v4995
    %v4997 = vpop.xlane.xlu0 %4996
    %v4998 = vsel %vm564, %v4981, 0.0
    %4999 = vadd.xlane.f32.xlu0 %v4998
    %v5000 = vpop.xlane.xlu0 %4999
    %v5001 = vsel %vm564, %v4983, 0.0
    %5002 = vadd.xlane.f32.xlu0 %v5001
    %v5003 = vpop.xlane.xlu0 %5002
    %v5004 = vsel %vm564, %v4985, 0.0
    %5005 = vadd.xlane.f32.xlu0 %v5004
    %v5006 = vpop.xlane.xlu0 %5005
    %v5007 = vsel %vm564, %v4987, 0.0
    %5008 = vadd.xlane.f32.xlu0 %v5007
    %v5009 = vpop.xlane.xlu0 %5008
    %v5010 = vsel %vm564, %v4989, 0.0
    %5011 = vadd.xlane.f32.xlu0 %v5010
    %v5012 = vpop.xlane.xlu0 %5011
    %v5013 = vsel %vm564, %v4991, 0.0
    %5014 = vadd.xlane.f32.xlu0 %v5013
    %v5015 = vpop.xlane.xlu0 %5014
    %v5016 = vrcp.pop %v4994
    %v5017 = vrcp.pop %v4997
    %v5018 = vrcp.pop %v5000
    %v5019 = vrcp.pop %v5003
    %v5020 = vrcp.pop %v5006
    %v5021 = vrcp.pop %v5009
    %v5022 = vrcp.pop %v5012
    %v5023 = vrcp.pop %v5015
    %v5024 = vmul.f32 %v4977, %v5016
    %v5025 = vmul.f32 %v4979, %v5017
    %v5026 = vmul.f32 %v4981, %v5018
    %v5027 = vmul.f32 %v4983, %v5019
    %v5028 = vmul.f32 %v4985, %v5020
    %v5029 = vmul.f32 %v4987, %v5021
    %v5030 = vmul.f32 %v4989, %v5022
    %v5031 = vmul.f32 %v4991, %v5023
    %v5032 = vpack.c.bf16 %v5025, %v5024
    %v5033 = vpack.c.bf16 %v5027, %v5026
    %v5034 = vpack.c.bf16 %v5029, %v5028
    %v5035 = vpack.c.bf16 %v5031, %v5030
    %5036 = vrot.lane.b32.xlu0 %v4375, 64
    %v5037 = vpop.permute.xlu0 %5036
    %5038 = vrot.lane.b32.xlu0 %v4376, 64
    %v5039 = vpop.permute.xlu0 %5038
    %5040 = vrot.lane.b32.xlu0 %v4377, 64
    %v5041 = vpop.permute.xlu0 %5040
    %5042 = vrot.lane.b32.xlu0 %v4378, 64
    %v5043 = vpop.permute.xlu0 %5042
    %v5049 = vsel %vm564, %v5032, 0
    %v5052 = vsel %vm564, %v5033, 0
    %v5055 = vsel %vm564, %v5034, 0
    %v5058 = vsel %vm564, %v5035, 0
    %5060 = vmatprep.subr.bf16.mxu0 0
    %5061 = vmatpush1.bf16.msra.mxu0 %v5037
    %5062 = vmatprep.subr.bf16.mxu0 0
    %5063 = vmatpush1.bf16.msra.mxu0 %v5039
    %5064 = vmatprep.subr.bf16.mxu0 0
    %5065 = vmatpush1.bf16.msra.mxu0 %v5041
    %5066 = vmatprep.subr.bf16.mxu0 0
    %5067 = vmatpush1.bf16.msra.mxu0 %v5043
    %5068 = vmatprep.subr.bf16.mxu0 0
    %5069 = vmatpush1.bf16.msra.mxu0 0
    %5070 = vmatprep.subr.bf16.mxu0 0
    %5071 = vmatpush1.bf16.msra.mxu0 0
    %5072 = vmatprep.subr.bf16.mxu0 0
    %5073 = vmatpush1.bf16.msra.mxu0 0
    %5074 = vmatprep.subr.bf16.mxu0 0
    %5075 = vmatpush1.bf16.msra.mxu0 0
    %5076 = vmatprep.subr.bf16.mxu0 0
    %5077 = vmatpush1.bf16.msra.mxu0 0
    %5078 = vmatprep.subr.bf16.mxu0 0
    %5079 = vmatpush1.bf16.msra.mxu0 0
    %5080 = vmatprep.subr.bf16.mxu0 0
    %5081 = vmatpush1.bf16.msra.mxu0 0
    %5082 = vmatprep.subr.bf16.mxu0 0
    %5083 = vmatpush1.bf16.msra.mxu0 0
    %5084 = vmatprep.subr.bf16.mxu0 0
    %5085 = vmatpush1.bf16.msra.mxu0 0
    %5086 = vmatprep.subr.bf16.mxu0 0
    %5087 = vmatpush1.bf16.msra.mxu0 0
    %5088 = vmatprep.subr.bf16.mxu0 0
    %5089 = vmatpush1.bf16.msra.mxu0 0
    %5090 = vmatprep.subr.bf16.mxu0 0
    %5091 = vmatpush1.bf16.msra.mxu0 0
    %5092 = vmatprep.mubr.bf16.mxu0 0
    %5093 = vmatmul.mubr.bf16.gmra.mrb[0].mxu0 %v5049
    %v5094 = vpop.f32.mrb[0].mxu0
    %v5095 = vadd.f32 0.0, %v5094
    %v5096 = vpop.f32.mrb[0].mxu0
    %v5097 = vpop.f32.mrb[0].mxu0
    %v5098 = vadd.f32 0.0, %v5097
    %v5099 = vpop.f32.mrb[0].mxu0
    %5100 = vmatprep.mubr.bf16.mxu0 0
    %5101 = vmatmul.mubr.bf16.gmra.mrb[0].mxu0 %v5052
    %v5102 = vpop.f32.mrb[0].mxu0
    %v5103 = vadd.f32 0.0, %v5102
    %v5104 = vpop.f32.mrb[0].mxu0
    %v5105 = vpop.f32.mrb[0].mxu0
    %v5106 = vadd.f32 0.0, %v5105
    %v5107 = vpop.f32.mrb[0].mxu0
    %5108 = vmatprep.mubr.bf16.mxu0 0
    %5109 = vmatmul.mubr.bf16.gmra.mrb[0].mxu0 %v5055
    %v5110 = vpop.f32.mrb[0].mxu0
    %v5111 = vadd.f32 0.0, %v5110
    %v5112 = vpop.f32.mrb[0].mxu0
    %v5113 = vpop.f32.mrb[0].mxu0
    %v5114 = vadd.f32 0.0, %v5113
    %v5115 = vpop.f32.mrb[0].mxu0
    %5116 = vmatprep.mubr.bf16.mxu0 0
    %5117 = vmatmul.mubr.bf16.gmra.mrb[0].mxu0 %v5058
    %v5118 = vpop.f32.mrb[0].mxu0
    %v5119 = vadd.f32 0.0, %v5118
    %v5120 = vpop.f32.mrb[0].mxu0
    %v5121 = vpop.f32.mrb[0].mxu0
    %v5122 = vadd.f32 0.0, %v5121
    %v5123 = vpop.f32.mrb[0].mxu0
    %5124 = vdwg.mxu0
    %v5125 = vadd.f32 %v4841, %v5095
    %v5126 = vadd.f32 %v4844, %v5098
    %v5127 = vadd.f32 %v4849, %v5103
    %v5128 = vadd.f32 %v4852, %v5106
    %v5129 = vadd.f32 %v4857, %v5111
    %v5130 = vadd.f32 %v4860, %v5114
    %v5131 = vadd.f32 %v4865, %v5119
    %v5132 = vadd.f32 %v4868, %v5122
    %5133 = vrot.lane.b32.xlu0 %v4265, 104
    %v5134 = vpop.permute.xlu0 %5133
    %5135 = vrot.lane.b32.xlu0 %v4266, 104
    %v5136 = vpop.permute.xlu0 %5135
    %5137 = vrot.lane.b32.xlu0 %v4267, 104
    %v5138 = vpop.permute.xlu0 %5137
    %5139 = vrot.lane.b32.xlu0 %v4268, 104
    %v5140 = vpop.permute.xlu0 %5139
    %5141 = vrot.lane.b32.xlu0 %v4265, 72
    %v5142 = vpop.permute.xlu0 %5141
    %5143 = vrot.lane.b32.xlu0 %v4266, 72
    %v5144 = vpop.permute.xlu0 %5143
    %5145 = vrot.lane.b32.xlu0 %v4267, 72
    %v5146 = vpop.permute.xlu0 %5145
    %5147 = vrot.lane.b32.xlu0 %v4268, 72
    %v5148 = vpop.permute.xlu0 %5147
    %v5150 = vsel %vm458, %v5134, 0
    %v5153 = vsel %vm458, %v5136, 0
    %v5156 = vsel %vm458, %v5138, 0
    %v5159 = vsel %vm458, %v5140, 0
    %v5162 = vsel %vm458, %v5142, 0
    %v5165 = vsel %vm458, %v5144, 0
    %v5168 = vsel %vm458, %v5146, 0
    %v5171 = vsel %vm458, %v5148, 0
    %5173 = vmatprep.subr.bf16.mxu0 0
    %5174 = vmatpush1.bf16.xpose.msra.mxu0 %v5162
    %5175 = vmatprep.subr.bf16.mxu0 0
    %5176 = vmatpush1.bf16.xpose.msra.mxu0 %v5165
    %5177 = vmatprep.subr.bf16.mxu0 0
    %5178 = vmatpush1.bf16.xpose.msra.mxu0 %v5168
    %5179 = vmatprep.subr.bf16.mxu0 0
    %5180 = vmatpush1.bf16.xpose.msra.mxu0 %v5171
    %5181 = vmatprep.subr.bf16.mxu0 0
    %5182 = vmatpush1.bf16.xpose.msra.mxu0 0
    %5183 = vmatprep.subr.bf16.mxu0 0
    %5184 = vmatpush1.bf16.xpose.msra.mxu0 0
    %5185 = vmatprep.subr.bf16.mxu0 0
    %5186 = vmatpush1.bf16.xpose.msra.mxu0 0
    %5187 = vmatprep.subr.bf16.mxu0 0
    %5188 = vmatpush1.bf16.xpose.msra.mxu0 0
    %5189 = vmatprep.subr.bf16.mxu0 0
    %5190 = vmatpush1.bf16.xpose.msra.mxu0 0
    %5191 = vmatprep.subr.bf16.mxu0 0
    %5192 = vmatpush1.bf16.xpose.msra.mxu0 0
    %5193 = vmatprep.subr.bf16.mxu0 0
    %5194 = vmatpush1.bf16.xpose.msra.mxu0 0
    %5195 = vmatprep.subr.bf16.mxu0 0
    %5196 = vmatpush1.bf16.xpose.msra.mxu0 0
    %5197 = vmatprep.subr.bf16.mxu0 0
    %5198 = vmatpush1.bf16.xpose.msra.mxu0 0
    %5199 = vmatprep.subr.bf16.mxu0 0
    %5200 = vmatpush1.bf16.xpose.msra.mxu0 0
    %5201 = vmatprep.subr.bf16.mxu0 0
    %5202 = vmatpush1.bf16.xpose.msra.mxu0 0
    %5203 = vmatprep.subr.bf16.mxu0 0
    %5204 = vmatpush1.bf16.xpose.msra.mxu0 0
    %5205 = vmatprep.mubr.bf16.mxu0 0
    %5206 = vmatmul.mubr.bf16.gmra.mrb[0].mxu0 %v5150
    %v5207 = vpop.f32.mrb[0].mxu0
    %v5208 = vadd.f32 %v87, %v5207
    %v5209 = vpop.f32.mrb[0].mxu0
    %v5210 = vpop.f32.mrb[0].mxu0
    %v5211 = vadd.f32 %v88, %v5210
    %v5212 = vpop.f32.mrb[0].mxu0
    %5213 = vmatprep.mubr.bf16.mxu0 0
    %5214 = vmatmul.mubr.bf16.gmra.mrb[0].mxu0 %v5153
    %v5215 = vpop.f32.mrb[0].mxu0
    %v5216 = vadd.f32 %v89, %v5215
    %v5217 = vpop.f32.mrb[0].mxu0
    %v5218 = vpop.f32.mrb[0].mxu0
    %v5219 = vadd.f32 %v90, %v5218
    %v5220 = vpop.f32.mrb[0].mxu0
    %5221 = vmatprep.mubr.bf16.mxu0 0
    %5222 = vmatmul.mubr.bf16.gmra.mrb[0].mxu0 %v5156
    %v5223 = vpop.f32.mrb[0].mxu0
    %v5224 = vadd.f32 %v91, %v5223
    %v5225 = vpop.f32.mrb[0].mxu0
    %v5226 = vpop.f32.mrb[0].mxu0
    %v5227 = vadd.f32 %v92, %v5226
    %v5228 = vpop.f32.mrb[0].mxu0
    %5229 = vmatprep.mubr.bf16.mxu0 0
    %5230 = vmatmul.mubr.bf16.gmra.mrb[0].mxu0 %v5159
    %v5231 = vpop.f32.mrb[0].mxu0
    %v5232 = vadd.f32 %v93, %v5231
    %v5233 = vpop.f32.mrb[0].mxu0
    %v5234 = vpop.f32.mrb[0].mxu0
    %v5235 = vadd.f32 %v94, %v5234
    %v5236 = vpop.f32.mrb[0].mxu0
    %5237 = vdwg.mxu0
    %v5238 = vmul.f32 %v5208, 1.442695
    %v5239 = vpow.pop %v5238
    %v5240 = vmul.f32 %v5211, 1.442695
    %v5241 = vpow.pop %v5240
    %v5242 = vmul.f32 %v5216, 1.442695
    %v5243 = vpow.pop %v5242
    %v5244 = vmul.f32 %v5219, 1.442695
    %v5245 = vpow.pop %v5244
    %v5246 = vmul.f32 %v5224, 1.442695
    %v5247 = vpow.pop %v5246
    %v5248 = vmul.f32 %v5227, 1.442695
    %v5249 = vpow.pop %v5248
    %v5250 = vmul.f32 %v5232, 1.442695
    %v5251 = vpow.pop %v5250
    %v5252 = vmul.f32 %v5235, 1.442695
    %v5253 = vpow.pop %v5252
    %v5254 = vsel %vm564, %v5239, 0.0
    %5255 = vadd.xlane.f32.xlu0 %v5254
    %v5256 = vpop.xlane.xlu0 %5255
    %v5257 = vsel %vm564, %v5241, 0.0
    %5258 = vadd.xlane.f32.xlu0 %v5257
    %v5259 = vpop.xlane.xlu0 %5258
    %v5260 = vsel %vm564, %v5243, 0.0
    %5261 = vadd.xlane.f32.xlu0 %v5260
    %v5262 = vpop.xlane.xlu0 %5261
    %v5263 = vsel %vm564, %v5245, 0.0
    %5264 = vadd.xlane.f32.xlu0 %v5263
    %v5265 = vpop.xlane.xlu0 %5264
    %v5266 = vsel %vm564, %v5247, 0.0
    %5267 = vadd.xlane.f32.xlu0 %v5266
    %v5268 = vpop.xlane.xlu0 %5267
    %v5269 = vsel %vm564, %v5249, 0.0
    %5270 = vadd.xlane.f32.xlu0 %v5269
    %v5271 = vpop.xlane.xlu0 %5270
    %v5272 = vsel %vm564, %v5251, 0.0
    %5273 = vadd.xlane.f32.xlu0 %v5272
    %v5274 = vpop.xlane.xlu0 %5273
    %v5275 = vsel %vm564, %v5253, 0.0
    %5276 = vadd.xlane.f32.xlu0 %v5275
    %v5277 = vpop.xlane.xlu0 %5276
    %v5278 = vrcp.pop %v5256
    %v5279 = vrcp.pop %v5259
    %v5280 = vrcp.pop %v5262
    %v5281 = vrcp.pop %v5265
    %v5282 = vrcp.pop %v5268
    %v5283 = vrcp.pop %v5271
    %v5284 = vrcp.pop %v5274
    %v5285 = vrcp.pop %v5277
    %v5286 = vmul.f32 %v5239, %v5278
    %v5287 = vmul.f32 %v5241, %v5279
    %v5288 = vmul.f32 %v5243, %v5280
    %v5289 = vmul.f32 %v5245, %v5281
    %v5290 = vmul.f32 %v5247, %v5282
    %v5291 = vmul.f32 %v5249, %v5283
    %v5292 = vmul.f32 %v5251, %v5284
    %v5293 = vmul.f32 %v5253, %v5285
    %v5294 = vpack.c.bf16 %v5287, %v5286
    %v5295 = vpack.c.bf16 %v5289, %v5288
    %v5296 = vpack.c.bf16 %v5291, %v5290
    %v5297 = vpack.c.bf16 %v5293, %v5292
    %5298 = vrot.lane.b32.xlu0 %v4375, 32
    %v5299 = vpop.permute.xlu0 %5298
    %5300 = vrot.lane.b32.xlu0 %v4376, 32
    %v5301 = vpop.permute.xlu0 %5300
    %5302 = vrot.lane.b32.xlu0 %v4377, 32
    %v5303 = vpop.permute.xlu0 %5302
    %5304 = vrot.lane.b32.xlu0 %v4378, 32
    %v5305 = vpop.permute.xlu0 %5304
    %v5311 = vsel %vm564, %v5294, 0
    %v5314 = vsel %vm564, %v5295, 0
    %v5317 = vsel %vm564, %v5296, 0
    %v5320 = vsel %vm564, %v5297, 0
    %5322 = vmatprep.subr.bf16.mxu0 0
    %5323 = vmatpush1.bf16.msra.mxu0 %v5299
    %5324 = vmatprep.subr.bf16.mxu0 0
    %5325 = vmatpush1.bf16.msra.mxu0 %v5301
    %5326 = vmatprep.subr.bf16.mxu0 0
    %5327 = vmatpush1.bf16.msra.mxu0 %v5303
    %5328 = vmatprep.subr.bf16.mxu0 0
    %5329 = vmatpush1.bf16.msra.mxu0 %v5305
    %5330 = vmatprep.subr.bf16.mxu0 0
    %5331 = vmatpush1.bf16.msra.mxu0 0
    %5332 = vmatprep.subr.bf16.mxu0 0
    %5333 = vmatpush1.bf16.msra.mxu0 0
    %5334 = vmatprep.subr.bf16.mxu0 0
    %5335 = vmatpush1.bf16.msra.mxu0 0
    %5336 = vmatprep.subr.bf16.mxu0 0
    %5337 = vmatpush1.bf16.msra.mxu0 0
    %5338 = vmatprep.subr.bf16.mxu0 0
    %5339 = vmatpush1.bf16.msra.mxu0 0
    %5340 = vmatprep.subr.bf16.mxu0 0
    %5341 = vmatpush1.bf16.msra.mxu0 0
    %5342 = vmatprep.subr.bf16.mxu0 0
    %5343 = vmatpush1.bf16.msra.mxu0 0
    %5344 = vmatprep.subr.bf16.mxu0 0
    %5345 = vmatpush1.bf16.msra.mxu0 0
    %5346 = vmatprep.subr.bf16.mxu0 0
    %5347 = vmatpush1.bf16.msra.mxu0 0
    %5348 = vmatprep.subr.bf16.mxu0 0
    %5349 = vmatpush1.bf16.msra.mxu0 0
    %5350 = vmatprep.subr.bf16.mxu0 0
    %5351 = vmatpush1.bf16.msra.mxu0 0
    %5352 = vmatprep.subr.bf16.mxu0 0
    %5353 = vmatpush1.bf16.msra.mxu0 0
    %5354 = vmatprep.mubr.bf16.mxu0 0
    %5355 = vmatmul.mubr.bf16.gmra.mrb[0].mxu0 %v5311
    %v5356 = vpop.f32.mrb[0].mxu0
    %v5357 = vadd.f32 0.0, %v5356
    %v5358 = vpop.f32.mrb[0].mxu0
    %v5359 = vpop.f32.mrb[0].mxu0
    %v5360 = vadd.f32 0.0, %v5359
    %v5361 = vpop.f32.mrb[0].mxu0
    %5362 = vmatprep.mubr.bf16.mxu0 0
    %5363 = vmatmul.mubr.bf16.gmra.mrb[0].mxu0 %v5314
    %v5364 = vpop.f32.mrb[0].mxu0
    %v5365 = vadd.f32 0.0, %v5364
    %v5366 = vpop.f32.mrb[0].mxu0
    %v5367 = vpop.f32.mrb[0].mxu0
    %v5368 = vadd.f32 0.0, %v5367
    %v5369 = vpop.f32.mrb[0].mxu0
    %5370 = vmatprep.mubr.bf16.mxu0 0
    %5371 = vmatmul.mubr.bf16.gmra.mrb[0].mxu0 %v5317
    %v5372 = vpop.f32.mrb[0].mxu0
    %v5373 = vadd.f32 0.0, %v5372
    %v5374 = vpop.f32.mrb[0].mxu0
    %v5375 = vpop.f32.mrb[0].mxu0
    %v5376 = vadd.f32 0.0, %v5375
    %v5377 = vpop.f32.mrb[0].mxu0
    %5378 = vmatprep.mubr.bf16.mxu0 0
    %5379 = vmatmul.mubr.bf16.gmra.mrb[0].mxu0 %v5320
    %v5380 = vpop.f32.mrb[0].mxu0
    %v5381 = vadd.f32 0.0, %v5380
    %v5382 = vpop.f32.mrb[0].mxu0
    %v5383 = vpop.f32.mrb[0].mxu0
    %v5384 = vadd.f32 0.0, %v5383
    %v5385 = vpop.f32.mrb[0].mxu0
    %5386 = vdwg.mxu0
    %v5387 = vadd.f32 %v5125, %v5357
    %v5388 = vadd.f32 %v5126, %v5360
    %v5389 = vadd.f32 %v5127, %v5365
    %v5390 = vadd.f32 %v5128, %v5368
    %v5391 = vadd.f32 %v5129, %v5373
    %v5392 = vadd.f32 %v5130, %v5376
    %v5393 = vadd.f32 %v5131, %v5381
    %v5394 = vadd.f32 %v5132, %v5384
    %v5395 = vadd.f32 %v4031, %v5387
    %v5396 = vadd.f32 %v4032, %v5388
    %v5397 = vadd.f32 %v4033, %v5389
    %v5398 = vadd.f32 %v4034, %v5390
    %v5399 = vadd.f32 %v4035, %v5391
    %v5400 = vadd.f32 %v4036, %v5392
    %v5401 = vadd.f32 %v4037, %v5393
    %v5402 = vadd.f32 %v4038, %v5394
    %s5403 = scalar_lea.vmem %s11, 2
    %v5404 = vld [vmem:[%s5403] sm:$0x1]
    %v5406 = vlaneseq
    %v5407 = vshrl.u32 %v5406, 7
    %v5408 = vsub.s32 0, %v5407
    %v5409 = vrot.slane %v5404, %v5408
    %v5411 = vadd.f32 %v5395, %v5409
    %v5412 = vadd.f32 %v5396, %v5409
    %v5413 = vadd.f32 %v5397, %v5409
    %v5414 = vadd.f32 %v5398, %v5409
    %v5415 = vadd.f32 %v5399, %v5409
    %v5416 = vadd.f32 %v5400, %v5409
    %v5417 = vadd.f32 %v5401, %v5409
    %v5418 = vadd.f32 %v5402, %v5409
    %v5419 = vsel %vm111, %v5411, 0.0
    %5420 = vadd.xlane.f32.xlu0 %v5419
    %v5421 = vpop.xlane.xlu0 %5420
    %v5422 = vsel %vm111, %v5412, 0.0
    %5423 = vadd.xlane.f32.xlu0 %v5422
    %v5424 = vpop.xlane.xlu0 %5423
    %v5425 = vsel %vm111, %v5413, 0.0
    %5426 = vadd.xlane.f32.xlu0 %v5425
    %v5427 = vpop.xlane.xlu0 %5426
    %v5428 = vsel %vm111, %v5414, 0.0
    %5429 = vadd.xlane.f32.xlu0 %v5428
    %v5430 = vpop.xlane.xlu0 %5429
    %v5431 = vsel %vm111, %v5415, 0.0
    %5432 = vadd.xlane.f32.xlu0 %v5431
    %v5433 = vpop.xlane.xlu0 %5432
    %v5434 = vsel %vm111, %v5416, 0.0
    %5435 = vadd.xlane.f32.xlu0 %v5434
    %v5436 = vpop.xlane.xlu0 %5435
    %v5437 = vsel %vm111, %v5417, 0.0
    %5438 = vadd.xlane.f32.xlu0 %v5437
    %v5439 = vpop.xlane.xlu0 %5438
    %v5440 = vsel %vm111, %v5418, 0.0
    %5441 = vadd.xlane.f32.xlu0 %v5440
    %v5442 = vpop.xlane.xlu0 %5441
    %v5443 = vmul.f32 %v5421, %v136
    %v5444 = vmul.f32 %v5424, %v136
    %v5445 = vmul.f32 %v5427, %v136
    %v5446 = vmul.f32 %v5430, %v136
    %v5447 = vmul.f32 %v5433, %v136
    %v5448 = vmul.f32 %v5436, %v136
    %v5449 = vmul.f32 %v5439, %v136
    %v5450 = vmul.f32 %v5442, %v136
    %v5451 = vmul.f32 %v5411, %v5411
    %v5452 = vmul.f32 %v5412, %v5412
    %v5453 = vmul.f32 %v5413, %v5413
    %v5454 = vmul.f32 %v5414, %v5414
    %v5455 = vmul.f32 %v5415, %v5415
    %v5456 = vmul.f32 %v5416, %v5416
    %v5457 = vmul.f32 %v5417, %v5417
    %v5458 = vmul.f32 %v5418, %v5418
    %v5459 = vsel %vm111, %v5451, 0.0
    %5460 = vadd.xlane.f32.xlu0 %v5459
    %v5461 = vpop.xlane.xlu0 %5460
    %v5462 = vsel %vm111, %v5452, 0.0
    %5463 = vadd.xlane.f32.xlu0 %v5462
    %v5464 = vpop.xlane.xlu0 %5463
    %v5465 = vsel %vm111, %v5453, 0.0
    %5466 = vadd.xlane.f32.xlu0 %v5465
    %v5467 = vpop.xlane.xlu0 %5466
    %v5468 = vsel %vm111, %v5454, 0.0
    %5469 = vadd.xlane.f32.xlu0 %v5468
    %v5470 = vpop.xlane.xlu0 %5469
    %v5471 = vsel %vm111, %v5455, 0.0
    %5472 = vadd.xlane.f32.xlu0 %v5471
    %v5473 = vpop.xlane.xlu0 %5472
    %v5474 = vsel %vm111, %v5456, 0.0
    %5475 = vadd.xlane.f32.xlu0 %v5474
    %v5476 = vpop.xlane.xlu0 %5475
    %v5477 = vsel %vm111, %v5457, 0.0
    %5478 = vadd.xlane.f32.xlu0 %v5477
    %v5479 = vpop.xlane.xlu0 %5478
    %v5480 = vsel %vm111, %v5458, 0.0
    %5481 = vadd.xlane.f32.xlu0 %v5480
    %v5482 = vpop.xlane.xlu0 %5481
    %v5483 = vmul.f32 %v5461, %v136
    %v5484 = vmul.f32 %v5464, %v136
    %v5485 = vmul.f32 %v5467, %v136
    %v5486 = vmul.f32 %v5470, %v136
    %v5487 = vmul.f32 %v5473, %v136
    %v5488 = vmul.f32 %v5476, %v136
    %v5489 = vmul.f32 %v5479, %v136
    %v5490 = vmul.f32 %v5482, %v136
    %v5491 = vsub.f32 %v5411, %v5443
    %v5492 = vsub.f32 %v5412, %v5444
    %v5493 = vsub.f32 %v5413, %v5445
    %v5494 = vsub.f32 %v5414, %v5446
    %v5495 = vsub.f32 %v5415, %v5447
    %v5496 = vsub.f32 %v5416, %v5448
    %v5497 = vsub.f32 %v5417, %v5449
    %v5498 = vsub.f32 %v5418, %v5450
    %v5499 = vmul.f32 %v5443, %v5443
    %v5500 = vmul.f32 %v5444, %v5444
    %v5501 = vmul.f32 %v5445, %v5445
    %v5502 = vmul.f32 %v5446, %v5446
    %v5503 = vmul.f32 %v5447, %v5447
    %v5504 = vmul.f32 %v5448, %v5448
    %v5505 = vmul.f32 %v5449, %v5449
    %v5506 = vmul.f32 %v5450, %v5450
    %v5507 = vsub.f32 %v5483, %v5499
    %v5508 = vsub.f32 %v5484, %v5500
    %v5509 = vsub.f32 %v5485, %v5501
    %v5510 = vsub.f32 %v5486, %v5502
    %v5511 = vsub.f32 %v5487, %v5503
    %v5512 = vsub.f32 %v5488, %v5504
    %v5513 = vsub.f32 %v5489, %v5505
    %v5514 = vsub.f32 %v5490, %v5506
    %v5515 = vadd.f32 %v5507, 1e-05
    %v5516 = vadd.f32 %v5508, 1e-05
    %v5517 = vadd.f32 %v5509, 1e-05
    %v5518 = vadd.f32 %v5510, 1e-05
    %v5519 = vadd.f32 %v5511, 1e-05
    %v5520 = vadd.f32 %v5512, 1e-05
    %v5521 = vadd.f32 %v5513, 1e-05
    %v5522 = vadd.f32 %v5514, 1e-05
    %v5523 = vrsqrt.pop %v5515
    %v5524 = vrsqrt.pop %v5516
    %v5525 = vrsqrt.pop %v5517
    %v5526 = vrsqrt.pop %v5518
    %v5527 = vrsqrt.pop %v5519
    %v5528 = vrsqrt.pop %v5520
    %v5529 = vrsqrt.pop %v5521
    %v5530 = vrsqrt.pop %v5522
    %v5531 = vmul.f32 %v5491, %v5523
    %v5532 = vmul.f32 %v5492, %v5524
    %v5533 = vmul.f32 %v5493, %v5525
    %v5534 = vmul.f32 %v5494, %v5526
    %v5535 = vmul.f32 %v5495, %v5527
    %v5536 = vmul.f32 %v5496, %v5528
    %v5537 = vmul.f32 %v5497, %v5529
    %v5538 = vmul.f32 %v5498, %v5530
    %v5539 = vpack.c.bf16 %v5532, %v5531
    %v5540 = vpack.c.bf16 %v5534, %v5533
    %v5541 = vpack.c.bf16 %v5536, %v5535
    %v5542 = vpack.c.bf16 %v5538, %v5537
    %s5543 = scalar_lea.vmem %s12, 32
    %v5544 = vld [vmem:[%s5543] sm:$0xf]
    %v5545 = vld [vmem:[%s5543 + $0x4] sm:$0xf]
    %v5546 = vld [vmem:[%s5543 + $0x8] sm:$0xf]
    %v5547 = vld [vmem:[%s5543 + $0xc] sm:$0xf]
    %s5548 = scalar_lea.vmem %s13, 2
    %v5549 = vld [vmem:[%s5548] sm:$0x1]
    %v5551 = vlaneseq
    %v5552 = vshrl.u32 %v5551, 7
    %v5553 = vsub.s32 0, %v5552
    %v5554 = vrot.slane %v5549, %v5553
    %v5560 = vunpack.c.l.b16 %v5544
    %v5561 = vunpack.c.l.b16 %v5545
    %v5562 = vunpack.c.l.b16 %v5546
    %v5563 = vunpack.c.l.b16 %v5547
    %v5564 = vpack.c.b16 %v5561, %v5560
    %v5565 = vpack.c.b16 %v5563, %v5562
    %v5569 = vsel %vm111, %v5539, 0
    %v5572 = vsel %vm111, %v5540, 0
    %v5575 = vsel %vm111, %v5541, 0
    %v5578 = vsel %vm111, %v5542, 0
    %5580 = vmatprep.subr.bf16.mxu0 0
    %5581 = vmatpush1.bf16.msra.mxu0 %v5564
    %5582 = vmatprep.subr.bf16.mxu0 0
    %5583 = vmatpush1.bf16.msra.mxu0 %v5565
    %5584 = vmatprep.subr.bf16.mxu0 0
    %5585 = vmatpush1.bf16.msra.mxu0 0
    %5586 = vmatprep.subr.bf16.mxu0 0
    %5587 = vmatpush1.bf16.msra.mxu0 0
    %5588 = vmatprep.subr.bf16.mxu0 0
    %5589 = vmatpush1.bf16.msra.mxu0 0
    %5590 = vmatprep.subr.bf16.mxu0 0
    %5591 = vmatpush1.bf16.msra.mxu0 0
    %5592 = vmatprep.subr.bf16.mxu0 0
    %5593 = vmatpush1.bf16.msra.mxu0 0
    %5594 = vmatprep.subr.bf16.mxu0 0
    %5595 = vmatpush1.bf16.msra.mxu0 0
    %5596 = vmatprep.subr.bf16.mxu0 0
    %5597 = vmatpush1.bf16.msra.mxu0 0
    %5598 = vmatprep.subr.bf16.mxu0 0
    %5599 = vmatpush1.bf16.msra.mxu0 0
    %5600 = vmatprep.subr.bf16.mxu0 0
    %5601 = vmatpush1.bf16.msra.mxu0 0
    %5602 = vmatprep.subr.bf16.mxu0 0
    %5603 = vmatpush1.bf16.msra.mxu0 0
    %5604 = vmatprep.subr.bf16.mxu0 0
    %5605 = vmatpush1.bf16.msra.mxu0 0
    %5606 = vmatprep.subr.bf16.mxu0 0
    %5607 = vmatpush1.bf16.msra.mxu0 0
    %5608 = vmatprep.subr.bf16.mxu0 0
    %5609 = vmatpush1.bf16.msra.mxu0 0
    %5610 = vmatprep.subr.bf16.mxu0 0
    %5611 = vmatpush1.bf16.msra.mxu0 0
    %5612 = vmatprep.mubr.bf16.mxu0 0
    %5613 = vmatmul.mubr.bf16.gmra.mrb[0].mxu0 %v5569
    %v5614 = vpop.f32.mrb[0].mxu0
    %v5615 = vadd.f32 %v5554, %v5614
    %v5616 = vpop.f32.mrb[0].mxu0
    %v5617 = vpop.f32.mrb[0].mxu0
    %v5618 = vadd.f32 %v5554, %v5617
    %v5619 = vpop.f32.mrb[0].mxu0
    %5620 = vmatprep.mubr.bf16.mxu0 0
    %5621 = vmatmul.mubr.bf16.gmra.mrb[0].mxu0 %v5572
    %v5622 = vpop.f32.mrb[0].mxu0
    %v5623 = vadd.f32 %v5554, %v5622
    %v5624 = vpop.f32.mrb[0].mxu0
    %v5625 = vpop.f32.mrb[0].mxu0
    %v5626 = vadd.f32 %v5554, %v5625
    %v5627 = vpop.f32.mrb[0].mxu0
    %5628 = vmatprep.mubr.bf16.mxu0 0
    %5629 = vmatmul.mubr.bf16.gmra.mrb[0].mxu0 %v5575
    %v5630 = vpop.f32.mrb[0].mxu0
    %v5631 = vadd.f32 %v5554, %v5630
    %v5632 = vpop.f32.mrb[0].mxu0
    %v5633 = vpop.f32.mrb[0].mxu0
    %v5634 = vadd.f32 %v5554, %v5633
    %v5635 = vpop.f32.mrb[0].mxu0
    %5636 = vmatprep.mubr.bf16.mxu0 0
    %5637 = vmatmul.mubr.bf16.gmra.mrb[0].mxu0 %v5578
    %v5638 = vpop.f32.mrb[0].mxu0
    %v5639 = vadd.f32 %v5554, %v5638
    %v5640 = vpop.f32.mrb[0].mxu0
    %v5641 = vpop.f32.mrb[0].mxu0
    %v5642 = vadd.f32 %v5554, %v5641
    %v5643 = vpop.f32.mrb[0].mxu0
    %5644 = vdwg.mxu0
    %v5645 = vmul.f32 %v5615, 1.702
    %v5646 = vmul.f32 %v5618, 1.702
    %v5647 = vmul.f32 %v5623, 1.702
    %v5648 = vmul.f32 %v5626, 1.702
    %v5649 = vmul.f32 %v5631, 1.702
    %v5650 = vmul.f32 %v5634, 1.702
    %v5651 = vmul.f32 %v5639, 1.702
    %v5652 = vmul.f32 %v5642, 1.702
    %v5653 = vxor.u32 %v5645, 2147483648
    %v5654 = vxor.u32 %v5646, 2147483648
    %v5655 = vxor.u32 %v5647, 2147483648
    %v5656 = vxor.u32 %v5648, 2147483648
    %v5657 = vxor.u32 %v5649, 2147483648
    %v5658 = vxor.u32 %v5650, 2147483648
    %v5659 = vxor.u32 %v5651, 2147483648
    %v5660 = vxor.u32 %v5652, 2147483648
    %v5661 = vmul.f32 %v5653, 1.442695
    %v5662 = vpow.pop %v5661
    %v5663 = vmul.f32 %v5654, 1.442695
    %v5664 = vpow.pop %v5663
    %v5665 = vmul.f32 %v5655, 1.442695
    %v5666 = vpow.pop %v5665
    %v5667 = vmul.f32 %v5656, 1.442695
    %v5668 = vpow.pop %v5667
    %v5669 = vmul.f32 %v5657, 1.442695
    %v5670 = vpow.pop %v5669
    %v5671 = vmul.f32 %v5658, 1.442695
    %v5672 = vpow.pop %v5671
    %v5673 = vmul.f32 %v5659, 1.442695
    %v5674 = vpow.pop %v5673
    %v5675 = vmul.f32 %v5660, 1.442695
    %v5676 = vpow.pop %v5675
    %v5677 = vadd.f32 %v5662, 1.0
    %v5678 = vadd.f32 %v5664, 1.0
    %v5679 = vadd.f32 %v5666, 1.0
    %v5680 = vadd.f32 %v5668, 1.0
    %v5681 = vadd.f32 %v5670, 1.0
    %v5682 = vadd.f32 %v5672, 1.0
    %v5683 = vadd.f32 %v5674, 1.0
    %v5684 = vadd.f32 %v5676, 1.0
    %v5685 = vrcp.pop %v5677
    %v5686 = vmul.f32 1.0, %v5685
    %v5687 = vrcp.pop %v5678
    %v5688 = vmul.f32 1.0, %v5687
    %v5689 = vrcp.pop %v5679
    %v5690 = vmul.f32 1.0, %v5689
    %v5691 = vrcp.pop %v5680
    %v5692 = vmul.f32 1.0, %v5691
    %v5693 = vrcp.pop %v5681
    %v5694 = vmul.f32 1.0, %v5693
    %v5695 = vrcp.pop %v5682
    %v5696 = vmul.f32 1.0, %v5695
    %v5697 = vrcp.pop %v5683
    %v5698 = vmul.f32 1.0, %v5697
    %v5699 = vrcp.pop %v5684
    %v5700 = vmul.f32 1.0, %v5699
    %v5701 = vmul.f32 %v5615, %v5686
    %v5702 = vmul.f32 %v5618, %v5688
    %v5703 = vmul.f32 %v5623, %v5690
    %v5704 = vmul.f32 %v5626, %v5692
    %v5705 = vmul.f32 %v5631, %v5694
    %v5706 = vmul.f32 %v5634, %v5696
    %v5707 = vmul.f32 %v5639, %v5698
    %v5708 = vmul.f32 %v5642, %v5700
    %v5709 = vpack.c.bf16 %v5702, %v5701
    %v5710 = vpack.c.bf16 %v5704, %v5703
    %v5711 = vpack.c.bf16 %v5706, %v5705
    %v5712 = vpack.c.bf16 %v5708, %v5707
    %s5713 = scalar_lea.vmem %s14, 128
    %v5714 = vld [vmem:[%s5713] sm:$0xf]
    %v5715 = vld [vmem:[%s5713 + $0x4] sm:$0xf]
    %v5716 = vld [vmem:[%s5713 + $0x8] sm:$0xf]
    %v5717 = vld [vmem:[%s5713 + $0xc] sm:$0xf]
    %v5718 = vld [vmem:[%s5713 + $0x10] sm:$0xf]
    %v5719 = vld [vmem:[%s5713 + $0x14] sm:$0xf]
    %v5720 = vld [vmem:[%s5713 + $0x18] sm:$0xf]
    %v5721 = vld [vmem:[%s5713 + $0x1c] sm:$0xf]
    %v5722 = vld [vmem:[%s5713 + $0x20] sm:$0xf]
    %v5723 = vld [vmem:[%s5713 + $0x24] sm:$0xf]
    %v5724 = vld [vmem:[%s5713 + $0x28] sm:$0xf]
    %v5725 = vld [vmem:[%s5713 + $0x2c] sm:$0xf]
    %v5726 = vld [vmem:[%s5713 + $0x30] sm:$0xf]
    %v5727 = vld [vmem:[%s5713 + $0x34] sm:$0xf]
    %v5728 = vld [vmem:[%s5713 + $0x38] sm:$0xf]
    %v5729 = vld [vmem:[%s5713 + $0x3c] sm:$0xf]
    %v5746 = vunpack.c.l.b16 %v5714
    %v5747 = vunpack.c.l.b16 %v5715
    %v5748 = vunpack.c.l.b16 %v5716
    %v5749 = vunpack.c.l.b16 %v5717
    %v5750 = vunpack.c.l.b16 %v5718
    %v5751 = vunpack.c.l.b16 %v5719
    %v5752 = vunpack.c.l.b16 %v5720
    %v5753 = vunpack.c.l.b16 %v5721
    %v5754 = vunpack.c.l.b16 %v5722
    %v5755 = vunpack.c.l.b16 %v5723
    %v5756 = vunpack.c.l.b16 %v5724
    %v5757 = vunpack.c.l.b16 %v5725
    %v5758 = vunpack.c.l.b16 %v5726
    %v5759 = vunpack.c.l.b16 %v5727
    %v5760 = vunpack.c.l.b16 %v5728
    %v5761 = vunpack.c.l.b16 %v5729
    %v5762 = vpack.c.b16 %v5747, %v5746
    %v5763 = vpack.c.b16 %v5749, %v5748
    %v5764 = vpack.c.b16 %v5751, %v5750
    %v5765 = vpack.c.b16 %v5753, %v5752
    %v5766 = vpack.c.b16 %v5755, %v5754
    %v5767 = vpack.c.b16 %v5757, %v5756
    %v5768 = vpack.c.b16 %v5759, %v5758
    %v5769 = vpack.c.b16 %v5761, %v5760
    %5778 = vmatprep.subr.bf16.mxu0 0
    %5779 = vmatpush1.bf16.msra.mxu0 %v5762
    %5780 = vmatprep.subr.bf16.mxu0 0
    %5781 = vmatpush1.bf16.msra.mxu0 %v5763
    %5782 = vmatprep.subr.bf16.mxu0 0
    %5783 = vmatpush1.bf16.msra.mxu0 %v5764
    %5784 = vmatprep.subr.bf16.mxu0 0
    %5785 = vmatpush1.bf16.msra.mxu0 %v5765
    %5786 = vmatprep.subr.bf16.mxu0 0
    %5787 = vmatpush1.bf16.msra.mxu0 %v5766
    %5788 = vmatprep.subr.bf16.mxu0 0
    %5789 = vmatpush1.bf16.msra.mxu0 %v5767
    %5790 = vmatprep.subr.bf16.mxu0 0
    %5791 = vmatpush1.bf16.msra.mxu0 %v5768
    %5792 = vmatprep.subr.bf16.mxu0 0
    %5793 = vmatpush1.bf16.msra.mxu0 %v5769
    %5794 = vmatprep.subr.bf16.mxu0 0
    %5795 = vmatpush1.bf16.msra.mxu0 0
    %5796 = vmatprep.subr.bf16.mxu0 0
    %5797 = vmatpush1.bf16.msra.mxu0 0
    %5798 = vmatprep.subr.bf16.mxu0 0
    %5799 = vmatpush1.bf16.msra.mxu0 0
    %5800 = vmatprep.subr.bf16.mxu0 0
    %5801 = vmatpush1.bf16.msra.mxu0 0
    %5802 = vmatprep.subr.bf16.mxu0 0
    %5803 = vmatpush1.bf16.msra.mxu0 0
    %5804 = vmatprep.subr.bf16.mxu0 0
    %5805 = vmatpush1.bf16.msra.mxu0 0
    %5806 = vmatprep.subr.bf16.mxu0 0
    %5807 = vmatpush1.bf16.msra.mxu0 0
    %5808 = vmatprep.subr.bf16.mxu0 0
    %5809 = vmatpush1.bf16.msra.mxu0 0
    %5810 = vmatprep.mubr.bf16.mxu0 0
    %5811 = vmatmul.mubr.bf16.gmra.mrb[0].mxu0 %v5709
    %v5812 = vpop.f32.mrb[0].mxu0
    %v5813 = vadd.f32 0.0, %v5812
    %v5814 = vpop.f32.mrb[0].mxu0
    %v5815 = vpop.f32.mrb[0].mxu0
    %v5816 = vadd.f32 0.0, %v5815
    %v5817 = vpop.f32.mrb[0].mxu0
    %5818 = vmatprep.mubr.bf16.mxu0 0
    %5819 = vmatmul.mubr.bf16.gmra.mrb[0].mxu0 %v5710
    %v5820 = vpop.f32.mrb[0].mxu0
    %v5821 = vadd.f32 0.0, %v5820
    %v5822 = vpop.f32.mrb[0].mxu0
    %v5823 = vpop.f32.mrb[0].mxu0
    %v5824 = vadd.f32 0.0, %v5823
    %v5825 = vpop.f32.mrb[0].mxu0
    %5826 = vmatprep.mubr.bf16.mxu0 0
    %5827 = vmatmul.mubr.bf16.gmra.mrb[0].mxu0 %v5711
    %v5828 = vpop.f32.mrb[0].mxu0
    %v5829 = vadd.f32 0.0, %v5828
    %v5830 = vpop.f32.mrb[0].mxu0
    %v5831 = vpop.f32.mrb[0].mxu0
    %v5832 = vadd.f32 0.0, %v5831
    %v5833 = vpop.f32.mrb[0].mxu0
    %5834 = vmatprep.mubr.bf16.mxu0 0
    %5835 = vmatmul.mubr.bf16.gmra.mrb[0].mxu0 %v5712
    %v5836 = vpop.f32.mrb[0].mxu0
    %v5837 = vadd.f32 0.0, %v5836
    %v5838 = vpop.f32.mrb[0].mxu0
    %v5839 = vpop.f32.mrb[0].mxu0
    %v5840 = vadd.f32 0.0, %v5839
    %v5841 = vpop.f32.mrb[0].mxu0
    %5842 = vdwg.mxu0
    %v5843 = vadd.f32 %v5411, %v5813
    %v5844 = vadd.f32 %v5412, %v5816
    %v5845 = vadd.f32 %v5413, %v5821
    %v5846 = vadd.f32 %v5414, %v5824
    %v5847 = vadd.f32 %v5415, %v5829
    %v5848 = vadd.f32 %v5416, %v5832
    %v5849 = vadd.f32 %v5417, %v5837
    %v5850 = vadd.f32 %v5418, %v5840
    %s5851 = scalar_lea.vmem %s15, 2
    %v5852 = vld [vmem:[%s5851] sm:$0x1]
    %v5854 = vlaneseq
    %v5855 = vshrl.u32 %v5854, 7
    %v5856 = vsub.s32 0, %v5855
    %v5857 = vrot.slane %v5852, %v5856
    %v5859 = vadd.f32 %v5843, %v5857
    %v5860 = vadd.f32 %v5844, %v5857
    %v5861 = vadd.f32 %v5845, %v5857
    %v5862 = vadd.f32 %v5846, %v5857
    %v5863 = vadd.f32 %v5847, %v5857
    %v5864 = vadd.f32 %v5848, %v5857
    %v5865 = vadd.f32 %v5849, %v5857
    %v5866 = vadd.f32 %v5850, %v5857
    %v5867 = vsel %vm111, %v5859, 0.0
    %5868 = vadd.xlane.f32.xlu0 %v5867
    %v5869 = vpop.xlane.xlu0 %5868
    %v5870 = vsel %vm111, %v5860, 0.0
    %5871 = vadd.xlane.f32.xlu0 %v5870
    %v5872 = vpop.xlane.xlu0 %5871
    %v5873 = vsel %vm111, %v5861, 0.0
    %5874 = vadd.xlane.f32.xlu0 %v5873
    %v5875 = vpop.xlane.xlu0 %5874
    %v5876 = vsel %vm111, %v5862, 0.0
    %5877 = vadd.xlane.f32.xlu0 %v5876
    %v5878 = vpop.xlane.xlu0 %5877
    %v5879 = vsel %vm111, %v5863, 0.0
    %5880 = vadd.xlane.f32.xlu0 %v5879
    %v5881 = vpop.xlane.xlu0 %5880
    %v5882 = vsel %vm111, %v5864, 0.0
    %5883 = vadd.xlane.f32.xlu0 %v5882
    %v5884 = vpop.xlane.xlu0 %5883
    %v5885 = vsel %vm111, %v5865, 0.0
    %5886 = vadd.xlane.f32.xlu0 %v5885
    %v5887 = vpop.xlane.xlu0 %5886
    %v5888 = vsel %vm111, %v5866, 0.0
    %5889 = vadd.xlane.f32.xlu0 %v5888
    %v5890 = vpop.xlane.xlu0 %5889
    %v5891 = vmul.f32 %v5869, %v136
    %v5892 = vmul.f32 %v5872, %v136
    %v5893 = vmul.f32 %v5875, %v136
    %v5894 = vmul.f32 %v5878, %v136
    %v5895 = vmul.f32 %v5881, %v136
    %v5896 = vmul.f32 %v5884, %v136
    %v5897 = vmul.f32 %v5887, %v136
    %v5898 = vmul.f32 %v5890, %v136
    %v5899 = vmul.f32 %v5859, %v5859
    %v5900 = vmul.f32 %v5860, %v5860
    %v5901 = vmul.f32 %v5861, %v5861
    %v5902 = vmul.f32 %v5862, %v5862
    %v5903 = vmul.f32 %v5863, %v5863
    %v5904 = vmul.f32 %v5864, %v5864
    %v5905 = vmul.f32 %v5865, %v5865
    %v5906 = vmul.f32 %v5866, %v5866
    %v5907 = vsel %vm111, %v5899, 0.0
    %5908 = vadd.xlane.f32.xlu0 %v5907
    %v5909 = vpop.xlane.xlu0 %5908
    %v5910 = vsel %vm111, %v5900, 0.0
    %5911 = vadd.xlane.f32.xlu0 %v5910
    %v5912 = vpop.xlane.xlu0 %5911
    %v5913 = vsel %vm111, %v5901, 0.0
    %5914 = vadd.xlane.f32.xlu0 %v5913
    %v5915 = vpop.xlane.xlu0 %5914
    %v5916 = vsel %vm111, %v5902, 0.0
    %5917 = vadd.xlane.f32.xlu0 %v5916
    %v5918 = vpop.xlane.xlu0 %5917
    %v5919 = vsel %vm111, %v5903, 0.0
    %5920 = vadd.xlane.f32.xlu0 %v5919
    %v5921 = vpop.xlane.xlu0 %5920
    %v5922 = vsel %vm111, %v5904, 0.0
    %5923 = vadd.xlane.f32.xlu0 %v5922
    %v5924 = vpop.xlane.xlu0 %5923
    %v5925 = vsel %vm111, %v5905, 0.0
    %5926 = vadd.xlane.f32.xlu0 %v5925
    %v5927 = vpop.xlane.xlu0 %5926
    %v5928 = vsel %vm111, %v5906, 0.0
    %5929 = vadd.xlane.f32.xlu0 %v5928
    %v5930 = vpop.xlane.xlu0 %5929
    %v5931 = vmul.f32 %v5909, %v136
    %v5932 = vmul.f32 %v5912, %v136
    %v5933 = vmul.f32 %v5915, %v136
    %v5934 = vmul.f32 %v5918, %v136
    %v5935 = vmul.f32 %v5921, %v136
    %v5936 = vmul.f32 %v5924, %v136
    %v5937 = vmul.f32 %v5927, %v136
    %v5938 = vmul.f32 %v5930, %v136
    %v5939 = vsub.f32 %v5859, %v5891
    %v5940 = vsub.f32 %v5860, %v5892
    %v5941 = vsub.f32 %v5861, %v5893
    %v5942 = vsub.f32 %v5862, %v5894
    %v5943 = vsub.f32 %v5863, %v5895
    %v5944 = vsub.f32 %v5864, %v5896
    %v5945 = vsub.f32 %v5865, %v5897
    %v5946 = vsub.f32 %v5866, %v5898
    %v5947 = vmul.f32 %v5891, %v5891
    %v5948 = vmul.f32 %v5892, %v5892
    %v5949 = vmul.f32 %v5893, %v5893
    %v5950 = vmul.f32 %v5894, %v5894
    %v5951 = vmul.f32 %v5895, %v5895
    %v5952 = vmul.f32 %v5896, %v5896
    %v5953 = vmul.f32 %v5897, %v5897
    %v5954 = vmul.f32 %v5898, %v5898
    %v5955 = vsub.f32 %v5931, %v5947
    %v5956 = vsub.f32 %v5932, %v5948
    %v5957 = vsub.f32 %v5933, %v5949
    %v5958 = vsub.f32 %v5934, %v5950
    %v5959 = vsub.f32 %v5935, %v5951
    %v5960 = vsub.f32 %v5936, %v5952
    %v5961 = vsub.f32 %v5937, %v5953
    %v5962 = vsub.f32 %v5938, %v5954
    %v5963 = vadd.f32 %v5955, 1e-05
    %v5964 = vadd.f32 %v5956, 1e-05
    %v5965 = vadd.f32 %v5957, 1e-05
    %v5966 = vadd.f32 %v5958, 1e-05
    %v5967 = vadd.f32 %v5959, 1e-05
    %v5968 = vadd.f32 %v5960, 1e-05
    %v5969 = vadd.f32 %v5961, 1e-05
    %v5970 = vadd.f32 %v5962, 1e-05
    %v5971 = vrsqrt.pop %v5963
    %v5972 = vrsqrt.pop %v5964
    %v5973 = vrsqrt.pop %v5965
    %v5974 = vrsqrt.pop %v5966
    %v5975 = vrsqrt.pop %v5967
    %v5976 = vrsqrt.pop %v5968
    %v5977 = vrsqrt.pop %v5969
    %v5978 = vrsqrt.pop %v5970
    %v5979 = vmul.f32 %v5939, %v5971
    %v5980 = vmul.f32 %v5940, %v5972
    %v5981 = vmul.f32 %v5941, %v5973
    %v5982 = vmul.f32 %v5942, %v5974
    %v5983 = vmul.f32 %v5943, %v5975
    %v5984 = vmul.f32 %v5944, %v5976
    %v5985 = vmul.f32 %v5945, %v5977
    %v5986 = vmul.f32 %v5946, %v5978
    %v5987 = vpack.c.bf16 %v5980, %v5979
    %v5988 = vpack.c.bf16 %v5982, %v5981
    %v5989 = vpack.c.bf16 %v5984, %v5983
    %v5990 = vpack.c.bf16 %v5986, %v5985
    %v5991 = vld [vmem:[%s16] sm:$0xf]
    %v5992 = vld [vmem:[%s16 + $0x4] sm:$0xf]
    %v5993 = vld [vmem:[%s16 + $0x8] sm:$0xf]
    %v5994 = vld [vmem:[%s16 + $0xc] sm:$0xf]
    %v5995 = vld [vmem:[%s17] sm:$0x1]
    %v5997 = vlaneseq
    %v5998 = vshrl.u32 %v5997, 7
    %v5999 = vsub.s32 0, %v5998
    %v6000 = vrot.slane %v5995, %v5999
    %v6006 = vunpack.c.l.b16 %v5991
    %v6007 = vunpack.c.l.b16 %v5992
    %v6008 = vunpack.c.l.b16 %v5993
    %v6009 = vunpack.c.l.b16 %v5994
    %v6010 = vpack.c.b16 %v6007, %v6006
    %v6011 = vpack.c.b16 %v6009, %v6008
    %v6015 = vsel %vm111, %v5987, 0
    %v6018 = vsel %vm111, %v5988, 0
    %v6021 = vsel %vm111, %v5989, 0
    %v6024 = vsel %vm111, %v5990, 0
    %6026 = vmatprep.subr.bf16.mxu0 0
    %6027 = vmatpush1.bf16.msra.mxu0 %v6010
    %6028 = vmatprep.subr.bf16.mxu0 0
    %6029 = vmatpush1.bf16.msra.mxu0 %v6011
    %6030 = vmatprep.subr.bf16.mxu0 0
    %6031 = vmatpush1.bf16.msra.mxu0 0
    %6032 = vmatprep.subr.bf16.mxu0 0
    %6033 = vmatpush1.bf16.msra.mxu0 0
    %6034 = vmatprep.subr.bf16.mxu0 0
    %6035 = vmatpush1.bf16.msra.mxu0 0
    %6036 = vmatprep.subr.bf16.mxu0 0
    %6037 = vmatpush1.bf16.msra.mxu0 0
    %6038 = vmatprep.subr.bf16.mxu0 0
    %6039 = vmatpush1.bf16.msra.mxu0 0
    %6040 = vmatprep.subr.bf16.mxu0 0
    %6041 = vmatpush1.bf16.msra.mxu0 0
    %6042 = vmatprep.subr.bf16.mxu0 0
    %6043 = vmatpush1.bf16.msra.mxu0 0
    %6044 = vmatprep.subr.bf16.mxu0 0
    %6045 = vmatpush1.bf16.msra.mxu0 0
    %6046 = vmatprep.subr.bf16.mxu0 0
    %6047 = vmatpush1.bf16.msra.mxu0 0
    %6048 = vmatprep.subr.bf16.mxu0 0
    %6049 = vmatpush1.bf16.msra.mxu0 0
    %6050 = vmatprep.subr.bf16.mxu0 0
    %6051 = vmatpush1.bf16.msra.mxu0 0
    %6052 = vmatprep.subr.bf16.mxu0 0
    %6053 = vmatpush1.bf16.msra.mxu0 0
    %6054 = vmatprep.subr.bf16.mxu0 0
    %6055 = vmatpush1.bf16.msra.mxu0 0
    %6056 = vmatprep.subr.bf16.mxu0 0
    %6057 = vmatpush1.bf16.msra.mxu0 0
    %6058 = vmatprep.mubr.bf16.mxu0 0
    %6059 = vmatmul.mubr.bf16.gmra.mrb[0].mxu0 %v6015
    %v6060 = vpop.f32.mrb[0].mxu0
    %v6061 = vadd.f32 %v6000, %v6060
    %v6062 = vpop.f32.mrb[0].mxu0
    %v6063 = vpop.f32.mrb[0].mxu0
    %v6064 = vadd.f32 %v6000, %v6063
    %v6065 = vpop.f32.mrb[0].mxu0
    %6066 = vmatprep.mubr.bf16.mxu0 0
    %6067 = vmatmul.mubr.bf16.gmra.mrb[0].mxu0 %v6018
    %v6068 = vpop.f32.mrb[0].mxu0
    %v6069 = vadd.f32 %v6000, %v6068
    %v6070 = vpop.f32.mrb[0].mxu0
    %v6071 = vpop.f32.mrb[0].mxu0
    %v6072 = vadd.f32 %v6000, %v6071
    %v6073 = vpop.f32.mrb[0].mxu0
    %6074 = vmatprep.mubr.bf16.mxu0 0
    %6075 = vmatmul.mubr.bf16.gmra.mrb[0].mxu0 %v6021
    %v6076 = vpop.f32.mrb[0].mxu0
    %v6077 = vadd.f32 %v6000, %v6076
    %v6078 = vpop.f32.mrb[0].mxu0
    %v6079 = vpop.f32.mrb[0].mxu0
    %v6080 = vadd.f32 %v6000, %v6079
    %v6081 = vpop.f32.mrb[0].mxu0
    %6082 = vmatprep.mubr.bf16.mxu0 0
    %6083 = vmatmul.mubr.bf16.gmra.mrb[0].mxu0 %v6024
    %v6084 = vpop.f32.mrb[0].mxu0
    %v6085 = vadd.f32 %v6000, %v6084
    %v6086 = vpop.f32.mrb[0].mxu0
    %v6087 = vpop.f32.mrb[0].mxu0
    %v6088 = vadd.f32 %v6000, %v6087
    %v6089 = vpop.f32.mrb[0].mxu0
    %6090 = vdwg.mxu0
    %v6091 = vld [vmem:[%s4] sm:$0xff]
    %v6093 = vsel %vm564, %v6091, 0
    %6095 = vmatprep.subr.mxu0 0.0
    %6096 = vmatpush1.msra.mxu0 %v6061
    %6097 = vmatprep.subr.mxu0 0.0
    %6098 = vmatpush1.msra.mxu0 %v6064
    %6099 = vmatprep.subr.mxu0 0.0
    %6100 = vmatpush1.msra.mxu0 %v6069
    %6101 = vmatprep.subr.mxu0 0.0
    %6102 = vmatpush1.msra.mxu0 %v6072
    %6103 = vmatprep.subr.mxu0 0.0
    %6104 = vmatpush1.msra.mxu0 %v6077
    %6105 = vmatprep.subr.mxu0 0.0
    %6106 = vmatpush1.msra.mxu0 %v6080
    %6107 = vmatprep.subr.mxu0 0.0
    %6108 = vmatpush1.msra.mxu0 %v6085
    %6109 = vmatprep.subr.mxu0 0.0
    %6110 = vmatpush1.msra.mxu0 %v6088
    %6111 = vmatprep.subr.mxu0 0.0
    %6112 = vmatpush1.msra.mxu0 0.0
    %6113 = vmatprep.subr.mxu0 0.0
    %6114 = vmatpush1.msra.mxu0 0.0
    %6115 = vmatprep.subr.mxu0 0.0
    %6116 = vmatpush1.msra.mxu0 0.0
    %6117 = vmatprep.subr.mxu0 0.0
    %6118 = vmatpush1.msra.mxu0 0.0
    %6119 = vmatprep.subr.mxu0 0.0
    %6120 = vmatpush1.msra.mxu0 0.0
    %6121 = vmatprep.subr.mxu0 0.0
    %6122 = vmatpush1.msra.mxu0 0.0
    %6123 = vmatprep.subr.mxu0 0.0
    %6124 = vmatpush1.msra.mxu0 0.0
    %6125 = vmatprep.subr.mxu0 0.0
    %6126 = vmatpush1.msra.mxu0 0.0
    %6127 = vmatprep.subr.mxu0 0.0
    %6128 = vmatpush1.msra.mxu0 0.0
    %6129 = vmatprep.subr.mxu0 0.0
    %6130 = vmatpush1.msra.mxu0 0.0
    %6131 = vmatprep.subr.mxu0 0.0
    %6132 = vmatpush1.msra.mxu0 0.0
    %6133 = vmatprep.subr.mxu0 0.0
    %6134 = vmatpush1.msra.mxu0 0.0
    %6135 = vmatprep.subr.mxu0 0.0
    %6136 = vmatpush1.msra.mxu0 0.0
    %6137 = vmatprep.subr.mxu0 0.0
    %6138 = vmatpush1.msra.mxu0 0.0
    %6139 = vmatprep.subr.mxu0 0.0
    %6140 = vmatpush1.msra.mxu0 0.0
    %6141 = vmatprep.subr.mxu0 0.0
    %6142 = vmatpush1.msra.mxu0 0.0
    %6143 = vmatprep.subr.mxu0 0.0
    %6144 = vmatpush1.msra.mxu0 0.0
    %6145 = vmatprep.subr.mxu0 0.0
    %6146 = vmatpush1.msra.mxu0 0.0
    %6147 = vmatprep.subr.mxu0 0.0
    %6148 = vmatpush1.msra.mxu0 0.0
    %6149 = vmatprep.subr.mxu0 0.0
    %6150 = vmatpush1.msra.mxu0 0.0
    %6151 = vmatprep.subr.mxu0 0.0
    %6152 = vmatpush1.msra.mxu0 0.0
    %6153 = vmatprep.subr.mxu0 0.0
    %6154 = vmatpush1.msra.mxu0 0.0
    %6155 = vmatprep.subr.mxu0 0.0
    %6156 = vmatpush1.msra.mxu0 0.0
    %6157 = vmatprep.subr.mxu0 0.0
    %6158 = vmatpush1.msra.mxu0 0.0
    %6159 = vmatprep.mubr.f32.mxu0 0.0
    %6160 = vmatmul.mubr.f32.gmra.mrb[0].mxu0 %v6093
    %v6161 = vpop.f32.mrb[0].mxu0
    %v6162 = vadd.f32 0.0, %v6161
    %v6163 = vpop.f32.mrb[0].mxu0
    %6164 = vdwg.mxu0
    %6165 = vst.msk [vmem:[#allocation2] sm:$0xff] %vm111, %v6162
    %v6166 = vmul.f32 %v6061, %v6061
    %v6167 = vmul.f32 %v6064, %v6064
    %v6168 = vmul.f32 %v6069, %v6069
    %v6169 = vmul.f32 %v6072, %v6072
    %v6170 = vmul.f32 %v6077, %v6077
    %v6171 = vmul.f32 %v6080, %v6080
    %v6172 = vmul.f32 %v6085, %v6085
    %v6173 = vmul.f32 %v6088, %v6088
    %v6174 = vsel %vm111, %v6166, 0.0
    %6175 = vadd.xlane.f32.xlu0 %v6174
    %v6176 = vpop.xlane.xlu0 %6175
    %v6177 = vsel %vm111, %v6167, 0.0
    %6178 = vadd.xlane.f32.xlu0 %v6177
    %v6179 = vpop.xlane.xlu0 %6178
    %v6180 = vsel %vm111, %v6168, 0.0
    %6181 = vadd.xlane.f32.xlu0 %v6180
    %v6182 = vpop.xlane.xlu0 %6181
    %v6183 = vsel %vm111, %v6169, 0.0
    %6184 = vadd.xlane.f32.xlu0 %v6183
    %v6185 = vpop.xlane.xlu0 %6184
    %v6186 = vsel %vm111, %v6170, 0.0
    %6187 = vadd.xlane.f32.xlu0 %v6186
    %v6188 = vpop.xlane.xlu0 %6187
    %v6189 = vsel %vm111, %v6171, 0.0
    %6190 = vadd.xlane.f32.xlu0 %v6189
    %v6191 = vpop.xlane.xlu0 %6190
    %v6192 = vsel %vm111, %v6172, 0.0
    %6193 = vadd.xlane.f32.xlu0 %v6192
    %v6194 = vpop.xlane.xlu0 %6193
    %v6195 = vsel %vm111, %v6173, 0.0
    %6196 = vadd.xlane.f32.xlu0 %v6195
    %v6197 = vpop.xlane.xlu0 %6196
    %v6198 = vadd.f32 %v6176, 1e-12
    %v6199 = vadd.f32 %v6179, 1e-12
    %v6200 = vadd.f32 %v6182, 1e-12
    %v6201 = vadd.f32 %v6185, 1e-12
    %v6202 = vadd.f32 %v6188, 1e-12
    %v6203 = vadd.f32 %v6191, 1e-12
    %v6204 = vadd.f32 %v6194, 1e-12
    %v6205 = vadd.f32 %v6197, 1e-12
    %v6206 = vrsqrt.pop %v6198
    %v6207 = vrsqrt.pop %v6199
    %v6208 = vrsqrt.pop %v6200
    %v6209 = vrsqrt.pop %v6201
    %v6210 = vrsqrt.pop %v6202
    %v6211 = vrsqrt.pop %v6203
    %v6212 = vrsqrt.pop %v6204
    %v6213 = vrsqrt.pop %v6205
    %v6214 = vmul.f32 %v6061, %v6206
    %v6215 = vmul.f32 %v6064, %v6207
    %v6216 = vmul.f32 %v6069, %v6208
    %v6217 = vmul.f32 %v6072, %v6209
    %v6218 = vmul.f32 %v6077, %v6210
    %v6219 = vmul.f32 %v6080, %v6211
    %v6220 = vmul.f32 %v6085, %v6212
    %v6221 = vmul.f32 %v6088, %v6213
    %6222 = vst.msk [vmem:[%s19] sm:$0xff] %vm111, %v6214
    %6223 = vst.msk [vmem:[%s19 + $0x8] sm:$0xff] %vm111, %v6215
    %6224 = vst.msk [vmem:[%s19 + $0x10] sm:$0xff] %vm111, %v6216
    %6225 = vst.msk [vmem:[%s19 + $0x18] sm:$0xff] %vm111, %v6217
    %6226 = vst.msk [vmem:[%s19 + $0x20] sm:$0xff] %vm111, %v6218
    %6227 = vst.msk [vmem:[%s19 + $0x28] sm:$0xff] %vm111, %v6219
    %6228 = vst.msk [vmem:[%s19 + $0x30] sm:$0xff] %vm111, %v6220
    %6229 = vst.msk [vmem:[%s19 + $0x38] sm:$0xff] %vm111, %v6221
    // Predicated region
    $region74: #{_device_forward.1} parent=1 // pred_check
      _
    $region75: #{_device_forward.1} parent=1 // pred_check_branch
      %6231 = sbr.rel (0) target = $region77
    $region76: #{_device_forward.1} parent=1 // pred_region
      %s6233 = ssub.s32 128, 128
      %6234 = vsyncadd [#allocation3], %s6233
      %s6236 = sshll.u32 [#allocation2], 4
      %s6237 = int_to_ptr.vmem [resolvable:$true] %s6236
      %6239 = dma.vmem_to_hbm [thread:$0]  %s6237, 128, %s18, [#allocation3]
    $region77: #{_device_forward.1} parent=1 // pred_fallthru
      _
    // Predicated region
    $region78: #{_device_forward.1} parent=1 // pred_check
      _
    $region79: #{_device_forward.1} parent=1 // pred_check_branch
      %6241 = sbr.rel (0) target = $region81
    $region80: #{_device_forward.1} parent=1 // pred_region
      _
    $region81: #{_device_forward.1} parent=1 // pred_fallthru
      _
    // Predicated region
    $region82: #{_device_forward.1} parent=1 // pred_check
      _
    $region83: #{_device_forward.1} parent=1 // pred_check_branch
      %6243 = sbr.rel (0) target = $region85
    $region84: #{_device_forward.1} parent=1 // pred_region
      %6244 = dma.done [#allocation3], 128
    $region85: #{_device_forward.1} parent=1 // pred_fallthru
      _
    // Predicated region
    $region86: #{_device_forward.1} parent=1 // pred_check
      _
    $region87: #{_device_forward.1} parent=1 // pred_check_branch
      %6246 = sbr.rel (0) target = $region89
    $region88: #{_device_forward.1} parent=1 // pred_region
      _
    $region89: #{_device_forward.1} parent=1 // pred_fallthru
      _
    %6247 = vsyncpa [#allocation3], 1

</llo_original>
